<compile_context>
chip_gen: v5e
topology: v5e:2x2
jax: 0.10.0
libtpu: 0.0.40
codegen_flags: <defaults>
</compile_context>

<pallas_src>
import functools
import math

import jax
import jax.numpy as jnp
from jax import lax
from jax.experimental import pallas as pl
from jax.experimental.pallas import tpu as pltpu

_INV_SQRT2 = 1.0 / math.sqrt(2.0)
_PREC = lax.Precision.HIGHEST            # only used by the pure-JAX reference
_VMEM_LIMIT = 64 * 1024 * 1024           # cap; per-step footprint is far smaller
# TODO(synk): re-derive tile sizes / vmem limit for v7x (64 MiB VMEM) at very
# large H*W; current whole-image spatial blocks fit comfortably up to 256x256.


def _round_up(x, m):
    return (x + m - 1) // m * m


def _gelu_exact(x):
    # nn.GELU() default (erf-based, approximate='none')
    return 0.5 * x * (1.0 + lax.erf(x * _INV_SQRT2))


# ----------------------------- FreBlock kernel ------------------------------
# Channel-major layout: activation blocks are (C, TL) with TL rfft2 pixels on
# the lane axis, so the 1x1 convolutions are (C, C) x (C, TL) matmuls with
# lane-dense outputs and the resident weights are tiny.
def freblock_kernel(mag_ref, pha_ref,
                    w1m_ref, b1m_ref, w2m_ref, b2m_ref,
                    w1p_ref, b1p_ref, w2p_ref, b2p_ref,
                    re_ref, im_ref):
    m = mag_ref[...]                                   # (C, TL)
    q = pha_ref[...]

    # processmag: 1x1 conv -> LeakyReLU(0.1) (per spec) -> 1x1 conv
    h = jnp.dot(w1m_ref[...], m, preferred_element_type=jnp.float32) + b1m_ref[...]
    h = jnp.where(h > 0, h, 0.1 * h)
    mag2 = jnp.dot(w2m_ref[...], h, preferred_element_type=jnp.float32) + b2m_ref[...]

    # processpha: 1x1 conv -> LeakyReLU(0.1) -> 1x1 conv
    g = jnp.dot(w1p_ref[...], q, preferred_element_type=jnp.float32) + b1p_ref[...]
    g = jnp.where(g > 0, g, 0.1 * g)
    pha2 = jnp.dot(w2p_ref[...], g, preferred_element_type=jnp.float32) + b2p_ref[...]

    # recombine: real = mag*cos(pha), imag = mag*sin(pha)
    re_ref[...] = mag2 * jnp.cos(pha2)
    im_ref[...] = mag2 * jnp.sin(pha2)


def freblock_apply(mag, pha, p):
    """mag / pha: (N, C, L) float32 with L = H * (W//2 + 1)."""
    N, C, L = mag.shape
    TL_TARGET = 2048                                   # lane tile, multiple of 128
    if L <= TL_TARGET:
        TL, L_pad = L, L
    else:
        TL = TL_TARGET
        L_pad = _round_up(L, TL)
        mag = jnp.pad(mag, ((0, 0), (0, 0), (0, L_pad - L)))
        pha = jnp.pad(pha, ((0, 0), (0, 0), (0, L_pad - L)))

    act_spec = pl.BlockSpec((None, C, TL), lambda n, l: (n, 0, l))
    w_spec = pl.BlockSpec((C, C), lambda n, l: (0, 0))     # VMEM-resident
    b_spec = pl.BlockSpec((C, 1), lambda n, l: (0, 0))

    re, im = pl.pallas_call(
        freblock_kernel,
        out_shape=(jax.ShapeDtypeStruct((N, C, L_pad), jnp.float32),
                   jax.ShapeDtypeStruct((N, C, L_pad), jnp.float32)),
        grid=(N, L_pad // TL),
        in_specs=[act_spec, act_spec,
                  w_spec, b_spec, w_spec, b_spec,
                  w_spec, b_spec, w_spec, b_spec],
        out_specs=(act_spec, act_spec),
        compiler_params=pltpu.CompilerParams(
            dimension_semantics=("parallel", "parallel"),
            vmem_limit_bytes=_VMEM_LIMIT),
    )(mag, pha,
      p['w1m'].T, p['b1m'].T, p['w2m'].T, p['b2m'].T,
      p['w1p'].T, p['b1p'].T, p['w2p'].T, p['b2p'].T)
    return re[:, :, :L], im[:, :, :L]


# ------------- fused spatial branch: layer_1 -> layer_2 -> +residual ---------
# One grid step = one image (NHWC).  Each 3x3 conv is nine shifted
# (H*W, Cin) @ (Cin, Cout) matmuls accumulated in VMEM (no HBM im2col); the
# zero-padded intermediate y1 lives only in a VMEM scratch.
# TODO(synk): for very large H*W add a row-tile grid axis with manual halo DMA
# (memory_space=pl.ANY + pltpu.make_async_copy) instead of whole-image blocks.
def spatial_kernel(xp_ref, res_ref, w1_ref, b1_ref, w2_ref, b2_ref,
                   out_ref, y1p_ref, *, H, W, C):
    # layer_1: conv3x3 (stride 1, pad 1, bias) + GELU
    acc = jnp.dot(xp_ref[0:H, 0:W, :].reshape(H * W, C), w1_ref[0],
                  preferred_element_type=jnp.float32)
    for k in range(1, 9):
        dy, dx = divmod(k, 3)
        sh = xp_ref[dy:dy + H, dx:dx + W, :].reshape(H * W, C)
        acc = acc + jnp.dot(sh, w1_ref[k], preferred_element_type=jnp.float32)
    y1 = _gelu_exact(acc + b1_ref[...])                # (H*W, C)

    # padded y1 kept in VMEM scratch (halo = zeros), never round-trips HBM
    y1p_ref[...] = jnp.zeros_like(y1p_ref)
    y1p_ref[1:H + 1, 1:W + 1, :] = y1.reshape(H, W, C)

    # layer_2: conv3x3 + GELU, then residual add
    acc2 = jnp.dot(y1p_ref[0:H, 0:W, :].reshape(H * W, C), w2_ref[0],
                   preferred_element_type=jnp.float32)
    for k in range(1, 9):
        dy, dx = divmod(k, 3)
        sh = y1p_ref[dy:dy + H, dx:dx + W, :].reshape(H * W, C)
        acc2 = acc2 + jnp.dot(sh, w2_ref[k], preferred_element_type=jnp.float32)
    y2 = _gelu_exact(acc2 + b2_ref[...]) + res_ref[...].reshape(H * W, C)
    out_ref[...] = y2.reshape(H, W, C)


def spatial_apply(x2_nchw, p):
    N, C, H, W = x2_nchw.shape
    x2 = jnp.transpose(x2_nchw, (0, 2, 3, 1))          # NHWC at the kernel boundary
    xp = jnp.pad(x2, ((0, 0), (1, 1), (1, 1), (0, 0)))
    w1 = p['wc1'].reshape(9, C, C)                     # tap-major (dy, dx), then cin
    w2 = p['wc2'].reshape(9, C, C)

    out = pl.pallas_call(
        functools.partial(spatial_kernel, H=H, W=W, C=C),
        out_shape=jax.ShapeDtypeStruct((N, H, W, C), jnp.float32),
        grid=(N,),
        in_specs=[
            pl.BlockSpec((None, H + 2, W + 2, C), lambda n: (n, 0, 0, 0)),
            pl.BlockSpec((None, H, W, C), lambda n: (n, 0, 0, 0)),
            pl.BlockSpec((9, C, C), lambda n: (0, 0, 0)),   # resident weights
            pl.BlockSpec((1, C), lambda n: (0, 0)),
            pl.BlockSpec((9, C, C), lambda n: (0, 0, 0)),
            pl.BlockSpec((1, C), lambda n: (0, 0)),
        ],
        out_specs=pl.BlockSpec((None, H, W, C), lambda n: (n, 0, 0, 0)),
        scratch_shapes=[pltpu.VMEM((H + 2, W + 2, C), jnp.float32)],
        compiler_params=pltpu.CompilerParams(
            dimension_semantics=("parallel",),
            vmem_limit_bytes=_VMEM_LIMIT),
    )(xp, x2, w1, p['bc1'], w2, p['bc2'])
    return jnp.transpose(out, (0, 3, 1, 2))            # back to NCHW


# -------------------------------- FRB forward --------------------------------
def frb_forward(x, p):
    N, Cfull, H, W = x.shape
    C = Cfull // 2
    x1 = x[:, :C]
    x2 = x[:, C:]

    # ---- frequency branch (all NCHW; no layout transposes) ----
    # TODO(synk): rfft2/irfft2 and the complex abs/angle (atan2) next to them
    # have no Pallas TPU lowering; they stay in XLA.  All FreBlock compute
    # (4 matmuls, LeakyReLU, cos/sin recombination) runs in the Pallas kernel.
    xf = jnp.fft.rfft2(x1, axes=(-2, -1))              # norm='backward'
    Wf = xf.shape[-1]
    mag = jnp.abs(xf).astype(jnp.float32).reshape(N, C, H * Wf)
    pha = jnp.angle(xf).astype(jnp.float32).reshape(N, C, H * Wf)
    re, im = freblock_apply(mag, pha, p)
    xf_out = lax.complex(re.reshape(N, C, H, Wf), im.reshape(N, C, H, Wf))
    x_freq = x1 + jnp.fft.irfft2(xf_out, s=(H, W), axes=(-2, -1))

    # ---- spatial branch (fused layer_1 + layer_2 + residual, one kernel) ----
    x_spatial = spatial_apply(x2, p)

    return jnp.concatenate([x_freq, x_spatial], axis=1)


# ---------------------- pure-JAX reference (for checking) --------------------
def frb_reference(x, p):
    N, Cfull, H, W = x.shape
    C = Cfull // 2
    x1, x2 = x[:, :C], x[:, C:]

    xf = jnp.fft.rfft2(x1, axes=(-2, -1))
    mag, pha = jnp.abs(xf), jnp.angle(xf)

    def conv1x1(t, w, b):               # w: (Cin, Cout), b: (1, Cout)
        return (jnp.einsum('nchw,cd->ndhw', t, w, precision=_PREC)
                + b.reshape(1, -1, 1, 1))

    m = conv1x1(mag, p['w1m'], p['b1m'])
    m = jnp.where(m > 0, m, 0.1 * m)
    m = conv1x1(m, p['w2m'], p['b2m'])
    q = conv1x1(pha, p['w1p'], p['b1p'])
    q = jnp.where(q > 0, q, 0.1 * q)
    q = conv1x1(q, p['w2p'], p['b2p'])
    xf_out = lax.complex(m * jnp.cos(q), m * jnp.sin(q))
    x_freq = x1 + jnp.fft.irfft2(xf_out, s=(H, W), axes=(-2, -1))

    def conv3x3(t, w_mat, b_row):
        Cin = t.shape[1]
        Cout = w_mat.shape[1]
        w4 = w_mat.reshape(3, 3, Cin, Cout).transpose(3, 2, 0, 1)   # OIHW
        out = lax.conv_general_dilated(
            t, w4, (1, 1), ((1, 1), (1, 1)),
            dimension_numbers=('NCHW', 'OIHW', 'NCHW'), precision=_PREC)
        return out + b_row.reshape(1, -1, 1, 1)

    y1 = _gelu_exact(conv3x3(x2, p['wc1'], p['bc1']))
    y2 = _gelu_exact(conv3x3(y1, p['wc2'], p['bc2']))
    x_spatial = x2 + y2
    return jnp.concatenate([x_freq, x_spatial], axis=1)


if __name__ == "__main__":
    key = jax.random.PRNGKey(0)
    N, channels, H, W = 2, 4, 16, 16
    C = channels // 2
    keys = jax.random.split(key, 14)

    x = jax.random.normal(keys[0], (N, channels, H, W), dtype=jnp.float32)

    def mk_w(k, cin, cout, scale):
        return scale * jax.random.normal(k, (cin, cout), dtype=jnp.float32)

    def mk_b(k, c):
        return 0.1 * jax.random.normal(k, (1, c), dtype=jnp.float32)

    params = dict(
        # FreBlock 1x1 convs stored as (Cin, Cout); biases (1, C)
        w1m=mk_w(keys[1], C, C, 0.3), b1m=mk_b(keys[2], C),
        w2m=mk_w(keys[3], C, C, 0.3), b2m=mk_b(keys[4], C),
        w1p=mk_w(keys[5], C, C, 0.3), b1p=mk_b(keys[6], C),
        w2p=mk_w(keys[7], C, C, 0.3), b2p=mk_b(keys[8], C),
        # layer_1 / layer_2 3x3 convs as (9*Cin, Cout), rows ordered (dy,dx,cin)
        wc1=mk_w(keys[9], 9 * C, C, 0.2), bc1=mk_b(keys[10], C),
        wc2=mk_w(keys[11], 9 * C, C, 0.2), bc2=mk_b(keys[12], C),
    )

    fwd = jax.jit(frb_forward)
    out = jax.block_until_ready(fwd(x, params))

    ref = frb_reference(x, params)
    assert out.shape == (N, channels, H, W), out.shape
    assert bool(jnp.all(jnp.isfinite(out)))
    err = float(jnp.max(jnp.abs(out - ref)))
    assert err < 5e-2, f"max abs err vs reference: {err}"

    print("KERNEL_OK")
</pallas_src>

<mosaic_0001>
module attributes {stable_mosaic.version = 11 : i64} {
  func.func @spatial_kernel(%arg0: i32, %arg1: memref<1x18x18x2xf32, #tpu.memory_space<vmem>>, %arg2: memref<1x16x16x2xf32, #tpu.memory_space<vmem>>, %arg3: memref<9x2x2xf32, #tpu.memory_space<vmem>>, %arg4: memref<1x2xf32, #tpu.memory_space<vmem>>, %arg5: memref<9x2x2xf32, #tpu.memory_space<vmem>>, %arg6: memref<1x2xf32, #tpu.memory_space<vmem>>, %arg7: memref<1x16x16x2xf32, #tpu.memory_space<vmem>>, %arg8: memref<18x18x2xf32, #tpu.memory_space<vmem>>) attributes {dimension_semantics = [#tpu.dimension_semantics<parallel>], iteration_bounds = array<i64: 2>, scalar_prefetch = 0 : i64, scratch_operands = 1 : i64, tpu.core_type = #tpu.core_type<tc>, window_params = [{transform_indices = @transform_0, window_bounds = array<i64: 1, 18, 18, 2>}, {transform_indices = @transform_1, window_bounds = array<i64: 1, 16, 16, 2>}, {pipeline_mode = #tpu.pipeline_mode<synchronous>, transform_indices = @transform_2, window_bounds = array<i64: 9, 2, 2>}, {pipeline_mode = #tpu.pipeline_mode<synchronous>, transform_indices = @transform_3, window_bounds = array<i64: 1, 2>}, {pipeline_mode = #tpu.pipeline_mode<synchronous>, transform_indices = @transform_4, window_bounds = array<i64: 9, 2, 2>}, {pipeline_mode = #tpu.pipeline_mode<synchronous>, transform_indices = @transform_5, window_bounds = array<i64: 1, 2>}, {transform_indices = @transform_6, window_bounds = array<i64: 1, 16, 16, 2>}]} {
    %c0 = arith.constant 0 : index
    %c0_0 = arith.constant 0 : index
    %c0_1 = arith.constant 0 : index
    %c0_2 = arith.constant 0 : index
    %0 = vector.load %arg1[%c0, %c0_0, %c0_1, %c0_2] : memref<1x18x18x2xf32, #tpu.memory_space<vmem>>, vector<1x16x16x2xf32>
    %1 = vector.shape_cast %0 : vector<1x16x16x2xf32> to vector<16x16x2xf32>
    %2 = vector.shape_cast %1 : vector<16x16x2xf32> to vector<256x2xf32>
    %c0_3 = arith.constant 0 : index
    %c0_4 = arith.constant 0 : index
    %c0_5 = arith.constant 0 : index
    %3 = vector.load %arg3[%c0_3, %c0_4, %c0_5] : memref<9x2x2xf32, #tpu.memory_space<vmem>>, vector<1x2x2xf32>
    %4 = vector.shape_cast %3 : vector<1x2x2xf32> to vector<2x2xf32>
    %cst = arith.constant dense<0.000000e+00> : vector<256x2xf32>
    %5 = tpu.matmul %2, %4, %cst {dimension_numbers = #tpu.dot_dimension_numbers<[1], [0], [0], [1], [0, 0, 1, 1], [], []>} : vector<256x2xf32>, vector<2x2xf32>, vector<256x2xf32> -> vector<256x2xf32>
    %c0_6 = arith.constant 0 : index
    %c0_7 = arith.constant 0 : index
    %c1 = arith.constant 1 : index
    %c0_8 = arith.constant 0 : index
    %6 = vector.load %arg1[%c0_6, %c0_7, %c1, %c0_8] : memref<1x18x18x2xf32, #tpu.memory_space<vmem>>, vector<1x16x16x2xf32>
    %7 = vector.shape_cast %6 : vector<1x16x16x2xf32> to vector<16x16x2xf32>
    %8 = vector.shape_cast %7 : vector<16x16x2xf32> to vector<256x2xf32>
    %c1_9 = arith.constant 1 : index
    %c0_10 = arith.constant 0 : index
    %c0_11 = arith.constant 0 : index
    %9 = vector.load %arg3[%c1_9, %c0_10, %c0_11] : memref<9x2x2xf32, #tpu.memory_space<vmem>>, vector<1x2x2xf32>
    %10 = vector.shape_cast %9 : vector<1x2x2xf32> to vector<2x2xf32>
    %cst_12 = arith.constant dense<0.000000e+00> : vector<256x2xf32>
    %11 = tpu.matmul %8, %10, %cst_12 {dimension_numbers = #tpu.dot_dimension_numbers<[1], [0], [0], [1], [0, 0, 1, 1], [], []>} : vector<256x2xf32>, vector<2x2xf32>, vector<256x2xf32> -> vector<256x2xf32>
    %12 = arith.addf %5, %11 : vector<256x2xf32>
    %c0_13 = arith.constant 0 : index
    %c0_14 = arith.constant 0 : index
    %c2 = arith.constant 2 : index
    %c0_15 = arith.constant 0 : index
    %13 = vector.load %arg1[%c0_13, %c0_14, %c2, %c0_15] : memref<1x18x18x2xf32, #tpu.memory_space<vmem>>, vector<1x16x16x2xf32>
    %14 = vector.shape_cast %13 : vector<1x16x16x2xf32> to vector<16x16x2xf32>
    %15 = vector.shape_cast %14 : vector<16x16x2xf32> to vector<256x2xf32>
    %c2_16 = arith.constant 2 : index
    %c0_17 = arith.constant 0 : index
    %c0_18 = arith.constant 0 : index
    %16 = vector.load %arg3[%c2_16, %c0_17, %c0_18] : memref<9x2x2xf32, #tpu.memory_space<vmem>>, vector<1x2x2xf32>
    %17 = vector.shape_cast %16 : vector<1x2x2xf32> to vector<2x2xf32>
    %cst_19 = arith.constant dense<0.000000e+00> : vector<256x2xf32>
    %18 = tpu.matmul %15, %17, %cst_19 {dimension_numbers = #tpu.dot_dimension_numbers<[1], [0], [0], [1], [0, 0, 1, 1], [], []>} : vector<256x2xf32>, vector<2x2xf32>, vector<256x2xf32> -> vector<256x2xf32>
    %19 = arith.addf %12, %18 : vector<256x2xf32>
    %c0_20 = arith.constant 0 : index
    %c1_21 = arith.constant 1 : index
    %c0_22 = arith.constant 0 : index
    %c0_23 = arith.constant 0 : index
    %20 = vector.load %arg1[%c0_20, %c1_21, %c0_22, %c0_23] : memref<1x18x18x2xf32, #tpu.memory_space<vmem>>, vector<1x16x16x2xf32>
    %21 = vector.shape_cast %20 : vector<1x16x16x2xf32> to vector<16x16x2xf32>
    %22 = vector.shape_cast %21 : vector<16x16x2xf32> to vector<256x2xf32>
    %c3 = arith.constant 3 : index
    %c0_24 = arith.constant 0 : index
    %c0_25 = arith.constant 0 : index
    %23 = vector.load %arg3[%c3, %c0_24, %c0_25] : memref<9x2x2xf32, #tpu.memory_space<vmem>>, vector<1x2x2xf32>
    %24 = vector.shape_cast %23 : vector<1x2x2xf32> to vector<2x2xf32>
    %cst_26 = arith.constant dense<0.000000e+00> : vector<256x2xf32>
    %25 = tpu.matmul %22, %24, %cst_26 {dimension_numbers = #tpu.dot_dimension_numbers<[1], [0], [0], [1], [0, 0, 1, 1], [], []>} : vector<256x2xf32>, vector<2x2xf32>, vector<256x2xf32> -> vector<256x2xf32>
    %26 = arith.addf %19, %25 : vector<256x2xf32>
    %c0_27 = arith.constant 0 : index
    %c1_28 = arith.constant 1 : index
    %c1_29 = arith.constant 1 : index
    %c0_30 = arith.constant 0 : index
    %27 = vector.load %arg1[%c0_27, %c1_28, %c1_29, %c0_30] : memref<1x18x18x2xf32, #tpu.memory_space<vmem>>, vector<1x16x16x2xf32>
    %28 = vector.shape_cast %27 : vector<1x16x16x2xf32> to vector<16x16x2xf32>
    %29 = vector.shape_cast %28 : vector<16x16x2xf32> to vector<256x2xf32>
    %c4 = arith.constant 4 : index
    %c0_31 = arith.constant 0 : index
    %c0_32 = arith.constant 0 : index
    %30 = vector.load %arg3[%c4, %c0_31, %c0_32] : memref<9x2x2xf32, #tpu.memory_space<vmem>>, vector<1x2x2xf32>
    %31 = vector.shape_cast %30 : vector<1x2x2xf32> to vector<2x2xf32>
    %cst_33 = arith.constant dense<0.000000e+00> : vector<256x2xf32>
    %32 = tpu.matmul %29, %31, %cst_33 {dimension_numbers = #tpu.dot_dimension_numbers<[1], [0], [0], [1], [0, 0, 1, 1], [], []>} : vector<256x2xf32>, vector<2x2xf32>, vector<256x2xf32> -> vector<256x2xf32>
    %33 = arith.addf %26, %32 : vector<256x2xf32>
    %c0_34 = arith.constant 0 : index
    %c1_35 = arith.constant 1 : index
    %c2_36 = arith.constant 2 : index
    %c0_37 = arith.constant 0 : index
    %34 = vector.load %arg1[%c0_34, %c1_35, %c2_36, %c0_37] : memref<1x18x18x2xf32, #tpu.memory_space<vmem>>, vector<1x16x16x2xf32>
    %35 = vector.shape_cast %34 : vector<1x16x16x2xf32> to vector<16x16x2xf32>
    %36 = vector.shape_cast %35 : vector<16x16x2xf32> to vector<256x2xf32>
    %c5 = arith.constant 5 : index
    %c0_38 = arith.constant 0 : index
    %c0_39 = arith.constant 0 : index
    %37 = vector.load %arg3[%c5, %c0_38, %c0_39] : memref<9x2x2xf32, #tpu.memory_space<vmem>>, vector<1x2x2xf32>
    %38 = vector.shape_cast %37 : vector<1x2x2xf32> to vector<2x2xf32>
    %cst_40 = arith.constant dense<0.000000e+00> : vector<256x2xf32>
    %39 = tpu.matmul %36, %38, %cst_40 {dimension_numbers = #tpu.dot_dimension_numbers<[1], [0], [0], [1], [0, 0, 1, 1], [], []>} : vector<256x2xf32>, vector<2x2xf32>, vector<256x2xf32> -> vector<256x2xf32>
    %40 = arith.addf %33, %39 : vector<256x2xf32>
    %c0_41 = arith.constant 0 : index
    %c2_42 = arith.constant 2 : index
    %c0_43 = arith.constant 0 : index
    %c0_44 = arith.constant 0 : index
    %41 = vector.load %arg1[%c0_41, %c2_42, %c0_43, %c0_44] : memref<1x18x18x2xf32, #tpu.memory_space<vmem>>, vector<1x16x16x2xf32>
    %42 = vector.shape_cast %41 : vector<1x16x16x2xf32> to vector<16x16x2xf32>
    %43 = vector.shape_cast %42 : vector<16x16x2xf32> to vector<256x2xf32>
    %c6 = arith.constant 6 : index
    %c0_45 = arith.constant 0 : index
    %c0_46 = arith.constant 0 : index
    %44 = vector.load %arg3[%c6, %c0_45, %c0_46] : memref<9x2x2xf32, #tpu.memory_space<vmem>>, vector<1x2x2xf32>
    %45 = vector.shape_cast %44 : vector<1x2x2xf32> to vector<2x2xf32>
    %cst_47 = arith.constant dense<0.000000e+00> : vector<256x2xf32>
    %46 = tpu.matmul %43, %45, %cst_47 {dimension_numbers = #tpu.dot_dimension_numbers<[1], [0], [0], [1], [0, 0, 1, 1], [], []>} : vector<256x2xf32>, vector<2x2xf32>, vector<256x2xf32> -> vector<256x2xf32>
    %47 = arith.addf %40, %46 : vector<256x2xf32>
    %c0_48 = arith.constant 0 : index
    %c2_49 = arith.constant 2 : index
    %c1_50 = arith.constant 1 : index
    %c0_51 = arith.constant 0 : index
    %48 = vector.load %arg1[%c0_48, %c2_49, %c1_50, %c0_51] : memref<1x18x18x2xf32, #tpu.memory_space<vmem>>, vector<1x16x16x2xf32>
    %49 = vector.shape_cast %48 : vector<1x16x16x2xf32> to vector<16x16x2xf32>
    %50 = vector.shape_cast %49 : vector<16x16x2xf32> to vector<256x2xf32>
    %c7 = arith.constant 7 : index
    %c0_52 = arith.constant 0 : index
    %c0_53 = arith.constant 0 : index
    %51 = vector.load %arg3[%c7, %c0_52, %c0_53] : memref<9x2x2xf32, #tpu.memory_space<vmem>>, vector<1x2x2xf32>
    %52 = vector.shape_cast %51 : vector<1x2x2xf32> to vector<2x2xf32>
    %cst_54 = arith.constant dense<0.000000e+00> : vector<256x2xf32>
    %53 = tpu.matmul %50, %52, %cst_54 {dimension_numbers = #tpu.dot_dimension_numbers<[1], [0], [0], [1], [0, 0, 1, 1], [], []>} : vector<256x2xf32>, vector<2x2xf32>, vector<256x2xf32> -> vector<256x2xf32>
    %54 = arith.addf %47, %53 : vector<256x2xf32>
    %c0_55 = arith.constant 0 : index
    %c2_56 = arith.constant 2 : index
    %c2_57 = arith.constant 2 : index
    %c0_58 = arith.constant 0 : index
    %55 = vector.load %arg1[%c0_55, %c2_56, %c2_57, %c0_58] : memref<1x18x18x2xf32, #tpu.memory_space<vmem>>, vector<1x16x16x2xf32>
    %56 = vector.shape_cast %55 : vector<1x16x16x2xf32> to vector<16x16x2xf32>
    %57 = vector.shape_cast %56 : vector<16x16x2xf32> to vector<256x2xf32>
    %c8 = arith.constant 8 : index
    %c0_59 = arith.constant 0 : index
    %c0_60 = arith.constant 0 : index
    %58 = vector.load %arg3[%c8, %c0_59, %c0_60] : memref<9x2x2xf32, #tpu.memory_space<vmem>>, vector<1x2x2xf32>
    %59 = vector.shape_cast %58 : vector<1x2x2xf32> to vector<2x2xf32>
    %cst_61 = arith.constant dense<0.000000e+00> : vector<256x2xf32>
    %60 = tpu.matmul %57, %59, %cst_61 {dimension_numbers = #tpu.dot_dimension_numbers<[1], [0], [0], [1], [0, 0, 1, 1], [], []>} : vector<256x2xf32>, vector<2x2xf32>, vector<256x2xf32> -> vector<256x2xf32>
    %61 = arith.addf %54, %60 : vector<256x2xf32>
    %c0_62 = arith.constant 0 : index
    %c0_63 = arith.constant 0 : index
    %62 = vector.load %arg4[%c0_62, %c0_63] : memref<1x2xf32, #tpu.memory_space<vmem>>, vector<1x2xf32>
    %63 = vector.broadcast %62 : vector<1x2xf32> to vector<256x2xf32>
    %64 = arith.addf %61, %63 : vector<256x2xf32>
    %cst_64 = arith.constant 5.000000e-01 : f32
    %65 = vector.broadcast %cst_64 : f32 to vector<256x2xf32>
    %66 = arith.mulf %65, %64 : vector<256x2xf32>
    %cst_65 = arith.constant 0.707106769 : f32
    %67 = vector.broadcast %cst_65 : f32 to vector<256x2xf32>
    %68 = arith.mulf %64, %67 : vector<256x2xf32>
    %69 = math.erf %68 : vector<256x2xf32>
    %cst_66 = arith.constant 1.000000e+00 : f32
    %70 = vector.broadcast %cst_66 : f32 to vector<256x2xf32>
    %71 = arith.addf %70, %69 : vector<256x2xf32>
    %72 = arith.mulf %66, %71 : vector<256x2xf32>
    %cst_67 = arith.constant 0.000000e+00 : f32
    %73 = vector.broadcast %cst_67 : f32 to vector<18x18x2xf32>
    %c0_68 = arith.constant 0 : index
    %c0_69 = arith.constant 0 : index
    %c0_70 = arith.constant 0 : index
    %74 = vector.load %arg8[%c0_68, %c0_69, %c0_70] : memref<18x18x2xf32, #tpu.memory_space<vmem>>, vector<18x18x2xf32>
    tpu.vector_store %arg8[%c0_68, %c0_69, %c0_70], %73 {strides = array<i32>} : memref<18x18x2xf32, #tpu.memory_space<vmem>>, vector<18x18x2xf32>,
    %75 = vector.shape_cast %72 : vector<256x2xf32> to vector<16x16x2xf32>
    %c1_71 = arith.constant 1 : index
    %c1_72 = arith.constant 1 : index
    %c0_73 = arith.constant 0 : index
    %76 = vector.load %arg8[%c1_71, %c1_72, %c0_73] : memref<18x18x2xf32, #tpu.memory_space<vmem>>, vector<16x16x2xf32>
    tpu.vector_store %arg8[%c1_71, %c1_72, %c0_73], %75 {strides = array<i32>} : memref<18x18x2xf32, #tpu.memory_space<vmem>>, vector<16x16x2xf32>,
    %c0_74 = arith.constant 0 : index
    %c0_75 = arith.constant 0 : index
    %c0_76 = arith.constant 0 : index
    %77 = vector.load %arg8[%c0_74, %c0_75, %c0_76] : memref<18x18x2xf32, #tpu.memory_space<vmem>>, vector<16x16x2xf32>
    %78 = vector.shape_cast %77 : vector<16x16x2xf32> to vector<256x2xf32>
    %c0_77 = arith.constant 0 : index
    %c0_78 = arith.constant 0 : index
    %c0_79 = arith.constant 0 : index
    %79 = vector.load %arg5[%c0_77, %c0_78, %c0_79] : memref<9x2x2xf32, #tpu.memory_space<vmem>>, vector<1x2x2xf32>
    %80 = vector.shape_cast %79 : vector<1x2x2xf32> to vector<2x2xf32>
    %cst_80 = arith.constant dense<0.000000e+00> : vector<256x2xf32>
    %81 = tpu.matmul %78, %80, %cst_80 {dimension_numbers = #tpu.dot_dimension_numbers<[1], [0], [0], [1], [0, 0, 1, 1], [], []>} : vector<256x2xf32>, vector<2x2xf32>, vector<256x2xf32> -> vector<256x2xf32>
    %c0_81 = arith.constant 0 : index
    %c1_82 = arith.constant 1 : index
    %c0_83 = arith.constant 0 : index
    %82 = vector.load %arg8[%c0_81, %c1_82, %c0_83] : memref<18x18x2xf32, #tpu.memory_space<vmem>>, vector<16x16x2xf32>
    %83 = vector.shape_cast %82 : vector<16x16x2xf32> to vector<256x2xf32>
    %c1_84 = arith.constant 1 : index
    %c0_85 = arith.constant 0 : index
    %c0_86 = arith.constant 0 : index
    %84 = vector.load %arg5[%c1_84, %c0_85, %c0_86] : memref<9x2x2xf32, #tpu.memory_space<vmem>>, vector<1x2x2xf32>
    %85 = vector.shape_cast %84 : vector<1x2x2xf32> to vector<2x2xf32>
    %cst_87 = arith.constant dense<0.000000e+00> : vector<256x2xf32>
    %86 = tpu.matmul %83, %85, %cst_87 {dimension_numbers = #tpu.dot_dimension_numbers<[1], [0], [0], [1], [0, 0, 1, 1], [], []>} : vector<256x2xf32>, vector<2x2xf32>, vector<256x2xf32> -> vector<256x2xf32>
    %87 = arith.addf %81, %86 : vector<256x2xf32>
    %c0_88 = arith.constant 0 : index
    %c2_89 = arith.constant 2 : index
    %c0_90 = arith.constant 0 : index
    %88 = vector.load %arg8[%c0_88, %c2_89, %c0_90] : memref<18x18x2xf32, #tpu.memory_space<vmem>>, vector<16x16x2xf32>
    %89 = vector.shape_cast %88 : vector<16x16x2xf32> to vector<256x2xf32>
    %c2_91 = arith.constant 2 : index
    %c0_92 = arith.constant 0 : index
    %c0_93 = arith.constant 0 : index
    %90 = vector.load %arg5[%c2_91, %c0_92, %c0_93] : memref<9x2x2xf32, #tpu.memory_space<vmem>>, vector<1x2x2xf32>
    %91 = vector.shape_cast %90 : vector<1x2x2xf32> to vector<2x2xf32>
    %cst_94 = arith.constant dense<0.000000e+00> : vector<256x2xf32>
    %92 = tpu.matmul %89, %91, %cst_94 {dimension_numbers = #tpu.dot_dimension_numbers<[1], [0], [0], [1], [0, 0, 1, 1], [], []>} : vector<256x2xf32>, vector<2x2xf32>, vector<256x2xf32> -> vector<256x2xf32>
    %93 = arith.addf %87, %92 : vector<256x2xf32>
    %c1_95 = arith.constant 1 : index
    %c0_96 = arith.constant 0 : index
    %c0_97 = arith.constant 0 : index
    %94 = vector.load %arg8[%c1_95, %c0_96, %c0_97] : memref<18x18x2xf32, #tpu.memory_space<vmem>>, vector<16x16x2xf32>
    %95 = vector.shape_cast %94 : vector<16x16x2xf32> to vector<256x2xf32>
    %c3_98 = arith.constant 3 : index
    %c0_99 = arith.constant 0 : index
    %c0_100 = arith.constant 0 : index
    %96 = vector.load %arg5[%c3_98, %c0_99, %c0_100] : memref<9x2x2xf32, #tpu.memory_space<vmem>>, vector<1x2x2xf32>
    %97 = vector.shape_cast %96 : vector<1x2x2xf32> to vector<2x2xf32>
    %cst_101 = arith.constant dense<0.000000e+00> : vector<256x2xf32>
    %98 = tpu.matmul %95, %97, %cst_101 {dimension_numbers = #tpu.dot_dimension_numbers<[1], [0], [0], [1], [0, 0, 1, 1], [], []>} : vector<256x2xf32>, vector<2x2xf32>, vector<256x2xf32> -> vector<256x2xf32>
    %99 = arith.addf %93, %98 : vector<256x2xf32>
    %c1_102 = arith.constant 1 : index
    %c1_103 = arith.constant 1 : index
    %c0_104 = arith.constant 0 : index
    %100 = vector.load %arg8[%c1_102, %c1_103, %c0_104] : memref<18x18x2xf32, #tpu.memory_space<vmem>>, vector<16x16x2xf32>
    %101 = vector.shape_cast %100 : vector<16x16x2xf32> to vector<256x2xf32>
    %c4_105 = arith.constant 4 : index
    %c0_106 = arith.constant 0 : index
    %c0_107 = arith.constant 0 : index
    %102 = vector.load %arg5[%c4_105, %c0_106, %c0_107] : memref<9x2x2xf32, #tpu.memory_space<vmem>>, vector<1x2x2xf32>
    %103 = vector.shape_cast %102 : vector<1x2x2xf32> to vector<2x2xf32>
    %cst_108 = arith.constant dense<0.000000e+00> : vector<256x2xf32>
    %104 = tpu.matmul %101, %103, %cst_108 {dimension_numbers = #tpu.dot_dimension_numbers<[1], [0], [0], [1], [0, 0, 1, 1], [], []>} : vector<256x2xf32>, vector<2x2xf32>, vector<256x2xf32> -> vector<256x2xf32>
    %105 = arith.addf %99, %104 : vector<256x2xf32>
    %c1_109 = arith.constant 1 : index
    %c2_110 = arith.constant 2 : index
    %c0_111 = arith.constant 0 : index
    %106 = vector.load %arg8[%c1_109, %c2_110, %c0_111] : memref<18x18x2xf32, #tpu.memory_space<vmem>>, vector<16x16x2xf32>
    %107 = vector.shape_cast %106 : vector<16x16x2xf32> to vector<256x2xf32>
    %c5_112 = arith.constant 5 : index
    %c0_113 = arith.constant 0 : index
    %c0_114 = arith.constant 0 : index
    %108 = vector.load %arg5[%c5_112, %c0_113, %c0_114] : memref<9x2x2xf32, #tpu.memory_space<vmem>>, vector<1x2x2xf32>
    %109 = vector.shape_cast %108 : vector<1x2x2xf32> to vector<2x2xf32>
    %cst_115 = arith.constant dense<0.000000e+00> : vector<256x2xf32>
    %110 = tpu.matmul %107, %109, %cst_115 {dimension_numbers = #tpu.dot_dimension_numbers<[1], [0], [0], [1], [0, 0, 1, 1], [], []>} : vector<256x2xf32>, vector<2x2xf32>, vector<256x2xf32> -> vector<256x2xf32>
    %111 = arith.addf %105, %110 : vector<256x2xf32>
    %c2_116 = arith.constant 2 : index
    %c0_117 = arith.constant 0 : index
    %c0_118 = arith.constant 0 : index
    %112 = vector.load %arg8[%c2_116, %c0_117, %c0_118] : memref<18x18x2xf32, #tpu.memory_space<vmem>>, vector<16x16x2xf32>
    %113 = vector.shape_cast %112 : vector<16x16x2xf32> to vector<256x2xf32>
    %c6_119 = arith.constant 6 : index
    %c0_120 = arith.constant 0 : index
    %c0_121 = arith.constant 0 : index
    %114 = vector.load %arg5[%c6_119, %c0_120, %c0_121] : memref<9x2x2xf32, #tpu.memory_space<vmem>>, vector<1x2x2xf32>
    %115 = vector.shape_cast %114 : vector<1x2x2xf32> to vector<2x2xf32>
    %cst_122 = arith.constant dense<0.000000e+00> : vector<256x2xf32>
    %116 = tpu.matmul %113, %115, %cst_122 {dimension_numbers = #tpu.dot_dimension_numbers<[1], [0], [0], [1], [0, 0, 1, 1], [], []>} : vector<256x2xf32>, vector<2x2xf32>, vector<256x2xf32> -> vector<256x2xf32>
    %117 = arith.addf %111, %116 : vector<256x2xf32>
    %c2_123 = arith.constant 2 : index
    %c1_124 = arith.constant 1 : index
    %c0_125 = arith.constant 0 : index
    %118 = vector.load %arg8[%c2_123, %c1_124, %c0_125] : memref<18x18x2xf32, #tpu.memory_space<vmem>>, vector<16x16x2xf32>
    %119 = vector.shape_cast %118 : vector<16x16x2xf32> to vector<256x2xf32>
    %c7_126 = arith.constant 7 : index
    %c0_127 = arith.constant 0 : index
    %c0_128 = arith.constant 0 : index
    %120 = vector.load %arg5[%c7_126, %c0_127, %c0_128] : memref<9x2x2xf32, #tpu.memory_space<vmem>>, vector<1x2x2xf32>
    %121 = vector.shape_cast %120 : vector<1x2x2xf32> to vector<2x2xf32>
    %cst_129 = arith.constant dense<0.000000e+00> : vector<256x2xf32>
    %122 = tpu.matmul %119, %121, %cst_129 {dimension_numbers = #tpu.dot_dimension_numbers<[1], [0], [0], [1], [0, 0, 1, 1], [], []>} : vector<256x2xf32>, vector<2x2xf32>, vector<256x2xf32> -> vector<256x2xf32>
    %123 = arith.addf %117, %122 : vector<256x2xf32>
    %c2_130 = arith.constant 2 : index
    %c2_131 = arith.constant 2 : index
    %c0_132 = arith.constant 0 : index
    %124 = vector.load %arg8[%c2_130, %c2_131, %c0_132] : memref<18x18x2xf32, #tpu.memory_space<vmem>>, vector<16x16x2xf32>
    %125 = vector.shape_cast %124 : vector<16x16x2xf32> to vector<256x2xf32>
    %c8_133 = arith.constant 8 : index
    %c0_134 = arith.constant 0 : index
    %c0_135 = arith.constant 0 : index
    %126 = vector.load %arg5[%c8_133, %c0_134, %c0_135] : memref<9x2x2xf32, #tpu.memory_space<vmem>>, vector<1x2x2xf32>
    %127 = vector.shape_cast %126 : vector<1x2x2xf32> to vector<2x2xf32>
    %cst_136 = arith.constant dense<0.000000e+00> : vector<256x2xf32>
    %128 = tpu.matmul %125, %127, %cst_136 {dimension_numbers = #tpu.dot_dimension_numbers<[1], [0], [0], [1], [0, 0, 1, 1], [], []>} : vector<256x2xf32>, vector<2x2xf32>, vector<256x2xf32> -> vector<256x2xf32>
    %129 = arith.addf %123, %128 : vector<256x2xf32>
    %c0_137 = arith.constant 0 : index
    %c0_138 = arith.constant 0 : index
    %130 = vector.load %arg6[%c0_137, %c0_138] : memref<1x2xf32, #tpu.memory_space<vmem>>, vector<1x2xf32>
    %131 = vector.broadcast %130 : vector<1x2xf32> to vector<256x2xf32>
    %132 = arith.addf %129, %131 : vector<256x2xf32>
    %cst_139 = arith.constant 5.000000e-01 : f32
    %133 = vector.broadcast %cst_139 : f32 to vector<256x2xf32>
    %134 = arith.mulf %133, %132 : vector<256x2xf32>
    %cst_140 = arith.constant 0.707106769 : f32
    %135 = vector.broadcast %cst_140 : f32 to vector<256x2xf32>
    %136 = arith.mulf %132, %135 : vector<256x2xf32>
    %137 = math.erf %136 : vector<256x2xf32>
    %cst_141 = arith.constant 1.000000e+00 : f32
    %138 = vector.broadcast %cst_141 : f32 to vector<256x2xf32>
    %139 = arith.addf %138, %137 : vector<256x2xf32>
    %140 = arith.mulf %134, %139 : vector<256x2xf32>
    %c0_142 = arith.constant 0 : index
    %c0_143 = arith.constant 0 : index
    %c0_144 = arith.constant 0 : index
    %c0_145 = arith.constant 0 : index
    %141 = vector.load %arg2[%c0_142, %c0_143, %c0_144, %c0_145] : memref<1x16x16x2xf32, #tpu.memory_space<vmem>>, vector<1x16x16x2xf32>
    %142 = vector.shape_cast %141 : vector<1x16x16x2xf32> to vector<16x16x2xf32>
    %143 = vector.shape_cast %142 : vector<16x16x2xf32> to vector<256x2xf32>
    %144 = arith.addf %140, %143 : vector<256x2xf32>
    %145 = vector.shape_cast %144 : vector<256x2xf32> to vector<16x16x2xf32>
    %c0_146 = arith.constant 0 : index
    %c0_147 = arith.constant 0 : index
    %c0_148 = arith.constant 0 : index
    %c0_149 = arith.constant 0 : index
    %146 = vector.load %arg7[%c0_146, %c0_147, %c0_148, %c0_149] : memref<1x16x16x2xf32, #tpu.memory_space<vmem>>, vector<1x16x16x2xf32>
    %147 = vector.shape_cast %146 : vector<1x16x16x2xf32> to vector<16x16x2xf32>
    %148 = vector.shape_cast %145 : vector<16x16x2xf32> to vector<1x16x16x2xf32>
    tpu.vector_store %arg7[%c0_146, %c0_147, %c0_148, %c0_149], %148 {strides = array<i32>} : memref<1x16x16x2xf32, #tpu.memory_space<vmem>>, vector<1x16x16x2xf32>,
    return
  }
  func.func @transform_0(%arg0: i32) -> (i32, i32, i32, i32) {
    %c0_i32 = arith.constant 0 : i32
    %c0_i32_0 = arith.constant 0 : i32
    %c0_i32_1 = arith.constant 0 : i32
    %c0_i32_2 = arith.constant 0 : i32
    return %arg0, %c0_i32, %c0_i32_0, %c0_i32_1 : i32, i32, i32, i32
  }
  func.func @transform_1(%arg0: i32) -> (i32, i32, i32, i32) {
    %c0_i32 = arith.constant 0 : i32
    %c0_i32_0 = arith.constant 0 : i32
    %c0_i32_1 = arith.constant 0 : i32
    %c0_i32_2 = arith.constant 0 : i32
    return %arg0, %c0_i32, %c0_i32_0, %c0_i32_1 : i32, i32, i32, i32
  }
  func.func @transform_2(%arg0: i32) -> (i32, i32, i32) {
    %c0_i32 = arith.constant 0 : i32
    %c0_i32_0 = arith.constant 0 : i32
    %c0_i32_1 = arith.constant 0 : i32
    %c0_i32_2 = arith.constant 0 : i32
    return %c0_i32, %c0_i32_0, %c0_i32_1 : i32, i32, i32
  }
  func.func @transform_3(%arg0: i32) -> (i32, i32) {
    %c0_i32 = arith.constant 0 : i32
    %c0_i32_0 = arith.constant 0 : i32
    %c0_i32_1 = arith.constant 0 : i32
    return %c0_i32, %c0_i32_0 : i32, i32
  }
  func.func @transform_4(%arg0: i32) -> (i32, i32, i32) {
    %c0_i32 = arith.constant 0 : i32
    %c0_i32_0 = arith.constant 0 : i32
    %c0_i32_1 = arith.constant 0 : i32
    %c0_i32_2 = arith.constant 0 : i32
    return %c0_i32, %c0_i32_0, %c0_i32_1 : i32, i32, i32
  }
  func.func @transform_5(%arg0: i32) -> (i32, i32) {
    %c0_i32 = arith.constant 0 : i32
    %c0_i32_0 = arith.constant 0 : i32
    %c0_i32_1 = arith.constant 0 : i32
    return %c0_i32, %c0_i32_0 : i32, i32
  }
  func.func @transform_6(%arg0: i32) -> (i32, i32, i32, i32) {
    %c0_i32 = arith.constant 0 : i32
    %c0_i32_0 = arith.constant 0 : i32
    %c0_i32_1 = arith.constant 0 : i32
    %c0_i32_2 = arith.constant 0 : i32
    return %arg0, %c0_i32, %c0_i32_0, %c0_i32_1 : i32, i32, i32, i32
  }
}

module attributes {stable_mosaic.version = 11 : i64} {
  func.func @freblock_kernel(%arg0: i32, %arg1: i32, %arg2: memref<1x2x144xf32, #tpu.memory_space<vmem>>, %arg3: memref<1x2x144xf32, #tpu.memory_space<vmem>>, %arg4: memref<2x2xf32, #tpu.memory_space<vmem>>, %arg5: memref<2x1xf32, #tpu.memory_space<vmem>>, %arg6: memref<2x2xf32, #tpu.memory_space<vmem>>, %arg7: memref<2x1xf32, #tpu.memory_space<vmem>>, %arg8: memref<2x2xf32, #tpu.memory_space<vmem>>, %arg9: memref<2x1xf32, #tpu.memory_space<vmem>>, %arg10: memref<2x2xf32, #tpu.memory_space<vmem>>, %arg11: memref<2x1xf32, #tpu.memory_space<vmem>>, %arg12: memref<1x2x144xf32, #tpu.memory_space<vmem>>, %arg13: memref<1x2x144xf32, #tpu.memory_space<vmem>>) attributes {dimension_semantics = [#tpu.dimension_semantics<parallel>, #tpu.dimension_semantics<parallel>], iteration_bounds = array<i64: 2, 1>, scalar_prefetch = 0 : i64, scratch_operands = 0 : i64, tpu.core_type = #tpu.core_type<tc>, window_params = [{transform_indices = @transform_0, window_bounds = array<i64: 1, 2, 144>}, {transform_indices = @transform_1, window_bounds = array<i64: 1, 2, 144>}, {pipeline_mode = #tpu.pipeline_mode<synchronous>, transform_indices = @transform_2, window_bounds = array<i64: 2, 2>}, {pipeline_mode = #tpu.pipeline_mode<synchronous>, transform_indices = @transform_3, window_bounds = array<i64: 2, 1>}, {pipeline_mode = #tpu.pipeline_mode<synchronous>, transform_indices = @transform_4, window_bounds = array<i64: 2, 2>}, {pipeline_mode = #tpu.pipeline_mode<synchronous>, transform_indices = @transform_5, window_bounds = array<i64: 2, 1>}, {pipeline_mode = #tpu.pipeline_mode<synchronous>, transform_indices = @transform_6, window_bounds = array<i64: 2, 2>}, {pipeline_mode = #tpu.pipeline_mode<synchronous>, transform_indices = @transform_7, window_bounds = array<i64: 2, 1>}, {pipeline_mode = #tpu.pipeline_mode<synchronous>, transform_indices = @transform_8, window_bounds = array<i64: 2, 2>}, {pipeline_mode = #tpu.pipeline_mode<synchronous>, transform_indices = @transform_9, window_bounds = array<i64: 2, 1>}, {transform_indices = @transform_10, window_bounds = array<i64: 1, 2, 144>}, {transform_indices = @transform_11, window_bounds = array<i64: 1, 2, 144>}]} {
    %c0 = arith.constant 0 : index
    %c0_0 = arith.constant 0 : index
    %c0_1 = arith.constant 0 : index
    %0 = vector.load %arg2[%c0, %c0_0, %c0_1] : memref<1x2x144xf32, #tpu.memory_space<vmem>>, vector<1x2x144xf32>
    %1 = vector.shape_cast %0 : vector<1x2x144xf32> to vector<2x144xf32>
    %c0_2 = arith.constant 0 : index
    %c0_3 = arith.constant 0 : index
    %c0_4 = arith.constant 0 : index
    %2 = vector.load %arg3[%c0_2, %c0_3, %c0_4] : memref<1x2x144xf32, #tpu.memory_space<vmem>>, vector<1x2x144xf32>
    %3 = vector.shape_cast %2 : vector<1x2x144xf32> to vector<2x144xf32>
    %c0_5 = arith.constant 0 : index
    %c0_6 = arith.constant 0 : index
    %4 = vector.load %arg4[%c0_5, %c0_6] : memref<2x2xf32, #tpu.memory_space<vmem>>, vector<2x2xf32>
    %cst = arith.constant dense<0.000000e+00> : vector<2x144xf32>
    %5 = tpu.matmul %4, %1, %cst {dimension_numbers = #tpu.dot_dimension_numbers<[1], [0], [0], [1], [0, 0, 1, 1], [], []>} : vector<2x2xf32>, vector<2x144xf32>, vector<2x144xf32> -> vector<2x144xf32>
    %c0_7 = arith.constant 0 : index
    %c0_8 = arith.constant 0 : index
    %6 = vector.load %arg5[%c0_7, %c0_8] : memref<2x1xf32, #tpu.memory_space<vmem>>, vector<2x1xf32>
    %7 = vector.broadcast %6 : vector<2x1xf32> to vector<2x144xf32>
    %8 = arith.addf %5, %7 : vector<2x144xf32>
    %cst_9 = arith.constant 0.000000e+00 : f32
    %9 = vector.broadcast %cst_9 : f32 to vector<2x144xf32>
    %10 = arith.cmpf ogt, %8, %9 : vector<2x144xf32>
    %cst_10 = arith.constant 1.000000e-01 : f32
    %11 = vector.broadcast %cst_10 : f32 to vector<2x144xf32>
    %12 = arith.mulf %11, %8 : vector<2x144xf32>
    %13 = arith.select %10, %8, %12 : vector<2x144xi1>, vector<2x144xf32>
    %c0_11 = arith.constant 0 : index
    %c0_12 = arith.constant 0 : index
    %14 = vector.load %arg6[%c0_11, %c0_12] : memref<2x2xf32, #tpu.memory_space<vmem>>, vector<2x2xf32>
    %cst_13 = arith.constant dense<0.000000e+00> : vector<2x144xf32>
    %15 = tpu.matmul %14, %13, %cst_13 {dimension_numbers = #tpu.dot_dimension_numbers<[1], [0], [0], [1], [0, 0, 1, 1], [], []>} : vector<2x2xf32>, vector<2x144xf32>, vector<2x144xf32> -> vector<2x144xf32>
    %c0_14 = arith.constant 0 : index
    %c0_15 = arith.constant 0 : index
    %16 = vector.load %arg7[%c0_14, %c0_15] : memref<2x1xf32, #tpu.memory_space<vmem>>, vector<2x1xf32>
    %17 = vector.broadcast %16 : vector<2x1xf32> to vector<2x144xf32>
    %18 = arith.addf %15, %17 : vector<2x144xf32>
    %c0_16 = arith.constant 0 : index
    %c0_17 = arith.constant 0 : index
    %19 = vector.load %arg8[%c0_16, %c0_17] : memref<2x2xf32, #tpu.memory_space<vmem>>, vector<2x2xf32>
    %cst_18 = arith.constant dense<0.000000e+00> : vector<2x144xf32>
    %20 = tpu.matmul %19, %3, %cst_18 {dimension_numbers = #tpu.dot_dimension_numbers<[1], [0], [0], [1], [0, 0, 1, 1], [], []>} : vector<2x2xf32>, vector<2x144xf32>, vector<2x144xf32> -> vector<2x144xf32>
    %c0_19 = arith.constant 0 : index
    %c0_20 = arith.constant 0 : index
    %21 = vector.load %arg9[%c0_19, %c0_20] : memref<2x1xf32, #tpu.memory_space<vmem>>, vector<2x1xf32>
    %22 = vector.broadcast %21 : vector<2x1xf32> to vector<2x144xf32>
    %23 = arith.addf %20, %22 : vector<2x144xf32>
    %cst_21 = arith.constant 0.000000e+00 : f32
    %24 = vector.broadcast %cst_21 : f32 to vector<2x144xf32>
    %25 = arith.cmpf ogt, %23, %24 : vector<2x144xf32>
    %cst_22 = arith.constant 1.000000e-01 : f32
    %26 = vector.broadcast %cst_22 : f32 to vector<2x144xf32>
    %27 = arith.mulf %26, %23 : vector<2x144xf32>
    %28 = arith.select %25, %23, %27 : vector<2x144xi1>, vector<2x144xf32>
    %c0_23 = arith.constant 0 : index
    %c0_24 = arith.constant 0 : index
    %29 = vector.load %arg10[%c0_23, %c0_24] : memref<2x2xf32, #tpu.memory_space<vmem>>, vector<2x2xf32>
    %cst_25 = arith.constant dense<0.000000e+00> : vector<2x144xf32>
    %30 = tpu.matmul %29, %28, %cst_25 {dimension_numbers = #tpu.dot_dimension_numbers<[1], [0], [0], [1], [0, 0, 1, 1], [], []>} : vector<2x2xf32>, vector<2x144xf32>, vector<2x144xf32> -> vector<2x144xf32>
    %c0_26 = arith.constant 0 : index
    %c0_27 = arith.constant 0 : index
    %31 = vector.load %arg11[%c0_26, %c0_27] : memref<2x1xf32, #tpu.memory_space<vmem>>, vector<2x1xf32>
    %32 = vector.broadcast %31 : vector<2x1xf32> to vector<2x144xf32>
    %33 = arith.addf %30, %32 : vector<2x144xf32>
    %34 = math.cos %33 : vector<2x144xf32>
    %35 = arith.mulf %18, %34 : vector<2x144xf32>
    %c0_28 = arith.constant 0 : index
    %c0_29 = arith.constant 0 : index
    %c0_30 = arith.constant 0 : index
    %36 = vector.load %arg12[%c0_28, %c0_29, %c0_30] : memref<1x2x144xf32, #tpu.memory_space<vmem>>, vector<1x2x144xf32>
    %37 = vector.shape_cast %36 : vector<1x2x144xf32> to vector<2x144xf32>
    %38 = vector.shape_cast %35 : vector<2x144xf32> to vector<1x2x144xf32>
    tpu.vector_store %arg12[%c0_28, %c0_29, %c0_30], %38 {strides = array<i32>} : memref<1x2x144xf32, #tpu.memory_space<vmem>>, vector<1x2x144xf32>,
    %39 = math.sin %33 : vector<2x144xf32>
    %40 = arith.mulf %18, %39 : vector<2x144xf32>
    %c0_31 = arith.constant 0 : index
    %c0_32 = arith.constant 0 : index
    %c0_33 = arith.constant 0 : index
    %41 = vector.load %arg13[%c0_31, %c0_32, %c0_33] : memref<1x2x144xf32, #tpu.memory_space<vmem>>, vector<1x2x144xf32>
    %42 = vector.shape_cast %41 : vector<1x2x144xf32> to vector<2x144xf32>
    %43 = vector.shape_cast %40 : vector<2x144xf32> to vector<1x2x144xf32>
    tpu.vector_store %arg13[%c0_31, %c0_32, %c0_33], %43 {strides = array<i32>} : memref<1x2x144xf32, #tpu.memory_space<vmem>>, vector<1x2x144xf32>,
    return
  }
  func.func @transform_0(%arg0: i32, %arg1: i32) -> (i32, i32, i32) {
    %c0_i32 = arith.constant 0 : i32
    %c0_i32_0 = arith.constant 0 : i32
    return %arg0, %c0_i32, %arg1 : i32, i32, i32
  }
  func.func @transform_1(%arg0: i32, %arg1: i32) -> (i32, i32, i32) {
    %c0_i32 = arith.constant 0 : i32
    %c0_i32_0 = arith.constant 0 : i32
    return %arg0, %c0_i32, %arg1 : i32, i32, i32
  }
  func.func @transform_2(%arg0: i32, %arg1: i32) -> (i32, i32) {
    %c0_i32 = arith.constant 0 : i32
    %c0_i32_0 = arith.constant 0 : i32
    %c0_i32_1 = arith.constant 0 : i32
    return %c0_i32, %c0_i32_0 : i32, i32
  }
  func.func @transform_3(%arg0: i32, %arg1: i32) -> (i32, i32) {
    %c0_i32 = arith.constant 0 : i32
    %c0_i32_0 = arith.constant 0 : i32
    %c0_i32_1 = arith.constant 0 : i32
    return %c0_i32, %c0_i32_0 : i32, i32
  }
  func.func @transform_4(%arg0: i32, %arg1: i32) -> (i32, i32) {
    %c0_i32 = arith.constant 0 : i32
    %c0_i32_0 = arith.constant 0 : i32
    %c0_i32_1 = arith.constant 0 : i32
    return %c0_i32, %c0_i32_0 : i32, i32
  }
  func.func @transform_5(%arg0: i32, %arg1: i32) -> (i32, i32) {
    %c0_i32 = arith.constant 0 : i32
    %c0_i32_0 = arith.constant 0 : i32
    %c0_i32_1 = arith.constant 0 : i32
    return %c0_i32, %c0_i32_0 : i32, i32
  }
  func.func @transform_6(%arg0: i32, %arg1: i32) -> (i32, i32) {
    %c0_i32 = arith.constant 0 : i32
    %c0_i32_0 = arith.constant 0 : i32
    %c0_i32_1 = arith.constant 0 : i32
    return %c0_i32, %c0_i32_0 : i32, i32
  }
  func.func @transform_7(%arg0: i32, %arg1: i32) -> (i32, i32) {
    %c0_i32 = arith.constant 0 : i32
    %c0_i32_0 = arith.constant 0 : i32
    %c0_i32_1 = arith.constant 0 : i32
    return %c0_i32, %c0_i32_0 : i32, i32
  }
  func.func @transform_8(%arg0: i32, %arg1: i32) -> (i32, i32) {
    %c0_i32 = arith.constant 0 : i32
    %c0_i32_0 = arith.constant 0 : i32
    %c0_i32_1 = arith.constant 0 : i32
    return %c0_i32, %c0_i32_0 : i32, i32
  }
  func.func @transform_9(%arg0: i32, %arg1: i32) -> (i32, i32) {
    %c0_i32 = arith.constant 0 : i32
    %c0_i32_0 = arith.constant 0 : i32
    %c0_i32_1 = arith.constant 0 : i32
    return %c0_i32, %c0_i32_0 : i32, i32
  }
  func.func @transform_10(%arg0: i32, %arg1: i32) -> (i32, i32, i32) {
    %c0_i32 = arith.constant 0 : i32
    %c0_i32_0 = arith.constant 0 : i32
    return %arg0, %c0_i32, %arg1 : i32, i32, i32
  }
  func.func @transform_11(%arg0: i32, %arg1: i32) -> (i32, i32, i32) {
    %c0_i32 = arith.constant 0 : i32
    %c0_i32_0 = arith.constant 0 : i32
    return %arg0, %c0_i32, %arg1 : i32, i32, i32
  }
}

</mosaic_0001>

<llo_original>
// kernel: reverse.0
$region0: #{reverse.0}
  %s0 = inlined_call_operand.vmem [shape: f32[2,2,16,7], index: 0, kind: input, shape index: {}]
  %s1 = inlined_call_operand.vmem [shape: f32[2,2,16,7], index: 1, kind: output, shape index: {}]
  $region1: #{reverse.0} parent=0
    #allocation0 [shape = 'u8[32768]{0}', space=vmem, size = 0x8000, scoped, tag = 'operand span for operand 0']
    #allocation1 [shape = 'u8[16384]{0}', space=vmem, size = 0x4000, scoped, tag = 'operand span for operand 1']
    %s2 = scalar_lea.vmem [#allocation0], 8
    // Predicated region
    $region2: #{reverse.0} parent=1 // pred_check
      _
    $region3: #{reverse.0} parent=1 // pred_check_branch
      %4 = sbr.rel (0) target = $region5
    $region4: #{reverse.0} parent=1 // pred_region
      // Predicated region
      $region6: #{reverse.0} parent=4 // pred_check
        _
      $region7: #{reverse.0} parent=4 // pred_check_branch
        %6 = sbr.rel (0) target = $region9
      $region8: #{reverse.0} parent=4 // pred_region
        // Predicated region
        $region21: #{reverse.0} parent=8 // pred_check
          _
        $region22: #{reverse.0} parent=8 // pred_check_branch
          %28 = sbr.rel (0) target = $region24
        $region23: #{reverse.0} parent=8 // pred_region
          loop: start=0, step=1, limit=1
          $region25: #{reverse.0} parent=23 // loop_pre_header
            _
          $region26: #{reverse.0} parent=23 // loop_header
            %s30 = sphi 0, %s34
            %p31 = scmp.ge.s32.totalorder %s30, 1
            %s35 = sphi %s0, %s0
            %s36 = sphi %s2, %s2
          $region27: #{reverse.0} parent=23 // loop_header_branch
            %33 = sbr.rel (%p31) target = $region31
          $region28: #{reverse.0} parent=23 // loop_body
            %v37 = vld [vmem:[%s35] sm:$0xff]
            %38 = vst [vmem:[%s36] sm:$0xff] %v37
            %v39 = vld [vmem:[%s35 + $0x8] sm:$0xff]
            %40 = vst [vmem:[%s36 + $0x10] sm:$0xff] %v39
            %v41 = vld [vmem:[%s35 + $0x10] sm:$0xff]
            %42 = vst [vmem:[%s36 + $0x20] sm:$0xff] %v41
            %v43 = vld [vmem:[%s35 + $0x18] sm:$0xff]
            %44 = vst [vmem:[%s36 + $0x30] sm:$0xff] %v43
          $region29: #{reverse.0} parent=23 // loop_footer
            %s34 = sadd.s32 1, %s30
          $region30: #{reverse.0} parent=23 // loop_footer_branch
            %29 = sbr.rel target = $region26
          $region31: #{reverse.0} parent=23 // loop_exit
            _
        $region24: #{reverse.0} parent=8 // pred_fallthru
          _
        // Predicated region
        $region32: #{reverse.0} parent=8 // pred_check
          _
        $region33: #{reverse.0} parent=8 // pred_check_branch
          %46 = sbr.rel target = $region35
        $region34: #{reverse.0} parent=8 // pred_region
          _
        $region35: #{reverse.0} parent=8 // pred_fallthru
          _
      $region9: #{reverse.0} parent=4 // pred_fallthru
        _
      // Predicated region
      $region10: #{reverse.0} parent=4 // pred_check
        _
      $region11: #{reverse.0} parent=4 // pred_check_branch
        %8 = sbr.rel target = $region13
      $region12: #{reverse.0} parent=4 // pred_region
        %s10 = ssub.s32 256, 1
        loop: start=0, step=1, limit=1
        $region14: #{reverse.0} parent=12 // loop_pre_header
          _
        $region15: #{reverse.0} parent=12 // loop_header
          %s12 = sphi 0, %s16
          %p13 = scmp.ge.s32.totalorder %s12, 1
          %s17 = sphi %s0, %s0
          %s18 = sphi %s2, %s2
        $region16: #{reverse.0} parent=12 // loop_header_branch
          %15 = sbr.rel (%p13) target = $region20
        $region17: #{reverse.0} parent=12 // loop_body
          %v19 = vld [vmem:[%s17] sm:%s10]
          %20 = vst [vmem:[%s18] sm:%s10] %v19
          %v21 = vld [vmem:[%s17 + $0x8] sm:%s10]
          %22 = vst [vmem:[%s18 + $0x10] sm:%s10] %v21
          %v23 = vld [vmem:[%s17 + $0x10] sm:%s10]
          %24 = vst [vmem:[%s18 + $0x20] sm:%s10] %v23
          %v25 = vld [vmem:[%s17 + $0x18] sm:%s10]
          %26 = vst [vmem:[%s18 + $0x30] sm:%s10] %v25
        $region18: #{reverse.0} parent=12 // loop_footer
          %s16 = sadd.s32 1, %s12
        $region19: #{reverse.0} parent=12 // loop_footer_branch
          %11 = sbr.rel target = $region15
        $region20: #{reverse.0} parent=12 // loop_exit
          _
      $region13: #{reverse.0} parent=4 // pred_fallthru
        _
    $region5: #{reverse.0} parent=1 // pred_fallthru
      _
    %47 = vnop
    %s48 = scalar_lea.vmem [#allocation0], 7
    %v49 = vld [vmem:[%s48] ss:$-1 sm:$0xff]
    %v50 = vrot.slane %v49, 1
    %51 = vst [vmem:[#allocation1] sm:$0xff] %v50
    %s52 = scalar_lea.vmem [#allocation0], 8
    %s53 = scalar_lea.vmem %s52, 7 [#allocation0]
    %v54 = vld [vmem:[%s53] ss:$-1 sm:$0xff]
    %v55 = vrot.slane %v54, 1
    %v56 = vlaneseq
    %v57 = vshrl.u32 %v56, 7
    %vm58 = vcmp.lt.s32.totalorder %v57, 7
    %59 = vst.msk [vmem:[#allocation1] sm:$0xff] %vm58, %v55
    %s60 = scalar_lea.vmem [#allocation1], 8
    %s61 = scalar_lea.vmem [#allocation0], 16
    %s62 = scalar_lea.vmem %s61, 7 [#allocation0]
    %v63 = vld [vmem:[%s62] ss:$-1 sm:$0xff]
    %v64 = vrot.slane %v63, 1
    %65 = vst [vmem:[%s60] sm:$0xff] %v64
    %s66 = scalar_lea.vmem %s61, 8 [#allocation0]
    %s67 = scalar_lea.vmem %s66, 7 [#allocation0]
    %v68 = vld [vmem:[%s67] ss:$-1 sm:$0xff]
    %v69 = vrot.slane %v68, 1
    %v70 = vlaneseq
    %v71 = vshrl.u32 %v70, 7
    %vm72 = vcmp.lt.s32.totalorder %v71, 7
    %73 = vst.msk [vmem:[%s60] sm:$0xff] %vm72, %v69
    %s74 = scalar_lea.vmem [#allocation1], 16
    %s75 = scalar_lea.vmem [#allocation0], 32
    %s76 = scalar_lea.vmem %s75, 7 [#allocation0]
    %v77 = vld [vmem:[%s76] ss:$-1 sm:$0xff]
    %v78 = vrot.slane %v77, 1
    %79 = vst [vmem:[%s74] sm:$0xff] %v78
    %s80 = scalar_lea.vmem %s75, 8 [#allocation0]
    %s81 = scalar_lea.vmem %s80, 7 [#allocation0]
    %v82 = vld [vmem:[%s81] ss:$-1 sm:$0xff]
    %v83 = vrot.slane %v82, 1
    %v84 = vlaneseq
    %v85 = vshrl.u32 %v84, 7
    %vm86 = vcmp.lt.s32.totalorder %v85, 7
    %87 = vst.msk [vmem:[%s74] sm:$0xff] %vm86, %v83
    %s88 = scalar_lea.vmem [#allocation1], 24
    %s89 = scalar_lea.vmem [#allocation0], 48
    %s90 = scalar_lea.vmem %s89, 7 [#allocation0]
    %v91 = vld [vmem:[%s90] ss:$-1 sm:$0xff]
    %v92 = vrot.slane %v91, 1
    %93 = vst [vmem:[%s88] sm:$0xff] %v92
    %s94 = scalar_lea.vmem %s89, 8 [#allocation0]
    %s95 = scalar_lea.vmem %s94, 7 [#allocation0]
    %v96 = vld [vmem:[%s95] ss:$-1 sm:$0xff]
    %v97 = vrot.slane %v96, 1
    %v98 = vlaneseq
    %v99 = vshrl.u32 %v98, 7
    %vm100 = vcmp.lt.s32.totalorder %v99, 7
    %101 = vst.msk [vmem:[%s88] sm:$0xff] %vm100, %v97
    // Predicated region
    $region36: #{reverse.0} parent=1 // pred_check
      _
    $region37: #{reverse.0} parent=1 // pred_check_branch
      %103 = sbr.rel (0) target = $region39
    $region38: #{reverse.0} parent=1 // pred_region
      // Predicated region
      $region40: #{reverse.0} parent=38 // pred_check
        _
      $region41: #{reverse.0} parent=38 // pred_check_branch
        %105 = sbr.rel (0) target = $region43
      $region42: #{reverse.0} parent=38 // pred_region
        // Predicated region
        $region55: #{reverse.0} parent=42 // pred_check
          _
        $region56: #{reverse.0} parent=42 // pred_check_branch
          %127 = sbr.rel (0) target = $region58
        $region57: #{reverse.0} parent=42 // pred_region
          loop: start=0, step=1, limit=1
          $region59: #{reverse.0} parent=57 // loop_pre_header
            _
          $region60: #{reverse.0} parent=57 // loop_header
            %s129 = sphi 0, %s133
            %p130 = scmp.ge.s32.totalorder %s129, 1
            %s134 = sphi [#allocation1], [#allocation1]
            %s135 = sphi %s1, %s1
          $region61: #{reverse.0} parent=57 // loop_header_branch
            %132 = sbr.rel (%p130) target = $region65
          $region62: #{reverse.0} parent=57 // loop_body
            %v136 = vld [vmem:[%s134] sm:$0xff]
            %137 = vst [vmem:[%s135] sm:$0xff] %v136
            %v138 = vld [vmem:[%s134 + $0x8] sm:$0xff]
            %139 = vst [vmem:[%s135 + $0x8] sm:$0xff] %v138
            %v140 = vld [vmem:[%s134 + $0x10] sm:$0xff]
            %141 = vst [vmem:[%s135 + $0x10] sm:$0xff] %v140
            %v142 = vld [vmem:[%s134 + $0x18] sm:$0xff]
            %143 = vst [vmem:[%s135 + $0x18] sm:$0xff] %v142
          $region63: #{reverse.0} parent=57 // loop_footer
            %s133 = sadd.s32 1, %s129
          $region64: #{reverse.0} parent=57 // loop_footer_branch
            %128 = sbr.rel target = $region60
          $region65: #{reverse.0} parent=57 // loop_exit
            _
        $region58: #{reverse.0} parent=42 // pred_fallthru
          _
        // Predicated region
        $region66: #{reverse.0} parent=42 // pred_check
          _
        $region67: #{reverse.0} parent=42 // pred_check_branch
          %145 = sbr.rel target = $region69
        $region68: #{reverse.0} parent=42 // pred_region
          _
        $region69: #{reverse.0} parent=42 // pred_fallthru
          _
      $region43: #{reverse.0} parent=38 // pred_fallthru
        _
      // Predicated region
      $region44: #{reverse.0} parent=38 // pred_check
        _
      $region45: #{reverse.0} parent=38 // pred_check_branch
        %107 = sbr.rel target = $region47
      $region46: #{reverse.0} parent=38 // pred_region
        %s109 = ssub.s32 256, 1
        loop: start=0, step=1, limit=1
        $region48: #{reverse.0} parent=46 // loop_pre_header
          _
        $region49: #{reverse.0} parent=46 // loop_header
          %s111 = sphi 0, %s115
          %p112 = scmp.ge.s32.totalorder %s111, 1
          %s116 = sphi [#allocation1], [#allocation1]
          %s117 = sphi %s1, %s1
        $region50: #{reverse.0} parent=46 // loop_header_branch
          %114 = sbr.rel (%p112) target = $region54
        $region51: #{reverse.0} parent=46 // loop_body
          %v118 = vld [vmem:[%s116] sm:%s109]
          %119 = vst [vmem:[%s117] sm:%s109] %v118
          %v120 = vld [vmem:[%s116 + $0x8] sm:%s109]
          %121 = vst [vmem:[%s117 + $0x8] sm:%s109] %v120
          %v122 = vld [vmem:[%s116 + $0x10] sm:%s109]
          %123 = vst [vmem:[%s117 + $0x10] sm:%s109] %v122
          %v124 = vld [vmem:[%s116 + $0x18] sm:%s109]
          %125 = vst [vmem:[%s117 + $0x18] sm:%s109] %v124
        $region52: #{reverse.0} parent=46 // loop_footer
          %s115 = sadd.s32 1, %s111
        $region53: #{reverse.0} parent=46 // loop_footer_branch
          %110 = sbr.rel target = $region49
        $region54: #{reverse.0} parent=46 // loop_exit
          _
      $region47: #{reverse.0} parent=38 // pred_fallthru
        _
    $region39: #{reverse.0} parent=1 // pred_fallthru
      _
    %146 = vnop

// kernel: frb_forward.2
$region0: #{frb_forward.2}
  #allocation0 [shape = 'u32[]', space=smem, size = 0x4, offset = 0x4, fixed_abs, tag = 'smem constant byte address 0x4 - core index']
  #allocation1 [shape = 'u32[72,128]{1,0:T(1,128)}', space=vmem, size = 0x9000, scoped, tag = 'internal scratch']
  %s0 = inlined_call_operand.vmem [shape: f32[2,2,144], index: 0, kind: input, shape index: {}]
  %s1 = inlined_call_operand.vmem [shape: f32[2,2,144], index: 1, kind: input, shape index: {}]
  %s2 = inlined_call_operand.vmem [shape: f32[2,2], index: 2, kind: input, shape index: {}]
  %s3 = inlined_call_operand.vmem [shape: f32[2,1], index: 3, kind: input, shape index: {}]
  %s4 = inlined_call_operand.vmem [shape: f32[2,2], index: 4, kind: input, shape index: {}]
  %s5 = inlined_call_operand.vmem [shape: f32[2,1], index: 5, kind: input, shape index: {}]
  %s6 = inlined_call_operand.vmem [shape: f32[2,2], index: 6, kind: input, shape index: {}]
  %s7 = inlined_call_operand.vmem [shape: f32[2,1], index: 7, kind: input, shape index: {}]
  %s8 = inlined_call_operand.vmem [shape: f32[2,2], index: 8, kind: input, shape index: {}]
  %s9 = inlined_call_operand.vmem [shape: f32[2,1], index: 9, kind: input, shape index: {}]
  %s10 = inlined_call_operand.vmem [shape: f32[2,2,144], index: 10, kind: output, shape index: {0}]
  %s11 = inlined_call_operand.vmem [shape: f32[2,2,144], index: 11, kind: output, shape index: {1}]
  %12 = xla_tuple %s10, %s11
  %s13 = sld [smem:[#allocation0]]
  $region81: #{frb_forward.2} parent=0
    _
  %s15 = ssub.s32 1, %s13
  %s16 = scalar_select 0, %s15, %s13
  loop: start=0, step=1, limit=4
  $region2: #{frb_forward.2} parent=0 // loop_pre_header
    _
  $region3: #{frb_forward.2} parent=0 // loop_header
    %s18 = sphi 0, %s22
    %p19 = scmp.ge.s32.totalorder %s18, 4
    %s25 = sphi 0, %s37
    %s26 = sphi 0, %s33
    %s27 = sphi 0, %s25
    %s28 = sphi 0, %s26
    %s29 = sphi 0, %s27
    %s30 = sphi 0, %s28
    %s42 = sphi 0, %s44
    %s45 = sphi 0, %s42
    %s46 = sphi 0, %s45
    %s62 = sphi 0, %s46
    %s70 = sphi 0, %s72
    %s73 = sphi 0, %s70
    %s74 = sphi 0, %s73
    %s90 = sphi 0, %s74
    %s94 = sphi 0, %s94
    %s96 = sphi 0, %s94
    %s97 = sphi 0, %s96
    %s111 = sphi 0, %s97
    %s115 = sphi 0, %s115
    %s117 = sphi 0, %s115
    %s118 = sphi 0, %s117
    %s132 = sphi 0, %s118
    %s136 = sphi 0, %s136
    %s138 = sphi 0, %s136
    %s139 = sphi 0, %s138
    %s153 = sphi 0, %s139
    %s157 = sphi 0, %s157
    %s159 = sphi 0, %s157
    %s160 = sphi 0, %s159
    %s174 = sphi 0, %s160
    %s178 = sphi 0, %s178
    %s180 = sphi 0, %s178
    %s181 = sphi 0, %s180
    %s195 = sphi 0, %s181
    %s199 = sphi 0, %s199
    %s201 = sphi 0, %s199
    %s202 = sphi 0, %s201
    %s216 = sphi 0, %s202
    %s220 = sphi 0, %s220
    %s222 = sphi 0, %s220
    %s223 = sphi 0, %s222
    %s237 = sphi 0, %s223
    %s241 = sphi 0, %s241
    %s243 = sphi 0, %s241
    %s244 = sphi 0, %s243
    %s258 = sphi 0, %s244
    %s266 = sphi 0, %s268
    %s269 = sphi 0, %s266
    %s270 = sphi 0, %s269
    %s286 = sphi 0, %s270
    %s294 = sphi 0, %s296
    %s297 = sphi 0, %s294
    %s298 = sphi 0, %s297
    %s314 = sphi 0, %s298
  $region4: #{frb_forward.2} parent=0 // loop_header_branch
    %21 = sbr.rel (%p19) target = $region8
  $region5: #{frb_forward.2} parent=0 // loop_body
    %s23 = ssub.s32 %s18, 1
    %s24 = ssub.s32 %s18, 2
    %s31 = sadd.s32 1, %s26
    %p32 = scmp.ge.s32.totalorder %s31, 1
    %s33 = scalar_select %p32, 0, %s31
    %s34 = sadd.s32 1, %s25
    %s35 = scalar_select %p32, %s34, %s25
    %p36 = scmp.ge.s32.totalorder %s35, 2
    %s37 = scalar_select %p36, 0, %s35
    %s38 = ssub.s32 %s25, %s37
    %s39 = ssub.s32 %s26, %s33
    %s40 = sor.u32 %s38, %s39
    %p41 = scmp.eq.s32.totalorder %s40, 0
    %s43 = sadd.s32 %s42, 1
    %s44 = scalar_select %p41, %s42, %s43
    %p47 = pneg %p41
    %p48 = scmp.eq.s32.totalorder %s18, 1
    %p49 = por %p47, %p48
    %p50 = scmp.ne.s32.totalorder %s42, %s45
    %p51 = scmp.eq.s32.totalorder %s18, 0
    %p52 = por %p50, %p51
    %p53 = scmp.ne.s32.totalorder %s42, %s45
    %p54 = scmp.eq.s32.totalorder %s23, 1
    %p55 = por %p53, %p54
    %p56 = scmp.ne.s32.totalorder %s45, %s46
    %p57 = scmp.eq.s32.totalorder %s23, 0
    %p58 = por %p56, %p57
    %p59 = scmp.ne.s32.totalorder %s45, %s46
    %p60 = scmp.eq.s32.totalorder %s24, 1
    %p61 = por %p59, %p60
    %p63 = scmp.ne.s32.totalorder %s46, %s62
    %p64 = scmp.eq.s32.totalorder %s24, 0
    %p65 = por %p63, %p64
    %s66 = ssub.s32 %s25, %s37
    %s67 = ssub.s32 %s26, %s33
    %s68 = sor.u32 %s66, %s67
    %p69 = scmp.eq.s32.totalorder %s68, 0
    %s71 = sadd.s32 %s70, 1
    %s72 = scalar_select %p69, %s70, %s71
    %p75 = pneg %p69
    %p76 = scmp.eq.s32.totalorder %s18, 1
    %p77 = por %p75, %p76
    %p78 = scmp.ne.s32.totalorder %s70, %s73
    %p79 = scmp.eq.s32.totalorder %s18, 0
    %p80 = por %p78, %p79
    %p81 = scmp.ne.s32.totalorder %s70, %s73
    %p82 = scmp.eq.s32.totalorder %s23, 1
    %p83 = por %p81, %p82
    %p84 = scmp.ne.s32.totalorder %s73, %s74
    %p85 = scmp.eq.s32.totalorder %s23, 0
    %p86 = por %p84, %p85
    %p87 = scmp.ne.s32.totalorder %s73, %s74
    %p88 = scmp.eq.s32.totalorder %s24, 1
    %p89 = por %p87, %p88
    %p91 = scmp.ne.s32.totalorder %s74, %s90
    %p92 = scmp.eq.s32.totalorder %s24, 0
    %p93 = por %p91, %p92
    %s95 = sadd.s32 %s94, 1
    %p98 = scmp.eq.s32.totalorder %s18, 1
    %p99 = scmp.ne.s32.totalorder %s94, %s96
    %p100 = scmp.eq.s32.totalorder %s18, 0
    %p101 = por %p99, %p100
    %p102 = scmp.ne.s32.totalorder %s94, %s96
    %p103 = scmp.eq.s32.totalorder %s23, 1
    %p104 = por %p102, %p103
    %p105 = scmp.ne.s32.totalorder %s96, %s97
    %p106 = scmp.eq.s32.totalorder %s23, 0
    %p107 = por %p105, %p106
    %p108 = scmp.ne.s32.totalorder %s96, %s97
    %p109 = scmp.eq.s32.totalorder %s24, 1
    %p110 = por %p108, %p109
    %p112 = scmp.ne.s32.totalorder %s97, %s111
    %p113 = scmp.eq.s32.totalorder %s24, 0
    %p114 = por %p112, %p113
    %s116 = sadd.s32 %s115, 1
    %p119 = scmp.eq.s32.totalorder %s18, 1
    %p120 = scmp.ne.s32.totalorder %s115, %s117
    %p121 = scmp.eq.s32.totalorder %s18, 0
    %p122 = por %p120, %p121
    %p123 = scmp.ne.s32.totalorder %s115, %s117
    %p124 = scmp.eq.s32.totalorder %s23, 1
    %p125 = por %p123, %p124
    %p126 = scmp.ne.s32.totalorder %s117, %s118
    %p127 = scmp.eq.s32.totalorder %s23, 0
    %p128 = por %p126, %p127
    %p129 = scmp.ne.s32.totalorder %s117, %s118
    %p130 = scmp.eq.s32.totalorder %s24, 1
    %p131 = por %p129, %p130
    %p133 = scmp.ne.s32.totalorder %s118, %s132
    %p134 = scmp.eq.s32.totalorder %s24, 0
    %p135 = por %p133, %p134
    %s137 = sadd.s32 %s136, 1
    %p140 = scmp.eq.s32.totalorder %s18, 1
    %p141 = scmp.ne.s32.totalorder %s136, %s138
    %p142 = scmp.eq.s32.totalorder %s18, 0
    %p143 = por %p141, %p142
    %p144 = scmp.ne.s32.totalorder %s136, %s138
    %p145 = scmp.eq.s32.totalorder %s23, 1
    %p146 = por %p144, %p145
    %p147 = scmp.ne.s32.totalorder %s138, %s139
    %p148 = scmp.eq.s32.totalorder %s23, 0
    %p149 = por %p147, %p148
    %p150 = scmp.ne.s32.totalorder %s138, %s139
    %p151 = scmp.eq.s32.totalorder %s24, 1
    %p152 = por %p150, %p151
    %p154 = scmp.ne.s32.totalorder %s139, %s153
    %p155 = scmp.eq.s32.totalorder %s24, 0
    %p156 = por %p154, %p155
    %s158 = sadd.s32 %s157, 1
    %p161 = scmp.eq.s32.totalorder %s18, 1
    %p162 = scmp.ne.s32.totalorder %s157, %s159
    %p163 = scmp.eq.s32.totalorder %s18, 0
    %p164 = por %p162, %p163
    %p165 = scmp.ne.s32.totalorder %s157, %s159
    %p166 = scmp.eq.s32.totalorder %s23, 1
    %p167 = por %p165, %p166
    %p168 = scmp.ne.s32.totalorder %s159, %s160
    %p169 = scmp.eq.s32.totalorder %s23, 0
    %p170 = por %p168, %p169
    %p171 = scmp.ne.s32.totalorder %s159, %s160
    %p172 = scmp.eq.s32.totalorder %s24, 1
    %p173 = por %p171, %p172
    %p175 = scmp.ne.s32.totalorder %s160, %s174
    %p176 = scmp.eq.s32.totalorder %s24, 0
    %p177 = por %p175, %p176
    %s179 = sadd.s32 %s178, 1
    %p182 = scmp.eq.s32.totalorder %s18, 1
    %p183 = scmp.ne.s32.totalorder %s178, %s180
    %p184 = scmp.eq.s32.totalorder %s18, 0
    %p185 = por %p183, %p184
    %p186 = scmp.ne.s32.totalorder %s178, %s180
    %p187 = scmp.eq.s32.totalorder %s23, 1
    %p188 = por %p186, %p187
    %p189 = scmp.ne.s32.totalorder %s180, %s181
    %p190 = scmp.eq.s32.totalorder %s23, 0
    %p191 = por %p189, %p190
    %p192 = scmp.ne.s32.totalorder %s180, %s181
    %p193 = scmp.eq.s32.totalorder %s24, 1
    %p194 = por %p192, %p193
    %p196 = scmp.ne.s32.totalorder %s181, %s195
    %p197 = scmp.eq.s32.totalorder %s24, 0
    %p198 = por %p196, %p197
    %s200 = sadd.s32 %s199, 1
    %p203 = scmp.eq.s32.totalorder %s18, 1
    %p204 = scmp.ne.s32.totalorder %s199, %s201
    %p205 = scmp.eq.s32.totalorder %s18, 0
    %p206 = por %p204, %p205
    %p207 = scmp.ne.s32.totalorder %s199, %s201
    %p208 = scmp.eq.s32.totalorder %s23, 1
    %p209 = por %p207, %p208
    %p210 = scmp.ne.s32.totalorder %s201, %s202
    %p211 = scmp.eq.s32.totalorder %s23, 0
    %p212 = por %p210, %p211
    %p213 = scmp.ne.s32.totalorder %s201, %s202
    %p214 = scmp.eq.s32.totalorder %s24, 1
    %p215 = por %p213, %p214
    %p217 = scmp.ne.s32.totalorder %s202, %s216
    %p218 = scmp.eq.s32.totalorder %s24, 0
    %p219 = por %p217, %p218
    %s221 = sadd.s32 %s220, 1
    %p224 = scmp.eq.s32.totalorder %s18, 1
    %p225 = scmp.ne.s32.totalorder %s220, %s222
    %p226 = scmp.eq.s32.totalorder %s18, 0
    %p227 = por %p225, %p226
    %p228 = scmp.ne.s32.totalorder %s220, %s222
    %p229 = scmp.eq.s32.totalorder %s23, 1
    %p230 = por %p228, %p229
    %p231 = scmp.ne.s32.totalorder %s222, %s223
    %p232 = scmp.eq.s32.totalorder %s23, 0
    %p233 = por %p231, %p232
    %p234 = scmp.ne.s32.totalorder %s222, %s223
    %p235 = scmp.eq.s32.totalorder %s24, 1
    %p236 = por %p234, %p235
    %p238 = scmp.ne.s32.totalorder %s223, %s237
    %p239 = scmp.eq.s32.totalorder %s24, 0
    %p240 = por %p238, %p239
    %s242 = sadd.s32 %s241, 1
    %p245 = scmp.eq.s32.totalorder %s18, 1
    %p246 = scmp.ne.s32.totalorder %s241, %s243
    %p247 = scmp.eq.s32.totalorder %s18, 0
    %p248 = por %p246, %p247
    %p249 = scmp.ne.s32.totalorder %s241, %s243
    %p250 = scmp.eq.s32.totalorder %s23, 1
    %p251 = por %p249, %p250
    %p252 = scmp.ne.s32.totalorder %s243, %s244
    %p253 = scmp.eq.s32.totalorder %s23, 0
    %p254 = por %p252, %p253
    %p255 = scmp.ne.s32.totalorder %s243, %s244
    %p256 = scmp.eq.s32.totalorder %s24, 1
    %p257 = por %p255, %p256
    %p259 = scmp.ne.s32.totalorder %s244, %s258
    %p260 = scmp.eq.s32.totalorder %s24, 0
    %p261 = por %p259, %p260
    %s262 = ssub.s32 %s25, %s37
    %s263 = ssub.s32 %s26, %s33
    %s264 = sor.u32 %s262, %s263
    %p265 = scmp.eq.s32.totalorder %s264, 0
    %s267 = sadd.s32 %s266, 1
    %s268 = scalar_select %p265, %s266, %s267
    %p271 = pneg %p265
    %p272 = scmp.eq.s32.totalorder %s18, 1
    %p273 = por %p271, %p272
    %p274 = scmp.ne.s32.totalorder %s266, %s269
    %p275 = scmp.eq.s32.totalorder %s18, 0
    %p276 = por %p274, %p275
    %p277 = scmp.ne.s32.totalorder %s266, %s269
    %p278 = scmp.eq.s32.totalorder %s23, 1
    %p279 = por %p277, %p278
    %p280 = scmp.ne.s32.totalorder %s269, %s270
    %p281 = scmp.eq.s32.totalorder %s23, 0
    %p282 = por %p280, %p281
    %p283 = scmp.ne.s32.totalorder %s269, %s270
    %p284 = scmp.eq.s32.totalorder %s24, 1
    %p285 = por %p283, %p284
    %p287 = scmp.ne.s32.totalorder %s270, %s286
    %p288 = scmp.eq.s32.totalorder %s24, 0
    %p289 = por %p287, %p288
    %s290 = ssub.s32 %s25, %s37
    %s291 = ssub.s32 %s26, %s33
    %s292 = sor.u32 %s290, %s291
    %p293 = scmp.eq.s32.totalorder %s292, 0
    %s295 = sadd.s32 %s294, 1
    %s296 = scalar_select %p293, %s294, %s295
    %p299 = pneg %p293
    %p300 = scmp.eq.s32.totalorder %s18, 1
    %p301 = por %p299, %p300
    %p302 = scmp.ne.s32.totalorder %s294, %s297
    %p303 = scmp.eq.s32.totalorder %s18, 0
    %p304 = por %p302, %p303
    %p305 = scmp.ne.s32.totalorder %s294, %s297
    %p306 = scmp.eq.s32.totalorder %s23, 1
    %p307 = por %p305, %p306
    %p308 = scmp.ne.s32.totalorder %s297, %s298
    %p309 = scmp.eq.s32.totalorder %s23, 0
    %p310 = por %p308, %p309
    %p311 = scmp.ne.s32.totalorder %s297, %s298
    %p312 = scmp.eq.s32.totalorder %s24, 1
    %p313 = por %p311, %p312
    %p315 = scmp.ne.s32.totalorder %s298, %s314
    %p316 = scmp.eq.s32.totalorder %s24, 0
    %p317 = por %p315, %p316
    %p318 = scmp.le.s32.totalorder 1, %s18
    %p319 = scmp.lt.s32.totalorder %s18, 3
    %p320 = pnand %p318, %p319
    %p321 = pneg %p320
    // Predicated region
    $region9: #{frb_forward.2} parent=5 // pred_check
      _
    $region10: #{frb_forward.2} parent=5 // pred_check_branch
      %323 = sbr.rel (%p320) target = $region12
    $region11: #{frb_forward.2} parent=5 // pred_region
      %s324 = ssub.s32 %s18, 1
      // Predicated region
      $region13: #{frb_forward.2} parent=11 // pred_check
        %p325 = pneg %p107
      $region14: #{frb_forward.2} parent=11 // pred_check_branch
        %327 = sbr.rel (%p325) target = $region16
      $region15: #{frb_forward.2} parent=11 // pred_region
        _
      $region16: #{frb_forward.2} parent=11 // pred_fallthru
        _
      // Predicated region
      $region17: #{frb_forward.2} parent=11 // pred_check
        %p328 = pneg %p128
      $region18: #{frb_forward.2} parent=11 // pred_check_branch
        %330 = sbr.rel (%p328) target = $region20
      $region19: #{frb_forward.2} parent=11 // pred_region
        _
      $region20: #{frb_forward.2} parent=11 // pred_fallthru
        _
      // Predicated region
      $region21: #{frb_forward.2} parent=11 // pred_check
        %p331 = pneg %p149
      $region22: #{frb_forward.2} parent=11 // pred_check_branch
        %333 = sbr.rel (%p331) target = $region24
      $region23: #{frb_forward.2} parent=11 // pred_region
        _
      $region24: #{frb_forward.2} parent=11 // pred_fallthru
        _
      // Predicated region
      $region25: #{frb_forward.2} parent=11 // pred_check
        %p334 = pneg %p170
      $region26: #{frb_forward.2} parent=11 // pred_check_branch
        %336 = sbr.rel (%p334) target = $region28
      $region27: #{frb_forward.2} parent=11 // pred_region
        _
      $region28: #{frb_forward.2} parent=11 // pred_fallthru
        _
      // Predicated region
      $region29: #{frb_forward.2} parent=11 // pred_check
        %p337 = pneg %p191
      $region30: #{frb_forward.2} parent=11 // pred_check_branch
        %339 = sbr.rel (%p337) target = $region32
      $region31: #{frb_forward.2} parent=11 // pred_region
        _
      $region32: #{frb_forward.2} parent=11 // pred_fallthru
        _
      // Predicated region
      $region33: #{frb_forward.2} parent=11 // pred_check
        %p340 = pneg %p212
      $region34: #{frb_forward.2} parent=11 // pred_check_branch
        %342 = sbr.rel (%p340) target = $region36
      $region35: #{frb_forward.2} parent=11 // pred_region
        _
      $region36: #{frb_forward.2} parent=11 // pred_fallthru
        _
      // Predicated region
      $region37: #{frb_forward.2} parent=11 // pred_check
        %p343 = pneg %p233
      $region38: #{frb_forward.2} parent=11 // pred_check_branch
        %345 = sbr.rel (%p343) target = $region40
      $region39: #{frb_forward.2} parent=11 // pred_region
        _
      $region40: #{frb_forward.2} parent=11 // pred_fallthru
        _
      // Predicated region
      $region41: #{frb_forward.2} parent=11 // pred_check
        %p346 = pneg %p254
      $region42: #{frb_forward.2} parent=11 // pred_check_branch
        %348 = sbr.rel (%p346) target = $region44
      $region43: #{frb_forward.2} parent=11 // pred_region
        _
      $region44: #{frb_forward.2} parent=11 // pred_fallthru
        _
    $region12: #{frb_forward.2} parent=5 // pred_fallthru
      _
    %p349 = scmp.lt.s32.totalorder %s18, 2
    // Predicated region
    $region45: #{frb_forward.2} parent=5 // pred_check
      %p350 = pneg %p349
    $region46: #{frb_forward.2} parent=5 // pred_check_branch
      %352 = sbr.rel (%p350) target = $region48
    $region47: #{frb_forward.2} parent=5 // pred_region
      // Predicated region
      $region49: #{frb_forward.2} parent=47 // pred_check
        %p353 = pneg %p52
      $region50: #{frb_forward.2} parent=47 // pred_check_branch
        %355 = sbr.rel (%p353) target = $region52
      $region51: #{frb_forward.2} parent=47 // pred_region
        %s356 = smul.u32 2, %s26
        %p357 = scmp.lt.s32.totalorder %s25, 1
        %s358 = scalar_select %p357, %s25, 1
        %p359 = scmp.lt.s32.totalorder %s356, 1
        %s360 = scalar_select %p359, %s356, 1
        %s361 = smul.addr %s358, 2
        %s362 = sadd.s32 %s360, %s361
        %s363 = smul.addr %s362, 2
        %s364 = scalar_lea.vmem %s0, %s363
        %s365 = smul.u32 2, %s26
      $region52: #{frb_forward.2} parent=47 // pred_fallthru
        _
      // Predicated region
      $region53: #{frb_forward.2} parent=47 // pred_check
        %p366 = pneg %p80
      $region54: #{frb_forward.2} parent=47 // pred_check_branch
        %368 = sbr.rel (%p366) target = $region56
      $region55: #{frb_forward.2} parent=47 // pred_region
        %s369 = smul.u32 2, %s26
        %p370 = scmp.lt.s32.totalorder %s25, 1
        %s371 = scalar_select %p370, %s25, 1
        %p372 = scmp.lt.s32.totalorder %s369, 1
        %s373 = scalar_select %p372, %s369, 1
        %s374 = smul.addr %s371, 2
        %s375 = sadd.s32 %s373, %s374
        %s376 = smul.addr %s375, 2
        %s377 = scalar_lea.vmem %s1, %s376
        %s378 = smul.u32 2, %s26
      $region56: #{frb_forward.2} parent=47 // pred_fallthru
        _
    $region48: #{frb_forward.2} parent=5 // pred_fallthru
      _
    %p379 = scmp.le.s32.totalorder 1, %s18
    %p380 = scmp.lt.s32.totalorder %s18, 3
    %p381 = pnand %p379, %p380
    %p382 = pneg %p381
    // Predicated region
    $region57: #{frb_forward.2} parent=5 // pred_check
      _
    $region58: #{frb_forward.2} parent=5 // pred_check_branch
      %384 = sbr.rel (%p381) target = $region60
    $region59: #{frb_forward.2} parent=5 // pred_region
      %s385 = ssub.s32 %s18, 1
      %s386 = smul.u32 2, %s28
      %p387 = scmp.lt.s32.totalorder %s27, 1
      %s388 = scalar_select %p387, %s27, 1
      %p389 = scmp.lt.s32.totalorder %s386, 1
      %s390 = scalar_select %p389, %s386, 1
      %s391 = smul.addr %s388, 2
      %s392 = sadd.s32 %s390, %s391
      %s393 = smul.addr %s392, 2
      %s394 = scalar_lea.vmem %s0, %s393
      %p395 = pneg %p58
      %p396 = pneg %p55
      %s397 = smul.u32 2, %s28
      %p398 = scmp.lt.s32.totalorder %s27, 1
      %s399 = scalar_select %p398, %s27, 1
      %p400 = scmp.lt.s32.totalorder %s397, 1
      %s401 = scalar_select %p400, %s397, 1
      %s402 = smul.addr %s399, 2
      %s403 = sadd.s32 %s401, %s402
      %s404 = smul.addr %s403, 2
      %s405 = scalar_lea.vmem %s1, %s404
      %p406 = pneg %p86
      %p407 = pneg %p83
      %p408 = pneg %p107
      %p409 = pneg %p104
      %p410 = pneg %p128
      %p411 = pneg %p125
      %p412 = pneg %p149
      %p413 = pneg %p146
      %p414 = pneg %p170
      %p415 = pneg %p167
      %p416 = pneg %p191
      %p417 = pneg %p188
      %p418 = pneg %p212
      %p419 = pneg %p209
      %p420 = pneg %p233
      %p421 = pneg %p230
      %p422 = pneg %p254
      %p423 = pneg %p251
      %p424 = pneg %p282
      %p425 = pneg %p279
      %s426 = smul.u32 2, %s28
      %p427 = scmp.lt.s32.totalorder %s27, 1
      %s428 = scalar_select %p427, %s27, 1
      %p429 = scmp.lt.s32.totalorder %s426, 1
      %s430 = scalar_select %p429, %s426, 1
      %s431 = smul.addr %s428, 2
      %s432 = sadd.s32 %s430, %s431
      %s433 = smul.addr %s432, 2
      %s434 = scalar_lea.vmem %s10, %s433
      %p435 = pneg %p310
      %p436 = pneg %p307
      %s437 = smul.u32 2, %s28
      %p438 = scmp.lt.s32.totalorder %s27, 1
      %s439 = scalar_select %p438, %s27, 1
      %p440 = scmp.lt.s32.totalorder %s437, 1
      %s441 = scalar_select %p440, %s437, 1
      %s442 = smul.addr %s439, 2
      %s443 = sadd.s32 %s441, %s442
      %s444 = smul.addr %s443, 2
      %s445 = scalar_lea.vmem %s11, %s444
      %s446 = smul.u32 2, %s28
      %p447 = scmp.lt.s32.totalorder %s27, 1
      %s448 = scalar_select %p447, %s27, 1
      %p449 = scmp.lt.s32.totalorder %s446, 1
      %s450 = scalar_select %p449, %s446, 1
      %s451 = smul.addr %s448, 2
      %s452 = sadd.s32 %s450, %s451
      %s453 = smul.addr %s452, 2
      %s454 = scalar_lea.vmem %s0, %s453
      %s455 = smul.u32 2, %s28
      %s456 = smul.u32 2, %s28
      %p457 = scmp.lt.s32.totalorder %s27, 1
      %s458 = scalar_select %p457, %s27, 1
      %p459 = scmp.lt.s32.totalorder %s456, 1
      %s460 = scalar_select %p459, %s456, 1
      %s461 = smul.addr %s458, 2
      %s462 = sadd.s32 %s460, %s461
      %s463 = smul.addr %s462, 2
      %s464 = scalar_lea.vmem %s1, %s463
      %s465 = smul.u32 2, %s28
      %s466 = smul.u32 2, %s28
      %p467 = scmp.lt.s32.totalorder %s27, 1
      %s468 = scalar_select %p467, %s27, 1
      %p469 = scmp.lt.s32.totalorder %s466, 1
      %s470 = scalar_select %p469, %s466, 1
      %s471 = smul.addr %s468, 2
      %s472 = sadd.s32 %s470, %s471
      %s473 = smul.addr %s472, 2
      %s474 = scalar_lea.vmem %s10, %s473
      %s475 = smul.u32 2, %s28
      %s476 = smul.u32 2, %s28
      %p477 = scmp.lt.s32.totalorder %s27, 1
      %s478 = scalar_select %p477, %s27, 1
      %p479 = scmp.lt.s32.totalorder %s476, 1
      %s480 = scalar_select %p479, %s476, 1
      %s481 = smul.addr %s478, 2
      %s482 = sadd.s32 %s480, %s481
      %s483 = smul.addr %s482, 2
      %s484 = scalar_lea.vmem %s11, %s483
      %s485 = smul.u32 2, %s28
      %v486 = vld [vmem:[%s454] sm:$0xf]
      %v487 = vld [vmem:[%s464] sm:$0xf]
      %v488 = vld [vmem:[%s2] sm:$0x3]
      %v489 = vld [vmem:[%s3] sm:$0x3]
      %491 = vset.pattern.permute.xlu0 0
      %492 = vperm.xlu0 %491, %v489
      %v493 = vpop.permute.xlu0 %492
      %496 = vst [vmem:[#allocation1] ss:$4 sm:$0xff] %v486
      %v497 = vld.sshfl [vmem:[#allocation1] sm:$0xff pattern:$0x73625140]
      %v498 = vld.sshfl [vmem:[#allocation1 + $0x8] sm:$0xff pattern:$0x73625140]
      %vm499 = vcmask 15360
      %v501 = vsel %vm499, %v488, 0
      %vm503 = vcmask 1041408
      %v504 = vsel %vm503, %v497, 0
      %v506 = vsel %vm503, %v498, 0
      %508 = vmatpush.msra.mxu0 0.0
      %509 = vmatpush.msra.mxu0 0.0
      %510 = vmatpush.msra.mxu0 0.0
      %511 = vmatpush.msra.mxu0 0.0
      %512 = vmatpush.msra.mxu0 0.0
      %513 = vmatpush.msra.mxu0 0.0
      %514 = vmatpush.msra.mxu0 0.0
      %515 = vmatpush.msra.mxu0 0.0
      %516 = vmatpush.msra.mxu0 0.0
      %517 = vmatpush.msra.mxu0 0.0
      %518 = vmatpush.msra.mxu0 0.0
      %519 = vmatpush.msra.mxu0 0.0
      %520 = vmatpush.msra.mxu0 0.0
      %521 = vmatpush.msra.mxu0 0.0
      %522 = vmatpush.msra.mxu0 0.0
      %523 = vmatpush.msra.mxu0 %v504
      %524 = vmatmul.f32.gmra.mxu0 %v501
      %v525 = vpop.f32.mrf.mxu0
      %v526 = vadd.f32 %v493, %v525
      %527 = vdwg.mxu0
      %528 = vmatpush.msra.mxu0 0.0
      %529 = vmatpush.msra.mxu0 0.0
      %530 = vmatpush.msra.mxu0 0.0
      %531 = vmatpush.msra.mxu0 0.0
      %532 = vmatpush.msra.mxu0 0.0
      %533 = vmatpush.msra.mxu0 0.0
      %534 = vmatpush.msra.mxu0 0.0
      %535 = vmatpush.msra.mxu0 0.0
      %536 = vmatpush.msra.mxu0 0.0
      %537 = vmatpush.msra.mxu0 0.0
      %538 = vmatpush.msra.mxu0 0.0
      %539 = vmatpush.msra.mxu0 0.0
      %540 = vmatpush.msra.mxu0 0.0
      %541 = vmatpush.msra.mxu0 0.0
      %542 = vmatpush.msra.mxu0 0.0
      %543 = vmatpush.msra.mxu0 %v506
      %544 = vmatmul.f32.gmra.mxu0 %v501
      %v545 = vpop.f32.mrf.mxu0
      %v546 = vadd.f32 %v493, %v545
      %547 = vdwg.mxu0
      %vm548 = vcmp.gt.f32.partialorder %v526, 0.0
      %vm549 = vcmp.gt.f32.partialorder %v546, 0.0
      %v550 = vmul.f32 %v526, 0.1
      %v551 = vmul.f32 %v546, 0.1
      %v552 = vsel %vm548, %v526, %v550
      %v553 = vsel %vm549, %v546, %v551
      %v554 = vld [vmem:[%s4] sm:$0x3]
      %v555 = vld [vmem:[%s5] sm:$0x3]
      %557 = vset.pattern.permute.xlu0 0
      %558 = vperm.xlu0 %557, %v555
      %v559 = vpop.permute.xlu0 %558
      %v562 = vsel %vm499, %v554, 0
      %v565 = vsel %vm503, %v552, 0
      %v568 = vsel %vm503, %v553, 0
      %570 = vmatpush.msra.mxu0 0.0
      %571 = vmatpush.msra.mxu0 0.0
      %572 = vmatpush.msra.mxu0 0.0
      %573 = vmatpush.msra.mxu0 0.0
      %574 = vmatpush.msra.mxu0 0.0
      %575 = vmatpush.msra.mxu0 0.0
      %576 = vmatpush.msra.mxu0 0.0
      %577 = vmatpush.msra.mxu0 0.0
      %578 = vmatpush.msra.mxu0 0.0
      %579 = vmatpush.msra.mxu0 0.0
      %580 = vmatpush.msra.mxu0 0.0
      %581 = vmatpush.msra.mxu0 0.0
      %582 = vmatpush.msra.mxu0 0.0
      %583 = vmatpush.msra.mxu0 0.0
      %584 = vmatpush.msra.mxu0 0.0
      %585 = vmatpush.msra.mxu0 %v565
      %586 = vmatmul.f32.gmra.mxu0 %v562
      %v587 = vpop.f32.mrf.mxu0
      %v588 = vadd.f32 %v559, %v587
      %589 = vdwg.mxu0
      %590 = vmatpush.msra.mxu0 0.0
      %591 = vmatpush.msra.mxu0 0.0
      %592 = vmatpush.msra.mxu0 0.0
      %593 = vmatpush.msra.mxu0 0.0
      %594 = vmatpush.msra.mxu0 0.0
      %595 = vmatpush.msra.mxu0 0.0
      %596 = vmatpush.msra.mxu0 0.0
      %597 = vmatpush.msra.mxu0 0.0
      %598 = vmatpush.msra.mxu0 0.0
      %599 = vmatpush.msra.mxu0 0.0
      %600 = vmatpush.msra.mxu0 0.0
      %601 = vmatpush.msra.mxu0 0.0
      %602 = vmatpush.msra.mxu0 0.0
      %603 = vmatpush.msra.mxu0 0.0
      %604 = vmatpush.msra.mxu0 0.0
      %605 = vmatpush.msra.mxu0 %v568
      %606 = vmatmul.f32.gmra.mxu0 %v562
      %v607 = vpop.f32.mrf.mxu0
      %v608 = vadd.f32 %v559, %v607
      %609 = vdwg.mxu0
      %v610 = vld [vmem:[%s6] sm:$0x3]
      %v611 = vld [vmem:[%s7] sm:$0x3]
      %613 = vset.pattern.permute.xlu0 0
      %614 = vperm.xlu0 %613, %v611
      %v615 = vpop.permute.xlu0 %614
      %618 = vst [vmem:[#allocation1] ss:$4 sm:$0xff] %v487
      %v619 = vld.sshfl [vmem:[#allocation1] sm:$0xff pattern:$0x73625140]
      %v620 = vld.sshfl [vmem:[#allocation1 + $0x8] sm:$0xff pattern:$0x73625140]
      %v622 = vsel %vm499, %v610, 0
      %v624 = vsel %vm503, %v619, 0
      %v626 = vsel %vm503, %v620, 0
      %628 = vmatpush.msra.mxu0 0.0
      %629 = vmatpush.msra.mxu0 0.0
      %630 = vmatpush.msra.mxu0 0.0
      %631 = vmatpush.msra.mxu0 0.0
      %632 = vmatpush.msra.mxu0 0.0
      %633 = vmatpush.msra.mxu0 0.0
      %634 = vmatpush.msra.mxu0 0.0
      %635 = vmatpush.msra.mxu0 0.0
      %636 = vmatpush.msra.mxu0 0.0
      %637 = vmatpush.msra.mxu0 0.0
      %638 = vmatpush.msra.mxu0 0.0
      %639 = vmatpush.msra.mxu0 0.0
      %640 = vmatpush.msra.mxu0 0.0
      %641 = vmatpush.msra.mxu0 0.0
      %642 = vmatpush.msra.mxu0 0.0
      %643 = vmatpush.msra.mxu0 %v624
      %644 = vmatmul.f32.gmra.mxu0 %v622
      %v645 = vpop.f32.mrf.mxu0
      %v646 = vadd.f32 %v615, %v645
      %647 = vdwg.mxu0
      %648 = vmatpush.msra.mxu0 0.0
      %649 = vmatpush.msra.mxu0 0.0
      %650 = vmatpush.msra.mxu0 0.0
      %651 = vmatpush.msra.mxu0 0.0
      %652 = vmatpush.msra.mxu0 0.0
      %653 = vmatpush.msra.mxu0 0.0
      %654 = vmatpush.msra.mxu0 0.0
      %655 = vmatpush.msra.mxu0 0.0
      %656 = vmatpush.msra.mxu0 0.0
      %657 = vmatpush.msra.mxu0 0.0
      %658 = vmatpush.msra.mxu0 0.0
      %659 = vmatpush.msra.mxu0 0.0
      %660 = vmatpush.msra.mxu0 0.0
      %661 = vmatpush.msra.mxu0 0.0
      %662 = vmatpush.msra.mxu0 0.0
      %663 = vmatpush.msra.mxu0 %v626
      %664 = vmatmul.f32.gmra.mxu0 %v622
      %v665 = vpop.f32.mrf.mxu0
      %v666 = vadd.f32 %v615, %v665
      %667 = vdwg.mxu0
      %vm668 = vcmp.gt.f32.partialorder %v646, 0.0
      %vm669 = vcmp.gt.f32.partialorder %v666, 0.0
      %v670 = vmul.f32 %v646, 0.1
      %v671 = vmul.f32 %v666, 0.1
      %v672 = vsel %vm668, %v646, %v670
      %v673 = vsel %vm669, %v666, %v671
      %v674 = vld [vmem:[%s8] sm:$0x3]
      %v675 = vld [vmem:[%s9] sm:$0x3]
      %677 = vset.pattern.permute.xlu0 0
      %678 = vperm.xlu0 %677, %v675
      %v679 = vpop.permute.xlu0 %678
      %v682 = vsel %vm499, %v674, 0
      %v685 = vsel %vm503, %v672, 0
      %v688 = vsel %vm503, %v673, 0
      %690 = vmatpush.msra.mxu0 0.0
      %691 = vmatpush.msra.mxu0 0.0
      %692 = vmatpush.msra.mxu0 0.0
      %693 = vmatpush.msra.mxu0 0.0
      %694 = vmatpush.msra.mxu0 0.0
      %695 = vmatpush.msra.mxu0 0.0
      %696 = vmatpush.msra.mxu0 0.0
      %697 = vmatpush.msra.mxu0 0.0
      %698 = vmatpush.msra.mxu0 0.0
      %699 = vmatpush.msra.mxu0 0.0
      %700 = vmatpush.msra.mxu0 0.0
      %701 = vmatpush.msra.mxu0 0.0
      %702 = vmatpush.msra.mxu0 0.0
      %703 = vmatpush.msra.mxu0 0.0
      %704 = vmatpush.msra.mxu0 0.0
      %705 = vmatpush.msra.mxu0 %v685
      %706 = vmatmul.f32.gmra.mxu0 %v682
      %v707 = vpop.f32.mrf.mxu0
      %v708 = vadd.f32 %v679, %v707
      %709 = vdwg.mxu0
      %710 = vmatpush.msra.mxu0 0.0
      %711 = vmatpush.msra.mxu0 0.0
      %712 = vmatpush.msra.mxu0 0.0
      %713 = vmatpush.msra.mxu0 0.0
      %714 = vmatpush.msra.mxu0 0.0
      %715 = vmatpush.msra.mxu0 0.0
      %716 = vmatpush.msra.mxu0 0.0
      %717 = vmatpush.msra.mxu0 0.0
      %718 = vmatpush.msra.mxu0 0.0
      %719 = vmatpush.msra.mxu0 0.0
      %720 = vmatpush.msra.mxu0 0.0
      %721 = vmatpush.msra.mxu0 0.0
      %722 = vmatpush.msra.mxu0 0.0
      %723 = vmatpush.msra.mxu0 0.0
      %724 = vmatpush.msra.mxu0 0.0
      %725 = vmatpush.msra.mxu0 %v688
      %726 = vmatmul.f32.gmra.mxu0 %v682
      %v727 = vpop.f32.mrf.mxu0
      %v728 = vadd.f32 %v679, %v727
      %729 = vdwg.mxu0
      %v730 = vand.u32 2147483647, %v708
      %vm731 = vcmp.le.f32.partialorder %v730, 0.7853982
      %vm732 = vcmp.lt.s32.totalorder %v708, 0
      %v733 = vand.u32 %v708, 2139095040
      %v734 = vshrl.u32 %v733, 23
      %v735 = vsub.s32 %v734, 127
      %v736 = vand.u32 2147483647, %v708
      %v737 = vand.u32 %v736, 8388607
      %v738 = vor.u32 %v737, 8388608
      %v739 = vsub.s32 0, %v738
      %v740 = vadd.s32 %v735, 1
      %vm741 = vcmp.gt.s32.totalorder %v740, 0
      %v742 = vsel %vm741, %v740, 0
      %v743 = vshrl.u32 %v742, 5
      %v744 = vand.u32 %v742, 31
      %v745 = vsub.s32 32, %v744
      %v746 = vshrl.u32 683565275, %v745
      %v747 = vshll.u32 683565275, %v744
      %v748 = vshrl.u32 2475754826, %v745
      %v749 = vor.u32 %v747, %v748
      %v750 = vshll.u32 2475754826, %v744
      %v751 = vshrl.u32 2131351028, %v745
      %v752 = vor.u32 %v750, %v751
      %v753 = vshll.u32 2131351028, %v744
      %v754 = vshrl.u32 2102212464, %v745
      %v755 = vor.u32 %v753, %v754
      %v756 = vshll.u32 2102212464, %v744
      %v757 = vshrl.u32 920167782, %v745
      %v758 = vor.u32 %v756, %v757
      %v759 = vshll.u32 920167782, %v744
      %v760 = vshrl.u32 1326507024, %v745
      %v761 = vor.u32 %v759, %v760
      %vm762 = vcmp.lt.s32.totalorder %v743, 1
      %vm763 = vcmp.lt.s32.totalorder %v743, 2
      %vm764 = vcmp.lt.s32.totalorder %v743, 3
      %vm765 = vcmp.lt.s32.totalorder %v743, 4
      %v766 = vsel %vm762, %v746, %v749
      %v767 = vsel %vm765, %v755, 2102212464
      %v768 = vsel %vm764, %v752, %v767
      %v769 = vsel %vm763, %v766, %v768
      %v770 = vsel %vm762, %v749, %v752
      %v771 = vsel %vm765, %v758, 920167782
      %v772 = vsel %vm764, %v755, %v771
      %v773 = vsel %vm763, %v770, %v772
      %v774 = vsel %vm762, %v752, %v755
      %v775 = vsel %vm765, %v761, 1326507024
      %v776 = vsel %vm764, %v758, %v775
      %v777 = vsel %vm763, %v774, %v776
      %v778 = vshll.u32 %v738, 8
      %v779 = vand.u32 %v778, 65535
      %v780 = vshrl.u32 %v778, 16
      %v781 = vand.u32 %v777, 65535
      %v782 = vshrl.u32 %v777, 16
      %v783 = vmul.u32 %v779, %v781
      %v784 = vmul.u32 %v779, %v782
      %v785 = vmul.u32 %v780, %v781
      %v786 = vmul.u32 %v780, %v782
      %v787 = vshll.u32 %v784, 16
      %v788 = vshrl.u32 %v784, 16
      %v789 = vshll.u32 %v785, 16
      %v790 = vshrl.u32 %v785, 16
      %vm791 = vc.u32 %v783, %v787
      %v792 = vsel %vm791, 1, 0
      %v793 = vadd.s32 %v783, %v787
      %v794 = vadd.s32 %v786, %v792
      %vm795 = vc.u32 %v793, %v789
      %v796 = vsel %vm795, 1, 0
      %v797 = vadd.s32 %v793, %v789
      %v798 = vadd.s32 %v794, %v796
      %v799 = vadd.s32 %v798, %v788
      %v800 = vadd.s32 %v799, %v790
      %v801 = vand.u32 %v778, 65535
      %v802 = vshrl.u32 %v778, 16
      %v803 = vand.u32 %v773, 65535
      %v804 = vshrl.u32 %v773, 16
      %v805 = vmul.u32 %v801, %v803
      %v806 = vmul.u32 %v801, %v804
      %v807 = vmul.u32 %v802, %v803
      %v808 = vmul.u32 %v802, %v804
      %v809 = vshll.u32 %v806, 16
      %v810 = vshrl.u32 %v806, 16
      %v811 = vshll.u32 %v807, 16
      %v812 = vshrl.u32 %v807, 16
      %vm813 = vc.u32 %v805, %v809
      %v814 = vsel %vm813, 1, 0
      %v815 = vadd.s32 %v805, %v809
      %v816 = vadd.s32 %v808, %v814
      %vm817 = vc.u32 %v815, %v811
      %v818 = vsel %vm817, 1, 0
      %v819 = vadd.s32 %v815, %v811
      %v820 = vadd.s32 %v816, %v818
      %v821 = vadd.s32 %v820, %v810
      %v822 = vadd.s32 %v821, %v812
      %v823 = vmul.u32 %v778, %v769
      %v824 = vadd.s32 %v800, %v819
      %vm825 = vc.u32 %v800, %v819
      %v826 = vadd.s32 %v822, 1
      %v827 = vsel %vm825, %v826, %v822
      %v828 = vadd.s32 %v823, %v827
      %v829 = vadd.s32 %v828, 536870912
      %v830 = vshrl.u32 %v829, 30
      %v831 = vshll.u32 %v830, 30
      %v832 = vsub.s32 %v828, %v831
      %vm833 = vcmp.lt.s32.totalorder %v832, 0
      %v834 = vsub.s32 0, %v832
      %v835 = vsel %vm833, %v834, %v832
      %v836 = vclz %v835
      %v837 = vsub.s32 %v836, 2
      %vm838 = vcmp.gt.s32.totalorder 0, %v837
      %v839 = vsel %vm838, 0, %v837
      %v840 = vsub.s32 32, %v839
      %v841 = vshll.u32 %v832, %v839
      %v842 = vshrl.u32 %v824, %v840
      %v843 = vor.u32 %v841, %v842
      %v844 = vsub.s32 4294967266, %v839
      %v845 = vadd.s32 %v844, 127
      %v846 = vshll.u32 %v845, 23
      %v847 = vor.u32 4788187, %v846
      %v848 = vand.u32 2147483647, %v847
      %v850 = vcvt.s32.f32 %v843
      %v851 = vmul.f32 %v850, %v848
      %v852 = vxor.u32 %v851, 2147483648
      %v853 = vsel %vm732, %v852, %v851
      %v854 = vsub.s32 4, %v830
      %v855 = vsel %vm732, %v854, %v830
      %v856 = vsel %vm731, %v708, %v853
      %v857 = vsel %vm731, 0, %v855
      %v858 = vmul.f32 %v856, %v856
      %v859 = vmul.f32 %v858, -0.001358992
      %v860 = vadd.f32 %v859, 0.041655596
      %v861 = vmul.f32 %v858, %v860
      %v862 = vadd.f32 %v861, -0.4999988
      %v863 = vmul.f32 %v858, %v862
      %v864 = vadd.f32 1.0, %v863
      %v865 = vmul.f32 %v856, %v856
      %v866 = vmul.f32 %v865, -0.00019511016
      %v867 = vadd.f32 %v866, 0.008332121
      %v868 = vmul.f32 %v865, %v867
      %v869 = vadd.f32 %v868, -0.16666654
      %v870 = vmul.f32 %v865, %v869
      %v871 = vadd.f32 %v870, 1.0
      %v872 = vmul.f32 %v871, %v856
      %vm873 = vweird.f32 %v708
      %v874 = vand.u32 %v857, 3
      %vm875 = vcmp.lt.s32.totalorder %v874, 2
      %vm876 = vcmp.eq.s32.totalorder %v874, 0
      %v877 = vxor.u32 %v872, 2147483648
      %v878 = vsel %vm876, %v864, %v877
      %vm879 = vcmp.eq.s32.totalorder %v874, 2
      %v880 = vxor.u32 %v864, 2147483648
      %v881 = vsel %vm879, %v880, %v872
      %v882 = vsel %vm875, %v878, %v881
      %v883 = vsel %vm873, nan, %v882
      %v884 = vand.u32 2147483647, %v728
      %vm885 = vcmp.le.f32.partialorder %v884, 0.7853982
      %vm886 = vcmp.lt.s32.totalorder %v728, 0
      %v887 = vand.u32 %v728, 2139095040
      %v888 = vshrl.u32 %v887, 23
      %v889 = vsub.s32 %v888, 127
      %v890 = vand.u32 2147483647, %v728
      %v891 = vand.u32 %v890, 8388607
      %v892 = vor.u32 %v891, 8388608
      %v893 = vsub.s32 0, %v892
      %v894 = vadd.s32 %v889, 1
      %vm895 = vcmp.gt.s32.totalorder %v894, 0
      %v896 = vsel %vm895, %v894, 0
      %v897 = vshrl.u32 %v896, 5
      %v898 = vand.u32 %v896, 31
      %v899 = vsub.s32 32, %v898
      %v900 = vshrl.u32 683565275, %v899
      %v901 = vshll.u32 683565275, %v898
      %v902 = vshrl.u32 2475754826, %v899
      %v903 = vor.u32 %v901, %v902
      %v904 = vshll.u32 2475754826, %v898
      %v905 = vshrl.u32 2131351028, %v899
      %v906 = vor.u32 %v904, %v905
      %v907 = vshll.u32 2131351028, %v898
      %v908 = vshrl.u32 2102212464, %v899
      %v909 = vor.u32 %v907, %v908
      %v910 = vshll.u32 2102212464, %v898
      %v911 = vshrl.u32 920167782, %v899
      %v912 = vor.u32 %v910, %v911
      %v913 = vshll.u32 920167782, %v898
      %v914 = vshrl.u32 1326507024, %v899
      %v915 = vor.u32 %v913, %v914
      %vm916 = vcmp.lt.s32.totalorder %v897, 1
      %vm917 = vcmp.lt.s32.totalorder %v897, 2
      %vm918 = vcmp.lt.s32.totalorder %v897, 3
      %vm919 = vcmp.lt.s32.totalorder %v897, 4
      %v920 = vsel %vm916, %v900, %v903
      %v921 = vsel %vm919, %v909, 2102212464
      %v922 = vsel %vm918, %v906, %v921
      %v923 = vsel %vm917, %v920, %v922
      %v924 = vsel %vm916, %v903, %v906
      %v925 = vsel %vm919, %v912, 920167782
      %v926 = vsel %vm918, %v909, %v925
      %v927 = vsel %vm917, %v924, %v926
      %v928 = vsel %vm916, %v906, %v909
      %v929 = vsel %vm919, %v915, 1326507024
      %v930 = vsel %vm918, %v912, %v929
      %v931 = vsel %vm917, %v928, %v930
      %v932 = vshll.u32 %v892, 8
      %v933 = vand.u32 %v932, 65535
      %v934 = vshrl.u32 %v932, 16
      %v935 = vand.u32 %v931, 65535
      %v936 = vshrl.u32 %v931, 16
      %v937 = vmul.u32 %v933, %v935
      %v938 = vmul.u32 %v933, %v936
      %v939 = vmul.u32 %v934, %v935
      %v940 = vmul.u32 %v934, %v936
      %v941 = vshll.u32 %v938, 16
      %v942 = vshrl.u32 %v938, 16
      %v943 = vshll.u32 %v939, 16
      %v944 = vshrl.u32 %v939, 16
      %vm945 = vc.u32 %v937, %v941
      %v946 = vsel %vm945, 1, 0
      %v947 = vadd.s32 %v937, %v941
      %v948 = vadd.s32 %v940, %v946
      %vm949 = vc.u32 %v947, %v943
      %v950 = vsel %vm949, 1, 0
      %v951 = vadd.s32 %v947, %v943
      %v952 = vadd.s32 %v948, %v950
      %v953 = vadd.s32 %v952, %v942
      %v954 = vadd.s32 %v953, %v944
      %v955 = vand.u32 %v932, 65535
      %v956 = vshrl.u32 %v932, 16
      %v957 = vand.u32 %v927, 65535
      %v958 = vshrl.u32 %v927, 16
      %v959 = vmul.u32 %v955, %v957
      %v960 = vmul.u32 %v955, %v958
      %v961 = vmul.u32 %v956, %v957
      %v962 = vmul.u32 %v956, %v958
      %v963 = vshll.u32 %v960, 16
      %v964 = vshrl.u32 %v960, 16
      %v965 = vshll.u32 %v961, 16
      %v966 = vshrl.u32 %v961, 16
      %vm967 = vc.u32 %v959, %v963
      %v968 = vsel %vm967, 1, 0
      %v969 = vadd.s32 %v959, %v963
      %v970 = vadd.s32 %v962, %v968
      %vm971 = vc.u32 %v969, %v965
      %v972 = vsel %vm971, 1, 0
      %v973 = vadd.s32 %v969, %v965
      %v974 = vadd.s32 %v970, %v972
      %v975 = vadd.s32 %v974, %v964
      %v976 = vadd.s32 %v975, %v966
      %v977 = vmul.u32 %v932, %v923
      %v978 = vadd.s32 %v954, %v973
      %vm979 = vc.u32 %v954, %v973
      %v980 = vadd.s32 %v976, 1
      %v981 = vsel %vm979, %v980, %v976
      %v982 = vadd.s32 %v977, %v981
      %v983 = vadd.s32 %v982, 536870912
      %v984 = vshrl.u32 %v983, 30
      %v985 = vshll.u32 %v984, 30
      %v986 = vsub.s32 %v982, %v985
      %vm987 = vcmp.lt.s32.totalorder %v986, 0
      %v988 = vsub.s32 0, %v986
      %v989 = vsel %vm987, %v988, %v986
      %v990 = vclz %v989
      %v991 = vsub.s32 %v990, 2
      %vm992 = vcmp.gt.s32.totalorder 0, %v991
      %v993 = vsel %vm992, 0, %v991
      %v994 = vsub.s32 32, %v993
      %v995 = vshll.u32 %v986, %v993
      %v996 = vshrl.u32 %v978, %v994
      %v997 = vor.u32 %v995, %v996
      %v998 = vsub.s32 4294967266, %v993
      %v999 = vadd.s32 %v998, 127
      %v1000 = vshll.u32 %v999, 23
      %v1001 = vor.u32 4788187, %v1000
      %v1002 = vand.u32 2147483647, %v1001
      %v1004 = vcvt.s32.f32 %v997
      %v1005 = vmul.f32 %v1004, %v1002
      %v1006 = vxor.u32 %v1005, 2147483648
      %v1007 = vsel %vm886, %v1006, %v1005
      %v1008 = vsub.s32 4, %v984
      %v1009 = vsel %vm886, %v1008, %v984
      %v1010 = vsel %vm885, %v728, %v1007
      %v1011 = vsel %vm885, 0, %v1009
      %v1012 = vmul.f32 %v1010, %v1010
      %v1013 = vmul.f32 %v1012, -0.001358992
      %v1014 = vadd.f32 %v1013, 0.041655596
      %v1015 = vmul.f32 %v1012, %v1014
      %v1016 = vadd.f32 %v1015, -0.4999988
      %v1017 = vmul.f32 %v1012, %v1016
      %v1018 = vadd.f32 1.0, %v1017
      %v1019 = vmul.f32 %v1010, %v1010
      %v1020 = vmul.f32 %v1019, -0.00019511016
      %v1021 = vadd.f32 %v1020, 0.008332121
      %v1022 = vmul.f32 %v1019, %v1021
      %v1023 = vadd.f32 %v1022, -0.16666654
      %v1024 = vmul.f32 %v1019, %v1023
      %v1025 = vadd.f32 %v1024, 1.0
      %v1026 = vmul.f32 %v1025, %v1010
      %vm1027 = vweird.f32 %v728
      %v1028 = vand.u32 %v1011, 3
      %vm1029 = vcmp.lt.s32.totalorder %v1028, 2
      %vm1030 = vcmp.eq.s32.totalorder %v1028, 0
      %v1031 = vxor.u32 %v1026, 2147483648
      %v1032 = vsel %vm1030, %v1018, %v1031
      %vm1033 = vcmp.eq.s32.totalorder %v1028, 2
      %v1034 = vxor.u32 %v1018, 2147483648
      %v1035 = vsel %vm1033, %v1034, %v1026
      %v1036 = vsel %vm1029, %v1032, %v1035
      %v1037 = vsel %vm1027, nan, %v1036
      %v1038 = vmul.f32 %v588, %v883
      %v1039 = vmul.f32 %v608, %v1037
      %v1042 = vrot.slane %v1039, 6
      %v1043 = vsel %vm503, %v1038, %v1042
      %vm1045 = vcmask 125954
      %vm1046 = vmor %vm1045, %vm503
      %1047 = vst.msk [vmem:[%s474] sm:$0xf] %vm1046, %v1043
      %v1048 = vand.u32 2147483647, %v708
      %vm1049 = vcmp.le.f32.partialorder %v1048, 0.7853982
      %vm1050 = vcmp.lt.s32.totalorder %v708, 0
      %v1051 = vand.u32 %v708, 2139095040
      %v1052 = vshrl.u32 %v1051, 23
      %v1053 = vsub.s32 %v1052, 127
      %v1054 = vand.u32 2147483647, %v708
      %v1055 = vand.u32 %v1054, 8388607
      %v1056 = vor.u32 %v1055, 8388608
      %v1057 = vsub.s32 0, %v1056
      %v1058 = vadd.s32 %v1053, 1
      %vm1059 = vcmp.gt.s32.totalorder %v1058, 0
      %v1060 = vsel %vm1059, %v1058, 0
      %v1061 = vshrl.u32 %v1060, 5
      %v1062 = vand.u32 %v1060, 31
      %v1063 = vsub.s32 32, %v1062
      %v1064 = vshrl.u32 683565275, %v1063
      %v1065 = vshll.u32 683565275, %v1062
      %v1066 = vshrl.u32 2475754826, %v1063
      %v1067 = vor.u32 %v1065, %v1066
      %v1068 = vshll.u32 2475754826, %v1062
      %v1069 = vshrl.u32 2131351028, %v1063
      %v1070 = vor.u32 %v1068, %v1069
      %v1071 = vshll.u32 2131351028, %v1062
      %v1072 = vshrl.u32 2102212464, %v1063
      %v1073 = vor.u32 %v1071, %v1072
      %v1074 = vshll.u32 2102212464, %v1062
      %v1075 = vshrl.u32 920167782, %v1063
      %v1076 = vor.u32 %v1074, %v1075
      %v1077 = vshll.u32 920167782, %v1062
      %v1078 = vshrl.u32 1326507024, %v1063
      %v1079 = vor.u32 %v1077, %v1078
      %vm1080 = vcmp.lt.s32.totalorder %v1061, 1
      %vm1081 = vcmp.lt.s32.totalorder %v1061, 2
      %vm1082 = vcmp.lt.s32.totalorder %v1061, 3
      %vm1083 = vcmp.lt.s32.totalorder %v1061, 4
      %v1084 = vsel %vm1080, %v1064, %v1067
      %v1085 = vsel %vm1083, %v1073, 2102212464
      %v1086 = vsel %vm1082, %v1070, %v1085
      %v1087 = vsel %vm1081, %v1084, %v1086
      %v1088 = vsel %vm1080, %v1067, %v1070
      %v1089 = vsel %vm1083, %v1076, 920167782
      %v1090 = vsel %vm1082, %v1073, %v1089
      %v1091 = vsel %vm1081, %v1088, %v1090
      %v1092 = vsel %vm1080, %v1070, %v1073
      %v1093 = vsel %vm1083, %v1079, 1326507024
      %v1094 = vsel %vm1082, %v1076, %v1093
      %v1095 = vsel %vm1081, %v1092, %v1094
      %v1096 = vshll.u32 %v1056, 8
      %v1097 = vand.u32 %v1096, 65535
      %v1098 = vshrl.u32 %v1096, 16
      %v1099 = vand.u32 %v1095, 65535
      %v1100 = vshrl.u32 %v1095, 16
      %v1101 = vmul.u32 %v1097, %v1099
      %v1102 = vmul.u32 %v1097, %v1100
      %v1103 = vmul.u32 %v1098, %v1099
      %v1104 = vmul.u32 %v1098, %v1100
      %v1105 = vshll.u32 %v1102, 16
      %v1106 = vshrl.u32 %v1102, 16
      %v1107 = vshll.u32 %v1103, 16
      %v1108 = vshrl.u32 %v1103, 16
      %vm1109 = vc.u32 %v1101, %v1105
      %v1110 = vsel %vm1109, 1, 0
      %v1111 = vadd.s32 %v1101, %v1105
      %v1112 = vadd.s32 %v1104, %v1110
      %vm1113 = vc.u32 %v1111, %v1107
      %v1114 = vsel %vm1113, 1, 0
      %v1115 = vadd.s32 %v1111, %v1107
      %v1116 = vadd.s32 %v1112, %v1114
      %v1117 = vadd.s32 %v1116, %v1106
      %v1118 = vadd.s32 %v1117, %v1108
      %v1119 = vand.u32 %v1096, 65535
      %v1120 = vshrl.u32 %v1096, 16
      %v1121 = vand.u32 %v1091, 65535
      %v1122 = vshrl.u32 %v1091, 16
      %v1123 = vmul.u32 %v1119, %v1121
      %v1124 = vmul.u32 %v1119, %v1122
      %v1125 = vmul.u32 %v1120, %v1121
      %v1126 = vmul.u32 %v1120, %v1122
      %v1127 = vshll.u32 %v1124, 16
      %v1128 = vshrl.u32 %v1124, 16
      %v1129 = vshll.u32 %v1125, 16
      %v1130 = vshrl.u32 %v1125, 16
      %vm1131 = vc.u32 %v1123, %v1127
      %v1132 = vsel %vm1131, 1, 0
      %v1133 = vadd.s32 %v1123, %v1127
      %v1134 = vadd.s32 %v1126, %v1132
      %vm1135 = vc.u32 %v1133, %v1129
      %v1136 = vsel %vm1135, 1, 0
      %v1137 = vadd.s32 %v1133, %v1129
      %v1138 = vadd.s32 %v1134, %v1136
      %v1139 = vadd.s32 %v1138, %v1128
      %v1140 = vadd.s32 %v1139, %v1130
      %v1141 = vmul.u32 %v1096, %v1087
      %v1142 = vadd.s32 %v1118, %v1137
      %vm1143 = vc.u32 %v1118, %v1137
      %v1144 = vadd.s32 %v1140, 1
      %v1145 = vsel %vm1143, %v1144, %v1140
      %v1146 = vadd.s32 %v1141, %v1145
      %v1147 = vadd.s32 %v1146, 536870912
      %v1148 = vshrl.u32 %v1147, 30
      %v1149 = vshll.u32 %v1148, 30
      %v1150 = vsub.s32 %v1146, %v1149
      %vm1151 = vcmp.lt.s32.totalorder %v1150, 0
      %v1152 = vsub.s32 0, %v1150
      %v1153 = vsel %vm1151, %v1152, %v1150
      %v1154 = vclz %v1153
      %v1155 = vsub.s32 %v1154, 2
      %vm1156 = vcmp.gt.s32.totalorder 0, %v1155
      %v1157 = vsel %vm1156, 0, %v1155
      %v1158 = vsub.s32 32, %v1157
      %v1159 = vshll.u32 %v1150, %v1157
      %v1160 = vshrl.u32 %v1142, %v1158
      %v1161 = vor.u32 %v1159, %v1160
      %v1162 = vsub.s32 4294967266, %v1157
      %v1163 = vadd.s32 %v1162, 127
      %v1164 = vshll.u32 %v1163, 23
      %v1165 = vor.u32 4788187, %v1164
      %v1166 = vand.u32 2147483647, %v1165
      %v1168 = vcvt.s32.f32 %v1161
      %v1169 = vmul.f32 %v1168, %v1166
      %v1170 = vxor.u32 %v1169, 2147483648
      %v1171 = vsel %vm1050, %v1170, %v1169
      %v1172 = vsub.s32 4, %v1148
      %v1173 = vsel %vm1050, %v1172, %v1148
      %v1174 = vsel %vm1049, %v708, %v1171
      %v1175 = vsel %vm1049, 0, %v1173
      %v1176 = vmul.f32 %v1174, %v1174
      %v1177 = vmul.f32 %v1176, -0.001358992
      %v1178 = vadd.f32 %v1177, 0.041655596
      %v1179 = vmul.f32 %v1176, %v1178
      %v1180 = vadd.f32 %v1179, -0.4999988
      %v1181 = vmul.f32 %v1176, %v1180
      %v1182 = vadd.f32 1.0, %v1181
      %v1183 = vmul.f32 %v1174, %v1174
      %v1184 = vmul.f32 %v1183, -0.00019511016
      %v1185 = vadd.f32 %v1184, 0.008332121
      %v1186 = vmul.f32 %v1183, %v1185
      %v1187 = vadd.f32 %v1186, -0.16666654
      %v1188 = vmul.f32 %v1183, %v1187
      %v1189 = vadd.f32 %v1188, 1.0
      %v1190 = vmul.f32 %v1189, %v1174
      %vm1191 = vweird.f32 %v708
      %v1192 = vadd.s32 %v1175, 3
      %v1193 = vand.u32 %v1192, 3
      %vm1194 = vcmp.lt.s32.totalorder %v1193, 2
      %vm1195 = vcmp.eq.s32.totalorder %v1193, 0
      %v1196 = vxor.u32 %v1190, 2147483648
      %v1197 = vsel %vm1195, %v1182, %v1196
      %vm1198 = vcmp.eq.s32.totalorder %v1193, 2
      %v1199 = vxor.u32 %v1182, 2147483648
      %v1200 = vsel %vm1198, %v1199, %v1190
      %v1201 = vsel %vm1194, %v1197, %v1200
      %v1202 = vsel %vm1191, nan, %v1201
      %v1203 = vand.u32 2147483647, %v728
      %vm1204 = vcmp.le.f32.partialorder %v1203, 0.7853982
      %vm1205 = vcmp.lt.s32.totalorder %v728, 0
      %v1206 = vand.u32 %v728, 2139095040
      %v1207 = vshrl.u32 %v1206, 23
      %v1208 = vsub.s32 %v1207, 127
      %v1209 = vand.u32 2147483647, %v728
      %v1210 = vand.u32 %v1209, 8388607
      %v1211 = vor.u32 %v1210, 8388608
      %v1212 = vsub.s32 0, %v1211
      %v1213 = vadd.s32 %v1208, 1
      %vm1214 = vcmp.gt.s32.totalorder %v1213, 0
      %v1215 = vsel %vm1214, %v1213, 0
      %v1216 = vshrl.u32 %v1215, 5
      %v1217 = vand.u32 %v1215, 31
      %v1218 = vsub.s32 32, %v1217
      %v1219 = vshrl.u32 683565275, %v1218
      %v1220 = vshll.u32 683565275, %v1217
      %v1221 = vshrl.u32 2475754826, %v1218
      %v1222 = vor.u32 %v1220, %v1221
      %v1223 = vshll.u32 2475754826, %v1217
      %v1224 = vshrl.u32 2131351028, %v1218
      %v1225 = vor.u32 %v1223, %v1224
      %v1226 = vshll.u32 2131351028, %v1217
      %v1227 = vshrl.u32 2102212464, %v1218
      %v1228 = vor.u32 %v1226, %v1227
      %v1229 = vshll.u32 2102212464, %v1217
      %v1230 = vshrl.u32 920167782, %v1218
      %v1231 = vor.u32 %v1229, %v1230
      %v1232 = vshll.u32 920167782, %v1217
      %v1233 = vshrl.u32 1326507024, %v1218
      %v1234 = vor.u32 %v1232, %v1233
      %vm1235 = vcmp.lt.s32.totalorder %v1216, 1
      %vm1236 = vcmp.lt.s32.totalorder %v1216, 2
      %vm1237 = vcmp.lt.s32.totalorder %v1216, 3
      %vm1238 = vcmp.lt.s32.totalorder %v1216, 4
      %v1239 = vsel %vm1235, %v1219, %v1222
      %v1240 = vsel %vm1238, %v1228, 2102212464
      %v1241 = vsel %vm1237, %v1225, %v1240
      %v1242 = vsel %vm1236, %v1239, %v1241
      %v1243 = vsel %vm1235, %v1222, %v1225
      %v1244 = vsel %vm1238, %v1231, 920167782
      %v1245 = vsel %vm1237, %v1228, %v1244
      %v1246 = vsel %vm1236, %v1243, %v1245
      %v1247 = vsel %vm1235, %v1225, %v1228
      %v1248 = vsel %vm1238, %v1234, 1326507024
      %v1249 = vsel %vm1237, %v1231, %v1248
      %v1250 = vsel %vm1236, %v1247, %v1249
      %v1251 = vshll.u32 %v1211, 8
      %v1252 = vand.u32 %v1251, 65535
      %v1253 = vshrl.u32 %v1251, 16
      %v1254 = vand.u32 %v1250, 65535
      %v1255 = vshrl.u32 %v1250, 16
      %v1256 = vmul.u32 %v1252, %v1254
      %v1257 = vmul.u32 %v1252, %v1255
      %v1258 = vmul.u32 %v1253, %v1254
      %v1259 = vmul.u32 %v1253, %v1255
      %v1260 = vshll.u32 %v1257, 16
      %v1261 = vshrl.u32 %v1257, 16
      %v1262 = vshll.u32 %v1258, 16
      %v1263 = vshrl.u32 %v1258, 16
      %vm1264 = vc.u32 %v1256, %v1260
      %v1265 = vsel %vm1264, 1, 0
      %v1266 = vadd.s32 %v1256, %v1260
      %v1267 = vadd.s32 %v1259, %v1265
      %vm1268 = vc.u32 %v1266, %v1262
      %v1269 = vsel %vm1268, 1, 0
      %v1270 = vadd.s32 %v1266, %v1262
      %v1271 = vadd.s32 %v1267, %v1269
      %v1272 = vadd.s32 %v1271, %v1261
      %v1273 = vadd.s32 %v1272, %v1263
      %v1274 = vand.u32 %v1251, 65535
      %v1275 = vshrl.u32 %v1251, 16
      %v1276 = vand.u32 %v1246, 65535
      %v1277 = vshrl.u32 %v1246, 16
      %v1278 = vmul.u32 %v1274, %v1276
      %v1279 = vmul.u32 %v1274, %v1277
      %v1280 = vmul.u32 %v1275, %v1276
      %v1281 = vmul.u32 %v1275, %v1277
      %v1282 = vshll.u32 %v1279, 16
      %v1283 = vshrl.u32 %v1279, 16
      %v1284 = vshll.u32 %v1280, 16
      %v1285 = vshrl.u32 %v1280, 16
      %vm1286 = vc.u32 %v1278, %v1282
      %v1287 = vsel %vm1286, 1, 0
      %v1288 = vadd.s32 %v1278, %v1282
      %v1289 = vadd.s32 %v1281, %v1287
      %vm1290 = vc.u32 %v1288, %v1284
      %v1291 = vsel %vm1290, 1, 0
      %v1292 = vadd.s32 %v1288, %v1284
      %v1293 = vadd.s32 %v1289, %v1291
      %v1294 = vadd.s32 %v1293, %v1283
      %v1295 = vadd.s32 %v1294, %v1285
      %v1296 = vmul.u32 %v1251, %v1242
      %v1297 = vadd.s32 %v1273, %v1292
      %vm1298 = vc.u32 %v1273, %v1292
      %v1299 = vadd.s32 %v1295, 1
      %v1300 = vsel %vm1298, %v1299, %v1295
      %v1301 = vadd.s32 %v1296, %v1300
      %v1302 = vadd.s32 %v1301, 536870912
      %v1303 = vshrl.u32 %v1302, 30
      %v1304 = vshll.u32 %v1303, 30
      %v1305 = vsub.s32 %v1301, %v1304
      %vm1306 = vcmp.lt.s32.totalorder %v1305, 0
      %v1307 = vsub.s32 0, %v1305
      %v1308 = vsel %vm1306, %v1307, %v1305
      %v1309 = vclz %v1308
      %v1310 = vsub.s32 %v1309, 2
      %vm1311 = vcmp.gt.s32.totalorder 0, %v1310
      %v1312 = vsel %vm1311, 0, %v1310
      %v1313 = vsub.s32 32, %v1312
      %v1314 = vshll.u32 %v1305, %v1312
      %v1315 = vshrl.u32 %v1297, %v1313
      %v1316 = vor.u32 %v1314, %v1315
      %v1317 = vsub.s32 4294967266, %v1312
      %v1318 = vadd.s32 %v1317, 127
      %v1319 = vshll.u32 %v1318, 23
      %v1320 = vor.u32 4788187, %v1319
      %v1321 = vand.u32 2147483647, %v1320
      %v1323 = vcvt.s32.f32 %v1316
      %v1324 = vmul.f32 %v1323, %v1321
      %v1325 = vxor.u32 %v1324, 2147483648
      %v1326 = vsel %vm1205, %v1325, %v1324
      %v1327 = vsub.s32 4, %v1303
      %v1328 = vsel %vm1205, %v1327, %v1303
      %v1329 = vsel %vm1204, %v728, %v1326
      %v1330 = vsel %vm1204, 0, %v1328
      %v1331 = vmul.f32 %v1329, %v1329
      %v1332 = vmul.f32 %v1331, -0.001358992
      %v1333 = vadd.f32 %v1332, 0.041655596
      %v1334 = vmul.f32 %v1331, %v1333
      %v1335 = vadd.f32 %v1334, -0.4999988
      %v1336 = vmul.f32 %v1331, %v1335
      %v1337 = vadd.f32 1.0, %v1336
      %v1338 = vmul.f32 %v1329, %v1329
      %v1339 = vmul.f32 %v1338, -0.00019511016
      %v1340 = vadd.f32 %v1339, 0.008332121
      %v1341 = vmul.f32 %v1338, %v1340
      %v1342 = vadd.f32 %v1341, -0.16666654
      %v1343 = vmul.f32 %v1338, %v1342
      %v1344 = vadd.f32 %v1343, 1.0
      %v1345 = vmul.f32 %v1344, %v1329
      %vm1346 = vweird.f32 %v728
      %v1347 = vadd.s32 %v1330, 3
      %v1348 = vand.u32 %v1347, 3
      %vm1349 = vcmp.lt.s32.totalorder %v1348, 2
      %vm1350 = vcmp.eq.s32.totalorder %v1348, 0
      %v1351 = vxor.u32 %v1345, 2147483648
      %v1352 = vsel %vm1350, %v1337, %v1351
      %vm1353 = vcmp.eq.s32.totalorder %v1348, 2
      %v1354 = vxor.u32 %v1337, 2147483648
      %v1355 = vsel %vm1353, %v1354, %v1345
      %v1356 = vsel %vm1349, %v1352, %v1355
      %v1357 = vsel %vm1346, nan, %v1356
      %v1358 = vmul.f32 %v588, %v1202
      %v1359 = vmul.f32 %v608, %v1357
      %v1362 = vrot.slane %v1359, 6
      %v1363 = vsel %vm503, %v1358, %v1362
      %1365 = vst.msk [vmem:[%s484] sm:$0xf] %vm1046, %v1363
      %s1366 = smul.u32 2, %s28
      %p1367 = scmp.lt.s32.totalorder %s27, 1
      %s1368 = scalar_select %p1367, %s27, 1
      %p1369 = scmp.lt.s32.totalorder %s1366, 1
      %s1370 = scalar_select %p1369, %s1366, 1
      %s1371 = smul.addr %s1368, 2
      %s1372 = sadd.s32 %s1370, %s1371
      %s1373 = smul.addr %s1372, 2
      %s1374 = scalar_lea.vmem %s10, %s1373
      %s1375 = smul.u32 2, %s28
      %p1376 = scmp.lt.s32.totalorder %s27, 1
      %s1377 = scalar_select %p1376, %s27, 1
      %p1378 = scmp.lt.s32.totalorder %s1375, 1
      %s1379 = scalar_select %p1378, %s1375, 1
      %s1380 = smul.addr %s1377, 2
      %s1381 = sadd.s32 %s1379, %s1380
      %s1382 = smul.addr %s1381, 2
      %s1383 = scalar_lea.vmem %s11, %s1382
      // Predicated region
      $region61: #{frb_forward.2} parent=59 // pred_check
        %p1384 = pneg %p279
      $region62: #{frb_forward.2} parent=59 // pred_check_branch
        %1386 = sbr.rel (%p1384) target = $region64
      $region63: #{frb_forward.2} parent=59 // pred_region
        %s1387 = smul.u32 2, %s28
      $region64: #{frb_forward.2} parent=59 // pred_fallthru
        _
      // Predicated region
      $region65: #{frb_forward.2} parent=59 // pred_check
        %p1388 = pneg %p307
      $region66: #{frb_forward.2} parent=59 // pred_check_branch
        %1390 = sbr.rel (%p1388) target = $region68
      $region67: #{frb_forward.2} parent=59 // pred_region
        %s1391 = smul.u32 2, %s28
      $region68: #{frb_forward.2} parent=59 // pred_fallthru
        _
    $region60: #{frb_forward.2} parent=5 // pred_fallthru
      _
    %p1392 = scmp.le.s32.totalorder 2, %s18
    // Predicated region
    $region69: #{frb_forward.2} parent=5 // pred_check
      %p1393 = pneg %p1392
    $region70: #{frb_forward.2} parent=5 // pred_check_branch
      %1395 = sbr.rel (%p1393) target = $region72
    $region71: #{frb_forward.2} parent=5 // pred_region
      %s1396 = ssub.s32 %s18, 2
      // Predicated region
      $region73: #{frb_forward.2} parent=71 // pred_check
        %p1397 = pneg %p285
      $region74: #{frb_forward.2} parent=71 // pred_check_branch
        %1399 = sbr.rel (%p1397) target = $region76
      $region75: #{frb_forward.2} parent=71 // pred_region
        %s1400 = smul.u32 2, %s30
        %p1401 = scmp.lt.s32.totalorder %s29, 1
        %s1402 = scalar_select %p1401, %s29, 1
        %p1403 = scmp.lt.s32.totalorder %s1400, 1
        %s1404 = scalar_select %p1403, %s1400, 1
        %s1405 = smul.addr %s1402, 2
        %s1406 = sadd.s32 %s1404, %s1405
        %s1407 = smul.addr %s1406, 2
        %s1408 = scalar_lea.vmem %s10, %s1407
      $region76: #{frb_forward.2} parent=71 // pred_fallthru
        _
      // Predicated region
      $region77: #{frb_forward.2} parent=71 // pred_check
        %p1409 = pneg %p313
      $region78: #{frb_forward.2} parent=71 // pred_check_branch
        %1411 = sbr.rel (%p1409) target = $region80
      $region79: #{frb_forward.2} parent=71 // pred_region
        %s1412 = smul.u32 2, %s30
        %p1413 = scmp.lt.s32.totalorder %s29, 1
        %s1414 = scalar_select %p1413, %s29, 1
        %p1415 = scmp.lt.s32.totalorder %s1412, 1
        %s1416 = scalar_select %p1415, %s1412, 1
        %s1417 = smul.addr %s1414, 2
        %s1418 = sadd.s32 %s1416, %s1417
        %s1419 = smul.addr %s1418, 2
        %s1420 = scalar_lea.vmem %s11, %s1419
      $region80: #{frb_forward.2} parent=71 // pred_fallthru
        _
    $region72: #{frb_forward.2} parent=5 // pred_fallthru
      _
  $region6: #{frb_forward.2} parent=0 // loop_footer
    %s22 = sadd.s32 1, %s18
  $region7: #{frb_forward.2} parent=0 // loop_footer_branch
    %17 = sbr.rel target = $region3
  $region8: #{frb_forward.2} parent=0 // loop_exit
    _

// kernel: frb_forward.3
$region0: #{frb_forward.3}
  #allocation0 [shape = 'u32[]', space=smem, size = 0x4, offset = 0x4, fixed_abs, tag = 'smem constant byte address 0x4 - core index']
  #allocation1 [shape = 'u32[72,128]{1,0:T(1,128)}', space=vmem, size = 0x9000, scoped, tag = 'internal scratch']
  #allocation2 [shape = 'f32[18,18,2]{2,1,0:T(8,128)}', space=vmem, size = 0x36000, scoped, tag = 'scratch operand']
  %s0 = inlined_call_operand.vmem [shape: f32[2,18,18,2], index: 0, kind: input, shape index: {}]
  %s1 = inlined_call_operand.vmem [shape: f32[2,16,16,2], index: 1, kind: input, shape index: {}]
  %s2 = inlined_call_operand.vmem [shape: f32[9,2,2], index: 2, kind: input, shape index: {}]
  %s3 = inlined_call_operand.vmem [shape: f32[1,2], index: 3, kind: input, shape index: {}]
  %s4 = inlined_call_operand.vmem [shape: f32[9,2,2], index: 4, kind: input, shape index: {}]
  %s5 = inlined_call_operand.vmem [shape: f32[1,2], index: 5, kind: input, shape index: {}]
  %s6 = inlined_call_operand.vmem [shape: f32[2,16,16,2], index: 6, kind: output, shape index: {}]
  %s7 = sld [smem:[#allocation0]]
  $region57: #{frb_forward.3} parent=0
    _
  %s9 = ssub.s32 1, %s7
  %s10 = scalar_select 0, %s9, %s7
  loop: start=0, step=1, limit=4
  $region2: #{frb_forward.3} parent=0 // loop_pre_header
    _
  $region3: #{frb_forward.3} parent=0 // loop_header
    %s12 = sphi 0, %s16
    %p13 = scmp.ge.s32.totalorder %s12, 4
    %s22 = sphi 0, %s24
    %s25 = sphi 0, %s22
    %s26 = sphi 0, %s25
    %s42 = sphi 0, %s26
    %s48 = sphi 0, %s50
    %s51 = sphi 0, %s48
    %s52 = sphi 0, %s51
    %s68 = sphi 0, %s52
    %s72 = sphi 0, %s72
    %s74 = sphi 0, %s72
    %s75 = sphi 0, %s74
    %s89 = sphi 0, %s75
    %s93 = sphi 0, %s93
    %s95 = sphi 0, %s93
    %s96 = sphi 0, %s95
    %s110 = sphi 0, %s96
    %s114 = sphi 0, %s114
    %s116 = sphi 0, %s114
    %s117 = sphi 0, %s116
    %s131 = sphi 0, %s117
    %s135 = sphi 0, %s135
    %s137 = sphi 0, %s135
    %s138 = sphi 0, %s137
    %s152 = sphi 0, %s138
    %s158 = sphi 0, %s160
    %s161 = sphi 0, %s158
    %s162 = sphi 0, %s161
    %s178 = sphi 0, %s162
  $region4: #{frb_forward.3} parent=0 // loop_header_branch
    %15 = sbr.rel (%p13) target = $region8
  $region5: #{frb_forward.3} parent=0 // loop_body
    %s17 = ssub.s32 %s12, 1
    %s18 = ssub.s32 %s12, 2
    %s19 = sadd.s32 %s12, 1
    %s20 = ssub.s32 %s12, %s19
    %p21 = scmp.eq.s32.totalorder %s20, 0
    %s23 = sadd.s32 %s22, 1
    %s24 = scalar_select %p21, %s22, %s23
    %p27 = pneg %p21
    %p28 = scmp.eq.s32.totalorder %s12, 1
    %p29 = por %p27, %p28
    %p30 = scmp.ne.s32.totalorder %s22, %s25
    %p31 = scmp.eq.s32.totalorder %s12, 0
    %p32 = por %p30, %p31
    %p33 = scmp.ne.s32.totalorder %s22, %s25
    %p34 = scmp.eq.s32.totalorder %s17, 1
    %p35 = por %p33, %p34
    %p36 = scmp.ne.s32.totalorder %s25, %s26
    %p37 = scmp.eq.s32.totalorder %s17, 0
    %p38 = por %p36, %p37
    %p39 = scmp.ne.s32.totalorder %s25, %s26
    %p40 = scmp.eq.s32.totalorder %s18, 1
    %p41 = por %p39, %p40
    %p43 = scmp.ne.s32.totalorder %s26, %s42
    %p44 = scmp.eq.s32.totalorder %s18, 0
    %p45 = por %p43, %p44
    %s46 = ssub.s32 %s12, %s19
    %p47 = scmp.eq.s32.totalorder %s46, 0
    %s49 = sadd.s32 %s48, 1
    %s50 = scalar_select %p47, %s48, %s49
    %p53 = pneg %p47
    %p54 = scmp.eq.s32.totalorder %s12, 1
    %p55 = por %p53, %p54
    %p56 = scmp.ne.s32.totalorder %s48, %s51
    %p57 = scmp.eq.s32.totalorder %s12, 0
    %p58 = por %p56, %p57
    %p59 = scmp.ne.s32.totalorder %s48, %s51
    %p60 = scmp.eq.s32.totalorder %s17, 1
    %p61 = por %p59, %p60
    %p62 = scmp.ne.s32.totalorder %s51, %s52
    %p63 = scmp.eq.s32.totalorder %s17, 0
    %p64 = por %p62, %p63
    %p65 = scmp.ne.s32.totalorder %s51, %s52
    %p66 = scmp.eq.s32.totalorder %s18, 1
    %p67 = por %p65, %p66
    %p69 = scmp.ne.s32.totalorder %s52, %s68
    %p70 = scmp.eq.s32.totalorder %s18, 0
    %p71 = por %p69, %p70
    %s73 = sadd.s32 %s72, 1
    %p76 = scmp.eq.s32.totalorder %s12, 1
    %p77 = scmp.ne.s32.totalorder %s72, %s74
    %p78 = scmp.eq.s32.totalorder %s12, 0
    %p79 = por %p77, %p78
    %p80 = scmp.ne.s32.totalorder %s72, %s74
    %p81 = scmp.eq.s32.totalorder %s17, 1
    %p82 = por %p80, %p81
    %p83 = scmp.ne.s32.totalorder %s74, %s75
    %p84 = scmp.eq.s32.totalorder %s17, 0
    %p85 = por %p83, %p84
    %p86 = scmp.ne.s32.totalorder %s74, %s75
    %p87 = scmp.eq.s32.totalorder %s18, 1
    %p88 = por %p86, %p87
    %p90 = scmp.ne.s32.totalorder %s75, %s89
    %p91 = scmp.eq.s32.totalorder %s18, 0
    %p92 = por %p90, %p91
    %s94 = sadd.s32 %s93, 1
    %p97 = scmp.eq.s32.totalorder %s12, 1
    %p98 = scmp.ne.s32.totalorder %s93, %s95
    %p99 = scmp.eq.s32.totalorder %s12, 0
    %p100 = por %p98, %p99
    %p101 = scmp.ne.s32.totalorder %s93, %s95
    %p102 = scmp.eq.s32.totalorder %s17, 1
    %p103 = por %p101, %p102
    %p104 = scmp.ne.s32.totalorder %s95, %s96
    %p105 = scmp.eq.s32.totalorder %s17, 0
    %p106 = por %p104, %p105
    %p107 = scmp.ne.s32.totalorder %s95, %s96
    %p108 = scmp.eq.s32.totalorder %s18, 1
    %p109 = por %p107, %p108
    %p111 = scmp.ne.s32.totalorder %s96, %s110
    %p112 = scmp.eq.s32.totalorder %s18, 0
    %p113 = por %p111, %p112
    %s115 = sadd.s32 %s114, 1
    %p118 = scmp.eq.s32.totalorder %s12, 1
    %p119 = scmp.ne.s32.totalorder %s114, %s116
    %p120 = scmp.eq.s32.totalorder %s12, 0
    %p121 = por %p119, %p120
    %p122 = scmp.ne.s32.totalorder %s114, %s116
    %p123 = scmp.eq.s32.totalorder %s17, 1
    %p124 = por %p122, %p123
    %p125 = scmp.ne.s32.totalorder %s116, %s117
    %p126 = scmp.eq.s32.totalorder %s17, 0
    %p127 = por %p125, %p126
    %p128 = scmp.ne.s32.totalorder %s116, %s117
    %p129 = scmp.eq.s32.totalorder %s18, 1
    %p130 = por %p128, %p129
    %p132 = scmp.ne.s32.totalorder %s117, %s131
    %p133 = scmp.eq.s32.totalorder %s18, 0
    %p134 = por %p132, %p133
    %s136 = sadd.s32 %s135, 1
    %p139 = scmp.eq.s32.totalorder %s12, 1
    %p140 = scmp.ne.s32.totalorder %s135, %s137
    %p141 = scmp.eq.s32.totalorder %s12, 0
    %p142 = por %p140, %p141
    %p143 = scmp.ne.s32.totalorder %s135, %s137
    %p144 = scmp.eq.s32.totalorder %s17, 1
    %p145 = por %p143, %p144
    %p146 = scmp.ne.s32.totalorder %s137, %s138
    %p147 = scmp.eq.s32.totalorder %s17, 0
    %p148 = por %p146, %p147
    %p149 = scmp.ne.s32.totalorder %s137, %s138
    %p150 = scmp.eq.s32.totalorder %s18, 1
    %p151 = por %p149, %p150
    %p153 = scmp.ne.s32.totalorder %s138, %s152
    %p154 = scmp.eq.s32.totalorder %s18, 0
    %p155 = por %p153, %p154
    %s156 = ssub.s32 %s12, %s19
    %p157 = scmp.eq.s32.totalorder %s156, 0
    %s159 = sadd.s32 %s158, 1
    %s160 = scalar_select %p157, %s158, %s159
    %p163 = pneg %p157
    %p164 = scmp.eq.s32.totalorder %s12, 1
    %p165 = por %p163, %p164
    %p166 = scmp.ne.s32.totalorder %s158, %s161
    %p167 = scmp.eq.s32.totalorder %s12, 0
    %p168 = por %p166, %p167
    %p169 = scmp.ne.s32.totalorder %s158, %s161
    %p170 = scmp.eq.s32.totalorder %s17, 1
    %p171 = por %p169, %p170
    %p172 = scmp.ne.s32.totalorder %s161, %s162
    %p173 = scmp.eq.s32.totalorder %s17, 0
    %p174 = por %p172, %p173
    %p175 = scmp.ne.s32.totalorder %s161, %s162
    %p176 = scmp.eq.s32.totalorder %s18, 1
    %p177 = por %p175, %p176
    %p179 = scmp.ne.s32.totalorder %s162, %s178
    %p180 = scmp.eq.s32.totalorder %s18, 0
    %p181 = por %p179, %p180
    %p182 = scmp.le.s32.totalorder 1, %s12
    %p183 = scmp.lt.s32.totalorder %s12, 3
    %p184 = pnand %p182, %p183
    %p185 = pneg %p184
    // Predicated region
    $region9: #{frb_forward.3} parent=5 // pred_check
      _
    $region10: #{frb_forward.3} parent=5 // pred_check_branch
      %187 = sbr.rel (%p184) target = $region12
    $region11: #{frb_forward.3} parent=5 // pred_region
      %s188 = ssub.s32 %s12, 1
      // Predicated region
      $region13: #{frb_forward.3} parent=11 // pred_check
        %p189 = pneg %p85
      $region14: #{frb_forward.3} parent=11 // pred_check_branch
        %191 = sbr.rel (%p189) target = $region16
      $region15: #{frb_forward.3} parent=11 // pred_region
        _
      $region16: #{frb_forward.3} parent=11 // pred_fallthru
        _
      // Predicated region
      $region17: #{frb_forward.3} parent=11 // pred_check
        %p192 = pneg %p106
      $region18: #{frb_forward.3} parent=11 // pred_check_branch
        %194 = sbr.rel (%p192) target = $region20
      $region19: #{frb_forward.3} parent=11 // pred_region
        _
      $region20: #{frb_forward.3} parent=11 // pred_fallthru
        _
      // Predicated region
      $region21: #{frb_forward.3} parent=11 // pred_check
        %p195 = pneg %p127
      $region22: #{frb_forward.3} parent=11 // pred_check_branch
        %197 = sbr.rel (%p195) target = $region24
      $region23: #{frb_forward.3} parent=11 // pred_region
        _
      $region24: #{frb_forward.3} parent=11 // pred_fallthru
        _
      // Predicated region
      $region25: #{frb_forward.3} parent=11 // pred_check
        %p198 = pneg %p148
      $region26: #{frb_forward.3} parent=11 // pred_check_branch
        %200 = sbr.rel (%p198) target = $region28
      $region27: #{frb_forward.3} parent=11 // pred_region
        _
      $region28: #{frb_forward.3} parent=11 // pred_fallthru
        _
    $region12: #{frb_forward.3} parent=5 // pred_fallthru
      _
    %p201 = scmp.lt.s32.totalorder %s12, 2
    // Predicated region
    $region29: #{frb_forward.3} parent=5 // pred_check
      %p202 = pneg %p201
    $region30: #{frb_forward.3} parent=5 // pred_check_branch
      %204 = sbr.rel (%p202) target = $region32
    $region31: #{frb_forward.3} parent=5 // pred_region
      // Predicated region
      $region33: #{frb_forward.3} parent=31 // pred_check
        %p205 = pneg %p32
      $region34: #{frb_forward.3} parent=31 // pred_check_branch
        %207 = sbr.rel (%p205) target = $region36
      $region35: #{frb_forward.3} parent=31 // pred_region
        %p208 = scmp.lt.s32.totalorder %s12, 1
        %s209 = scalar_select %p208, %s12, 1
        %s210 = smul.addr %s209, 54
        %s211 = smul.addr %s210, 8
        %s212 = scalar_lea.vmem %s0, %s211
      $region36: #{frb_forward.3} parent=31 // pred_fallthru
        _
      // Predicated region
      $region37: #{frb_forward.3} parent=31 // pred_check
        %p213 = pneg %p58
      $region38: #{frb_forward.3} parent=31 // pred_check_branch
        %215 = sbr.rel (%p213) target = $region40
      $region39: #{frb_forward.3} parent=31 // pred_region
        %p216 = scmp.lt.s32.totalorder %s12, 1
        %s217 = scalar_select %p216, %s12, 1
        %s218 = smul.addr %s217, 32
        %s219 = smul.addr %s218, 8
        %s220 = scalar_lea.vmem %s1, %s219
      $region40: #{frb_forward.3} parent=31 // pred_fallthru
        _
    $region32: #{frb_forward.3} parent=5 // pred_fallthru
      _
    %p221 = scmp.le.s32.totalorder 1, %s12
    %p222 = scmp.lt.s32.totalorder %s12, 3
    %p223 = pnand %p221, %p222
    %p224 = pneg %p223
    // Predicated region
    $region41: #{frb_forward.3} parent=5 // pred_check
      _
    $region42: #{frb_forward.3} parent=5 // pred_check_branch
      %226 = sbr.rel (%p223) target = $region44
    $region43: #{frb_forward.3} parent=5 // pred_region
      %s227 = ssub.s32 %s12, 1
      %p228 = scmp.lt.s32.totalorder %s17, 1
      %s229 = scalar_select %p228, %s17, 1
      %s230 = smul.addr %s229, 54
      %s231 = smul.addr %s230, 8
      %s232 = scalar_lea.vmem %s0, %s231
      %p233 = pneg %p38
      %p234 = pneg %p35
      %p235 = scmp.lt.s32.totalorder %s17, 1
      %s236 = scalar_select %p235, %s17, 1
      %s237 = smul.addr %s236, 32
      %s238 = smul.addr %s237, 8
      %s239 = scalar_lea.vmem %s1, %s238
      %p240 = pneg %p64
      %p241 = pneg %p61
      %p242 = pneg %p85
      %p243 = pneg %p82
      %p244 = pneg %p106
      %p245 = pneg %p103
      %p246 = pneg %p127
      %p247 = pneg %p124
      %p248 = pneg %p148
      %p249 = pneg %p145
      %p250 = pneg %p174
      %p251 = pneg %p171
      %p252 = scmp.lt.s32.totalorder %s17, 1
      %s253 = scalar_select %p252, %s17, 1
      %s254 = smul.addr %s253, 32
      %s255 = smul.addr %s254, 8
      %s256 = scalar_lea.vmem %s6, %s255
      %p257 = scmp.lt.s32.totalorder %s17, 1
      %s258 = scalar_select %p257, %s17, 1
      %s259 = smul.addr %s258, 54
      %s260 = smul.addr %s259, 8
      %s261 = scalar_lea.vmem %s0, %s260
      %p262 = scmp.lt.s32.totalorder %s17, 1
      %s263 = scalar_select %p262, %s17, 1
      %s264 = smul.addr %s263, 32
      %s265 = smul.addr %s264, 8
      %s266 = scalar_lea.vmem %s1, %s265
      %p267 = scmp.lt.s32.totalorder %s17, 1
      %s268 = scalar_select %p267, %s17, 1
      %s269 = smul.addr %s268, 32
      %s270 = smul.addr %s269, 8
      %s271 = scalar_lea.vmem %s6, %s270
      %v272 = vld [vmem:[%s261] sm:$0xff]
      %v273 = vld [vmem:[%s261 + $0x8] sm:$0xff]
      %v274 = vld [vmem:[%s261 + $0x18] sm:$0xff]
      %v275 = vld [vmem:[%s261 + $0x20] sm:$0xff]
      %v276 = vld [vmem:[%s261 + $0x30] sm:$0xff]
      %v277 = vld [vmem:[%s261 + $0x38] sm:$0xff]
      %v278 = vld [vmem:[%s261 + $0x48] sm:$0xff]
      %v279 = vld [vmem:[%s261 + $0x50] sm:$0xff]
      %v280 = vld [vmem:[%s261 + $0x60] sm:$0xff]
      %v281 = vld [vmem:[%s261 + $0x68] sm:$0xff]
      %v282 = vld [vmem:[%s261 + $0x78] sm:$0xff]
      %v283 = vld [vmem:[%s261 + $0x80] sm:$0xff]
      %v284 = vld [vmem:[%s261 + $0x90] sm:$0xff]
      %v285 = vld [vmem:[%s261 + $0x98] sm:$0xff]
      %v286 = vld [vmem:[%s261 + $0xa8] sm:$0xff]
      %v287 = vld [vmem:[%s261 + $0xb0] sm:$0xff]
      %v288 = vld [vmem:[%s261 + $0xc0] sm:$0xff]
      %v289 = vld [vmem:[%s261 + $0xc8] sm:$0xff]
      %v290 = vld [vmem:[%s261 + $0xd8] sm:$0xff]
      %v291 = vld [vmem:[%s261 + $0xe0] sm:$0xff]
      %v292 = vld [vmem:[%s261 + $0xf0] sm:$0xff]
      %v293 = vld [vmem:[%s261 + $0xf8] sm:$0xff]
      %v294 = vld [vmem:[%s261 + $0x108] sm:$0xff]
      %v295 = vld [vmem:[%s261 + $0x110] sm:$0xff]
      %v296 = vld [vmem:[%s261 + $0x120] sm:$0xff]
      %v297 = vld [vmem:[%s261 + $0x128] sm:$0xff]
      %v298 = vld [vmem:[%s261 + $0x138] sm:$0xff]
      %v299 = vld [vmem:[%s261 + $0x140] sm:$0xff]
      %v300 = vld [vmem:[%s261 + $0x150] sm:$0xff]
      %v301 = vld [vmem:[%s261 + $0x158] sm:$0xff]
      %v302 = vld [vmem:[%s261 + $0x168] sm:$0xff]
      %v303 = vld [vmem:[%s261 + $0x170] sm:$0xff]
      %v304 = vld [vmem:[%s2] sm:$0x3]
      %v305 = vld [vmem:[%s261 + $0x1] sm:$0xff]
      %v306 = vld [vmem:[%s261 + $0x9] sm:$0xff]
      %v307 = vld [vmem:[%s261 + $0x19] sm:$0xff]
      %v308 = vld [vmem:[%s261 + $0x21] sm:$0xff]
      %v309 = vld [vmem:[%s261 + $0x31] sm:$0xff]
      %v310 = vld [vmem:[%s261 + $0x39] sm:$0xff]
      %v311 = vld [vmem:[%s261 + $0x49] sm:$0xff]
      %v312 = vld [vmem:[%s261 + $0x51] sm:$0xff]
      %v313 = vld [vmem:[%s261 + $0x61] sm:$0xff]
      %v314 = vld [vmem:[%s261 + $0x69] sm:$0xff]
      %v315 = vld [vmem:[%s261 + $0x79] sm:$0xff]
      %v316 = vld [vmem:[%s261 + $0x81] sm:$0xff]
      %v317 = vld [vmem:[%s261 + $0x91] sm:$0xff]
      %v318 = vld [vmem:[%s261 + $0x99] sm:$0xff]
      %v319 = vld [vmem:[%s261 + $0xa9] sm:$0xff]
      %v320 = vld [vmem:[%s261 + $0xb1] sm:$0xff]
      %v321 = vld [vmem:[%s261 + $0xc1] sm:$0xff]
      %v322 = vld [vmem:[%s261 + $0xc9] sm:$0xff]
      %v323 = vld [vmem:[%s261 + $0xd9] sm:$0xff]
      %v324 = vld [vmem:[%s261 + $0xe1] sm:$0xff]
      %v325 = vld [vmem:[%s261 + $0xf1] sm:$0xff]
      %v326 = vld [vmem:[%s261 + $0xf9] sm:$0xff]
      %v327 = vld [vmem:[%s261 + $0x109] sm:$0xff]
      %v328 = vld [vmem:[%s261 + $0x111] sm:$0xff]
      %v329 = vld [vmem:[%s261 + $0x121] sm:$0xff]
      %v330 = vld [vmem:[%s261 + $0x129] sm:$0xff]
      %v331 = vld [vmem:[%s261 + $0x139] sm:$0xff]
      %v332 = vld [vmem:[%s261 + $0x141] sm:$0xff]
      %v333 = vld [vmem:[%s261 + $0x151] sm:$0xff]
      %v334 = vld [vmem:[%s261 + $0x159] sm:$0xff]
      %v335 = vld [vmem:[%s261 + $0x169] sm:$0xff]
      %v336 = vld [vmem:[%s261 + $0x171] sm:$0xff]
      %s337 = scalar_lea.vmem %s2, 2
      %v338 = vld [vmem:[%s337] sm:$0x3]
      %vm339 = vcmask 15360
      %v341 = vsel %vm339, %v305, 0
      %v344 = vsel %vm339, %v306, 0
      %v347 = vsel %vm339, %v307, 0
      %v350 = vsel %vm339, %v308, 0
      %v353 = vsel %vm339, %v309, 0
      %v356 = vsel %vm339, %v310, 0
      %v359 = vsel %vm339, %v311, 0
      %v362 = vsel %vm339, %v312, 0
      %v365 = vsel %vm339, %v313, 0
      %v368 = vsel %vm339, %v314, 0
      %v371 = vsel %vm339, %v315, 0
      %v374 = vsel %vm339, %v316, 0
      %v377 = vsel %vm339, %v317, 0
      %v380 = vsel %vm339, %v318, 0
      %v383 = vsel %vm339, %v319, 0
      %v386 = vsel %vm339, %v320, 0
      %v389 = vsel %vm339, %v321, 0
      %v392 = vsel %vm339, %v322, 0
      %v395 = vsel %vm339, %v323, 0
      %v398 = vsel %vm339, %v324, 0
      %v401 = vsel %vm339, %v325, 0
      %v404 = vsel %vm339, %v326, 0
      %v407 = vsel %vm339, %v327, 0
      %v410 = vsel %vm339, %v328, 0
      %v413 = vsel %vm339, %v329, 0
      %v416 = vsel %vm339, %v330, 0
      %v419 = vsel %vm339, %v331, 0
      %v422 = vsel %vm339, %v332, 0
      %v425 = vsel %vm339, %v333, 0
      %v428 = vsel %vm339, %v334, 0
      %v431 = vsel %vm339, %v335, 0
      %v434 = vsel %vm339, %v336, 0
      %vm436 = vcmask 1041408
      %v438 = vsel %vm436, %v338, 0
      %440 = vmatpush.msra.mxu0 0.0
      %441 = vmatpush.msra.mxu0 0.0
      %442 = vmatpush.msra.mxu0 0.0
      %443 = vmatpush.msra.mxu0 0.0
      %444 = vmatpush.msra.mxu0 0.0
      %445 = vmatpush.msra.mxu0 0.0
      %446 = vmatpush.msra.mxu0 0.0
      %447 = vmatpush.msra.mxu0 0.0
      %448 = vmatpush.msra.mxu0 0.0
      %449 = vmatpush.msra.mxu0 0.0
      %450 = vmatpush.msra.mxu0 0.0
      %451 = vmatpush.msra.mxu0 0.0
      %452 = vmatpush.msra.mxu0 0.0
      %453 = vmatpush.msra.mxu0 0.0
      %454 = vmatpush.msra.mxu0 0.0
      %455 = vmatpush.msra.mxu0 %v438
      %456 = vmatmul.f32.gmra.mxu0 %v341
      %v457 = vpop.f32.mrf.mxu0
      %v458 = vadd.f32 0.0, %v457
      %459 = vmatmul.f32.gmra.mxu0 %v344
      %v460 = vpop.f32.mrf.mxu0
      %v461 = vadd.f32 0.0, %v460
      %462 = vmatmul.f32.gmra.mxu0 %v347
      %v463 = vpop.f32.mrf.mxu0
      %v464 = vadd.f32 0.0, %v463
      %465 = vmatmul.f32.gmra.mxu0 %v350
      %v466 = vpop.f32.mrf.mxu0
      %v467 = vadd.f32 0.0, %v466
      %468 = vmatmul.f32.gmra.mxu0 %v353
      %v469 = vpop.f32.mrf.mxu0
      %v470 = vadd.f32 0.0, %v469
      %471 = vmatmul.f32.gmra.mxu0 %v356
      %v472 = vpop.f32.mrf.mxu0
      %v473 = vadd.f32 0.0, %v472
      %474 = vmatmul.f32.gmra.mxu0 %v359
      %v475 = vpop.f32.mrf.mxu0
      %v476 = vadd.f32 0.0, %v475
      %477 = vmatmul.f32.gmra.mxu0 %v362
      %v478 = vpop.f32.mrf.mxu0
      %v479 = vadd.f32 0.0, %v478
      %480 = vmatmul.f32.gmra.mxu0 %v365
      %v481 = vpop.f32.mrf.mxu0
      %v482 = vadd.f32 0.0, %v481
      %483 = vmatmul.f32.gmra.mxu0 %v368
      %v484 = vpop.f32.mrf.mxu0
      %v485 = vadd.f32 0.0, %v484
      %486 = vmatmul.f32.gmra.mxu0 %v371
      %v487 = vpop.f32.mrf.mxu0
      %v488 = vadd.f32 0.0, %v487
      %489 = vmatmul.f32.gmra.mxu0 %v374
      %v490 = vpop.f32.mrf.mxu0
      %v491 = vadd.f32 0.0, %v490
      %492 = vmatmul.f32.gmra.mxu0 %v377
      %v493 = vpop.f32.mrf.mxu0
      %v494 = vadd.f32 0.0, %v493
      %495 = vmatmul.f32.gmra.mxu0 %v380
      %v496 = vpop.f32.mrf.mxu0
      %v497 = vadd.f32 0.0, %v496
      %498 = vmatmul.f32.gmra.mxu0 %v383
      %v499 = vpop.f32.mrf.mxu0
      %v500 = vadd.f32 0.0, %v499
      %501 = vmatmul.f32.gmra.mxu0 %v386
      %v502 = vpop.f32.mrf.mxu0
      %v503 = vadd.f32 0.0, %v502
      %504 = vmatmul.f32.gmra.mxu0 %v389
      %v505 = vpop.f32.mrf.mxu0
      %v506 = vadd.f32 0.0, %v505
      %507 = vmatmul.f32.gmra.mxu0 %v392
      %v508 = vpop.f32.mrf.mxu0
      %v509 = vadd.f32 0.0, %v508
      %510 = vmatmul.f32.gmra.mxu0 %v395
      %v511 = vpop.f32.mrf.mxu0
      %v512 = vadd.f32 0.0, %v511
      %513 = vmatmul.f32.gmra.mxu0 %v398
      %v514 = vpop.f32.mrf.mxu0
      %v515 = vadd.f32 0.0, %v514
      %516 = vmatmul.f32.gmra.mxu0 %v401
      %v517 = vpop.f32.mrf.mxu0
      %v518 = vadd.f32 0.0, %v517
      %519 = vmatmul.f32.gmra.mxu0 %v404
      %v520 = vpop.f32.mrf.mxu0
      %v521 = vadd.f32 0.0, %v520
      %522 = vmatmul.f32.gmra.mxu0 %v407
      %v523 = vpop.f32.mrf.mxu0
      %v524 = vadd.f32 0.0, %v523
      %525 = vmatmul.f32.gmra.mxu0 %v410
      %v526 = vpop.f32.mrf.mxu0
      %v527 = vadd.f32 0.0, %v526
      %528 = vmatmul.f32.gmra.mxu0 %v413
      %v529 = vpop.f32.mrf.mxu0
      %v530 = vadd.f32 0.0, %v529
      %531 = vmatmul.f32.gmra.mxu0 %v416
      %v532 = vpop.f32.mrf.mxu0
      %v533 = vadd.f32 0.0, %v532
      %534 = vmatmul.f32.gmra.mxu0 %v419
      %v535 = vpop.f32.mrf.mxu0
      %v536 = vadd.f32 0.0, %v535
      %537 = vmatmul.f32.gmra.mxu0 %v422
      %v538 = vpop.f32.mrf.mxu0
      %v539 = vadd.f32 0.0, %v538
      %540 = vmatmul.f32.gmra.mxu0 %v425
      %v541 = vpop.f32.mrf.mxu0
      %v542 = vadd.f32 0.0, %v541
      %543 = vmatmul.f32.gmra.mxu0 %v428
      %v544 = vpop.f32.mrf.mxu0
      %v545 = vadd.f32 0.0, %v544
      %546 = vmatmul.f32.gmra.mxu0 %v431
      %v547 = vpop.f32.mrf.mxu0
      %v548 = vadd.f32 0.0, %v547
      %549 = vmatmul.f32.gmra.mxu0 %v434
      %v550 = vpop.f32.mrf.mxu0
      %v551 = vadd.f32 0.0, %v550
      %552 = vdwg.mxu0
      %v554 = vsel %vm339, %v272, 0
      %v557 = vsel %vm339, %v273, 0
      %v560 = vsel %vm339, %v274, 0
      %v563 = vsel %vm339, %v275, 0
      %v566 = vsel %vm339, %v276, 0
      %v569 = vsel %vm339, %v277, 0
      %v572 = vsel %vm339, %v278, 0
      %v575 = vsel %vm339, %v279, 0
      %v578 = vsel %vm339, %v280, 0
      %v581 = vsel %vm339, %v281, 0
      %v584 = vsel %vm339, %v282, 0
      %v587 = vsel %vm339, %v283, 0
      %v590 = vsel %vm339, %v284, 0
      %v593 = vsel %vm339, %v285, 0
      %v596 = vsel %vm339, %v286, 0
      %v599 = vsel %vm339, %v287, 0
      %v602 = vsel %vm339, %v288, 0
      %v605 = vsel %vm339, %v289, 0
      %v608 = vsel %vm339, %v290, 0
      %v611 = vsel %vm339, %v291, 0
      %v614 = vsel %vm339, %v292, 0
      %v617 = vsel %vm339, %v293, 0
      %v620 = vsel %vm339, %v294, 0
      %v623 = vsel %vm339, %v295, 0
      %v626 = vsel %vm339, %v296, 0
      %v629 = vsel %vm339, %v297, 0
      %v632 = vsel %vm339, %v298, 0
      %v635 = vsel %vm339, %v299, 0
      %v638 = vsel %vm339, %v300, 0
      %v641 = vsel %vm339, %v301, 0
      %v644 = vsel %vm339, %v302, 0
      %v647 = vsel %vm339, %v303, 0
      %v650 = vsel %vm436, %v304, 0
      %652 = vmatpush.msra.mxu0 0.0
      %653 = vmatpush.msra.mxu0 0.0
      %654 = vmatpush.msra.mxu0 0.0
      %655 = vmatpush.msra.mxu0 0.0
      %656 = vmatpush.msra.mxu0 0.0
      %657 = vmatpush.msra.mxu0 0.0
      %658 = vmatpush.msra.mxu0 0.0
      %659 = vmatpush.msra.mxu0 0.0
      %660 = vmatpush.msra.mxu0 0.0
      %661 = vmatpush.msra.mxu0 0.0
      %662 = vmatpush.msra.mxu0 0.0
      %663 = vmatpush.msra.mxu0 0.0
      %664 = vmatpush.msra.mxu0 0.0
      %665 = vmatpush.msra.mxu0 0.0
      %666 = vmatpush.msra.mxu0 0.0
      %667 = vmatpush.msra.mxu0 %v650
      %668 = vmatmul.f32.gmra.mxu0 %v554
      %v669 = vpop.f32.mrf.mxu0
      %v670 = vadd.f32 %v458, %v669
      %671 = vmatmul.f32.gmra.mxu0 %v557
      %v672 = vpop.f32.mrf.mxu0
      %v673 = vadd.f32 %v461, %v672
      %674 = vmatmul.f32.gmra.mxu0 %v560
      %v675 = vpop.f32.mrf.mxu0
      %v676 = vadd.f32 %v464, %v675
      %677 = vmatmul.f32.gmra.mxu0 %v563
      %v678 = vpop.f32.mrf.mxu0
      %v679 = vadd.f32 %v467, %v678
      %680 = vmatmul.f32.gmra.mxu0 %v566
      %v681 = vpop.f32.mrf.mxu0
      %v682 = vadd.f32 %v470, %v681
      %683 = vmatmul.f32.gmra.mxu0 %v569
      %v684 = vpop.f32.mrf.mxu0
      %v685 = vadd.f32 %v473, %v684
      %686 = vmatmul.f32.gmra.mxu0 %v572
      %v687 = vpop.f32.mrf.mxu0
      %v688 = vadd.f32 %v476, %v687
      %689 = vmatmul.f32.gmra.mxu0 %v575
      %v690 = vpop.f32.mrf.mxu0
      %v691 = vadd.f32 %v479, %v690
      %692 = vmatmul.f32.gmra.mxu0 %v578
      %v693 = vpop.f32.mrf.mxu0
      %v694 = vadd.f32 %v482, %v693
      %695 = vmatmul.f32.gmra.mxu0 %v581
      %v696 = vpop.f32.mrf.mxu0
      %v697 = vadd.f32 %v485, %v696
      %698 = vmatmul.f32.gmra.mxu0 %v584
      %v699 = vpop.f32.mrf.mxu0
      %v700 = vadd.f32 %v488, %v699
      %701 = vmatmul.f32.gmra.mxu0 %v587
      %v702 = vpop.f32.mrf.mxu0
      %v703 = vadd.f32 %v491, %v702
      %704 = vmatmul.f32.gmra.mxu0 %v590
      %v705 = vpop.f32.mrf.mxu0
      %v706 = vadd.f32 %v494, %v705
      %707 = vmatmul.f32.gmra.mxu0 %v593
      %v708 = vpop.f32.mrf.mxu0
      %v709 = vadd.f32 %v497, %v708
      %710 = vmatmul.f32.gmra.mxu0 %v596
      %v711 = vpop.f32.mrf.mxu0
      %v712 = vadd.f32 %v500, %v711
      %713 = vmatmul.f32.gmra.mxu0 %v599
      %v714 = vpop.f32.mrf.mxu0
      %v715 = vadd.f32 %v503, %v714
      %716 = vmatmul.f32.gmra.mxu0 %v602
      %v717 = vpop.f32.mrf.mxu0
      %v718 = vadd.f32 %v506, %v717
      %719 = vmatmul.f32.gmra.mxu0 %v605
      %v720 = vpop.f32.mrf.mxu0
      %v721 = vadd.f32 %v509, %v720
      %722 = vmatmul.f32.gmra.mxu0 %v608
      %v723 = vpop.f32.mrf.mxu0
      %v724 = vadd.f32 %v512, %v723
      %725 = vmatmul.f32.gmra.mxu0 %v611
      %v726 = vpop.f32.mrf.mxu0
      %v727 = vadd.f32 %v515, %v726
      %728 = vmatmul.f32.gmra.mxu0 %v614
      %v729 = vpop.f32.mrf.mxu0
      %v730 = vadd.f32 %v518, %v729
      %731 = vmatmul.f32.gmra.mxu0 %v617
      %v732 = vpop.f32.mrf.mxu0
      %v733 = vadd.f32 %v521, %v732
      %734 = vmatmul.f32.gmra.mxu0 %v620
      %v735 = vpop.f32.mrf.mxu0
      %v736 = vadd.f32 %v524, %v735
      %737 = vmatmul.f32.gmra.mxu0 %v623
      %v738 = vpop.f32.mrf.mxu0
      %v739 = vadd.f32 %v527, %v738
      %740 = vmatmul.f32.gmra.mxu0 %v626
      %v741 = vpop.f32.mrf.mxu0
      %v742 = vadd.f32 %v530, %v741
      %743 = vmatmul.f32.gmra.mxu0 %v629
      %v744 = vpop.f32.mrf.mxu0
      %v745 = vadd.f32 %v533, %v744
      %746 = vmatmul.f32.gmra.mxu0 %v632
      %v747 = vpop.f32.mrf.mxu0
      %v748 = vadd.f32 %v536, %v747
      %749 = vmatmul.f32.gmra.mxu0 %v635
      %v750 = vpop.f32.mrf.mxu0
      %v751 = vadd.f32 %v539, %v750
      %752 = vmatmul.f32.gmra.mxu0 %v638
      %v753 = vpop.f32.mrf.mxu0
      %v754 = vadd.f32 %v542, %v753
      %755 = vmatmul.f32.gmra.mxu0 %v641
      %v756 = vpop.f32.mrf.mxu0
      %v757 = vadd.f32 %v545, %v756
      %758 = vmatmul.f32.gmra.mxu0 %v644
      %v759 = vpop.f32.mrf.mxu0
      %v760 = vadd.f32 %v548, %v759
      %761 = vmatmul.f32.gmra.mxu0 %v647
      %v762 = vpop.f32.mrf.mxu0
      %v763 = vadd.f32 %v551, %v762
      %764 = vdwg.mxu0
      %v765 = vld [vmem:[%s261 + $0x2] sm:$0xff]
      %v766 = vld [vmem:[%s261 + $0xa] sm:$0xff]
      %v767 = vld [vmem:[%s261 + $0x1a] sm:$0xff]
      %v768 = vld [vmem:[%s261 + $0x22] sm:$0xff]
      %v769 = vld [vmem:[%s261 + $0x32] sm:$0xff]
      %v770 = vld [vmem:[%s261 + $0x3a] sm:$0xff]
      %v771 = vld [vmem:[%s261 + $0x4a] sm:$0xff]
      %v772 = vld [vmem:[%s261 + $0x52] sm:$0xff]
      %v773 = vld [vmem:[%s261 + $0x62] sm:$0xff]
      %v774 = vld [vmem:[%s261 + $0x6a] sm:$0xff]
      %v775 = vld [vmem:[%s261 + $0x7a] sm:$0xff]
      %v776 = vld [vmem:[%s261 + $0x82] sm:$0xff]
      %v777 = vld [vmem:[%s261 + $0x92] sm:$0xff]
      %v778 = vld [vmem:[%s261 + $0x9a] sm:$0xff]
      %v779 = vld [vmem:[%s261 + $0xaa] sm:$0xff]
      %v780 = vld [vmem:[%s261 + $0xb2] sm:$0xff]
      %v781 = vld [vmem:[%s261 + $0xc2] sm:$0xff]
      %v782 = vld [vmem:[%s261 + $0xca] sm:$0xff]
      %v783 = vld [vmem:[%s261 + $0xda] sm:$0xff]
      %v784 = vld [vmem:[%s261 + $0xe2] sm:$0xff]
      %v785 = vld [vmem:[%s261 + $0xf2] sm:$0xff]
      %v786 = vld [vmem:[%s261 + $0xfa] sm:$0xff]
      %v787 = vld [vmem:[%s261 + $0x10a] sm:$0xff]
      %v788 = vld [vmem:[%s261 + $0x112] sm:$0xff]
      %v789 = vld [vmem:[%s261 + $0x122] sm:$0xff]
      %v790 = vld [vmem:[%s261 + $0x12a] sm:$0xff]
      %v791 = vld [vmem:[%s261 + $0x13a] sm:$0xff]
      %v792 = vld [vmem:[%s261 + $0x142] sm:$0xff]
      %v793 = vld [vmem:[%s261 + $0x152] sm:$0xff]
      %v794 = vld [vmem:[%s261 + $0x15a] sm:$0xff]
      %v795 = vld [vmem:[%s261 + $0x16a] sm:$0xff]
      %v796 = vld [vmem:[%s261 + $0x172] sm:$0xff]
      %s797 = scalar_lea.vmem %s2, 4
      %v798 = vld [vmem:[%s797] sm:$0x3]
      %v800 = vsel %vm339, %v765, 0
      %v803 = vsel %vm339, %v766, 0
      %v806 = vsel %vm339, %v767, 0
      %v809 = vsel %vm339, %v768, 0
      %v812 = vsel %vm339, %v769, 0
      %v815 = vsel %vm339, %v770, 0
      %v818 = vsel %vm339, %v771, 0
      %v821 = vsel %vm339, %v772, 0
      %v824 = vsel %vm339, %v773, 0
      %v827 = vsel %vm339, %v774, 0
      %v830 = vsel %vm339, %v775, 0
      %v833 = vsel %vm339, %v776, 0
      %v836 = vsel %vm339, %v777, 0
      %v839 = vsel %vm339, %v778, 0
      %v842 = vsel %vm339, %v779, 0
      %v845 = vsel %vm339, %v780, 0
      %v848 = vsel %vm339, %v781, 0
      %v851 = vsel %vm339, %v782, 0
      %v854 = vsel %vm339, %v783, 0
      %v857 = vsel %vm339, %v784, 0
      %v860 = vsel %vm339, %v785, 0
      %v863 = vsel %vm339, %v786, 0
      %v866 = vsel %vm339, %v787, 0
      %v869 = vsel %vm339, %v788, 0
      %v872 = vsel %vm339, %v789, 0
      %v875 = vsel %vm339, %v790, 0
      %v878 = vsel %vm339, %v791, 0
      %v881 = vsel %vm339, %v792, 0
      %v884 = vsel %vm339, %v793, 0
      %v887 = vsel %vm339, %v794, 0
      %v890 = vsel %vm339, %v795, 0
      %v893 = vsel %vm339, %v796, 0
      %v896 = vsel %vm436, %v798, 0
      %898 = vmatpush.msra.mxu0 0.0
      %899 = vmatpush.msra.mxu0 0.0
      %900 = vmatpush.msra.mxu0 0.0
      %901 = vmatpush.msra.mxu0 0.0
      %902 = vmatpush.msra.mxu0 0.0
      %903 = vmatpush.msra.mxu0 0.0
      %904 = vmatpush.msra.mxu0 0.0
      %905 = vmatpush.msra.mxu0 0.0
      %906 = vmatpush.msra.mxu0 0.0
      %907 = vmatpush.msra.mxu0 0.0
      %908 = vmatpush.msra.mxu0 0.0
      %909 = vmatpush.msra.mxu0 0.0
      %910 = vmatpush.msra.mxu0 0.0
      %911 = vmatpush.msra.mxu0 0.0
      %912 = vmatpush.msra.mxu0 0.0
      %913 = vmatpush.msra.mxu0 %v896
      %914 = vmatmul.f32.gmra.mxu0 %v800
      %v915 = vpop.f32.mrf.mxu0
      %v916 = vadd.f32 0.0, %v915
      %917 = vmatmul.f32.gmra.mxu0 %v803
      %v918 = vpop.f32.mrf.mxu0
      %v919 = vadd.f32 0.0, %v918
      %920 = vmatmul.f32.gmra.mxu0 %v806
      %v921 = vpop.f32.mrf.mxu0
      %v922 = vadd.f32 0.0, %v921
      %923 = vmatmul.f32.gmra.mxu0 %v809
      %v924 = vpop.f32.mrf.mxu0
      %v925 = vadd.f32 0.0, %v924
      %926 = vmatmul.f32.gmra.mxu0 %v812
      %v927 = vpop.f32.mrf.mxu0
      %v928 = vadd.f32 0.0, %v927
      %929 = vmatmul.f32.gmra.mxu0 %v815
      %v930 = vpop.f32.mrf.mxu0
      %v931 = vadd.f32 0.0, %v930
      %932 = vmatmul.f32.gmra.mxu0 %v818
      %v933 = vpop.f32.mrf.mxu0
      %v934 = vadd.f32 0.0, %v933
      %935 = vmatmul.f32.gmra.mxu0 %v821
      %v936 = vpop.f32.mrf.mxu0
      %v937 = vadd.f32 0.0, %v936
      %938 = vmatmul.f32.gmra.mxu0 %v824
      %v939 = vpop.f32.mrf.mxu0
      %v940 = vadd.f32 0.0, %v939
      %941 = vmatmul.f32.gmra.mxu0 %v827
      %v942 = vpop.f32.mrf.mxu0
      %v943 = vadd.f32 0.0, %v942
      %944 = vmatmul.f32.gmra.mxu0 %v830
      %v945 = vpop.f32.mrf.mxu0
      %v946 = vadd.f32 0.0, %v945
      %947 = vmatmul.f32.gmra.mxu0 %v833
      %v948 = vpop.f32.mrf.mxu0
      %v949 = vadd.f32 0.0, %v948
      %950 = vmatmul.f32.gmra.mxu0 %v836
      %v951 = vpop.f32.mrf.mxu0
      %v952 = vadd.f32 0.0, %v951
      %953 = vmatmul.f32.gmra.mxu0 %v839
      %v954 = vpop.f32.mrf.mxu0
      %v955 = vadd.f32 0.0, %v954
      %956 = vmatmul.f32.gmra.mxu0 %v842
      %v957 = vpop.f32.mrf.mxu0
      %v958 = vadd.f32 0.0, %v957
      %959 = vmatmul.f32.gmra.mxu0 %v845
      %v960 = vpop.f32.mrf.mxu0
      %v961 = vadd.f32 0.0, %v960
      %962 = vmatmul.f32.gmra.mxu0 %v848
      %v963 = vpop.f32.mrf.mxu0
      %v964 = vadd.f32 0.0, %v963
      %965 = vmatmul.f32.gmra.mxu0 %v851
      %v966 = vpop.f32.mrf.mxu0
      %v967 = vadd.f32 0.0, %v966
      %968 = vmatmul.f32.gmra.mxu0 %v854
      %v969 = vpop.f32.mrf.mxu0
      %v970 = vadd.f32 0.0, %v969
      %971 = vmatmul.f32.gmra.mxu0 %v857
      %v972 = vpop.f32.mrf.mxu0
      %v973 = vadd.f32 0.0, %v972
      %974 = vmatmul.f32.gmra.mxu0 %v860
      %v975 = vpop.f32.mrf.mxu0
      %v976 = vadd.f32 0.0, %v975
      %977 = vmatmul.f32.gmra.mxu0 %v863
      %v978 = vpop.f32.mrf.mxu0
      %v979 = vadd.f32 0.0, %v978
      %980 = vmatmul.f32.gmra.mxu0 %v866
      %v981 = vpop.f32.mrf.mxu0
      %v982 = vadd.f32 0.0, %v981
      %983 = vmatmul.f32.gmra.mxu0 %v869
      %v984 = vpop.f32.mrf.mxu0
      %v985 = vadd.f32 0.0, %v984
      %986 = vmatmul.f32.gmra.mxu0 %v872
      %v987 = vpop.f32.mrf.mxu0
      %v988 = vadd.f32 0.0, %v987
      %989 = vmatmul.f32.gmra.mxu0 %v875
      %v990 = vpop.f32.mrf.mxu0
      %v991 = vadd.f32 0.0, %v990
      %992 = vmatmul.f32.gmra.mxu0 %v878
      %v993 = vpop.f32.mrf.mxu0
      %v994 = vadd.f32 0.0, %v993
      %995 = vmatmul.f32.gmra.mxu0 %v881
      %v996 = vpop.f32.mrf.mxu0
      %v997 = vadd.f32 0.0, %v996
      %998 = vmatmul.f32.gmra.mxu0 %v884
      %v999 = vpop.f32.mrf.mxu0
      %v1000 = vadd.f32 0.0, %v999
      %1001 = vmatmul.f32.gmra.mxu0 %v887
      %v1002 = vpop.f32.mrf.mxu0
      %v1003 = vadd.f32 0.0, %v1002
      %1004 = vmatmul.f32.gmra.mxu0 %v890
      %v1005 = vpop.f32.mrf.mxu0
      %v1006 = vadd.f32 0.0, %v1005
      %1007 = vmatmul.f32.gmra.mxu0 %v893
      %v1008 = vpop.f32.mrf.mxu0
      %v1009 = vadd.f32 0.0, %v1008
      %1010 = vdwg.mxu0
      %v1011 = vadd.f32 %v670, %v916
      %v1012 = vadd.f32 %v673, %v919
      %v1013 = vadd.f32 %v676, %v922
      %v1014 = vadd.f32 %v679, %v925
      %v1015 = vadd.f32 %v682, %v928
      %v1016 = vadd.f32 %v685, %v931
      %v1017 = vadd.f32 %v688, %v934
      %v1018 = vadd.f32 %v691, %v937
      %v1019 = vadd.f32 %v694, %v940
      %v1020 = vadd.f32 %v697, %v943
      %v1021 = vadd.f32 %v700, %v946
      %v1022 = vadd.f32 %v703, %v949
      %v1023 = vadd.f32 %v706, %v952
      %v1024 = vadd.f32 %v709, %v955
      %v1025 = vadd.f32 %v712, %v958
      %v1026 = vadd.f32 %v715, %v961
      %v1027 = vadd.f32 %v718, %v964
      %v1028 = vadd.f32 %v721, %v967
      %v1029 = vadd.f32 %v724, %v970
      %v1030 = vadd.f32 %v727, %v973
      %v1031 = vadd.f32 %v730, %v976
      %v1032 = vadd.f32 %v733, %v979
      %v1033 = vadd.f32 %v736, %v982
      %v1034 = vadd.f32 %v739, %v985
      %v1035 = vadd.f32 %v742, %v988
      %v1036 = vadd.f32 %v745, %v991
      %v1037 = vadd.f32 %v748, %v994
      %v1038 = vadd.f32 %v751, %v997
      %v1039 = vadd.f32 %v754, %v1000
      %v1040 = vadd.f32 %v757, %v1003
      %v1041 = vadd.f32 %v760, %v1006
      %v1042 = vadd.f32 %v763, %v1009
      %s1043 = scalar_lea.vmem %s261, 24
      %v1044 = vld [vmem:[%s1043] sm:$0xff]
      %v1045 = vld [vmem:[%s1043 + $0x8] sm:$0xff]
      %v1046 = vld [vmem:[%s1043 + $0x18] sm:$0xff]
      %v1047 = vld [vmem:[%s1043 + $0x20] sm:$0xff]
      %v1048 = vld [vmem:[%s1043 + $0x30] sm:$0xff]
      %v1049 = vld [vmem:[%s1043 + $0x38] sm:$0xff]
      %v1050 = vld [vmem:[%s1043 + $0x48] sm:$0xff]
      %v1051 = vld [vmem:[%s1043 + $0x50] sm:$0xff]
      %v1052 = vld [vmem:[%s1043 + $0x60] sm:$0xff]
      %v1053 = vld [vmem:[%s1043 + $0x68] sm:$0xff]
      %v1054 = vld [vmem:[%s1043 + $0x78] sm:$0xff]
      %v1055 = vld [vmem:[%s1043 + $0x80] sm:$0xff]
      %v1056 = vld [vmem:[%s1043 + $0x90] sm:$0xff]
      %v1057 = vld [vmem:[%s1043 + $0x98] sm:$0xff]
      %v1058 = vld [vmem:[%s1043 + $0xa8] sm:$0xff]
      %v1059 = vld [vmem:[%s1043 + $0xb0] sm:$0xff]
      %v1060 = vld [vmem:[%s1043 + $0xc0] sm:$0xff]
      %v1061 = vld [vmem:[%s1043 + $0xc8] sm:$0xff]
      %v1062 = vld [vmem:[%s1043 + $0xd8] sm:$0xff]
      %v1063 = vld [vmem:[%s1043 + $0xe0] sm:$0xff]
      %v1064 = vld [vmem:[%s1043 + $0xf0] sm:$0xff]
      %v1065 = vld [vmem:[%s1043 + $0xf8] sm:$0xff]
      %v1066 = vld [vmem:[%s1043 + $0x108] sm:$0xff]
      %v1067 = vld [vmem:[%s1043 + $0x110] sm:$0xff]
      %v1068 = vld [vmem:[%s1043 + $0x120] sm:$0xff]
      %v1069 = vld [vmem:[%s1043 + $0x128] sm:$0xff]
      %v1070 = vld [vmem:[%s1043 + $0x138] sm:$0xff]
      %v1071 = vld [vmem:[%s1043 + $0x140] sm:$0xff]
      %v1072 = vld [vmem:[%s1043 + $0x150] sm:$0xff]
      %v1073 = vld [vmem:[%s1043 + $0x158] sm:$0xff]
      %v1074 = vld [vmem:[%s1043 + $0x168] sm:$0xff]
      %v1075 = vld [vmem:[%s1043 + $0x170] sm:$0xff]
      %s1076 = scalar_lea.vmem %s2, 6
      %v1077 = vld [vmem:[%s1076] sm:$0x3]
      %v1079 = vsel %vm339, %v1044, 0
      %v1082 = vsel %vm339, %v1045, 0
      %v1085 = vsel %vm339, %v1046, 0
      %v1088 = vsel %vm339, %v1047, 0
      %v1091 = vsel %vm339, %v1048, 0
      %v1094 = vsel %vm339, %v1049, 0
      %v1097 = vsel %vm339, %v1050, 0
      %v1100 = vsel %vm339, %v1051, 0
      %v1103 = vsel %vm339, %v1052, 0
      %v1106 = vsel %vm339, %v1053, 0
      %v1109 = vsel %vm339, %v1054, 0
      %v1112 = vsel %vm339, %v1055, 0
      %v1115 = vsel %vm339, %v1056, 0
      %v1118 = vsel %vm339, %v1057, 0
      %v1121 = vsel %vm339, %v1058, 0
      %v1124 = vsel %vm339, %v1059, 0
      %v1127 = vsel %vm339, %v1060, 0
      %v1130 = vsel %vm339, %v1061, 0
      %v1133 = vsel %vm339, %v1062, 0
      %v1136 = vsel %vm339, %v1063, 0
      %v1139 = vsel %vm339, %v1064, 0
      %v1142 = vsel %vm339, %v1065, 0
      %v1145 = vsel %vm339, %v1066, 0
      %v1148 = vsel %vm339, %v1067, 0
      %v1151 = vsel %vm339, %v1068, 0
      %v1154 = vsel %vm339, %v1069, 0
      %v1157 = vsel %vm339, %v1070, 0
      %v1160 = vsel %vm339, %v1071, 0
      %v1163 = vsel %vm339, %v1072, 0
      %v1166 = vsel %vm339, %v1073, 0
      %v1169 = vsel %vm339, %v1074, 0
      %v1172 = vsel %vm339, %v1075, 0
      %v1175 = vsel %vm436, %v1077, 0
      %1177 = vmatpush.msra.mxu0 0.0
      %1178 = vmatpush.msra.mxu0 0.0
      %1179 = vmatpush.msra.mxu0 0.0
      %1180 = vmatpush.msra.mxu0 0.0
      %1181 = vmatpush.msra.mxu0 0.0
      %1182 = vmatpush.msra.mxu0 0.0
      %1183 = vmatpush.msra.mxu0 0.0
      %1184 = vmatpush.msra.mxu0 0.0
      %1185 = vmatpush.msra.mxu0 0.0
      %1186 = vmatpush.msra.mxu0 0.0
      %1187 = vmatpush.msra.mxu0 0.0
      %1188 = vmatpush.msra.mxu0 0.0
      %1189 = vmatpush.msra.mxu0 0.0
      %1190 = vmatpush.msra.mxu0 0.0
      %1191 = vmatpush.msra.mxu0 0.0
      %1192 = vmatpush.msra.mxu0 %v1175
      %1193 = vmatmul.f32.gmra.mxu0 %v1079
      %v1194 = vpop.f32.mrf.mxu0
      %v1195 = vadd.f32 0.0, %v1194
      %1196 = vmatmul.f32.gmra.mxu0 %v1082
      %v1197 = vpop.f32.mrf.mxu0
      %v1198 = vadd.f32 0.0, %v1197
      %1199 = vmatmul.f32.gmra.mxu0 %v1085
      %v1200 = vpop.f32.mrf.mxu0
      %v1201 = vadd.f32 0.0, %v1200
      %1202 = vmatmul.f32.gmra.mxu0 %v1088
      %v1203 = vpop.f32.mrf.mxu0
      %v1204 = vadd.f32 0.0, %v1203
      %1205 = vmatmul.f32.gmra.mxu0 %v1091
      %v1206 = vpop.f32.mrf.mxu0
      %v1207 = vadd.f32 0.0, %v1206
      %1208 = vmatmul.f32.gmra.mxu0 %v1094
      %v1209 = vpop.f32.mrf.mxu0
      %v1210 = vadd.f32 0.0, %v1209
      %1211 = vmatmul.f32.gmra.mxu0 %v1097
      %v1212 = vpop.f32.mrf.mxu0
      %v1213 = vadd.f32 0.0, %v1212
      %1214 = vmatmul.f32.gmra.mxu0 %v1100
      %v1215 = vpop.f32.mrf.mxu0
      %v1216 = vadd.f32 0.0, %v1215
      %1217 = vmatmul.f32.gmra.mxu0 %v1103
      %v1218 = vpop.f32.mrf.mxu0
      %v1219 = vadd.f32 0.0, %v1218
      %1220 = vmatmul.f32.gmra.mxu0 %v1106
      %v1221 = vpop.f32.mrf.mxu0
      %v1222 = vadd.f32 0.0, %v1221
      %1223 = vmatmul.f32.gmra.mxu0 %v1109
      %v1224 = vpop.f32.mrf.mxu0
      %v1225 = vadd.f32 0.0, %v1224
      %1226 = vmatmul.f32.gmra.mxu0 %v1112
      %v1227 = vpop.f32.mrf.mxu0
      %v1228 = vadd.f32 0.0, %v1227
      %1229 = vmatmul.f32.gmra.mxu0 %v1115
      %v1230 = vpop.f32.mrf.mxu0
      %v1231 = vadd.f32 0.0, %v1230
      %1232 = vmatmul.f32.gmra.mxu0 %v1118
      %v1233 = vpop.f32.mrf.mxu0
      %v1234 = vadd.f32 0.0, %v1233
      %1235 = vmatmul.f32.gmra.mxu0 %v1121
      %v1236 = vpop.f32.mrf.mxu0
      %v1237 = vadd.f32 0.0, %v1236
      %1238 = vmatmul.f32.gmra.mxu0 %v1124
      %v1239 = vpop.f32.mrf.mxu0
      %v1240 = vadd.f32 0.0, %v1239
      %1241 = vmatmul.f32.gmra.mxu0 %v1127
      %v1242 = vpop.f32.mrf.mxu0
      %v1243 = vadd.f32 0.0, %v1242
      %1244 = vmatmul.f32.gmra.mxu0 %v1130
      %v1245 = vpop.f32.mrf.mxu0
      %v1246 = vadd.f32 0.0, %v1245
      %1247 = vmatmul.f32.gmra.mxu0 %v1133
      %v1248 = vpop.f32.mrf.mxu0
      %v1249 = vadd.f32 0.0, %v1248
      %1250 = vmatmul.f32.gmra.mxu0 %v1136
      %v1251 = vpop.f32.mrf.mxu0
      %v1252 = vadd.f32 0.0, %v1251
      %1253 = vmatmul.f32.gmra.mxu0 %v1139
      %v1254 = vpop.f32.mrf.mxu0
      %v1255 = vadd.f32 0.0, %v1254
      %1256 = vmatmul.f32.gmra.mxu0 %v1142
      %v1257 = vpop.f32.mrf.mxu0
      %v1258 = vadd.f32 0.0, %v1257
      %1259 = vmatmul.f32.gmra.mxu0 %v1145
      %v1260 = vpop.f32.mrf.mxu0
      %v1261 = vadd.f32 0.0, %v1260
      %1262 = vmatmul.f32.gmra.mxu0 %v1148
      %v1263 = vpop.f32.mrf.mxu0
      %v1264 = vadd.f32 0.0, %v1263
      %1265 = vmatmul.f32.gmra.mxu0 %v1151
      %v1266 = vpop.f32.mrf.mxu0
      %v1267 = vadd.f32 0.0, %v1266
      %1268 = vmatmul.f32.gmra.mxu0 %v1154
      %v1269 = vpop.f32.mrf.mxu0
      %v1270 = vadd.f32 0.0, %v1269
      %1271 = vmatmul.f32.gmra.mxu0 %v1157
      %v1272 = vpop.f32.mrf.mxu0
      %v1273 = vadd.f32 0.0, %v1272
      %1274 = vmatmul.f32.gmra.mxu0 %v1160
      %v1275 = vpop.f32.mrf.mxu0
      %v1276 = vadd.f32 0.0, %v1275
      %1277 = vmatmul.f32.gmra.mxu0 %v1163
      %v1278 = vpop.f32.mrf.mxu0
      %v1279 = vadd.f32 0.0, %v1278
      %1280 = vmatmul.f32.gmra.mxu0 %v1166
      %v1281 = vpop.f32.mrf.mxu0
      %v1282 = vadd.f32 0.0, %v1281
      %1283 = vmatmul.f32.gmra.mxu0 %v1169
      %v1284 = vpop.f32.mrf.mxu0
      %v1285 = vadd.f32 0.0, %v1284
      %1286 = vmatmul.f32.gmra.mxu0 %v1172
      %v1287 = vpop.f32.mrf.mxu0
      %v1288 = vadd.f32 0.0, %v1287
      %1289 = vdwg.mxu0
      %v1290 = vadd.f32 %v1011, %v1195
      %v1291 = vadd.f32 %v1012, %v1198
      %v1292 = vadd.f32 %v1013, %v1201
      %v1293 = vadd.f32 %v1014, %v1204
      %v1294 = vadd.f32 %v1015, %v1207
      %v1295 = vadd.f32 %v1016, %v1210
      %v1296 = vadd.f32 %v1017, %v1213
      %v1297 = vadd.f32 %v1018, %v1216
      %v1298 = vadd.f32 %v1019, %v1219
      %v1299 = vadd.f32 %v1020, %v1222
      %v1300 = vadd.f32 %v1021, %v1225
      %v1301 = vadd.f32 %v1022, %v1228
      %v1302 = vadd.f32 %v1023, %v1231
      %v1303 = vadd.f32 %v1024, %v1234
      %v1304 = vadd.f32 %v1025, %v1237
      %v1305 = vadd.f32 %v1026, %v1240
      %v1306 = vadd.f32 %v1027, %v1243
      %v1307 = vadd.f32 %v1028, %v1246
      %v1308 = vadd.f32 %v1029, %v1249
      %v1309 = vadd.f32 %v1030, %v1252
      %v1310 = vadd.f32 %v1031, %v1255
      %v1311 = vadd.f32 %v1032, %v1258
      %v1312 = vadd.f32 %v1033, %v1261
      %v1313 = vadd.f32 %v1034, %v1264
      %v1314 = vadd.f32 %v1035, %v1267
      %v1315 = vadd.f32 %v1036, %v1270
      %v1316 = vadd.f32 %v1037, %v1273
      %v1317 = vadd.f32 %v1038, %v1276
      %v1318 = vadd.f32 %v1039, %v1279
      %v1319 = vadd.f32 %v1040, %v1282
      %v1320 = vadd.f32 %v1041, %v1285
      %v1321 = vadd.f32 %v1042, %v1288
      %v1322 = vld [vmem:[%s1043 + $0x1] sm:$0xff]
      %v1323 = vld [vmem:[%s1043 + $0x9] sm:$0xff]
      %v1324 = vld [vmem:[%s1043 + $0x19] sm:$0xff]
      %v1325 = vld [vmem:[%s1043 + $0x21] sm:$0xff]
      %v1326 = vld [vmem:[%s1043 + $0x31] sm:$0xff]
      %v1327 = vld [vmem:[%s1043 + $0x39] sm:$0xff]
      %v1328 = vld [vmem:[%s1043 + $0x49] sm:$0xff]
      %v1329 = vld [vmem:[%s1043 + $0x51] sm:$0xff]
      %v1330 = vld [vmem:[%s1043 + $0x61] sm:$0xff]
      %v1331 = vld [vmem:[%s1043 + $0x69] sm:$0xff]
      %v1332 = vld [vmem:[%s1043 + $0x79] sm:$0xff]
      %v1333 = vld [vmem:[%s1043 + $0x81] sm:$0xff]
      %v1334 = vld [vmem:[%s1043 + $0x91] sm:$0xff]
      %v1335 = vld [vmem:[%s1043 + $0x99] sm:$0xff]
      %v1336 = vld [vmem:[%s1043 + $0xa9] sm:$0xff]
      %v1337 = vld [vmem:[%s1043 + $0xb1] sm:$0xff]
      %v1338 = vld [vmem:[%s1043 + $0xc1] sm:$0xff]
      %v1339 = vld [vmem:[%s1043 + $0xc9] sm:$0xff]
      %v1340 = vld [vmem:[%s1043 + $0xd9] sm:$0xff]
      %v1341 = vld [vmem:[%s1043 + $0xe1] sm:$0xff]
      %v1342 = vld [vmem:[%s1043 + $0xf1] sm:$0xff]
      %v1343 = vld [vmem:[%s1043 + $0xf9] sm:$0xff]
      %v1344 = vld [vmem:[%s1043 + $0x109] sm:$0xff]
      %v1345 = vld [vmem:[%s1043 + $0x111] sm:$0xff]
      %v1346 = vld [vmem:[%s1043 + $0x121] sm:$0xff]
      %v1347 = vld [vmem:[%s1043 + $0x129] sm:$0xff]
      %v1348 = vld [vmem:[%s1043 + $0x139] sm:$0xff]
      %v1349 = vld [vmem:[%s1043 + $0x141] sm:$0xff]
      %v1350 = vld [vmem:[%s1043 + $0x151] sm:$0xff]
      %v1351 = vld [vmem:[%s1043 + $0x159] sm:$0xff]
      %v1352 = vld [vmem:[%s1043 + $0x169] sm:$0xff]
      %v1353 = vld [vmem:[%s1043 + $0x171] sm:$0xff]
      %s1354 = scalar_lea.vmem %s2, 8
      %v1355 = vld [vmem:[%s1354] sm:$0x3]
      %v1357 = vsel %vm339, %v1322, 0
      %v1360 = vsel %vm339, %v1323, 0
      %v1363 = vsel %vm339, %v1324, 0
      %v1366 = vsel %vm339, %v1325, 0
      %v1369 = vsel %vm339, %v1326, 0
      %v1372 = vsel %vm339, %v1327, 0
      %v1375 = vsel %vm339, %v1328, 0
      %v1378 = vsel %vm339, %v1329, 0
      %v1381 = vsel %vm339, %v1330, 0
      %v1384 = vsel %vm339, %v1331, 0
      %v1387 = vsel %vm339, %v1332, 0
      %v1390 = vsel %vm339, %v1333, 0
      %v1393 = vsel %vm339, %v1334, 0
      %v1396 = vsel %vm339, %v1335, 0
      %v1399 = vsel %vm339, %v1336, 0
      %v1402 = vsel %vm339, %v1337, 0
      %v1405 = vsel %vm339, %v1338, 0
      %v1408 = vsel %vm339, %v1339, 0
      %v1411 = vsel %vm339, %v1340, 0
      %v1414 = vsel %vm339, %v1341, 0
      %v1417 = vsel %vm339, %v1342, 0
      %v1420 = vsel %vm339, %v1343, 0
      %v1423 = vsel %vm339, %v1344, 0
      %v1426 = vsel %vm339, %v1345, 0
      %v1429 = vsel %vm339, %v1346, 0
      %v1432 = vsel %vm339, %v1347, 0
      %v1435 = vsel %vm339, %v1348, 0
      %v1438 = vsel %vm339, %v1349, 0
      %v1441 = vsel %vm339, %v1350, 0
      %v1444 = vsel %vm339, %v1351, 0
      %v1447 = vsel %vm339, %v1352, 0
      %v1450 = vsel %vm339, %v1353, 0
      %v1453 = vsel %vm436, %v1355, 0
      %1455 = vmatpush.msra.mxu0 0.0
      %1456 = vmatpush.msra.mxu0 0.0
      %1457 = vmatpush.msra.mxu0 0.0
      %1458 = vmatpush.msra.mxu0 0.0
      %1459 = vmatpush.msra.mxu0 0.0
      %1460 = vmatpush.msra.mxu0 0.0
      %1461 = vmatpush.msra.mxu0 0.0
      %1462 = vmatpush.msra.mxu0 0.0
      %1463 = vmatpush.msra.mxu0 0.0
      %1464 = vmatpush.msra.mxu0 0.0
      %1465 = vmatpush.msra.mxu0 0.0
      %1466 = vmatpush.msra.mxu0 0.0
      %1467 = vmatpush.msra.mxu0 0.0
      %1468 = vmatpush.msra.mxu0 0.0
      %1469 = vmatpush.msra.mxu0 0.0
      %1470 = vmatpush.msra.mxu0 %v1453
      %1471 = vmatmul.f32.gmra.mxu0 %v1357
      %v1472 = vpop.f32.mrf.mxu0
      %v1473 = vadd.f32 0.0, %v1472
      %1474 = vmatmul.f32.gmra.mxu0 %v1360
      %v1475 = vpop.f32.mrf.mxu0
      %v1476 = vadd.f32 0.0, %v1475
      %1477 = vmatmul.f32.gmra.mxu0 %v1363
      %v1478 = vpop.f32.mrf.mxu0
      %v1479 = vadd.f32 0.0, %v1478
      %1480 = vmatmul.f32.gmra.mxu0 %v1366
      %v1481 = vpop.f32.mrf.mxu0
      %v1482 = vadd.f32 0.0, %v1481
      %1483 = vmatmul.f32.gmra.mxu0 %v1369
      %v1484 = vpop.f32.mrf.mxu0
      %v1485 = vadd.f32 0.0, %v1484
      %1486 = vmatmul.f32.gmra.mxu0 %v1372
      %v1487 = vpop.f32.mrf.mxu0
      %v1488 = vadd.f32 0.0, %v1487
      %1489 = vmatmul.f32.gmra.mxu0 %v1375
      %v1490 = vpop.f32.mrf.mxu0
      %v1491 = vadd.f32 0.0, %v1490
      %1492 = vmatmul.f32.gmra.mxu0 %v1378
      %v1493 = vpop.f32.mrf.mxu0
      %v1494 = vadd.f32 0.0, %v1493
      %1495 = vmatmul.f32.gmra.mxu0 %v1381
      %v1496 = vpop.f32.mrf.mxu0
      %v1497 = vadd.f32 0.0, %v1496
      %1498 = vmatmul.f32.gmra.mxu0 %v1384
      %v1499 = vpop.f32.mrf.mxu0
      %v1500 = vadd.f32 0.0, %v1499
      %1501 = vmatmul.f32.gmra.mxu0 %v1387
      %v1502 = vpop.f32.mrf.mxu0
      %v1503 = vadd.f32 0.0, %v1502
      %1504 = vmatmul.f32.gmra.mxu0 %v1390
      %v1505 = vpop.f32.mrf.mxu0
      %v1506 = vadd.f32 0.0, %v1505
      %1507 = vmatmul.f32.gmra.mxu0 %v1393
      %v1508 = vpop.f32.mrf.mxu0
      %v1509 = vadd.f32 0.0, %v1508
      %1510 = vmatmul.f32.gmra.mxu0 %v1396
      %v1511 = vpop.f32.mrf.mxu0
      %v1512 = vadd.f32 0.0, %v1511
      %1513 = vmatmul.f32.gmra.mxu0 %v1399
      %v1514 = vpop.f32.mrf.mxu0
      %v1515 = vadd.f32 0.0, %v1514
      %1516 = vmatmul.f32.gmra.mxu0 %v1402
      %v1517 = vpop.f32.mrf.mxu0
      %v1518 = vadd.f32 0.0, %v1517
      %1519 = vmatmul.f32.gmra.mxu0 %v1405
      %v1520 = vpop.f32.mrf.mxu0
      %v1521 = vadd.f32 0.0, %v1520
      %1522 = vmatmul.f32.gmra.mxu0 %v1408
      %v1523 = vpop.f32.mrf.mxu0
      %v1524 = vadd.f32 0.0, %v1523
      %1525 = vmatmul.f32.gmra.mxu0 %v1411
      %v1526 = vpop.f32.mrf.mxu0
      %v1527 = vadd.f32 0.0, %v1526
      %1528 = vmatmul.f32.gmra.mxu0 %v1414
      %v1529 = vpop.f32.mrf.mxu0
      %v1530 = vadd.f32 0.0, %v1529
      %1531 = vmatmul.f32.gmra.mxu0 %v1417
      %v1532 = vpop.f32.mrf.mxu0
      %v1533 = vadd.f32 0.0, %v1532
      %1534 = vmatmul.f32.gmra.mxu0 %v1420
      %v1535 = vpop.f32.mrf.mxu0
      %v1536 = vadd.f32 0.0, %v1535
      %1537 = vmatmul.f32.gmra.mxu0 %v1423
      %v1538 = vpop.f32.mrf.mxu0
      %v1539 = vadd.f32 0.0, %v1538
      %1540 = vmatmul.f32.gmra.mxu0 %v1426
      %v1541 = vpop.f32.mrf.mxu0
      %v1542 = vadd.f32 0.0, %v1541
      %1543 = vmatmul.f32.gmra.mxu0 %v1429
      %v1544 = vpop.f32.mrf.mxu0
      %v1545 = vadd.f32 0.0, %v1544
      %1546 = vmatmul.f32.gmra.mxu0 %v1432
      %v1547 = vpop.f32.mrf.mxu0
      %v1548 = vadd.f32 0.0, %v1547
      %1549 = vmatmul.f32.gmra.mxu0 %v1435
      %v1550 = vpop.f32.mrf.mxu0
      %v1551 = vadd.f32 0.0, %v1550
      %1552 = vmatmul.f32.gmra.mxu0 %v1438
      %v1553 = vpop.f32.mrf.mxu0
      %v1554 = vadd.f32 0.0, %v1553
      %1555 = vmatmul.f32.gmra.mxu0 %v1441
      %v1556 = vpop.f32.mrf.mxu0
      %v1557 = vadd.f32 0.0, %v1556
      %1558 = vmatmul.f32.gmra.mxu0 %v1444
      %v1559 = vpop.f32.mrf.mxu0
      %v1560 = vadd.f32 0.0, %v1559
      %1561 = vmatmul.f32.gmra.mxu0 %v1447
      %v1562 = vpop.f32.mrf.mxu0
      %v1563 = vadd.f32 0.0, %v1562
      %1564 = vmatmul.f32.gmra.mxu0 %v1450
      %v1565 = vpop.f32.mrf.mxu0
      %v1566 = vadd.f32 0.0, %v1565
      %1567 = vdwg.mxu0
      %v1568 = vadd.f32 %v1290, %v1473
      %v1569 = vadd.f32 %v1291, %v1476
      %v1570 = vadd.f32 %v1292, %v1479
      %v1571 = vadd.f32 %v1293, %v1482
      %v1572 = vadd.f32 %v1294, %v1485
      %v1573 = vadd.f32 %v1295, %v1488
      %v1574 = vadd.f32 %v1296, %v1491
      %v1575 = vadd.f32 %v1297, %v1494
      %v1576 = vadd.f32 %v1298, %v1497
      %v1577 = vadd.f32 %v1299, %v1500
      %v1578 = vadd.f32 %v1300, %v1503
      %v1579 = vadd.f32 %v1301, %v1506
      %v1580 = vadd.f32 %v1302, %v1509
      %v1581 = vadd.f32 %v1303, %v1512
      %v1582 = vadd.f32 %v1304, %v1515
      %v1583 = vadd.f32 %v1305, %v1518
      %v1584 = vadd.f32 %v1306, %v1521
      %v1585 = vadd.f32 %v1307, %v1524
      %v1586 = vadd.f32 %v1308, %v1527
      %v1587 = vadd.f32 %v1309, %v1530
      %v1588 = vadd.f32 %v1310, %v1533
      %v1589 = vadd.f32 %v1311, %v1536
      %v1590 = vadd.f32 %v1312, %v1539
      %v1591 = vadd.f32 %v1313, %v1542
      %v1592 = vadd.f32 %v1314, %v1545
      %v1593 = vadd.f32 %v1315, %v1548
      %v1594 = vadd.f32 %v1316, %v1551
      %v1595 = vadd.f32 %v1317, %v1554
      %v1596 = vadd.f32 %v1318, %v1557
      %v1597 = vadd.f32 %v1319, %v1560
      %v1598 = vadd.f32 %v1320, %v1563
      %v1599 = vadd.f32 %v1321, %v1566
      %v1600 = vld [vmem:[%s1043 + $0x2] sm:$0xff]
      %v1601 = vld [vmem:[%s1043 + $0xa] sm:$0xff]
      %v1602 = vld [vmem:[%s1043 + $0x1a] sm:$0xff]
      %v1603 = vld [vmem:[%s1043 + $0x22] sm:$0xff]
      %v1604 = vld [vmem:[%s1043 + $0x32] sm:$0xff]
      %v1605 = vld [vmem:[%s1043 + $0x3a] sm:$0xff]
      %v1606 = vld [vmem:[%s1043 + $0x4a] sm:$0xff]
      %v1607 = vld [vmem:[%s1043 + $0x52] sm:$0xff]
      %v1608 = vld [vmem:[%s1043 + $0x62] sm:$0xff]
      %v1609 = vld [vmem:[%s1043 + $0x6a] sm:$0xff]
      %v1610 = vld [vmem:[%s1043 + $0x7a] sm:$0xff]
      %v1611 = vld [vmem:[%s1043 + $0x82] sm:$0xff]
      %v1612 = vld [vmem:[%s1043 + $0x92] sm:$0xff]
      %v1613 = vld [vmem:[%s1043 + $0x9a] sm:$0xff]
      %v1614 = vld [vmem:[%s1043 + $0xaa] sm:$0xff]
      %v1615 = vld [vmem:[%s1043 + $0xb2] sm:$0xff]
      %v1616 = vld [vmem:[%s1043 + $0xc2] sm:$0xff]
      %v1617 = vld [vmem:[%s1043 + $0xca] sm:$0xff]
      %v1618 = vld [vmem:[%s1043 + $0xda] sm:$0xff]
      %v1619 = vld [vmem:[%s1043 + $0xe2] sm:$0xff]
      %v1620 = vld [vmem:[%s1043 + $0xf2] sm:$0xff]
      %v1621 = vld [vmem:[%s1043 + $0xfa] sm:$0xff]
      %v1622 = vld [vmem:[%s1043 + $0x10a] sm:$0xff]
      %v1623 = vld [vmem:[%s1043 + $0x112] sm:$0xff]
      %v1624 = vld [vmem:[%s1043 + $0x122] sm:$0xff]
      %v1625 = vld [vmem:[%s1043 + $0x12a] sm:$0xff]
      %v1626 = vld [vmem:[%s1043 + $0x13a] sm:$0xff]
      %v1627 = vld [vmem:[%s1043 + $0x142] sm:$0xff]
      %v1628 = vld [vmem:[%s1043 + $0x152] sm:$0xff]
      %v1629 = vld [vmem:[%s1043 + $0x15a] sm:$0xff]
      %v1630 = vld [vmem:[%s1043 + $0x16a] sm:$0xff]
      %v1631 = vld [vmem:[%s1043 + $0x172] sm:$0xff]
      %s1632 = scalar_lea.vmem %s2, 10
      %v1633 = vld [vmem:[%s1632] sm:$0x3]
      %v1635 = vsel %vm339, %v1600, 0
      %v1638 = vsel %vm339, %v1601, 0
      %v1641 = vsel %vm339, %v1602, 0
      %v1644 = vsel %vm339, %v1603, 0
      %v1647 = vsel %vm339, %v1604, 0
      %v1650 = vsel %vm339, %v1605, 0
      %v1653 = vsel %vm339, %v1606, 0
      %v1656 = vsel %vm339, %v1607, 0
      %v1659 = vsel %vm339, %v1608, 0
      %v1662 = vsel %vm339, %v1609, 0
      %v1665 = vsel %vm339, %v1610, 0
      %v1668 = vsel %vm339, %v1611, 0
      %v1671 = vsel %vm339, %v1612, 0
      %v1674 = vsel %vm339, %v1613, 0
      %v1677 = vsel %vm339, %v1614, 0
      %v1680 = vsel %vm339, %v1615, 0
      %v1683 = vsel %vm339, %v1616, 0
      %v1686 = vsel %vm339, %v1617, 0
      %v1689 = vsel %vm339, %v1618, 0
      %v1692 = vsel %vm339, %v1619, 0
      %v1695 = vsel %vm339, %v1620, 0
      %v1698 = vsel %vm339, %v1621, 0
      %v1701 = vsel %vm339, %v1622, 0
      %v1704 = vsel %vm339, %v1623, 0
      %v1707 = vsel %vm339, %v1624, 0
      %v1710 = vsel %vm339, %v1625, 0
      %v1713 = vsel %vm339, %v1626, 0
      %v1716 = vsel %vm339, %v1627, 0
      %v1719 = vsel %vm339, %v1628, 0
      %v1722 = vsel %vm339, %v1629, 0
      %v1725 = vsel %vm339, %v1630, 0
      %v1728 = vsel %vm339, %v1631, 0
      %v1731 = vsel %vm436, %v1633, 0
      %1733 = vmatpush.msra.mxu0 0.0
      %1734 = vmatpush.msra.mxu0 0.0
      %1735 = vmatpush.msra.mxu0 0.0
      %1736 = vmatpush.msra.mxu0 0.0
      %1737 = vmatpush.msra.mxu0 0.0
      %1738 = vmatpush.msra.mxu0 0.0
      %1739 = vmatpush.msra.mxu0 0.0
      %1740 = vmatpush.msra.mxu0 0.0
      %1741 = vmatpush.msra.mxu0 0.0
      %1742 = vmatpush.msra.mxu0 0.0
      %1743 = vmatpush.msra.mxu0 0.0
      %1744 = vmatpush.msra.mxu0 0.0
      %1745 = vmatpush.msra.mxu0 0.0
      %1746 = vmatpush.msra.mxu0 0.0
      %1747 = vmatpush.msra.mxu0 0.0
      %1748 = vmatpush.msra.mxu0 %v1731
      %1749 = vmatmul.f32.gmra.mxu0 %v1635
      %v1750 = vpop.f32.mrf.mxu0
      %v1751 = vadd.f32 0.0, %v1750
      %1752 = vmatmul.f32.gmra.mxu0 %v1638
      %v1753 = vpop.f32.mrf.mxu0
      %v1754 = vadd.f32 0.0, %v1753
      %1755 = vmatmul.f32.gmra.mxu0 %v1641
      %v1756 = vpop.f32.mrf.mxu0
      %v1757 = vadd.f32 0.0, %v1756
      %1758 = vmatmul.f32.gmra.mxu0 %v1644
      %v1759 = vpop.f32.mrf.mxu0
      %v1760 = vadd.f32 0.0, %v1759
      %1761 = vmatmul.f32.gmra.mxu0 %v1647
      %v1762 = vpop.f32.mrf.mxu0
      %v1763 = vadd.f32 0.0, %v1762
      %1764 = vmatmul.f32.gmra.mxu0 %v1650
      %v1765 = vpop.f32.mrf.mxu0
      %v1766 = vadd.f32 0.0, %v1765
      %1767 = vmatmul.f32.gmra.mxu0 %v1653
      %v1768 = vpop.f32.mrf.mxu0
      %v1769 = vadd.f32 0.0, %v1768
      %1770 = vmatmul.f32.gmra.mxu0 %v1656
      %v1771 = vpop.f32.mrf.mxu0
      %v1772 = vadd.f32 0.0, %v1771
      %1773 = vmatmul.f32.gmra.mxu0 %v1659
      %v1774 = vpop.f32.mrf.mxu0
      %v1775 = vadd.f32 0.0, %v1774
      %1776 = vmatmul.f32.gmra.mxu0 %v1662
      %v1777 = vpop.f32.mrf.mxu0
      %v1778 = vadd.f32 0.0, %v1777
      %1779 = vmatmul.f32.gmra.mxu0 %v1665
      %v1780 = vpop.f32.mrf.mxu0
      %v1781 = vadd.f32 0.0, %v1780
      %1782 = vmatmul.f32.gmra.mxu0 %v1668
      %v1783 = vpop.f32.mrf.mxu0
      %v1784 = vadd.f32 0.0, %v1783
      %1785 = vmatmul.f32.gmra.mxu0 %v1671
      %v1786 = vpop.f32.mrf.mxu0
      %v1787 = vadd.f32 0.0, %v1786
      %1788 = vmatmul.f32.gmra.mxu0 %v1674
      %v1789 = vpop.f32.mrf.mxu0
      %v1790 = vadd.f32 0.0, %v1789
      %1791 = vmatmul.f32.gmra.mxu0 %v1677
      %v1792 = vpop.f32.mrf.mxu0
      %v1793 = vadd.f32 0.0, %v1792
      %1794 = vmatmul.f32.gmra.mxu0 %v1680
      %v1795 = vpop.f32.mrf.mxu0
      %v1796 = vadd.f32 0.0, %v1795
      %1797 = vmatmul.f32.gmra.mxu0 %v1683
      %v1798 = vpop.f32.mrf.mxu0
      %v1799 = vadd.f32 0.0, %v1798
      %1800 = vmatmul.f32.gmra.mxu0 %v1686
      %v1801 = vpop.f32.mrf.mxu0
      %v1802 = vadd.f32 0.0, %v1801
      %1803 = vmatmul.f32.gmra.mxu0 %v1689
      %v1804 = vpop.f32.mrf.mxu0
      %v1805 = vadd.f32 0.0, %v1804
      %1806 = vmatmul.f32.gmra.mxu0 %v1692
      %v1807 = vpop.f32.mrf.mxu0
      %v1808 = vadd.f32 0.0, %v1807
      %1809 = vmatmul.f32.gmra.mxu0 %v1695
      %v1810 = vpop.f32.mrf.mxu0
      %v1811 = vadd.f32 0.0, %v1810
      %1812 = vmatmul.f32.gmra.mxu0 %v1698
      %v1813 = vpop.f32.mrf.mxu0
      %v1814 = vadd.f32 0.0, %v1813
      %1815 = vmatmul.f32.gmra.mxu0 %v1701
      %v1816 = vpop.f32.mrf.mxu0
      %v1817 = vadd.f32 0.0, %v1816
      %1818 = vmatmul.f32.gmra.mxu0 %v1704
      %v1819 = vpop.f32.mrf.mxu0
      %v1820 = vadd.f32 0.0, %v1819
      %1821 = vmatmul.f32.gmra.mxu0 %v1707
      %v1822 = vpop.f32.mrf.mxu0
      %v1823 = vadd.f32 0.0, %v1822
      %1824 = vmatmul.f32.gmra.mxu0 %v1710
      %v1825 = vpop.f32.mrf.mxu0
      %v1826 = vadd.f32 0.0, %v1825
      %1827 = vmatmul.f32.gmra.mxu0 %v1713
      %v1828 = vpop.f32.mrf.mxu0
      %v1829 = vadd.f32 0.0, %v1828
      %1830 = vmatmul.f32.gmra.mxu0 %v1716
      %v1831 = vpop.f32.mrf.mxu0
      %v1832 = vadd.f32 0.0, %v1831
      %1833 = vmatmul.f32.gmra.mxu0 %v1719
      %v1834 = vpop.f32.mrf.mxu0
      %v1835 = vadd.f32 0.0, %v1834
      %1836 = vmatmul.f32.gmra.mxu0 %v1722
      %v1837 = vpop.f32.mrf.mxu0
      %v1838 = vadd.f32 0.0, %v1837
      %1839 = vmatmul.f32.gmra.mxu0 %v1725
      %v1840 = vpop.f32.mrf.mxu0
      %v1841 = vadd.f32 0.0, %v1840
      %1842 = vmatmul.f32.gmra.mxu0 %v1728
      %v1843 = vpop.f32.mrf.mxu0
      %v1844 = vadd.f32 0.0, %v1843
      %1845 = vdwg.mxu0
      %v1846 = vadd.f32 %v1568, %v1751
      %v1847 = vadd.f32 %v1569, %v1754
      %v1848 = vadd.f32 %v1570, %v1757
      %v1849 = vadd.f32 %v1571, %v1760
      %v1850 = vadd.f32 %v1572, %v1763
      %v1851 = vadd.f32 %v1573, %v1766
      %v1852 = vadd.f32 %v1574, %v1769
      %v1853 = vadd.f32 %v1575, %v1772
      %v1854 = vadd.f32 %v1576, %v1775
      %v1855 = vadd.f32 %v1577, %v1778
      %v1856 = vadd.f32 %v1578, %v1781
      %v1857 = vadd.f32 %v1579, %v1784
      %v1858 = vadd.f32 %v1580, %v1787
      %v1859 = vadd.f32 %v1581, %v1790
      %v1860 = vadd.f32 %v1582, %v1793
      %v1861 = vadd.f32 %v1583, %v1796
      %v1862 = vadd.f32 %v1584, %v1799
      %v1863 = vadd.f32 %v1585, %v1802
      %v1864 = vadd.f32 %v1586, %v1805
      %v1865 = vadd.f32 %v1587, %v1808
      %v1866 = vadd.f32 %v1588, %v1811
      %v1867 = vadd.f32 %v1589, %v1814
      %v1868 = vadd.f32 %v1590, %v1817
      %v1869 = vadd.f32 %v1591, %v1820
      %v1870 = vadd.f32 %v1592, %v1823
      %v1871 = vadd.f32 %v1593, %v1826
      %v1872 = vadd.f32 %v1594, %v1829
      %v1873 = vadd.f32 %v1595, %v1832
      %v1874 = vadd.f32 %v1596, %v1835
      %v1875 = vadd.f32 %v1597, %v1838
      %v1876 = vadd.f32 %v1598, %v1841
      %v1877 = vadd.f32 %v1599, %v1844
      %s1878 = scalar_lea.vmem %s261, 48
      %v1879 = vld [vmem:[%s1878] sm:$0xff]
      %v1880 = vld [vmem:[%s1878 + $0x8] sm:$0xff]
      %v1881 = vld [vmem:[%s1878 + $0x18] sm:$0xff]
      %v1882 = vld [vmem:[%s1878 + $0x20] sm:$0xff]
      %v1883 = vld [vmem:[%s1878 + $0x30] sm:$0xff]
      %v1884 = vld [vmem:[%s1878 + $0x38] sm:$0xff]
      %v1885 = vld [vmem:[%s1878 + $0x48] sm:$0xff]
      %v1886 = vld [vmem:[%s1878 + $0x50] sm:$0xff]
      %v1887 = vld [vmem:[%s1878 + $0x60] sm:$0xff]
      %v1888 = vld [vmem:[%s1878 + $0x68] sm:$0xff]
      %v1889 = vld [vmem:[%s1878 + $0x78] sm:$0xff]
      %v1890 = vld [vmem:[%s1878 + $0x80] sm:$0xff]
      %v1891 = vld [vmem:[%s1878 + $0x90] sm:$0xff]
      %v1892 = vld [vmem:[%s1878 + $0x98] sm:$0xff]
      %v1893 = vld [vmem:[%s1878 + $0xa8] sm:$0xff]
      %v1894 = vld [vmem:[%s1878 + $0xb0] sm:$0xff]
      %v1895 = vld [vmem:[%s1878 + $0xc0] sm:$0xff]
      %v1896 = vld [vmem:[%s1878 + $0xc8] sm:$0xff]
      %v1897 = vld [vmem:[%s1878 + $0xd8] sm:$0xff]
      %v1898 = vld [vmem:[%s1878 + $0xe0] sm:$0xff]
      %v1899 = vld [vmem:[%s1878 + $0xf0] sm:$0xff]
      %v1900 = vld [vmem:[%s1878 + $0xf8] sm:$0xff]
      %v1901 = vld [vmem:[%s1878 + $0x108] sm:$0xff]
      %v1902 = vld [vmem:[%s1878 + $0x110] sm:$0xff]
      %v1903 = vld [vmem:[%s1878 + $0x120] sm:$0xff]
      %v1904 = vld [vmem:[%s1878 + $0x128] sm:$0xff]
      %v1905 = vld [vmem:[%s1878 + $0x138] sm:$0xff]
      %v1906 = vld [vmem:[%s1878 + $0x140] sm:$0xff]
      %v1907 = vld [vmem:[%s1878 + $0x150] sm:$0xff]
      %v1908 = vld [vmem:[%s1878 + $0x158] sm:$0xff]
      %v1909 = vld [vmem:[%s1878 + $0x168] sm:$0xff]
      %v1910 = vld [vmem:[%s1878 + $0x170] sm:$0xff]
      %s1911 = scalar_lea.vmem %s2, 12
      %v1912 = vld [vmem:[%s1911] sm:$0x3]
      %v1914 = vsel %vm339, %v1879, 0
      %v1917 = vsel %vm339, %v1880, 0
      %v1920 = vsel %vm339, %v1881, 0
      %v1923 = vsel %vm339, %v1882, 0
      %v1926 = vsel %vm339, %v1883, 0
      %v1929 = vsel %vm339, %v1884, 0
      %v1932 = vsel %vm339, %v1885, 0
      %v1935 = vsel %vm339, %v1886, 0
      %v1938 = vsel %vm339, %v1887, 0
      %v1941 = vsel %vm339, %v1888, 0
      %v1944 = vsel %vm339, %v1889, 0
      %v1947 = vsel %vm339, %v1890, 0
      %v1950 = vsel %vm339, %v1891, 0
      %v1953 = vsel %vm339, %v1892, 0
      %v1956 = vsel %vm339, %v1893, 0
      %v1959 = vsel %vm339, %v1894, 0
      %v1962 = vsel %vm339, %v1895, 0
      %v1965 = vsel %vm339, %v1896, 0
      %v1968 = vsel %vm339, %v1897, 0
      %v1971 = vsel %vm339, %v1898, 0
      %v1974 = vsel %vm339, %v1899, 0
      %v1977 = vsel %vm339, %v1900, 0
      %v1980 = vsel %vm339, %v1901, 0
      %v1983 = vsel %vm339, %v1902, 0
      %v1986 = vsel %vm339, %v1903, 0
      %v1989 = vsel %vm339, %v1904, 0
      %v1992 = vsel %vm339, %v1905, 0
      %v1995 = vsel %vm339, %v1906, 0
      %v1998 = vsel %vm339, %v1907, 0
      %v2001 = vsel %vm339, %v1908, 0
      %v2004 = vsel %vm339, %v1909, 0
      %v2007 = vsel %vm339, %v1910, 0
      %v2010 = vsel %vm436, %v1912, 0
      %2012 = vmatpush.msra.mxu0 0.0
      %2013 = vmatpush.msra.mxu0 0.0
      %2014 = vmatpush.msra.mxu0 0.0
      %2015 = vmatpush.msra.mxu0 0.0
      %2016 = vmatpush.msra.mxu0 0.0
      %2017 = vmatpush.msra.mxu0 0.0
      %2018 = vmatpush.msra.mxu0 0.0
      %2019 = vmatpush.msra.mxu0 0.0
      %2020 = vmatpush.msra.mxu0 0.0
      %2021 = vmatpush.msra.mxu0 0.0
      %2022 = vmatpush.msra.mxu0 0.0
      %2023 = vmatpush.msra.mxu0 0.0
      %2024 = vmatpush.msra.mxu0 0.0
      %2025 = vmatpush.msra.mxu0 0.0
      %2026 = vmatpush.msra.mxu0 0.0
      %2027 = vmatpush.msra.mxu0 %v2010
      %2028 = vmatmul.f32.gmra.mxu0 %v1914
      %v2029 = vpop.f32.mrf.mxu0
      %v2030 = vadd.f32 0.0, %v2029
      %2031 = vmatmul.f32.gmra.mxu0 %v1917
      %v2032 = vpop.f32.mrf.mxu0
      %v2033 = vadd.f32 0.0, %v2032
      %2034 = vmatmul.f32.gmra.mxu0 %v1920
      %v2035 = vpop.f32.mrf.mxu0
      %v2036 = vadd.f32 0.0, %v2035
      %2037 = vmatmul.f32.gmra.mxu0 %v1923
      %v2038 = vpop.f32.mrf.mxu0
      %v2039 = vadd.f32 0.0, %v2038
      %2040 = vmatmul.f32.gmra.mxu0 %v1926
      %v2041 = vpop.f32.mrf.mxu0
      %v2042 = vadd.f32 0.0, %v2041
      %2043 = vmatmul.f32.gmra.mxu0 %v1929
      %v2044 = vpop.f32.mrf.mxu0
      %v2045 = vadd.f32 0.0, %v2044
      %2046 = vmatmul.f32.gmra.mxu0 %v1932
      %v2047 = vpop.f32.mrf.mxu0
      %v2048 = vadd.f32 0.0, %v2047
      %2049 = vmatmul.f32.gmra.mxu0 %v1935
      %v2050 = vpop.f32.mrf.mxu0
      %v2051 = vadd.f32 0.0, %v2050
      %2052 = vmatmul.f32.gmra.mxu0 %v1938
      %v2053 = vpop.f32.mrf.mxu0
      %v2054 = vadd.f32 0.0, %v2053
      %2055 = vmatmul.f32.gmra.mxu0 %v1941
      %v2056 = vpop.f32.mrf.mxu0
      %v2057 = vadd.f32 0.0, %v2056
      %2058 = vmatmul.f32.gmra.mxu0 %v1944
      %v2059 = vpop.f32.mrf.mxu0
      %v2060 = vadd.f32 0.0, %v2059
      %2061 = vmatmul.f32.gmra.mxu0 %v1947
      %v2062 = vpop.f32.mrf.mxu0
      %v2063 = vadd.f32 0.0, %v2062
      %2064 = vmatmul.f32.gmra.mxu0 %v1950
      %v2065 = vpop.f32.mrf.mxu0
      %v2066 = vadd.f32 0.0, %v2065
      %2067 = vmatmul.f32.gmra.mxu0 %v1953
      %v2068 = vpop.f32.mrf.mxu0
      %v2069 = vadd.f32 0.0, %v2068
      %2070 = vmatmul.f32.gmra.mxu0 %v1956
      %v2071 = vpop.f32.mrf.mxu0
      %v2072 = vadd.f32 0.0, %v2071
      %2073 = vmatmul.f32.gmra.mxu0 %v1959
      %v2074 = vpop.f32.mrf.mxu0
      %v2075 = vadd.f32 0.0, %v2074
      %2076 = vmatmul.f32.gmra.mxu0 %v1962
      %v2077 = vpop.f32.mrf.mxu0
      %v2078 = vadd.f32 0.0, %v2077
      %2079 = vmatmul.f32.gmra.mxu0 %v1965
      %v2080 = vpop.f32.mrf.mxu0
      %v2081 = vadd.f32 0.0, %v2080
      %2082 = vmatmul.f32.gmra.mxu0 %v1968
      %v2083 = vpop.f32.mrf.mxu0
      %v2084 = vadd.f32 0.0, %v2083
      %2085 = vmatmul.f32.gmra.mxu0 %v1971
      %v2086 = vpop.f32.mrf.mxu0
      %v2087 = vadd.f32 0.0, %v2086
      %2088 = vmatmul.f32.gmra.mxu0 %v1974
      %v2089 = vpop.f32.mrf.mxu0
      %v2090 = vadd.f32 0.0, %v2089
      %2091 = vmatmul.f32.gmra.mxu0 %v1977
      %v2092 = vpop.f32.mrf.mxu0
      %v2093 = vadd.f32 0.0, %v2092
      %2094 = vmatmul.f32.gmra.mxu0 %v1980
      %v2095 = vpop.f32.mrf.mxu0
      %v2096 = vadd.f32 0.0, %v2095
      %2097 = vmatmul.f32.gmra.mxu0 %v1983
      %v2098 = vpop.f32.mrf.mxu0
      %v2099 = vadd.f32 0.0, %v2098
      %2100 = vmatmul.f32.gmra.mxu0 %v1986
      %v2101 = vpop.f32.mrf.mxu0
      %v2102 = vadd.f32 0.0, %v2101
      %2103 = vmatmul.f32.gmra.mxu0 %v1989
      %v2104 = vpop.f32.mrf.mxu0
      %v2105 = vadd.f32 0.0, %v2104
      %2106 = vmatmul.f32.gmra.mxu0 %v1992
      %v2107 = vpop.f32.mrf.mxu0
      %v2108 = vadd.f32 0.0, %v2107
      %2109 = vmatmul.f32.gmra.mxu0 %v1995
      %v2110 = vpop.f32.mrf.mxu0
      %v2111 = vadd.f32 0.0, %v2110
      %2112 = vmatmul.f32.gmra.mxu0 %v1998
      %v2113 = vpop.f32.mrf.mxu0
      %v2114 = vadd.f32 0.0, %v2113
      %2115 = vmatmul.f32.gmra.mxu0 %v2001
      %v2116 = vpop.f32.mrf.mxu0
      %v2117 = vadd.f32 0.0, %v2116
      %2118 = vmatmul.f32.gmra.mxu0 %v2004
      %v2119 = vpop.f32.mrf.mxu0
      %v2120 = vadd.f32 0.0, %v2119
      %2121 = vmatmul.f32.gmra.mxu0 %v2007
      %v2122 = vpop.f32.mrf.mxu0
      %v2123 = vadd.f32 0.0, %v2122
      %2124 = vdwg.mxu0
      %v2125 = vadd.f32 %v1846, %v2030
      %v2126 = vadd.f32 %v1847, %v2033
      %v2127 = vadd.f32 %v1848, %v2036
      %v2128 = vadd.f32 %v1849, %v2039
      %v2129 = vadd.f32 %v1850, %v2042
      %v2130 = vadd.f32 %v1851, %v2045
      %v2131 = vadd.f32 %v1852, %v2048
      %v2132 = vadd.f32 %v1853, %v2051
      %v2133 = vadd.f32 %v1854, %v2054
      %v2134 = vadd.f32 %v1855, %v2057
      %v2135 = vadd.f32 %v1856, %v2060
      %v2136 = vadd.f32 %v1857, %v2063
      %v2137 = vadd.f32 %v1858, %v2066
      %v2138 = vadd.f32 %v1859, %v2069
      %v2139 = vadd.f32 %v1860, %v2072
      %v2140 = vadd.f32 %v1861, %v2075
      %v2141 = vadd.f32 %v1862, %v2078
      %v2142 = vadd.f32 %v1863, %v2081
      %v2143 = vadd.f32 %v1864, %v2084
      %v2144 = vadd.f32 %v1865, %v2087
      %v2145 = vadd.f32 %v1866, %v2090
      %v2146 = vadd.f32 %v1867, %v2093
      %v2147 = vadd.f32 %v1868, %v2096
      %v2148 = vadd.f32 %v1869, %v2099
      %v2149 = vadd.f32 %v1870, %v2102
      %v2150 = vadd.f32 %v1871, %v2105
      %v2151 = vadd.f32 %v1872, %v2108
      %v2152 = vadd.f32 %v1873, %v2111
      %v2153 = vadd.f32 %v1874, %v2114
      %v2154 = vadd.f32 %v1875, %v2117
      %v2155 = vadd.f32 %v1876, %v2120
      %v2156 = vadd.f32 %v1877, %v2123
      %v2157 = vld [vmem:[%s1878 + $0x1] sm:$0xff]
      %v2158 = vld [vmem:[%s1878 + $0x9] sm:$0xff]
      %v2159 = vld [vmem:[%s1878 + $0x19] sm:$0xff]
      %v2160 = vld [vmem:[%s1878 + $0x21] sm:$0xff]
      %v2161 = vld [vmem:[%s1878 + $0x31] sm:$0xff]
      %v2162 = vld [vmem:[%s1878 + $0x39] sm:$0xff]
      %v2163 = vld [vmem:[%s1878 + $0x49] sm:$0xff]
      %v2164 = vld [vmem:[%s1878 + $0x51] sm:$0xff]
      %v2165 = vld [vmem:[%s1878 + $0x61] sm:$0xff]
      %v2166 = vld [vmem:[%s1878 + $0x69] sm:$0xff]
      %v2167 = vld [vmem:[%s1878 + $0x79] sm:$0xff]
      %v2168 = vld [vmem:[%s1878 + $0x81] sm:$0xff]
      %v2169 = vld [vmem:[%s1878 + $0x91] sm:$0xff]
      %v2170 = vld [vmem:[%s1878 + $0x99] sm:$0xff]
      %v2171 = vld [vmem:[%s1878 + $0xa9] sm:$0xff]
      %v2172 = vld [vmem:[%s1878 + $0xb1] sm:$0xff]
      %v2173 = vld [vmem:[%s1878 + $0xc1] sm:$0xff]
      %v2174 = vld [vmem:[%s1878 + $0xc9] sm:$0xff]
      %v2175 = vld [vmem:[%s1878 + $0xd9] sm:$0xff]
      %v2176 = vld [vmem:[%s1878 + $0xe1] sm:$0xff]
      %v2177 = vld [vmem:[%s1878 + $0xf1] sm:$0xff]
      %v2178 = vld [vmem:[%s1878 + $0xf9] sm:$0xff]
      %v2179 = vld [vmem:[%s1878 + $0x109] sm:$0xff]
      %v2180 = vld [vmem:[%s1878 + $0x111] sm:$0xff]
      %v2181 = vld [vmem:[%s1878 + $0x121] sm:$0xff]
      %v2182 = vld [vmem:[%s1878 + $0x129] sm:$0xff]
      %v2183 = vld [vmem:[%s1878 + $0x139] sm:$0xff]
      %v2184 = vld [vmem:[%s1878 + $0x141] sm:$0xff]
      %v2185 = vld [vmem:[%s1878 + $0x151] sm:$0xff]
      %v2186 = vld [vmem:[%s1878 + $0x159] sm:$0xff]
      %v2187 = vld [vmem:[%s1878 + $0x169] sm:$0xff]
      %v2188 = vld [vmem:[%s1878 + $0x171] sm:$0xff]
      %s2189 = scalar_lea.vmem %s2, 14
      %v2190 = vld [vmem:[%s2189] sm:$0x3]
      %v2192 = vsel %vm339, %v2157, 0
      %v2195 = vsel %vm339, %v2158, 0
      %v2198 = vsel %vm339, %v2159, 0
      %v2201 = vsel %vm339, %v2160, 0
      %v2204 = vsel %vm339, %v2161, 0
      %v2207 = vsel %vm339, %v2162, 0
      %v2210 = vsel %vm339, %v2163, 0
      %v2213 = vsel %vm339, %v2164, 0
      %v2216 = vsel %vm339, %v2165, 0
      %v2219 = vsel %vm339, %v2166, 0
      %v2222 = vsel %vm339, %v2167, 0
      %v2225 = vsel %vm339, %v2168, 0
      %v2228 = vsel %vm339, %v2169, 0
      %v2231 = vsel %vm339, %v2170, 0
      %v2234 = vsel %vm339, %v2171, 0
      %v2237 = vsel %vm339, %v2172, 0
      %v2240 = vsel %vm339, %v2173, 0
      %v2243 = vsel %vm339, %v2174, 0
      %v2246 = vsel %vm339, %v2175, 0
      %v2249 = vsel %vm339, %v2176, 0
      %v2252 = vsel %vm339, %v2177, 0
      %v2255 = vsel %vm339, %v2178, 0
      %v2258 = vsel %vm339, %v2179, 0
      %v2261 = vsel %vm339, %v2180, 0
      %v2264 = vsel %vm339, %v2181, 0
      %v2267 = vsel %vm339, %v2182, 0
      %v2270 = vsel %vm339, %v2183, 0
      %v2273 = vsel %vm339, %v2184, 0
      %v2276 = vsel %vm339, %v2185, 0
      %v2279 = vsel %vm339, %v2186, 0
      %v2282 = vsel %vm339, %v2187, 0
      %v2285 = vsel %vm339, %v2188, 0
      %v2288 = vsel %vm436, %v2190, 0
      %2290 = vmatpush.msra.mxu0 0.0
      %2291 = vmatpush.msra.mxu0 0.0
      %2292 = vmatpush.msra.mxu0 0.0
      %2293 = vmatpush.msra.mxu0 0.0
      %2294 = vmatpush.msra.mxu0 0.0
      %2295 = vmatpush.msra.mxu0 0.0
      %2296 = vmatpush.msra.mxu0 0.0
      %2297 = vmatpush.msra.mxu0 0.0
      %2298 = vmatpush.msra.mxu0 0.0
      %2299 = vmatpush.msra.mxu0 0.0
      %2300 = vmatpush.msra.mxu0 0.0
      %2301 = vmatpush.msra.mxu0 0.0
      %2302 = vmatpush.msra.mxu0 0.0
      %2303 = vmatpush.msra.mxu0 0.0
      %2304 = vmatpush.msra.mxu0 0.0
      %2305 = vmatpush.msra.mxu0 %v2288
      %2306 = vmatmul.f32.gmra.mxu0 %v2192
      %v2307 = vpop.f32.mrf.mxu0
      %v2308 = vadd.f32 0.0, %v2307
      %2309 = vmatmul.f32.gmra.mxu0 %v2195
      %v2310 = vpop.f32.mrf.mxu0
      %v2311 = vadd.f32 0.0, %v2310
      %2312 = vmatmul.f32.gmra.mxu0 %v2198
      %v2313 = vpop.f32.mrf.mxu0
      %v2314 = vadd.f32 0.0, %v2313
      %2315 = vmatmul.f32.gmra.mxu0 %v2201
      %v2316 = vpop.f32.mrf.mxu0
      %v2317 = vadd.f32 0.0, %v2316
      %2318 = vmatmul.f32.gmra.mxu0 %v2204
      %v2319 = vpop.f32.mrf.mxu0
      %v2320 = vadd.f32 0.0, %v2319
      %2321 = vmatmul.f32.gmra.mxu0 %v2207
      %v2322 = vpop.f32.mrf.mxu0
      %v2323 = vadd.f32 0.0, %v2322
      %2324 = vmatmul.f32.gmra.mxu0 %v2210
      %v2325 = vpop.f32.mrf.mxu0
      %v2326 = vadd.f32 0.0, %v2325
      %2327 = vmatmul.f32.gmra.mxu0 %v2213
      %v2328 = vpop.f32.mrf.mxu0
      %v2329 = vadd.f32 0.0, %v2328
      %2330 = vmatmul.f32.gmra.mxu0 %v2216
      %v2331 = vpop.f32.mrf.mxu0
      %v2332 = vadd.f32 0.0, %v2331
      %2333 = vmatmul.f32.gmra.mxu0 %v2219
      %v2334 = vpop.f32.mrf.mxu0
      %v2335 = vadd.f32 0.0, %v2334
      %2336 = vmatmul.f32.gmra.mxu0 %v2222
      %v2337 = vpop.f32.mrf.mxu0
      %v2338 = vadd.f32 0.0, %v2337
      %2339 = vmatmul.f32.gmra.mxu0 %v2225
      %v2340 = vpop.f32.mrf.mxu0
      %v2341 = vadd.f32 0.0, %v2340
      %2342 = vmatmul.f32.gmra.mxu0 %v2228
      %v2343 = vpop.f32.mrf.mxu0
      %v2344 = vadd.f32 0.0, %v2343
      %2345 = vmatmul.f32.gmra.mxu0 %v2231
      %v2346 = vpop.f32.mrf.mxu0
      %v2347 = vadd.f32 0.0, %v2346
      %2348 = vmatmul.f32.gmra.mxu0 %v2234
      %v2349 = vpop.f32.mrf.mxu0
      %v2350 = vadd.f32 0.0, %v2349
      %2351 = vmatmul.f32.gmra.mxu0 %v2237
      %v2352 = vpop.f32.mrf.mxu0
      %v2353 = vadd.f32 0.0, %v2352
      %2354 = vmatmul.f32.gmra.mxu0 %v2240
      %v2355 = vpop.f32.mrf.mxu0
      %v2356 = vadd.f32 0.0, %v2355
      %2357 = vmatmul.f32.gmra.mxu0 %v2243
      %v2358 = vpop.f32.mrf.mxu0
      %v2359 = vadd.f32 0.0, %v2358
      %2360 = vmatmul.f32.gmra.mxu0 %v2246
      %v2361 = vpop.f32.mrf.mxu0
      %v2362 = vadd.f32 0.0, %v2361
      %2363 = vmatmul.f32.gmra.mxu0 %v2249
      %v2364 = vpop.f32.mrf.mxu0
      %v2365 = vadd.f32 0.0, %v2364
      %2366 = vmatmul.f32.gmra.mxu0 %v2252
      %v2367 = vpop.f32.mrf.mxu0
      %v2368 = vadd.f32 0.0, %v2367
      %2369 = vmatmul.f32.gmra.mxu0 %v2255
      %v2370 = vpop.f32.mrf.mxu0
      %v2371 = vadd.f32 0.0, %v2370
      %2372 = vmatmul.f32.gmra.mxu0 %v2258
      %v2373 = vpop.f32.mrf.mxu0
      %v2374 = vadd.f32 0.0, %v2373
      %2375 = vmatmul.f32.gmra.mxu0 %v2261
      %v2376 = vpop.f32.mrf.mxu0
      %v2377 = vadd.f32 0.0, %v2376
      %2378 = vmatmul.f32.gmra.mxu0 %v2264
      %v2379 = vpop.f32.mrf.mxu0
      %v2380 = vadd.f32 0.0, %v2379
      %2381 = vmatmul.f32.gmra.mxu0 %v2267
      %v2382 = vpop.f32.mrf.mxu0
      %v2383 = vadd.f32 0.0, %v2382
      %2384 = vmatmul.f32.gmra.mxu0 %v2270
      %v2385 = vpop.f32.mrf.mxu0
      %v2386 = vadd.f32 0.0, %v2385
      %2387 = vmatmul.f32.gmra.mxu0 %v2273
      %v2388 = vpop.f32.mrf.mxu0
      %v2389 = vadd.f32 0.0, %v2388
      %2390 = vmatmul.f32.gmra.mxu0 %v2276
      %v2391 = vpop.f32.mrf.mxu0
      %v2392 = vadd.f32 0.0, %v2391
      %2393 = vmatmul.f32.gmra.mxu0 %v2279
      %v2394 = vpop.f32.mrf.mxu0
      %v2395 = vadd.f32 0.0, %v2394
      %2396 = vmatmul.f32.gmra.mxu0 %v2282
      %v2397 = vpop.f32.mrf.mxu0
      %v2398 = vadd.f32 0.0, %v2397
      %2399 = vmatmul.f32.gmra.mxu0 %v2285
      %v2400 = vpop.f32.mrf.mxu0
      %v2401 = vadd.f32 0.0, %v2400
      %2402 = vdwg.mxu0
      %v2403 = vadd.f32 %v2125, %v2308
      %v2404 = vadd.f32 %v2126, %v2311
      %v2405 = vadd.f32 %v2127, %v2314
      %v2406 = vadd.f32 %v2128, %v2317
      %v2407 = vadd.f32 %v2129, %v2320
      %v2408 = vadd.f32 %v2130, %v2323
      %v2409 = vadd.f32 %v2131, %v2326
      %v2410 = vadd.f32 %v2132, %v2329
      %v2411 = vadd.f32 %v2133, %v2332
      %v2412 = vadd.f32 %v2134, %v2335
      %v2413 = vadd.f32 %v2135, %v2338
      %v2414 = vadd.f32 %v2136, %v2341
      %v2415 = vadd.f32 %v2137, %v2344
      %v2416 = vadd.f32 %v2138, %v2347
      %v2417 = vadd.f32 %v2139, %v2350
      %v2418 = vadd.f32 %v2140, %v2353
      %v2419 = vadd.f32 %v2141, %v2356
      %v2420 = vadd.f32 %v2142, %v2359
      %v2421 = vadd.f32 %v2143, %v2362
      %v2422 = vadd.f32 %v2144, %v2365
      %v2423 = vadd.f32 %v2145, %v2368
      %v2424 = vadd.f32 %v2146, %v2371
      %v2425 = vadd.f32 %v2147, %v2374
      %v2426 = vadd.f32 %v2148, %v2377
      %v2427 = vadd.f32 %v2149, %v2380
      %v2428 = vadd.f32 %v2150, %v2383
      %v2429 = vadd.f32 %v2151, %v2386
      %v2430 = vadd.f32 %v2152, %v2389
      %v2431 = vadd.f32 %v2153, %v2392
      %v2432 = vadd.f32 %v2154, %v2395
      %v2433 = vadd.f32 %v2155, %v2398
      %v2434 = vadd.f32 %v2156, %v2401
      %v2435 = vld [vmem:[%s1878 + $0x2] sm:$0xff]
      %v2436 = vld [vmem:[%s1878 + $0xa] sm:$0xff]
      %v2437 = vld [vmem:[%s1878 + $0x1a] sm:$0xff]
      %v2438 = vld [vmem:[%s1878 + $0x22] sm:$0xff]
      %v2439 = vld [vmem:[%s1878 + $0x32] sm:$0xff]
      %v2440 = vld [vmem:[%s1878 + $0x3a] sm:$0xff]
      %v2441 = vld [vmem:[%s1878 + $0x4a] sm:$0xff]
      %v2442 = vld [vmem:[%s1878 + $0x52] sm:$0xff]
      %v2443 = vld [vmem:[%s1878 + $0x62] sm:$0xff]
      %v2444 = vld [vmem:[%s1878 + $0x6a] sm:$0xff]
      %v2445 = vld [vmem:[%s1878 + $0x7a] sm:$0xff]
      %v2446 = vld [vmem:[%s1878 + $0x82] sm:$0xff]
      %v2447 = vld [vmem:[%s1878 + $0x92] sm:$0xff]
      %v2448 = vld [vmem:[%s1878 + $0x9a] sm:$0xff]
      %v2449 = vld [vmem:[%s1878 + $0xaa] sm:$0xff]
      %v2450 = vld [vmem:[%s1878 + $0xb2] sm:$0xff]
      %v2451 = vld [vmem:[%s1878 + $0xc2] sm:$0xff]
      %v2452 = vld [vmem:[%s1878 + $0xca] sm:$0xff]
      %v2453 = vld [vmem:[%s1878 + $0xda] sm:$0xff]
      %v2454 = vld [vmem:[%s1878 + $0xe2] sm:$0xff]
      %v2455 = vld [vmem:[%s1878 + $0xf2] sm:$0xff]
      %v2456 = vld [vmem:[%s1878 + $0xfa] sm:$0xff]
      %v2457 = vld [vmem:[%s1878 + $0x10a] sm:$0xff]
      %v2458 = vld [vmem:[%s1878 + $0x112] sm:$0xff]
      %v2459 = vld [vmem:[%s1878 + $0x122] sm:$0xff]
      %v2460 = vld [vmem:[%s1878 + $0x12a] sm:$0xff]
      %v2461 = vld [vmem:[%s1878 + $0x13a] sm:$0xff]
      %v2462 = vld [vmem:[%s1878 + $0x142] sm:$0xff]
      %v2463 = vld [vmem:[%s1878 + $0x152] sm:$0xff]
      %v2464 = vld [vmem:[%s1878 + $0x15a] sm:$0xff]
      %v2465 = vld [vmem:[%s1878 + $0x16a] sm:$0xff]
      %v2466 = vld [vmem:[%s1878 + $0x172] sm:$0xff]
      %s2467 = scalar_lea.vmem %s2, 16
      %v2468 = vld [vmem:[%s2467] sm:$0x3]
      %v2470 = vsel %vm339, %v2435, 0
      %v2473 = vsel %vm339, %v2436, 0
      %v2476 = vsel %vm339, %v2437, 0
      %v2479 = vsel %vm339, %v2438, 0
      %v2482 = vsel %vm339, %v2439, 0
      %v2485 = vsel %vm339, %v2440, 0
      %v2488 = vsel %vm339, %v2441, 0
      %v2491 = vsel %vm339, %v2442, 0
      %v2494 = vsel %vm339, %v2443, 0
      %v2497 = vsel %vm339, %v2444, 0
      %v2500 = vsel %vm339, %v2445, 0
      %v2503 = vsel %vm339, %v2446, 0
      %v2506 = vsel %vm339, %v2447, 0
      %v2509 = vsel %vm339, %v2448, 0
      %v2512 = vsel %vm339, %v2449, 0
      %v2515 = vsel %vm339, %v2450, 0
      %v2518 = vsel %vm339, %v2451, 0
      %v2521 = vsel %vm339, %v2452, 0
      %v2524 = vsel %vm339, %v2453, 0
      %v2527 = vsel %vm339, %v2454, 0
      %v2530 = vsel %vm339, %v2455, 0
      %v2533 = vsel %vm339, %v2456, 0
      %v2536 = vsel %vm339, %v2457, 0
      %v2539 = vsel %vm339, %v2458, 0
      %v2542 = vsel %vm339, %v2459, 0
      %v2545 = vsel %vm339, %v2460, 0
      %v2548 = vsel %vm339, %v2461, 0
      %v2551 = vsel %vm339, %v2462, 0
      %v2554 = vsel %vm339, %v2463, 0
      %v2557 = vsel %vm339, %v2464, 0
      %v2560 = vsel %vm339, %v2465, 0
      %v2563 = vsel %vm339, %v2466, 0
      %v2566 = vsel %vm436, %v2468, 0
      %2568 = vmatpush.msra.mxu0 0.0
      %2569 = vmatpush.msra.mxu0 0.0
      %2570 = vmatpush.msra.mxu0 0.0
      %2571 = vmatpush.msra.mxu0 0.0
      %2572 = vmatpush.msra.mxu0 0.0
      %2573 = vmatpush.msra.mxu0 0.0
      %2574 = vmatpush.msra.mxu0 0.0
      %2575 = vmatpush.msra.mxu0 0.0
      %2576 = vmatpush.msra.mxu0 0.0
      %2577 = vmatpush.msra.mxu0 0.0
      %2578 = vmatpush.msra.mxu0 0.0
      %2579 = vmatpush.msra.mxu0 0.0
      %2580 = vmatpush.msra.mxu0 0.0
      %2581 = vmatpush.msra.mxu0 0.0
      %2582 = vmatpush.msra.mxu0 0.0
      %2583 = vmatpush.msra.mxu0 %v2566
      %2584 = vmatmul.f32.gmra.mxu0 %v2470
      %v2585 = vpop.f32.mrf.mxu0
      %v2586 = vadd.f32 0.0, %v2585
      %2587 = vmatmul.f32.gmra.mxu0 %v2473
      %v2588 = vpop.f32.mrf.mxu0
      %v2589 = vadd.f32 0.0, %v2588
      %2590 = vmatmul.f32.gmra.mxu0 %v2476
      %v2591 = vpop.f32.mrf.mxu0
      %v2592 = vadd.f32 0.0, %v2591
      %2593 = vmatmul.f32.gmra.mxu0 %v2479
      %v2594 = vpop.f32.mrf.mxu0
      %v2595 = vadd.f32 0.0, %v2594
      %2596 = vmatmul.f32.gmra.mxu0 %v2482
      %v2597 = vpop.f32.mrf.mxu0
      %v2598 = vadd.f32 0.0, %v2597
      %2599 = vmatmul.f32.gmra.mxu0 %v2485
      %v2600 = vpop.f32.mrf.mxu0
      %v2601 = vadd.f32 0.0, %v2600
      %2602 = vmatmul.f32.gmra.mxu0 %v2488
      %v2603 = vpop.f32.mrf.mxu0
      %v2604 = vadd.f32 0.0, %v2603
      %2605 = vmatmul.f32.gmra.mxu0 %v2491
      %v2606 = vpop.f32.mrf.mxu0
      %v2607 = vadd.f32 0.0, %v2606
      %2608 = vmatmul.f32.gmra.mxu0 %v2494
      %v2609 = vpop.f32.mrf.mxu0
      %v2610 = vadd.f32 0.0, %v2609
      %2611 = vmatmul.f32.gmra.mxu0 %v2497
      %v2612 = vpop.f32.mrf.mxu0
      %v2613 = vadd.f32 0.0, %v2612
      %2614 = vmatmul.f32.gmra.mxu0 %v2500
      %v2615 = vpop.f32.mrf.mxu0
      %v2616 = vadd.f32 0.0, %v2615
      %2617 = vmatmul.f32.gmra.mxu0 %v2503
      %v2618 = vpop.f32.mrf.mxu0
      %v2619 = vadd.f32 0.0, %v2618
      %2620 = vmatmul.f32.gmra.mxu0 %v2506
      %v2621 = vpop.f32.mrf.mxu0
      %v2622 = vadd.f32 0.0, %v2621
      %2623 = vmatmul.f32.gmra.mxu0 %v2509
      %v2624 = vpop.f32.mrf.mxu0
      %v2625 = vadd.f32 0.0, %v2624
      %2626 = vmatmul.f32.gmra.mxu0 %v2512
      %v2627 = vpop.f32.mrf.mxu0
      %v2628 = vadd.f32 0.0, %v2627
      %2629 = vmatmul.f32.gmra.mxu0 %v2515
      %v2630 = vpop.f32.mrf.mxu0
      %v2631 = vadd.f32 0.0, %v2630
      %2632 = vmatmul.f32.gmra.mxu0 %v2518
      %v2633 = vpop.f32.mrf.mxu0
      %v2634 = vadd.f32 0.0, %v2633
      %2635 = vmatmul.f32.gmra.mxu0 %v2521
      %v2636 = vpop.f32.mrf.mxu0
      %v2637 = vadd.f32 0.0, %v2636
      %2638 = vmatmul.f32.gmra.mxu0 %v2524
      %v2639 = vpop.f32.mrf.mxu0
      %v2640 = vadd.f32 0.0, %v2639
      %2641 = vmatmul.f32.gmra.mxu0 %v2527
      %v2642 = vpop.f32.mrf.mxu0
      %v2643 = vadd.f32 0.0, %v2642
      %2644 = vmatmul.f32.gmra.mxu0 %v2530
      %v2645 = vpop.f32.mrf.mxu0
      %v2646 = vadd.f32 0.0, %v2645
      %2647 = vmatmul.f32.gmra.mxu0 %v2533
      %v2648 = vpop.f32.mrf.mxu0
      %v2649 = vadd.f32 0.0, %v2648
      %2650 = vmatmul.f32.gmra.mxu0 %v2536
      %v2651 = vpop.f32.mrf.mxu0
      %v2652 = vadd.f32 0.0, %v2651
      %2653 = vmatmul.f32.gmra.mxu0 %v2539
      %v2654 = vpop.f32.mrf.mxu0
      %v2655 = vadd.f32 0.0, %v2654
      %2656 = vmatmul.f32.gmra.mxu0 %v2542
      %v2657 = vpop.f32.mrf.mxu0
      %v2658 = vadd.f32 0.0, %v2657
      %2659 = vmatmul.f32.gmra.mxu0 %v2545
      %v2660 = vpop.f32.mrf.mxu0
      %v2661 = vadd.f32 0.0, %v2660
      %2662 = vmatmul.f32.gmra.mxu0 %v2548
      %v2663 = vpop.f32.mrf.mxu0
      %v2664 = vadd.f32 0.0, %v2663
      %2665 = vmatmul.f32.gmra.mxu0 %v2551
      %v2666 = vpop.f32.mrf.mxu0
      %v2667 = vadd.f32 0.0, %v2666
      %2668 = vmatmul.f32.gmra.mxu0 %v2554
      %v2669 = vpop.f32.mrf.mxu0
      %v2670 = vadd.f32 0.0, %v2669
      %2671 = vmatmul.f32.gmra.mxu0 %v2557
      %v2672 = vpop.f32.mrf.mxu0
      %v2673 = vadd.f32 0.0, %v2672
      %2674 = vmatmul.f32.gmra.mxu0 %v2560
      %v2675 = vpop.f32.mrf.mxu0
      %v2676 = vadd.f32 0.0, %v2675
      %2677 = vmatmul.f32.gmra.mxu0 %v2563
      %v2678 = vpop.f32.mrf.mxu0
      %v2679 = vadd.f32 0.0, %v2678
      %2680 = vdwg.mxu0
      %v2681 = vadd.f32 %v2403, %v2586
      %v2682 = vadd.f32 %v2404, %v2589
      %v2683 = vadd.f32 %v2405, %v2592
      %v2684 = vadd.f32 %v2406, %v2595
      %v2685 = vadd.f32 %v2407, %v2598
      %v2686 = vadd.f32 %v2408, %v2601
      %v2687 = vadd.f32 %v2409, %v2604
      %v2688 = vadd.f32 %v2410, %v2607
      %v2689 = vadd.f32 %v2411, %v2610
      %v2690 = vadd.f32 %v2412, %v2613
      %v2691 = vadd.f32 %v2413, %v2616
      %v2692 = vadd.f32 %v2414, %v2619
      %v2693 = vadd.f32 %v2415, %v2622
      %v2694 = vadd.f32 %v2416, %v2625
      %v2695 = vadd.f32 %v2417, %v2628
      %v2696 = vadd.f32 %v2418, %v2631
      %v2697 = vadd.f32 %v2419, %v2634
      %v2698 = vadd.f32 %v2420, %v2637
      %v2699 = vadd.f32 %v2421, %v2640
      %v2700 = vadd.f32 %v2422, %v2643
      %v2701 = vadd.f32 %v2423, %v2646
      %v2702 = vadd.f32 %v2424, %v2649
      %v2703 = vadd.f32 %v2425, %v2652
      %v2704 = vadd.f32 %v2426, %v2655
      %v2705 = vadd.f32 %v2427, %v2658
      %v2706 = vadd.f32 %v2428, %v2661
      %v2707 = vadd.f32 %v2429, %v2664
      %v2708 = vadd.f32 %v2430, %v2667
      %v2709 = vadd.f32 %v2431, %v2670
      %v2710 = vadd.f32 %v2432, %v2673
      %v2711 = vadd.f32 %v2433, %v2676
      %v2712 = vadd.f32 %v2434, %v2679
      %v2713 = vld [vmem:[%s3] sm:$0x1]
      %v2715 = vperm.slane %v2713, 0
      %v2717 = vadd.f32 %v2681, %v2715
      %v2718 = vadd.f32 %v2682, %v2715
      %v2719 = vadd.f32 %v2683, %v2715
      %v2720 = vadd.f32 %v2684, %v2715
      %v2721 = vadd.f32 %v2685, %v2715
      %v2722 = vadd.f32 %v2686, %v2715
      %v2723 = vadd.f32 %v2687, %v2715
      %v2724 = vadd.f32 %v2688, %v2715
      %v2725 = vadd.f32 %v2689, %v2715
      %v2726 = vadd.f32 %v2690, %v2715
      %v2727 = vadd.f32 %v2691, %v2715
      %v2728 = vadd.f32 %v2692, %v2715
      %v2729 = vadd.f32 %v2693, %v2715
      %v2730 = vadd.f32 %v2694, %v2715
      %v2731 = vadd.f32 %v2695, %v2715
      %v2732 = vadd.f32 %v2696, %v2715
      %v2733 = vadd.f32 %v2697, %v2715
      %v2734 = vadd.f32 %v2698, %v2715
      %v2735 = vadd.f32 %v2699, %v2715
      %v2736 = vadd.f32 %v2700, %v2715
      %v2737 = vadd.f32 %v2701, %v2715
      %v2738 = vadd.f32 %v2702, %v2715
      %v2739 = vadd.f32 %v2703, %v2715
      %v2740 = vadd.f32 %v2704, %v2715
      %v2741 = vadd.f32 %v2705, %v2715
      %v2742 = vadd.f32 %v2706, %v2715
      %v2743 = vadd.f32 %v2707, %v2715
      %v2744 = vadd.f32 %v2708, %v2715
      %v2745 = vadd.f32 %v2709, %v2715
      %v2746 = vadd.f32 %v2710, %v2715
      %v2747 = vadd.f32 %v2711, %v2715
      %v2748 = vadd.f32 %v2712, %v2715
      %v2749 = vmul.f32 %v2717, 0.5
      %v2750 = vmul.f32 %v2718, 0.5
      %v2751 = vmul.f32 %v2719, 0.5
      %v2752 = vmul.f32 %v2720, 0.5
      %v2753 = vmul.f32 %v2721, 0.5
      %v2754 = vmul.f32 %v2722, 0.5
      %v2755 = vmul.f32 %v2723, 0.5
      %v2756 = vmul.f32 %v2724, 0.5
      %v2757 = vmul.f32 %v2725, 0.5
      %v2758 = vmul.f32 %v2726, 0.5
      %v2759 = vmul.f32 %v2727, 0.5
      %v2760 = vmul.f32 %v2728, 0.5
      %v2761 = vmul.f32 %v2729, 0.5
      %v2762 = vmul.f32 %v2730, 0.5
      %v2763 = vmul.f32 %v2731, 0.5
      %v2764 = vmul.f32 %v2732, 0.5
      %v2765 = vmul.f32 %v2733, 0.5
      %v2766 = vmul.f32 %v2734, 0.5
      %v2767 = vmul.f32 %v2735, 0.5
      %v2768 = vmul.f32 %v2736, 0.5
      %v2769 = vmul.f32 %v2737, 0.5
      %v2770 = vmul.f32 %v2738, 0.5
      %v2771 = vmul.f32 %v2739, 0.5
      %v2772 = vmul.f32 %v2740, 0.5
      %v2773 = vmul.f32 %v2741, 0.5
      %v2774 = vmul.f32 %v2742, 0.5
      %v2775 = vmul.f32 %v2743, 0.5
      %v2776 = vmul.f32 %v2744, 0.5
      %v2777 = vmul.f32 %v2745, 0.5
      %v2778 = vmul.f32 %v2746, 0.5
      %v2779 = vmul.f32 %v2747, 0.5
      %v2780 = vmul.f32 %v2748, 0.5
      %v2781 = vmul.f32 %v2717, 0.70710677
      %v2782 = vmul.f32 %v2718, 0.70710677
      %v2783 = vmul.f32 %v2719, 0.70710677
      %v2784 = vmul.f32 %v2720, 0.70710677
      %v2785 = vmul.f32 %v2721, 0.70710677
      %v2786 = vmul.f32 %v2722, 0.70710677
      %v2787 = vmul.f32 %v2723, 0.70710677
      %v2788 = vmul.f32 %v2724, 0.70710677
      %v2789 = vmul.f32 %v2725, 0.70710677
      %v2790 = vmul.f32 %v2726, 0.70710677
      %v2791 = vmul.f32 %v2727, 0.70710677
      %v2792 = vmul.f32 %v2728, 0.70710677
      %v2793 = vmul.f32 %v2729, 0.70710677
      %v2794 = vmul.f32 %v2730, 0.70710677
      %v2795 = vmul.f32 %v2731, 0.70710677
      %v2796 = vmul.f32 %v2732, 0.70710677
      %v2797 = vmul.f32 %v2733, 0.70710677
      %v2798 = vmul.f32 %v2734, 0.70710677
      %v2799 = vmul.f32 %v2735, 0.70710677
      %v2800 = vmul.f32 %v2736, 0.70710677
      %v2801 = vmul.f32 %v2737, 0.70710677
      %v2802 = vmul.f32 %v2738, 0.70710677
      %v2803 = vmul.f32 %v2739, 0.70710677
      %v2804 = vmul.f32 %v2740, 0.70710677
      %v2805 = vmul.f32 %v2741, 0.70710677
      %v2806 = vmul.f32 %v2742, 0.70710677
      %v2807 = vmul.f32 %v2743, 0.70710677
      %v2808 = vmul.f32 %v2744, 0.70710677
      %v2809 = vmul.f32 %v2745, 0.70710677
      %v2810 = vmul.f32 %v2746, 0.70710677
      %v2811 = vmul.f32 %v2747, 0.70710677
      %v2812 = vmul.f32 %v2748, 0.70710677
      %v2813 = vmul.f32 %v2781, %v2781
      %v2814 = vmin.f32 16.0, %v2813
      %v2815 = vmul.f32 %v2814, 2.1237322e-06
      %v2816 = vadd.f32 %v2815, 0.00028619796
      %v2817 = vmul.f32 %v2814, %v2816
      %v2818 = vadd.f32 %v2817, 0.0036580483
      %v2819 = vmul.f32 %v2814, %v2818
      %v2820 = vadd.f32 %v2819, 0.05243302
      %v2821 = vmul.f32 %v2814, %v2820
      %v2822 = vadd.f32 %v2821, 0.18741608
      %v2823 = vmul.f32 %v2814, %v2822
      %v2824 = vadd.f32 %v2823, 1.1283791
      %v2825 = vmul.f32 %v2781, %v2824
      %v2826 = vmul.f32 %v2814, 3.8918573e-05
      %v2827 = vadd.f32 %v2826, 0.001143296
      %v2828 = vmul.f32 %v2814, %v2827
      %v2829 = vadd.f32 %v2828, 0.014752088
      %v2830 = vmul.f32 %v2814, %v2829
      %v2831 = vadd.f32 %v2830, 0.112945676
      %v2832 = vmul.f32 %v2814, %v2831
      %v2833 = vadd.f32 %v2832, 0.4994258
      %v2834 = vmul.f32 %v2814, %v2833
      %v2835 = vadd.f32 %v2834, 1.0
      %v2836 = vrcp.pop %v2835
      %v2837 = vmul.f32 %v2835, %v2836
      %v2838 = vsub.f32 1.0, %v2837
      %v2839 = vmul.f32 %v2836, %v2838
      %v2840 = vadd.f32 %v2836, %v2839
      %vm2841 = vweird.f32 %v2835
      %vm2842 = vweird.f32 %v2836
      %vm2843 = vmor %vm2841, %vm2842
      %v2844 = vsel %vm2843, %v2836, %v2840
      %v2845 = vand.u32 2147483647, %v2835
      %vm2846 = vcmp.eq.f32.partialorder %v2845, 8.507059e+37
      %v2847 = vand.u32 %v2835, 2147483648
      %v2848 = vor.u32 1.1754944e-38, %v2847
      %v2849 = vsel %vm2846, %v2848, %v2844
      %v2850 = vmul.f32 %v2825, %v2849
      %v2851 = vmin.f32 %v2850, 1.0
      %v2852 = vmax.f32 %v2851, -1.0
      %v2853 = vmul.f32 %v2782, %v2782
      %v2854 = vmin.f32 16.0, %v2853
      %v2855 = vmul.f32 %v2854, 2.1237322e-06
      %v2856 = vadd.f32 %v2855, 0.00028619796
      %v2857 = vmul.f32 %v2854, %v2856
      %v2858 = vadd.f32 %v2857, 0.0036580483
      %v2859 = vmul.f32 %v2854, %v2858
      %v2860 = vadd.f32 %v2859, 0.05243302
      %v2861 = vmul.f32 %v2854, %v2860
      %v2862 = vadd.f32 %v2861, 0.18741608
      %v2863 = vmul.f32 %v2854, %v2862
      %v2864 = vadd.f32 %v2863, 1.1283791
      %v2865 = vmul.f32 %v2782, %v2864
      %v2866 = vmul.f32 %v2854, 3.8918573e-05
      %v2867 = vadd.f32 %v2866, 0.001143296
      %v2868 = vmul.f32 %v2854, %v2867
      %v2869 = vadd.f32 %v2868, 0.014752088
      %v2870 = vmul.f32 %v2854, %v2869
      %v2871 = vadd.f32 %v2870, 0.112945676
      %v2872 = vmul.f32 %v2854, %v2871
      %v2873 = vadd.f32 %v2872, 0.4994258
      %v2874 = vmul.f32 %v2854, %v2873
      %v2875 = vadd.f32 %v2874, 1.0
      %v2876 = vrcp.pop %v2875
      %v2877 = vmul.f32 %v2875, %v2876
      %v2878 = vsub.f32 1.0, %v2877
      %v2879 = vmul.f32 %v2876, %v2878
      %v2880 = vadd.f32 %v2876, %v2879
      %vm2881 = vweird.f32 %v2875
      %vm2882 = vweird.f32 %v2876
      %vm2883 = vmor %vm2881, %vm2882
      %v2884 = vsel %vm2883, %v2876, %v2880
      %v2885 = vand.u32 2147483647, %v2875
      %vm2886 = vcmp.eq.f32.partialorder %v2885, 8.507059e+37
      %v2887 = vand.u32 %v2875, 2147483648
      %v2888 = vor.u32 1.1754944e-38, %v2887
      %v2889 = vsel %vm2886, %v2888, %v2884
      %v2890 = vmul.f32 %v2865, %v2889
      %v2891 = vmin.f32 %v2890, 1.0
      %v2892 = vmax.f32 %v2891, -1.0
      %v2893 = vmul.f32 %v2783, %v2783
      %v2894 = vmin.f32 16.0, %v2893
      %v2895 = vmul.f32 %v2894, 2.1237322e-06
      %v2896 = vadd.f32 %v2895, 0.00028619796
      %v2897 = vmul.f32 %v2894, %v2896
      %v2898 = vadd.f32 %v2897, 0.0036580483
      %v2899 = vmul.f32 %v2894, %v2898
      %v2900 = vadd.f32 %v2899, 0.05243302
      %v2901 = vmul.f32 %v2894, %v2900
      %v2902 = vadd.f32 %v2901, 0.18741608
      %v2903 = vmul.f32 %v2894, %v2902
      %v2904 = vadd.f32 %v2903, 1.1283791
      %v2905 = vmul.f32 %v2783, %v2904
      %v2906 = vmul.f32 %v2894, 3.8918573e-05
      %v2907 = vadd.f32 %v2906, 0.001143296
      %v2908 = vmul.f32 %v2894, %v2907
      %v2909 = vadd.f32 %v2908, 0.014752088
      %v2910 = vmul.f32 %v2894, %v2909
      %v2911 = vadd.f32 %v2910, 0.112945676
      %v2912 = vmul.f32 %v2894, %v2911
      %v2913 = vadd.f32 %v2912, 0.4994258
      %v2914 = vmul.f32 %v2894, %v2913
      %v2915 = vadd.f32 %v2914, 1.0
      %v2916 = vrcp.pop %v2915
      %v2917 = vmul.f32 %v2915, %v2916
      %v2918 = vsub.f32 1.0, %v2917
      %v2919 = vmul.f32 %v2916, %v2918
      %v2920 = vadd.f32 %v2916, %v2919
      %vm2921 = vweird.f32 %v2915
      %vm2922 = vweird.f32 %v2916
      %vm2923 = vmor %vm2921, %vm2922
      %v2924 = vsel %vm2923, %v2916, %v2920
      %v2925 = vand.u32 2147483647, %v2915
      %vm2926 = vcmp.eq.f32.partialorder %v2925, 8.507059e+37
      %v2927 = vand.u32 %v2915, 2147483648
      %v2928 = vor.u32 1.1754944e-38, %v2927
      %v2929 = vsel %vm2926, %v2928, %v2924
      %v2930 = vmul.f32 %v2905, %v2929
      %v2931 = vmin.f32 %v2930, 1.0
      %v2932 = vmax.f32 %v2931, -1.0
      %v2933 = vmul.f32 %v2784, %v2784
      %v2934 = vmin.f32 16.0, %v2933
      %v2935 = vmul.f32 %v2934, 2.1237322e-06
      %v2936 = vadd.f32 %v2935, 0.00028619796
      %v2937 = vmul.f32 %v2934, %v2936
      %v2938 = vadd.f32 %v2937, 0.0036580483
      %v2939 = vmul.f32 %v2934, %v2938
      %v2940 = vadd.f32 %v2939, 0.05243302
      %v2941 = vmul.f32 %v2934, %v2940
      %v2942 = vadd.f32 %v2941, 0.18741608
      %v2943 = vmul.f32 %v2934, %v2942
      %v2944 = vadd.f32 %v2943, 1.1283791
      %v2945 = vmul.f32 %v2784, %v2944
      %v2946 = vmul.f32 %v2934, 3.8918573e-05
      %v2947 = vadd.f32 %v2946, 0.001143296
      %v2948 = vmul.f32 %v2934, %v2947
      %v2949 = vadd.f32 %v2948, 0.014752088
      %v2950 = vmul.f32 %v2934, %v2949
      %v2951 = vadd.f32 %v2950, 0.112945676
      %v2952 = vmul.f32 %v2934, %v2951
      %v2953 = vadd.f32 %v2952, 0.4994258
      %v2954 = vmul.f32 %v2934, %v2953
      %v2955 = vadd.f32 %v2954, 1.0
      %v2956 = vrcp.pop %v2955
      %v2957 = vmul.f32 %v2955, %v2956
      %v2958 = vsub.f32 1.0, %v2957
      %v2959 = vmul.f32 %v2956, %v2958
      %v2960 = vadd.f32 %v2956, %v2959
      %vm2961 = vweird.f32 %v2955
      %vm2962 = vweird.f32 %v2956
      %vm2963 = vmor %vm2961, %vm2962
      %v2964 = vsel %vm2963, %v2956, %v2960
      %v2965 = vand.u32 2147483647, %v2955
      %vm2966 = vcmp.eq.f32.partialorder %v2965, 8.507059e+37
      %v2967 = vand.u32 %v2955, 2147483648
      %v2968 = vor.u32 1.1754944e-38, %v2967
      %v2969 = vsel %vm2966, %v2968, %v2964
      %v2970 = vmul.f32 %v2945, %v2969
      %v2971 = vmin.f32 %v2970, 1.0
      %v2972 = vmax.f32 %v2971, -1.0
      %v2973 = vmul.f32 %v2785, %v2785
      %v2974 = vmin.f32 16.0, %v2973
      %v2975 = vmul.f32 %v2974, 2.1237322e-06
      %v2976 = vadd.f32 %v2975, 0.00028619796
      %v2977 = vmul.f32 %v2974, %v2976
      %v2978 = vadd.f32 %v2977, 0.0036580483
      %v2979 = vmul.f32 %v2974, %v2978
      %v2980 = vadd.f32 %v2979, 0.05243302
      %v2981 = vmul.f32 %v2974, %v2980
      %v2982 = vadd.f32 %v2981, 0.18741608
      %v2983 = vmul.f32 %v2974, %v2982
      %v2984 = vadd.f32 %v2983, 1.1283791
      %v2985 = vmul.f32 %v2785, %v2984
      %v2986 = vmul.f32 %v2974, 3.8918573e-05
      %v2987 = vadd.f32 %v2986, 0.001143296
      %v2988 = vmul.f32 %v2974, %v2987
      %v2989 = vadd.f32 %v2988, 0.014752088
      %v2990 = vmul.f32 %v2974, %v2989
      %v2991 = vadd.f32 %v2990, 0.112945676
      %v2992 = vmul.f32 %v2974, %v2991
      %v2993 = vadd.f32 %v2992, 0.4994258
      %v2994 = vmul.f32 %v2974, %v2993
      %v2995 = vadd.f32 %v2994, 1.0
      %v2996 = vrcp.pop %v2995
      %v2997 = vmul.f32 %v2995, %v2996
      %v2998 = vsub.f32 1.0, %v2997
      %v2999 = vmul.f32 %v2996, %v2998
      %v3000 = vadd.f32 %v2996, %v2999
      %vm3001 = vweird.f32 %v2995
      %vm3002 = vweird.f32 %v2996
      %vm3003 = vmor %vm3001, %vm3002
      %v3004 = vsel %vm3003, %v2996, %v3000
      %v3005 = vand.u32 2147483647, %v2995
      %vm3006 = vcmp.eq.f32.partialorder %v3005, 8.507059e+37
      %v3007 = vand.u32 %v2995, 2147483648
      %v3008 = vor.u32 1.1754944e-38, %v3007
      %v3009 = vsel %vm3006, %v3008, %v3004
      %v3010 = vmul.f32 %v2985, %v3009
      %v3011 = vmin.f32 %v3010, 1.0
      %v3012 = vmax.f32 %v3011, -1.0
      %v3013 = vmul.f32 %v2786, %v2786
      %v3014 = vmin.f32 16.0, %v3013
      %v3015 = vmul.f32 %v3014, 2.1237322e-06
      %v3016 = vadd.f32 %v3015, 0.00028619796
      %v3017 = vmul.f32 %v3014, %v3016
      %v3018 = vadd.f32 %v3017, 0.0036580483
      %v3019 = vmul.f32 %v3014, %v3018
      %v3020 = vadd.f32 %v3019, 0.05243302
      %v3021 = vmul.f32 %v3014, %v3020
      %v3022 = vadd.f32 %v3021, 0.18741608
      %v3023 = vmul.f32 %v3014, %v3022
      %v3024 = vadd.f32 %v3023, 1.1283791
      %v3025 = vmul.f32 %v2786, %v3024
      %v3026 = vmul.f32 %v3014, 3.8918573e-05
      %v3027 = vadd.f32 %v3026, 0.001143296
      %v3028 = vmul.f32 %v3014, %v3027
      %v3029 = vadd.f32 %v3028, 0.014752088
      %v3030 = vmul.f32 %v3014, %v3029
      %v3031 = vadd.f32 %v3030, 0.112945676
      %v3032 = vmul.f32 %v3014, %v3031
      %v3033 = vadd.f32 %v3032, 0.4994258
      %v3034 = vmul.f32 %v3014, %v3033
      %v3035 = vadd.f32 %v3034, 1.0
      %v3036 = vrcp.pop %v3035
      %v3037 = vmul.f32 %v3035, %v3036
      %v3038 = vsub.f32 1.0, %v3037
      %v3039 = vmul.f32 %v3036, %v3038
      %v3040 = vadd.f32 %v3036, %v3039
      %vm3041 = vweird.f32 %v3035
      %vm3042 = vweird.f32 %v3036
      %vm3043 = vmor %vm3041, %vm3042
      %v3044 = vsel %vm3043, %v3036, %v3040
      %v3045 = vand.u32 2147483647, %v3035
      %vm3046 = vcmp.eq.f32.partialorder %v3045, 8.507059e+37
      %v3047 = vand.u32 %v3035, 2147483648
      %v3048 = vor.u32 1.1754944e-38, %v3047
      %v3049 = vsel %vm3046, %v3048, %v3044
      %v3050 = vmul.f32 %v3025, %v3049
      %v3051 = vmin.f32 %v3050, 1.0
      %v3052 = vmax.f32 %v3051, -1.0
      %v3053 = vmul.f32 %v2787, %v2787
      %v3054 = vmin.f32 16.0, %v3053
      %v3055 = vmul.f32 %v3054, 2.1237322e-06
      %v3056 = vadd.f32 %v3055, 0.00028619796
      %v3057 = vmul.f32 %v3054, %v3056
      %v3058 = vadd.f32 %v3057, 0.0036580483
      %v3059 = vmul.f32 %v3054, %v3058
      %v3060 = vadd.f32 %v3059, 0.05243302
      %v3061 = vmul.f32 %v3054, %v3060
      %v3062 = vadd.f32 %v3061, 0.18741608
      %v3063 = vmul.f32 %v3054, %v3062
      %v3064 = vadd.f32 %v3063, 1.1283791
      %v3065 = vmul.f32 %v2787, %v3064
      %v3066 = vmul.f32 %v3054, 3.8918573e-05
      %v3067 = vadd.f32 %v3066, 0.001143296
      %v3068 = vmul.f32 %v3054, %v3067
      %v3069 = vadd.f32 %v3068, 0.014752088
      %v3070 = vmul.f32 %v3054, %v3069
      %v3071 = vadd.f32 %v3070, 0.112945676
      %v3072 = vmul.f32 %v3054, %v3071
      %v3073 = vadd.f32 %v3072, 0.4994258
      %v3074 = vmul.f32 %v3054, %v3073
      %v3075 = vadd.f32 %v3074, 1.0
      %v3076 = vrcp.pop %v3075
      %v3077 = vmul.f32 %v3075, %v3076
      %v3078 = vsub.f32 1.0, %v3077
      %v3079 = vmul.f32 %v3076, %v3078
      %v3080 = vadd.f32 %v3076, %v3079
      %vm3081 = vweird.f32 %v3075
      %vm3082 = vweird.f32 %v3076
      %vm3083 = vmor %vm3081, %vm3082
      %v3084 = vsel %vm3083, %v3076, %v3080
      %v3085 = vand.u32 2147483647, %v3075
      %vm3086 = vcmp.eq.f32.partialorder %v3085, 8.507059e+37
      %v3087 = vand.u32 %v3075, 2147483648
      %v3088 = vor.u32 1.1754944e-38, %v3087
      %v3089 = vsel %vm3086, %v3088, %v3084
      %v3090 = vmul.f32 %v3065, %v3089
      %v3091 = vmin.f32 %v3090, 1.0
      %v3092 = vmax.f32 %v3091, -1.0
      %v3093 = vmul.f32 %v2788, %v2788
      %v3094 = vmin.f32 16.0, %v3093
      %v3095 = vmul.f32 %v3094, 2.1237322e-06
      %v3096 = vadd.f32 %v3095, 0.00028619796
      %v3097 = vmul.f32 %v3094, %v3096
      %v3098 = vadd.f32 %v3097, 0.0036580483
      %v3099 = vmul.f32 %v3094, %v3098
      %v3100 = vadd.f32 %v3099, 0.05243302
      %v3101 = vmul.f32 %v3094, %v3100
      %v3102 = vadd.f32 %v3101, 0.18741608
      %v3103 = vmul.f32 %v3094, %v3102
      %v3104 = vadd.f32 %v3103, 1.1283791
      %v3105 = vmul.f32 %v2788, %v3104
      %v3106 = vmul.f32 %v3094, 3.8918573e-05
      %v3107 = vadd.f32 %v3106, 0.001143296
      %v3108 = vmul.f32 %v3094, %v3107
      %v3109 = vadd.f32 %v3108, 0.014752088
      %v3110 = vmul.f32 %v3094, %v3109
      %v3111 = vadd.f32 %v3110, 0.112945676
      %v3112 = vmul.f32 %v3094, %v3111
      %v3113 = vadd.f32 %v3112, 0.4994258
      %v3114 = vmul.f32 %v3094, %v3113
      %v3115 = vadd.f32 %v3114, 1.0
      %v3116 = vrcp.pop %v3115
      %v3117 = vmul.f32 %v3115, %v3116
      %v3118 = vsub.f32 1.0, %v3117
      %v3119 = vmul.f32 %v3116, %v3118
      %v3120 = vadd.f32 %v3116, %v3119
      %vm3121 = vweird.f32 %v3115
      %vm3122 = vweird.f32 %v3116
      %vm3123 = vmor %vm3121, %vm3122
      %v3124 = vsel %vm3123, %v3116, %v3120
      %v3125 = vand.u32 2147483647, %v3115
      %vm3126 = vcmp.eq.f32.partialorder %v3125, 8.507059e+37
      %v3127 = vand.u32 %v3115, 2147483648
      %v3128 = vor.u32 1.1754944e-38, %v3127
      %v3129 = vsel %vm3126, %v3128, %v3124
      %v3130 = vmul.f32 %v3105, %v3129
      %v3131 = vmin.f32 %v3130, 1.0
      %v3132 = vmax.f32 %v3131, -1.0
      %v3133 = vmul.f32 %v2789, %v2789
      %v3134 = vmin.f32 16.0, %v3133
      %v3135 = vmul.f32 %v3134, 2.1237322e-06
      %v3136 = vadd.f32 %v3135, 0.00028619796
      %v3137 = vmul.f32 %v3134, %v3136
      %v3138 = vadd.f32 %v3137, 0.0036580483
      %v3139 = vmul.f32 %v3134, %v3138
      %v3140 = vadd.f32 %v3139, 0.05243302
      %v3141 = vmul.f32 %v3134, %v3140
      %v3142 = vadd.f32 %v3141, 0.18741608
      %v3143 = vmul.f32 %v3134, %v3142
      %v3144 = vadd.f32 %v3143, 1.1283791
      %v3145 = vmul.f32 %v2789, %v3144
      %v3146 = vmul.f32 %v3134, 3.8918573e-05
      %v3147 = vadd.f32 %v3146, 0.001143296
      %v3148 = vmul.f32 %v3134, %v3147
      %v3149 = vadd.f32 %v3148, 0.014752088
      %v3150 = vmul.f32 %v3134, %v3149
      %v3151 = vadd.f32 %v3150, 0.112945676
      %v3152 = vmul.f32 %v3134, %v3151
      %v3153 = vadd.f32 %v3152, 0.4994258
      %v3154 = vmul.f32 %v3134, %v3153
      %v3155 = vadd.f32 %v3154, 1.0
      %v3156 = vrcp.pop %v3155
      %v3157 = vmul.f32 %v3155, %v3156
      %v3158 = vsub.f32 1.0, %v3157
      %v3159 = vmul.f32 %v3156, %v3158
      %v3160 = vadd.f32 %v3156, %v3159
      %vm3161 = vweird.f32 %v3155
      %vm3162 = vweird.f32 %v3156
      %vm3163 = vmor %vm3161, %vm3162
      %v3164 = vsel %vm3163, %v3156, %v3160
      %v3165 = vand.u32 2147483647, %v3155
      %vm3166 = vcmp.eq.f32.partialorder %v3165, 8.507059e+37
      %v3167 = vand.u32 %v3155, 2147483648
      %v3168 = vor.u32 1.1754944e-38, %v3167
      %v3169 = vsel %vm3166, %v3168, %v3164
      %v3170 = vmul.f32 %v3145, %v3169
      %v3171 = vmin.f32 %v3170, 1.0
      %v3172 = vmax.f32 %v3171, -1.0
      %v3173 = vmul.f32 %v2790, %v2790
      %v3174 = vmin.f32 16.0, %v3173
      %v3175 = vmul.f32 %v3174, 2.1237322e-06
      %v3176 = vadd.f32 %v3175, 0.00028619796
      %v3177 = vmul.f32 %v3174, %v3176
      %v3178 = vadd.f32 %v3177, 0.0036580483
      %v3179 = vmul.f32 %v3174, %v3178
      %v3180 = vadd.f32 %v3179, 0.05243302
      %v3181 = vmul.f32 %v3174, %v3180
      %v3182 = vadd.f32 %v3181, 0.18741608
      %v3183 = vmul.f32 %v3174, %v3182
      %v3184 = vadd.f32 %v3183, 1.1283791
      %v3185 = vmul.f32 %v2790, %v3184
      %v3186 = vmul.f32 %v3174, 3.8918573e-05
      %v3187 = vadd.f32 %v3186, 0.001143296
      %v3188 = vmul.f32 %v3174, %v3187
      %v3189 = vadd.f32 %v3188, 0.014752088
      %v3190 = vmul.f32 %v3174, %v3189
      %v3191 = vadd.f32 %v3190, 0.112945676
      %v3192 = vmul.f32 %v3174, %v3191
      %v3193 = vadd.f32 %v3192, 0.4994258
      %v3194 = vmul.f32 %v3174, %v3193
      %v3195 = vadd.f32 %v3194, 1.0
      %v3196 = vrcp.pop %v3195
      %v3197 = vmul.f32 %v3195, %v3196
      %v3198 = vsub.f32 1.0, %v3197
      %v3199 = vmul.f32 %v3196, %v3198
      %v3200 = vadd.f32 %v3196, %v3199
      %vm3201 = vweird.f32 %v3195
      %vm3202 = vweird.f32 %v3196
      %vm3203 = vmor %vm3201, %vm3202
      %v3204 = vsel %vm3203, %v3196, %v3200
      %v3205 = vand.u32 2147483647, %v3195
      %vm3206 = vcmp.eq.f32.partialorder %v3205, 8.507059e+37
      %v3207 = vand.u32 %v3195, 2147483648
      %v3208 = vor.u32 1.1754944e-38, %v3207
      %v3209 = vsel %vm3206, %v3208, %v3204
      %v3210 = vmul.f32 %v3185, %v3209
      %v3211 = vmin.f32 %v3210, 1.0
      %v3212 = vmax.f32 %v3211, -1.0
      %v3213 = vmul.f32 %v2791, %v2791
      %v3214 = vmin.f32 16.0, %v3213
      %v3215 = vmul.f32 %v3214, 2.1237322e-06
      %v3216 = vadd.f32 %v3215, 0.00028619796
      %v3217 = vmul.f32 %v3214, %v3216
      %v3218 = vadd.f32 %v3217, 0.0036580483
      %v3219 = vmul.f32 %v3214, %v3218
      %v3220 = vadd.f32 %v3219, 0.05243302
      %v3221 = vmul.f32 %v3214, %v3220
      %v3222 = vadd.f32 %v3221, 0.18741608
      %v3223 = vmul.f32 %v3214, %v3222
      %v3224 = vadd.f32 %v3223, 1.1283791
      %v3225 = vmul.f32 %v2791, %v3224
      %v3226 = vmul.f32 %v3214, 3.8918573e-05
      %v3227 = vadd.f32 %v3226, 0.001143296
      %v3228 = vmul.f32 %v3214, %v3227
      %v3229 = vadd.f32 %v3228, 0.014752088
      %v3230 = vmul.f32 %v3214, %v3229
      %v3231 = vadd.f32 %v3230, 0.112945676
      %v3232 = vmul.f32 %v3214, %v3231
      %v3233 = vadd.f32 %v3232, 0.4994258
      %v3234 = vmul.f32 %v3214, %v3233
      %v3235 = vadd.f32 %v3234, 1.0
      %v3236 = vrcp.pop %v3235
      %v3237 = vmul.f32 %v3235, %v3236
      %v3238 = vsub.f32 1.0, %v3237
      %v3239 = vmul.f32 %v3236, %v3238
      %v3240 = vadd.f32 %v3236, %v3239
      %vm3241 = vweird.f32 %v3235
      %vm3242 = vweird.f32 %v3236
      %vm3243 = vmor %vm3241, %vm3242
      %v3244 = vsel %vm3243, %v3236, %v3240
      %v3245 = vand.u32 2147483647, %v3235
      %vm3246 = vcmp.eq.f32.partialorder %v3245, 8.507059e+37
      %v3247 = vand.u32 %v3235, 2147483648
      %v3248 = vor.u32 1.1754944e-38, %v3247
      %v3249 = vsel %vm3246, %v3248, %v3244
      %v3250 = vmul.f32 %v3225, %v3249
      %v3251 = vmin.f32 %v3250, 1.0
      %v3252 = vmax.f32 %v3251, -1.0
      %v3253 = vmul.f32 %v2792, %v2792
      %v3254 = vmin.f32 16.0, %v3253
      %v3255 = vmul.f32 %v3254, 2.1237322e-06
      %v3256 = vadd.f32 %v3255, 0.00028619796
      %v3257 = vmul.f32 %v3254, %v3256
      %v3258 = vadd.f32 %v3257, 0.0036580483
      %v3259 = vmul.f32 %v3254, %v3258
      %v3260 = vadd.f32 %v3259, 0.05243302
      %v3261 = vmul.f32 %v3254, %v3260
      %v3262 = vadd.f32 %v3261, 0.18741608
      %v3263 = vmul.f32 %v3254, %v3262
      %v3264 = vadd.f32 %v3263, 1.1283791
      %v3265 = vmul.f32 %v2792, %v3264
      %v3266 = vmul.f32 %v3254, 3.8918573e-05
      %v3267 = vadd.f32 %v3266, 0.001143296
      %v3268 = vmul.f32 %v3254, %v3267
      %v3269 = vadd.f32 %v3268, 0.014752088
      %v3270 = vmul.f32 %v3254, %v3269
      %v3271 = vadd.f32 %v3270, 0.112945676
      %v3272 = vmul.f32 %v3254, %v3271
      %v3273 = vadd.f32 %v3272, 0.4994258
      %v3274 = vmul.f32 %v3254, %v3273
      %v3275 = vadd.f32 %v3274, 1.0
      %v3276 = vrcp.pop %v3275
      %v3277 = vmul.f32 %v3275, %v3276
      %v3278 = vsub.f32 1.0, %v3277
      %v3279 = vmul.f32 %v3276, %v3278
      %v3280 = vadd.f32 %v3276, %v3279
      %vm3281 = vweird.f32 %v3275
      %vm3282 = vweird.f32 %v3276
      %vm3283 = vmor %vm3281, %vm3282
      %v3284 = vsel %vm3283, %v3276, %v3280
      %v3285 = vand.u32 2147483647, %v3275
      %vm3286 = vcmp.eq.f32.partialorder %v3285, 8.507059e+37
      %v3287 = vand.u32 %v3275, 2147483648
      %v3288 = vor.u32 1.1754944e-38, %v3287
      %v3289 = vsel %vm3286, %v3288, %v3284
      %v3290 = vmul.f32 %v3265, %v3289
      %v3291 = vmin.f32 %v3290, 1.0
      %v3292 = vmax.f32 %v3291, -1.0
      %v3293 = vmul.f32 %v2793, %v2793
      %v3294 = vmin.f32 16.0, %v3293
      %v3295 = vmul.f32 %v3294, 2.1237322e-06
      %v3296 = vadd.f32 %v3295, 0.00028619796
      %v3297 = vmul.f32 %v3294, %v3296
      %v3298 = vadd.f32 %v3297, 0.0036580483
      %v3299 = vmul.f32 %v3294, %v3298
      %v3300 = vadd.f32 %v3299, 0.05243302
      %v3301 = vmul.f32 %v3294, %v3300
      %v3302 = vadd.f32 %v3301, 0.18741608
      %v3303 = vmul.f32 %v3294, %v3302
      %v3304 = vadd.f32 %v3303, 1.1283791
      %v3305 = vmul.f32 %v2793, %v3304
      %v3306 = vmul.f32 %v3294, 3.8918573e-05
      %v3307 = vadd.f32 %v3306, 0.001143296
      %v3308 = vmul.f32 %v3294, %v3307
      %v3309 = vadd.f32 %v3308, 0.014752088
      %v3310 = vmul.f32 %v3294, %v3309
      %v3311 = vadd.f32 %v3310, 0.112945676
      %v3312 = vmul.f32 %v3294, %v3311
      %v3313 = vadd.f32 %v3312, 0.4994258
      %v3314 = vmul.f32 %v3294, %v3313
      %v3315 = vadd.f32 %v3314, 1.0
      %v3316 = vrcp.pop %v3315
      %v3317 = vmul.f32 %v3315, %v3316
      %v3318 = vsub.f32 1.0, %v3317
      %v3319 = vmul.f32 %v3316, %v3318
      %v3320 = vadd.f32 %v3316, %v3319
      %vm3321 = vweird.f32 %v3315
      %vm3322 = vweird.f32 %v3316
      %vm3323 = vmor %vm3321, %vm3322
      %v3324 = vsel %vm3323, %v3316, %v3320
      %v3325 = vand.u32 2147483647, %v3315
      %vm3326 = vcmp.eq.f32.partialorder %v3325, 8.507059e+37
      %v3327 = vand.u32 %v3315, 2147483648
      %v3328 = vor.u32 1.1754944e-38, %v3327
      %v3329 = vsel %vm3326, %v3328, %v3324
      %v3330 = vmul.f32 %v3305, %v3329
      %v3331 = vmin.f32 %v3330, 1.0
      %v3332 = vmax.f32 %v3331, -1.0
      %v3333 = vmul.f32 %v2794, %v2794
      %v3334 = vmin.f32 16.0, %v3333
      %v3335 = vmul.f32 %v3334, 2.1237322e-06
      %v3336 = vadd.f32 %v3335, 0.00028619796
      %v3337 = vmul.f32 %v3334, %v3336
      %v3338 = vadd.f32 %v3337, 0.0036580483
      %v3339 = vmul.f32 %v3334, %v3338
      %v3340 = vadd.f32 %v3339, 0.05243302
      %v3341 = vmul.f32 %v3334, %v3340
      %v3342 = vadd.f32 %v3341, 0.18741608
      %v3343 = vmul.f32 %v3334, %v3342
      %v3344 = vadd.f32 %v3343, 1.1283791
      %v3345 = vmul.f32 %v2794, %v3344
      %v3346 = vmul.f32 %v3334, 3.8918573e-05
      %v3347 = vadd.f32 %v3346, 0.001143296
      %v3348 = vmul.f32 %v3334, %v3347
      %v3349 = vadd.f32 %v3348, 0.014752088
      %v3350 = vmul.f32 %v3334, %v3349
      %v3351 = vadd.f32 %v3350, 0.112945676
      %v3352 = vmul.f32 %v3334, %v3351
      %v3353 = vadd.f32 %v3352, 0.4994258
      %v3354 = vmul.f32 %v3334, %v3353
      %v3355 = vadd.f32 %v3354, 1.0
      %v3356 = vrcp.pop %v3355
      %v3357 = vmul.f32 %v3355, %v3356
      %v3358 = vsub.f32 1.0, %v3357
      %v3359 = vmul.f32 %v3356, %v3358
      %v3360 = vadd.f32 %v3356, %v3359
      %vm3361 = vweird.f32 %v3355
      %vm3362 = vweird.f32 %v3356
      %vm3363 = vmor %vm3361, %vm3362
      %v3364 = vsel %vm3363, %v3356, %v3360
      %v3365 = vand.u32 2147483647, %v3355
      %vm3366 = vcmp.eq.f32.partialorder %v3365, 8.507059e+37
      %v3367 = vand.u32 %v3355, 2147483648
      %v3368 = vor.u32 1.1754944e-38, %v3367
      %v3369 = vsel %vm3366, %v3368, %v3364
      %v3370 = vmul.f32 %v3345, %v3369
      %v3371 = vmin.f32 %v3370, 1.0
      %v3372 = vmax.f32 %v3371, -1.0
      %v3373 = vmul.f32 %v2795, %v2795
      %v3374 = vmin.f32 16.0, %v3373
      %v3375 = vmul.f32 %v3374, 2.1237322e-06
      %v3376 = vadd.f32 %v3375, 0.00028619796
      %v3377 = vmul.f32 %v3374, %v3376
      %v3378 = vadd.f32 %v3377, 0.0036580483
      %v3379 = vmul.f32 %v3374, %v3378
      %v3380 = vadd.f32 %v3379, 0.05243302
      %v3381 = vmul.f32 %v3374, %v3380
      %v3382 = vadd.f32 %v3381, 0.18741608
      %v3383 = vmul.f32 %v3374, %v3382
      %v3384 = vadd.f32 %v3383, 1.1283791
      %v3385 = vmul.f32 %v2795, %v3384
      %v3386 = vmul.f32 %v3374, 3.8918573e-05
      %v3387 = vadd.f32 %v3386, 0.001143296
      %v3388 = vmul.f32 %v3374, %v3387
      %v3389 = vadd.f32 %v3388, 0.014752088
      %v3390 = vmul.f32 %v3374, %v3389
      %v3391 = vadd.f32 %v3390, 0.112945676
      %v3392 = vmul.f32 %v3374, %v3391
      %v3393 = vadd.f32 %v3392, 0.4994258
      %v3394 = vmul.f32 %v3374, %v3393
      %v3395 = vadd.f32 %v3394, 1.0
      %v3396 = vrcp.pop %v3395
      %v3397 = vmul.f32 %v3395, %v3396
      %v3398 = vsub.f32 1.0, %v3397
      %v3399 = vmul.f32 %v3396, %v3398
      %v3400 = vadd.f32 %v3396, %v3399
      %vm3401 = vweird.f32 %v3395
      %vm3402 = vweird.f32 %v3396
      %vm3403 = vmor %vm3401, %vm3402
      %v3404 = vsel %vm3403, %v3396, %v3400
      %v3405 = vand.u32 2147483647, %v3395
      %vm3406 = vcmp.eq.f32.partialorder %v3405, 8.507059e+37
      %v3407 = vand.u32 %v3395, 2147483648
      %v3408 = vor.u32 1.1754944e-38, %v3407
      %v3409 = vsel %vm3406, %v3408, %v3404
      %v3410 = vmul.f32 %v3385, %v3409
      %v3411 = vmin.f32 %v3410, 1.0
      %v3412 = vmax.f32 %v3411, -1.0
      %v3413 = vmul.f32 %v2796, %v2796
      %v3414 = vmin.f32 16.0, %v3413
      %v3415 = vmul.f32 %v3414, 2.1237322e-06
      %v3416 = vadd.f32 %v3415, 0.00028619796
      %v3417 = vmul.f32 %v3414, %v3416
      %v3418 = vadd.f32 %v3417, 0.0036580483
      %v3419 = vmul.f32 %v3414, %v3418
      %v3420 = vadd.f32 %v3419, 0.05243302
      %v3421 = vmul.f32 %v3414, %v3420
      %v3422 = vadd.f32 %v3421, 0.18741608
      %v3423 = vmul.f32 %v3414, %v3422
      %v3424 = vadd.f32 %v3423, 1.1283791
      %v3425 = vmul.f32 %v2796, %v3424
      %v3426 = vmul.f32 %v3414, 3.8918573e-05
      %v3427 = vadd.f32 %v3426, 0.001143296
      %v3428 = vmul.f32 %v3414, %v3427
      %v3429 = vadd.f32 %v3428, 0.014752088
      %v3430 = vmul.f32 %v3414, %v3429
      %v3431 = vadd.f32 %v3430, 0.112945676
      %v3432 = vmul.f32 %v3414, %v3431
      %v3433 = vadd.f32 %v3432, 0.4994258
      %v3434 = vmul.f32 %v3414, %v3433
      %v3435 = vadd.f32 %v3434, 1.0
      %v3436 = vrcp.pop %v3435
      %v3437 = vmul.f32 %v3435, %v3436
      %v3438 = vsub.f32 1.0, %v3437
      %v3439 = vmul.f32 %v3436, %v3438
      %v3440 = vadd.f32 %v3436, %v3439
      %vm3441 = vweird.f32 %v3435
      %vm3442 = vweird.f32 %v3436
      %vm3443 = vmor %vm3441, %vm3442
      %v3444 = vsel %vm3443, %v3436, %v3440
      %v3445 = vand.u32 2147483647, %v3435
      %vm3446 = vcmp.eq.f32.partialorder %v3445, 8.507059e+37
      %v3447 = vand.u32 %v3435, 2147483648
      %v3448 = vor.u32 1.1754944e-38, %v3447
      %v3449 = vsel %vm3446, %v3448, %v3444
      %v3450 = vmul.f32 %v3425, %v3449
      %v3451 = vmin.f32 %v3450, 1.0
      %v3452 = vmax.f32 %v3451, -1.0
      %v3453 = vmul.f32 %v2797, %v2797
      %v3454 = vmin.f32 16.0, %v3453
      %v3455 = vmul.f32 %v3454, 2.1237322e-06
      %v3456 = vadd.f32 %v3455, 0.00028619796
      %v3457 = vmul.f32 %v3454, %v3456
      %v3458 = vadd.f32 %v3457, 0.0036580483
      %v3459 = vmul.f32 %v3454, %v3458
      %v3460 = vadd.f32 %v3459, 0.05243302
      %v3461 = vmul.f32 %v3454, %v3460
      %v3462 = vadd.f32 %v3461, 0.18741608
      %v3463 = vmul.f32 %v3454, %v3462
      %v3464 = vadd.f32 %v3463, 1.1283791
      %v3465 = vmul.f32 %v2797, %v3464
      %v3466 = vmul.f32 %v3454, 3.8918573e-05
      %v3467 = vadd.f32 %v3466, 0.001143296
      %v3468 = vmul.f32 %v3454, %v3467
      %v3469 = vadd.f32 %v3468, 0.014752088
      %v3470 = vmul.f32 %v3454, %v3469
      %v3471 = vadd.f32 %v3470, 0.112945676
      %v3472 = vmul.f32 %v3454, %v3471
      %v3473 = vadd.f32 %v3472, 0.4994258
      %v3474 = vmul.f32 %v3454, %v3473
      %v3475 = vadd.f32 %v3474, 1.0
      %v3476 = vrcp.pop %v3475
      %v3477 = vmul.f32 %v3475, %v3476
      %v3478 = vsub.f32 1.0, %v3477
      %v3479 = vmul.f32 %v3476, %v3478
      %v3480 = vadd.f32 %v3476, %v3479
      %vm3481 = vweird.f32 %v3475
      %vm3482 = vweird.f32 %v3476
      %vm3483 = vmor %vm3481, %vm3482
      %v3484 = vsel %vm3483, %v3476, %v3480
      %v3485 = vand.u32 2147483647, %v3475
      %vm3486 = vcmp.eq.f32.partialorder %v3485, 8.507059e+37
      %v3487 = vand.u32 %v3475, 2147483648
      %v3488 = vor.u32 1.1754944e-38, %v3487
      %v3489 = vsel %vm3486, %v3488, %v3484
      %v3490 = vmul.f32 %v3465, %v3489
      %v3491 = vmin.f32 %v3490, 1.0
      %v3492 = vmax.f32 %v3491, -1.0
      %v3493 = vmul.f32 %v2798, %v2798
      %v3494 = vmin.f32 16.0, %v3493
      %v3495 = vmul.f32 %v3494, 2.1237322e-06
      %v3496 = vadd.f32 %v3495, 0.00028619796
      %v3497 = vmul.f32 %v3494, %v3496
      %v3498 = vadd.f32 %v3497, 0.0036580483
      %v3499 = vmul.f32 %v3494, %v3498
      %v3500 = vadd.f32 %v3499, 0.05243302
      %v3501 = vmul.f32 %v3494, %v3500
      %v3502 = vadd.f32 %v3501, 0.18741608
      %v3503 = vmul.f32 %v3494, %v3502
      %v3504 = vadd.f32 %v3503, 1.1283791
      %v3505 = vmul.f32 %v2798, %v3504
      %v3506 = vmul.f32 %v3494, 3.8918573e-05
      %v3507 = vadd.f32 %v3506, 0.001143296
      %v3508 = vmul.f32 %v3494, %v3507
      %v3509 = vadd.f32 %v3508, 0.014752088
      %v3510 = vmul.f32 %v3494, %v3509
      %v3511 = vadd.f32 %v3510, 0.112945676
      %v3512 = vmul.f32 %v3494, %v3511
      %v3513 = vadd.f32 %v3512, 0.4994258
      %v3514 = vmul.f32 %v3494, %v3513
      %v3515 = vadd.f32 %v3514, 1.0
      %v3516 = vrcp.pop %v3515
      %v3517 = vmul.f32 %v3515, %v3516
      %v3518 = vsub.f32 1.0, %v3517
      %v3519 = vmul.f32 %v3516, %v3518
      %v3520 = vadd.f32 %v3516, %v3519
      %vm3521 = vweird.f32 %v3515
      %vm3522 = vweird.f32 %v3516
      %vm3523 = vmor %vm3521, %vm3522
      %v3524 = vsel %vm3523, %v3516, %v3520
      %v3525 = vand.u32 2147483647, %v3515
      %vm3526 = vcmp.eq.f32.partialorder %v3525, 8.507059e+37
      %v3527 = vand.u32 %v3515, 2147483648
      %v3528 = vor.u32 1.1754944e-38, %v3527
      %v3529 = vsel %vm3526, %v3528, %v3524
      %v3530 = vmul.f32 %v3505, %v3529
      %v3531 = vmin.f32 %v3530, 1.0
      %v3532 = vmax.f32 %v3531, -1.0
      %v3533 = vmul.f32 %v2799, %v2799
      %v3534 = vmin.f32 16.0, %v3533
      %v3535 = vmul.f32 %v3534, 2.1237322e-06
      %v3536 = vadd.f32 %v3535, 0.00028619796
      %v3537 = vmul.f32 %v3534, %v3536
      %v3538 = vadd.f32 %v3537, 0.0036580483
      %v3539 = vmul.f32 %v3534, %v3538
      %v3540 = vadd.f32 %v3539, 0.05243302
      %v3541 = vmul.f32 %v3534, %v3540
      %v3542 = vadd.f32 %v3541, 0.18741608
      %v3543 = vmul.f32 %v3534, %v3542
      %v3544 = vadd.f32 %v3543, 1.1283791
      %v3545 = vmul.f32 %v2799, %v3544
      %v3546 = vmul.f32 %v3534, 3.8918573e-05
      %v3547 = vadd.f32 %v3546, 0.001143296
      %v3548 = vmul.f32 %v3534, %v3547
      %v3549 = vadd.f32 %v3548, 0.014752088
      %v3550 = vmul.f32 %v3534, %v3549
      %v3551 = vadd.f32 %v3550, 0.112945676
      %v3552 = vmul.f32 %v3534, %v3551
      %v3553 = vadd.f32 %v3552, 0.4994258
      %v3554 = vmul.f32 %v3534, %v3553
      %v3555 = vadd.f32 %v3554, 1.0
      %v3556 = vrcp.pop %v3555
      %v3557 = vmul.f32 %v3555, %v3556
      %v3558 = vsub.f32 1.0, %v3557
      %v3559 = vmul.f32 %v3556, %v3558
      %v3560 = vadd.f32 %v3556, %v3559
      %vm3561 = vweird.f32 %v3555
      %vm3562 = vweird.f32 %v3556
      %vm3563 = vmor %vm3561, %vm3562
      %v3564 = vsel %vm3563, %v3556, %v3560
      %v3565 = vand.u32 2147483647, %v3555
      %vm3566 = vcmp.eq.f32.partialorder %v3565, 8.507059e+37
      %v3567 = vand.u32 %v3555, 2147483648
      %v3568 = vor.u32 1.1754944e-38, %v3567
      %v3569 = vsel %vm3566, %v3568, %v3564
      %v3570 = vmul.f32 %v3545, %v3569
      %v3571 = vmin.f32 %v3570, 1.0
      %v3572 = vmax.f32 %v3571, -1.0
      %v3573 = vmul.f32 %v2800, %v2800
      %v3574 = vmin.f32 16.0, %v3573
      %v3575 = vmul.f32 %v3574, 2.1237322e-06
      %v3576 = vadd.f32 %v3575, 0.00028619796
      %v3577 = vmul.f32 %v3574, %v3576
      %v3578 = vadd.f32 %v3577, 0.0036580483
      %v3579 = vmul.f32 %v3574, %v3578
      %v3580 = vadd.f32 %v3579, 0.05243302
      %v3581 = vmul.f32 %v3574, %v3580
      %v3582 = vadd.f32 %v3581, 0.18741608
      %v3583 = vmul.f32 %v3574, %v3582
      %v3584 = vadd.f32 %v3583, 1.1283791
      %v3585 = vmul.f32 %v2800, %v3584
      %v3586 = vmul.f32 %v3574, 3.8918573e-05
      %v3587 = vadd.f32 %v3586, 0.001143296
      %v3588 = vmul.f32 %v3574, %v3587
      %v3589 = vadd.f32 %v3588, 0.014752088
      %v3590 = vmul.f32 %v3574, %v3589
      %v3591 = vadd.f32 %v3590, 0.112945676
      %v3592 = vmul.f32 %v3574, %v3591
      %v3593 = vadd.f32 %v3592, 0.4994258
      %v3594 = vmul.f32 %v3574, %v3593
      %v3595 = vadd.f32 %v3594, 1.0
      %v3596 = vrcp.pop %v3595
      %v3597 = vmul.f32 %v3595, %v3596
      %v3598 = vsub.f32 1.0, %v3597
      %v3599 = vmul.f32 %v3596, %v3598
      %v3600 = vadd.f32 %v3596, %v3599
      %vm3601 = vweird.f32 %v3595
      %vm3602 = vweird.f32 %v3596
      %vm3603 = vmor %vm3601, %vm3602
      %v3604 = vsel %vm3603, %v3596, %v3600
      %v3605 = vand.u32 2147483647, %v3595
      %vm3606 = vcmp.eq.f32.partialorder %v3605, 8.507059e+37
      %v3607 = vand.u32 %v3595, 2147483648
      %v3608 = vor.u32 1.1754944e-38, %v3607
      %v3609 = vsel %vm3606, %v3608, %v3604
      %v3610 = vmul.f32 %v3585, %v3609
      %v3611 = vmin.f32 %v3610, 1.0
      %v3612 = vmax.f32 %v3611, -1.0
      %v3613 = vmul.f32 %v2801, %v2801
      %v3614 = vmin.f32 16.0, %v3613
      %v3615 = vmul.f32 %v3614, 2.1237322e-06
      %v3616 = vadd.f32 %v3615, 0.00028619796
      %v3617 = vmul.f32 %v3614, %v3616
      %v3618 = vadd.f32 %v3617, 0.0036580483
      %v3619 = vmul.f32 %v3614, %v3618
      %v3620 = vadd.f32 %v3619, 0.05243302
      %v3621 = vmul.f32 %v3614, %v3620
      %v3622 = vadd.f32 %v3621, 0.18741608
      %v3623 = vmul.f32 %v3614, %v3622
      %v3624 = vadd.f32 %v3623, 1.1283791
      %v3625 = vmul.f32 %v2801, %v3624
      %v3626 = vmul.f32 %v3614, 3.8918573e-05
      %v3627 = vadd.f32 %v3626, 0.001143296
      %v3628 = vmul.f32 %v3614, %v3627
      %v3629 = vadd.f32 %v3628, 0.014752088
      %v3630 = vmul.f32 %v3614, %v3629
      %v3631 = vadd.f32 %v3630, 0.112945676
      %v3632 = vmul.f32 %v3614, %v3631
      %v3633 = vadd.f32 %v3632, 0.4994258
      %v3634 = vmul.f32 %v3614, %v3633
      %v3635 = vadd.f32 %v3634, 1.0
      %v3636 = vrcp.pop %v3635
      %v3637 = vmul.f32 %v3635, %v3636
      %v3638 = vsub.f32 1.0, %v3637
      %v3639 = vmul.f32 %v3636, %v3638
      %v3640 = vadd.f32 %v3636, %v3639
      %vm3641 = vweird.f32 %v3635
      %vm3642 = vweird.f32 %v3636
      %vm3643 = vmor %vm3641, %vm3642
      %v3644 = vsel %vm3643, %v3636, %v3640
      %v3645 = vand.u32 2147483647, %v3635
      %vm3646 = vcmp.eq.f32.partialorder %v3645, 8.507059e+37
      %v3647 = vand.u32 %v3635, 2147483648
      %v3648 = vor.u32 1.1754944e-38, %v3647
      %v3649 = vsel %vm3646, %v3648, %v3644
      %v3650 = vmul.f32 %v3625, %v3649
      %v3651 = vmin.f32 %v3650, 1.0
      %v3652 = vmax.f32 %v3651, -1.0
      %v3653 = vmul.f32 %v2802, %v2802
      %v3654 = vmin.f32 16.0, %v3653
      %v3655 = vmul.f32 %v3654, 2.1237322e-06
      %v3656 = vadd.f32 %v3655, 0.00028619796
      %v3657 = vmul.f32 %v3654, %v3656
      %v3658 = vadd.f32 %v3657, 0.0036580483
      %v3659 = vmul.f32 %v3654, %v3658
      %v3660 = vadd.f32 %v3659, 0.05243302
      %v3661 = vmul.f32 %v3654, %v3660
      %v3662 = vadd.f32 %v3661, 0.18741608
      %v3663 = vmul.f32 %v3654, %v3662
      %v3664 = vadd.f32 %v3663, 1.1283791
      %v3665 = vmul.f32 %v2802, %v3664
      %v3666 = vmul.f32 %v3654, 3.8918573e-05
      %v3667 = vadd.f32 %v3666, 0.001143296
      %v3668 = vmul.f32 %v3654, %v3667
      %v3669 = vadd.f32 %v3668, 0.014752088
      %v3670 = vmul.f32 %v3654, %v3669
      %v3671 = vadd.f32 %v3670, 0.112945676
      %v3672 = vmul.f32 %v3654, %v3671
      %v3673 = vadd.f32 %v3672, 0.4994258
      %v3674 = vmul.f32 %v3654, %v3673
      %v3675 = vadd.f32 %v3674, 1.0
      %v3676 = vrcp.pop %v3675
      %v3677 = vmul.f32 %v3675, %v3676
      %v3678 = vsub.f32 1.0, %v3677
      %v3679 = vmul.f32 %v3676, %v3678
      %v3680 = vadd.f32 %v3676, %v3679
      %vm3681 = vweird.f32 %v3675
      %vm3682 = vweird.f32 %v3676
      %vm3683 = vmor %vm3681, %vm3682
      %v3684 = vsel %vm3683, %v3676, %v3680
      %v3685 = vand.u32 2147483647, %v3675
      %vm3686 = vcmp.eq.f32.partialorder %v3685, 8.507059e+37
      %v3687 = vand.u32 %v3675, 2147483648
      %v3688 = vor.u32 1.1754944e-38, %v3687
      %v3689 = vsel %vm3686, %v3688, %v3684
      %v3690 = vmul.f32 %v3665, %v3689
      %v3691 = vmin.f32 %v3690, 1.0
      %v3692 = vmax.f32 %v3691, -1.0
      %v3693 = vmul.f32 %v2803, %v2803
      %v3694 = vmin.f32 16.0, %v3693
      %v3695 = vmul.f32 %v3694, 2.1237322e-06
      %v3696 = vadd.f32 %v3695, 0.00028619796
      %v3697 = vmul.f32 %v3694, %v3696
      %v3698 = vadd.f32 %v3697, 0.0036580483
      %v3699 = vmul.f32 %v3694, %v3698
      %v3700 = vadd.f32 %v3699, 0.05243302
      %v3701 = vmul.f32 %v3694, %v3700
      %v3702 = vadd.f32 %v3701, 0.18741608
      %v3703 = vmul.f32 %v3694, %v3702
      %v3704 = vadd.f32 %v3703, 1.1283791
      %v3705 = vmul.f32 %v2803, %v3704
      %v3706 = vmul.f32 %v3694, 3.8918573e-05
      %v3707 = vadd.f32 %v3706, 0.001143296
      %v3708 = vmul.f32 %v3694, %v3707
      %v3709 = vadd.f32 %v3708, 0.014752088
      %v3710 = vmul.f32 %v3694, %v3709
      %v3711 = vadd.f32 %v3710, 0.112945676
      %v3712 = vmul.f32 %v3694, %v3711
      %v3713 = vadd.f32 %v3712, 0.4994258
      %v3714 = vmul.f32 %v3694, %v3713
      %v3715 = vadd.f32 %v3714, 1.0
      %v3716 = vrcp.pop %v3715
      %v3717 = vmul.f32 %v3715, %v3716
      %v3718 = vsub.f32 1.0, %v3717
      %v3719 = vmul.f32 %v3716, %v3718
      %v3720 = vadd.f32 %v3716, %v3719
      %vm3721 = vweird.f32 %v3715
      %vm3722 = vweird.f32 %v3716
      %vm3723 = vmor %vm3721, %vm3722
      %v3724 = vsel %vm3723, %v3716, %v3720
      %v3725 = vand.u32 2147483647, %v3715
      %vm3726 = vcmp.eq.f32.partialorder %v3725, 8.507059e+37
      %v3727 = vand.u32 %v3715, 2147483648
      %v3728 = vor.u32 1.1754944e-38, %v3727
      %v3729 = vsel %vm3726, %v3728, %v3724
      %v3730 = vmul.f32 %v3705, %v3729
      %v3731 = vmin.f32 %v3730, 1.0
      %v3732 = vmax.f32 %v3731, -1.0
      %v3733 = vmul.f32 %v2804, %v2804
      %v3734 = vmin.f32 16.0, %v3733
      %v3735 = vmul.f32 %v3734, 2.1237322e-06
      %v3736 = vadd.f32 %v3735, 0.00028619796
      %v3737 = vmul.f32 %v3734, %v3736
      %v3738 = vadd.f32 %v3737, 0.0036580483
      %v3739 = vmul.f32 %v3734, %v3738
      %v3740 = vadd.f32 %v3739, 0.05243302
      %v3741 = vmul.f32 %v3734, %v3740
      %v3742 = vadd.f32 %v3741, 0.18741608
      %v3743 = vmul.f32 %v3734, %v3742
      %v3744 = vadd.f32 %v3743, 1.1283791
      %v3745 = vmul.f32 %v2804, %v3744
      %v3746 = vmul.f32 %v3734, 3.8918573e-05
      %v3747 = vadd.f32 %v3746, 0.001143296
      %v3748 = vmul.f32 %v3734, %v3747
      %v3749 = vadd.f32 %v3748, 0.014752088
      %v3750 = vmul.f32 %v3734, %v3749
      %v3751 = vadd.f32 %v3750, 0.112945676
      %v3752 = vmul.f32 %v3734, %v3751
      %v3753 = vadd.f32 %v3752, 0.4994258
      %v3754 = vmul.f32 %v3734, %v3753
      %v3755 = vadd.f32 %v3754, 1.0
      %v3756 = vrcp.pop %v3755
      %v3757 = vmul.f32 %v3755, %v3756
      %v3758 = vsub.f32 1.0, %v3757
      %v3759 = vmul.f32 %v3756, %v3758
      %v3760 = vadd.f32 %v3756, %v3759
      %vm3761 = vweird.f32 %v3755
      %vm3762 = vweird.f32 %v3756
      %vm3763 = vmor %vm3761, %vm3762
      %v3764 = vsel %vm3763, %v3756, %v3760
      %v3765 = vand.u32 2147483647, %v3755
      %vm3766 = vcmp.eq.f32.partialorder %v3765, 8.507059e+37
      %v3767 = vand.u32 %v3755, 2147483648
      %v3768 = vor.u32 1.1754944e-38, %v3767
      %v3769 = vsel %vm3766, %v3768, %v3764
      %v3770 = vmul.f32 %v3745, %v3769
      %v3771 = vmin.f32 %v3770, 1.0
      %v3772 = vmax.f32 %v3771, -1.0
      %v3773 = vmul.f32 %v2805, %v2805
      %v3774 = vmin.f32 16.0, %v3773
      %v3775 = vmul.f32 %v3774, 2.1237322e-06
      %v3776 = vadd.f32 %v3775, 0.00028619796
      %v3777 = vmul.f32 %v3774, %v3776
      %v3778 = vadd.f32 %v3777, 0.0036580483
      %v3779 = vmul.f32 %v3774, %v3778
      %v3780 = vadd.f32 %v3779, 0.05243302
      %v3781 = vmul.f32 %v3774, %v3780
      %v3782 = vadd.f32 %v3781, 0.18741608
      %v3783 = vmul.f32 %v3774, %v3782
      %v3784 = vadd.f32 %v3783, 1.1283791
      %v3785 = vmul.f32 %v2805, %v3784
      %v3786 = vmul.f32 %v3774, 3.8918573e-05
      %v3787 = vadd.f32 %v3786, 0.001143296
      %v3788 = vmul.f32 %v3774, %v3787
      %v3789 = vadd.f32 %v3788, 0.014752088
      %v3790 = vmul.f32 %v3774, %v3789
      %v3791 = vadd.f32 %v3790, 0.112945676
      %v3792 = vmul.f32 %v3774, %v3791
      %v3793 = vadd.f32 %v3792, 0.4994258
      %v3794 = vmul.f32 %v3774, %v3793
      %v3795 = vadd.f32 %v3794, 1.0
      %v3796 = vrcp.pop %v3795
      %v3797 = vmul.f32 %v3795, %v3796
      %v3798 = vsub.f32 1.0, %v3797
      %v3799 = vmul.f32 %v3796, %v3798
      %v3800 = vadd.f32 %v3796, %v3799
      %vm3801 = vweird.f32 %v3795
      %vm3802 = vweird.f32 %v3796
      %vm3803 = vmor %vm3801, %vm3802
      %v3804 = vsel %vm3803, %v3796, %v3800
      %v3805 = vand.u32 2147483647, %v3795
      %vm3806 = vcmp.eq.f32.partialorder %v3805, 8.507059e+37
      %v3807 = vand.u32 %v3795, 2147483648
      %v3808 = vor.u32 1.1754944e-38, %v3807
      %v3809 = vsel %vm3806, %v3808, %v3804
      %v3810 = vmul.f32 %v3785, %v3809
      %v3811 = vmin.f32 %v3810, 1.0
      %v3812 = vmax.f32 %v3811, -1.0
      %v3813 = vmul.f32 %v2806, %v2806
      %v3814 = vmin.f32 16.0, %v3813
      %v3815 = vmul.f32 %v3814, 2.1237322e-06
      %v3816 = vadd.f32 %v3815, 0.00028619796
      %v3817 = vmul.f32 %v3814, %v3816
      %v3818 = vadd.f32 %v3817, 0.0036580483
      %v3819 = vmul.f32 %v3814, %v3818
      %v3820 = vadd.f32 %v3819, 0.05243302
      %v3821 = vmul.f32 %v3814, %v3820
      %v3822 = vadd.f32 %v3821, 0.18741608
      %v3823 = vmul.f32 %v3814, %v3822
      %v3824 = vadd.f32 %v3823, 1.1283791
      %v3825 = vmul.f32 %v2806, %v3824
      %v3826 = vmul.f32 %v3814, 3.8918573e-05
      %v3827 = vadd.f32 %v3826, 0.001143296
      %v3828 = vmul.f32 %v3814, %v3827
      %v3829 = vadd.f32 %v3828, 0.014752088
      %v3830 = vmul.f32 %v3814, %v3829
      %v3831 = vadd.f32 %v3830, 0.112945676
      %v3832 = vmul.f32 %v3814, %v3831
      %v3833 = vadd.f32 %v3832, 0.4994258
      %v3834 = vmul.f32 %v3814, %v3833
      %v3835 = vadd.f32 %v3834, 1.0
      %v3836 = vrcp.pop %v3835
      %v3837 = vmul.f32 %v3835, %v3836
      %v3838 = vsub.f32 1.0, %v3837
      %v3839 = vmul.f32 %v3836, %v3838
      %v3840 = vadd.f32 %v3836, %v3839
      %vm3841 = vweird.f32 %v3835
      %vm3842 = vweird.f32 %v3836
      %vm3843 = vmor %vm3841, %vm3842
      %v3844 = vsel %vm3843, %v3836, %v3840
      %v3845 = vand.u32 2147483647, %v3835
      %vm3846 = vcmp.eq.f32.partialorder %v3845, 8.507059e+37
      %v3847 = vand.u32 %v3835, 2147483648
      %v3848 = vor.u32 1.1754944e-38, %v3847
      %v3849 = vsel %vm3846, %v3848, %v3844
      %v3850 = vmul.f32 %v3825, %v3849
      %v3851 = vmin.f32 %v3850, 1.0
      %v3852 = vmax.f32 %v3851, -1.0
      %v3853 = vmul.f32 %v2807, %v2807
      %v3854 = vmin.f32 16.0, %v3853
      %v3855 = vmul.f32 %v3854, 2.1237322e-06
      %v3856 = vadd.f32 %v3855, 0.00028619796
      %v3857 = vmul.f32 %v3854, %v3856
      %v3858 = vadd.f32 %v3857, 0.0036580483
      %v3859 = vmul.f32 %v3854, %v3858
      %v3860 = vadd.f32 %v3859, 0.05243302
      %v3861 = vmul.f32 %v3854, %v3860
      %v3862 = vadd.f32 %v3861, 0.18741608
      %v3863 = vmul.f32 %v3854, %v3862
      %v3864 = vadd.f32 %v3863, 1.1283791
      %v3865 = vmul.f32 %v2807, %v3864
      %v3866 = vmul.f32 %v3854, 3.8918573e-05
      %v3867 = vadd.f32 %v3866, 0.001143296
      %v3868 = vmul.f32 %v3854, %v3867
      %v3869 = vadd.f32 %v3868, 0.014752088
      %v3870 = vmul.f32 %v3854, %v3869
      %v3871 = vadd.f32 %v3870, 0.112945676
      %v3872 = vmul.f32 %v3854, %v3871
      %v3873 = vadd.f32 %v3872, 0.4994258
      %v3874 = vmul.f32 %v3854, %v3873
      %v3875 = vadd.f32 %v3874, 1.0
      %v3876 = vrcp.pop %v3875
      %v3877 = vmul.f32 %v3875, %v3876
      %v3878 = vsub.f32 1.0, %v3877
      %v3879 = vmul.f32 %v3876, %v3878
      %v3880 = vadd.f32 %v3876, %v3879
      %vm3881 = vweird.f32 %v3875
      %vm3882 = vweird.f32 %v3876
      %vm3883 = vmor %vm3881, %vm3882
      %v3884 = vsel %vm3883, %v3876, %v3880
      %v3885 = vand.u32 2147483647, %v3875
      %vm3886 = vcmp.eq.f32.partialorder %v3885, 8.507059e+37
      %v3887 = vand.u32 %v3875, 2147483648
      %v3888 = vor.u32 1.1754944e-38, %v3887
      %v3889 = vsel %vm3886, %v3888, %v3884
      %v3890 = vmul.f32 %v3865, %v3889
      %v3891 = vmin.f32 %v3890, 1.0
      %v3892 = vmax.f32 %v3891, -1.0
      %v3893 = vmul.f32 %v2808, %v2808
      %v3894 = vmin.f32 16.0, %v3893
      %v3895 = vmul.f32 %v3894, 2.1237322e-06
      %v3896 = vadd.f32 %v3895, 0.00028619796
      %v3897 = vmul.f32 %v3894, %v3896
      %v3898 = vadd.f32 %v3897, 0.0036580483
      %v3899 = vmul.f32 %v3894, %v3898
      %v3900 = vadd.f32 %v3899, 0.05243302
      %v3901 = vmul.f32 %v3894, %v3900
      %v3902 = vadd.f32 %v3901, 0.18741608
      %v3903 = vmul.f32 %v3894, %v3902
      %v3904 = vadd.f32 %v3903, 1.1283791
      %v3905 = vmul.f32 %v2808, %v3904
      %v3906 = vmul.f32 %v3894, 3.8918573e-05
      %v3907 = vadd.f32 %v3906, 0.001143296
      %v3908 = vmul.f32 %v3894, %v3907
      %v3909 = vadd.f32 %v3908, 0.014752088
      %v3910 = vmul.f32 %v3894, %v3909
      %v3911 = vadd.f32 %v3910, 0.112945676
      %v3912 = vmul.f32 %v3894, %v3911
      %v3913 = vadd.f32 %v3912, 0.4994258
      %v3914 = vmul.f32 %v3894, %v3913
      %v3915 = vadd.f32 %v3914, 1.0
      %v3916 = vrcp.pop %v3915
      %v3917 = vmul.f32 %v3915, %v3916
      %v3918 = vsub.f32 1.0, %v3917
      %v3919 = vmul.f32 %v3916, %v3918
      %v3920 = vadd.f32 %v3916, %v3919
      %vm3921 = vweird.f32 %v3915
      %vm3922 = vweird.f32 %v3916
      %vm3923 = vmor %vm3921, %vm3922
      %v3924 = vsel %vm3923, %v3916, %v3920
      %v3925 = vand.u32 2147483647, %v3915
      %vm3926 = vcmp.eq.f32.partialorder %v3925, 8.507059e+37
      %v3927 = vand.u32 %v3915, 2147483648
      %v3928 = vor.u32 1.1754944e-38, %v3927
      %v3929 = vsel %vm3926, %v3928, %v3924
      %v3930 = vmul.f32 %v3905, %v3929
      %v3931 = vmin.f32 %v3930, 1.0
      %v3932 = vmax.f32 %v3931, -1.0
      %v3933 = vmul.f32 %v2809, %v2809
      %v3934 = vmin.f32 16.0, %v3933
      %v3935 = vmul.f32 %v3934, 2.1237322e-06
      %v3936 = vadd.f32 %v3935, 0.00028619796
      %v3937 = vmul.f32 %v3934, %v3936
      %v3938 = vadd.f32 %v3937, 0.0036580483
      %v3939 = vmul.f32 %v3934, %v3938
      %v3940 = vadd.f32 %v3939, 0.05243302
      %v3941 = vmul.f32 %v3934, %v3940
      %v3942 = vadd.f32 %v3941, 0.18741608
      %v3943 = vmul.f32 %v3934, %v3942
      %v3944 = vadd.f32 %v3943, 1.1283791
      %v3945 = vmul.f32 %v2809, %v3944
      %v3946 = vmul.f32 %v3934, 3.8918573e-05
      %v3947 = vadd.f32 %v3946, 0.001143296
      %v3948 = vmul.f32 %v3934, %v3947
      %v3949 = vadd.f32 %v3948, 0.014752088
      %v3950 = vmul.f32 %v3934, %v3949
      %v3951 = vadd.f32 %v3950, 0.112945676
      %v3952 = vmul.f32 %v3934, %v3951
      %v3953 = vadd.f32 %v3952, 0.4994258
      %v3954 = vmul.f32 %v3934, %v3953
      %v3955 = vadd.f32 %v3954, 1.0
      %v3956 = vrcp.pop %v3955
      %v3957 = vmul.f32 %v3955, %v3956
      %v3958 = vsub.f32 1.0, %v3957
      %v3959 = vmul.f32 %v3956, %v3958
      %v3960 = vadd.f32 %v3956, %v3959
      %vm3961 = vweird.f32 %v3955
      %vm3962 = vweird.f32 %v3956
      %vm3963 = vmor %vm3961, %vm3962
      %v3964 = vsel %vm3963, %v3956, %v3960
      %v3965 = vand.u32 2147483647, %v3955
      %vm3966 = vcmp.eq.f32.partialorder %v3965, 8.507059e+37
      %v3967 = vand.u32 %v3955, 2147483648
      %v3968 = vor.u32 1.1754944e-38, %v3967
      %v3969 = vsel %vm3966, %v3968, %v3964
      %v3970 = vmul.f32 %v3945, %v3969
      %v3971 = vmin.f32 %v3970, 1.0
      %v3972 = vmax.f32 %v3971, -1.0
      %v3973 = vmul.f32 %v2810, %v2810
      %v3974 = vmin.f32 16.0, %v3973
      %v3975 = vmul.f32 %v3974, 2.1237322e-06
      %v3976 = vadd.f32 %v3975, 0.00028619796
      %v3977 = vmul.f32 %v3974, %v3976
      %v3978 = vadd.f32 %v3977, 0.0036580483
      %v3979 = vmul.f32 %v3974, %v3978
      %v3980 = vadd.f32 %v3979, 0.05243302
      %v3981 = vmul.f32 %v3974, %v3980
      %v3982 = vadd.f32 %v3981, 0.18741608
      %v3983 = vmul.f32 %v3974, %v3982
      %v3984 = vadd.f32 %v3983, 1.1283791
      %v3985 = vmul.f32 %v2810, %v3984
      %v3986 = vmul.f32 %v3974, 3.8918573e-05
      %v3987 = vadd.f32 %v3986, 0.001143296
      %v3988 = vmul.f32 %v3974, %v3987
      %v3989 = vadd.f32 %v3988, 0.014752088
      %v3990 = vmul.f32 %v3974, %v3989
      %v3991 = vadd.f32 %v3990, 0.112945676
      %v3992 = vmul.f32 %v3974, %v3991
      %v3993 = vadd.f32 %v3992, 0.4994258
      %v3994 = vmul.f32 %v3974, %v3993
      %v3995 = vadd.f32 %v3994, 1.0
      %v3996 = vrcp.pop %v3995
      %v3997 = vmul.f32 %v3995, %v3996
      %v3998 = vsub.f32 1.0, %v3997
      %v3999 = vmul.f32 %v3996, %v3998
      %v4000 = vadd.f32 %v3996, %v3999
      %vm4001 = vweird.f32 %v3995
      %vm4002 = vweird.f32 %v3996
      %vm4003 = vmor %vm4001, %vm4002
      %v4004 = vsel %vm4003, %v3996, %v4000
      %v4005 = vand.u32 2147483647, %v3995
      %vm4006 = vcmp.eq.f32.partialorder %v4005, 8.507059e+37
      %v4007 = vand.u32 %v3995, 2147483648
      %v4008 = vor.u32 1.1754944e-38, %v4007
      %v4009 = vsel %vm4006, %v4008, %v4004
      %v4010 = vmul.f32 %v3985, %v4009
      %v4011 = vmin.f32 %v4010, 1.0
      %v4012 = vmax.f32 %v4011, -1.0
      %v4013 = vmul.f32 %v2811, %v2811
      %v4014 = vmin.f32 16.0, %v4013
      %v4015 = vmul.f32 %v4014, 2.1237322e-06
      %v4016 = vadd.f32 %v4015, 0.00028619796
      %v4017 = vmul.f32 %v4014, %v4016
      %v4018 = vadd.f32 %v4017, 0.0036580483
      %v4019 = vmul.f32 %v4014, %v4018
      %v4020 = vadd.f32 %v4019, 0.05243302
      %v4021 = vmul.f32 %v4014, %v4020
      %v4022 = vadd.f32 %v4021, 0.18741608
      %v4023 = vmul.f32 %v4014, %v4022
      %v4024 = vadd.f32 %v4023, 1.1283791
      %v4025 = vmul.f32 %v2811, %v4024
      %v4026 = vmul.f32 %v4014, 3.8918573e-05
      %v4027 = vadd.f32 %v4026, 0.001143296
      %v4028 = vmul.f32 %v4014, %v4027
      %v4029 = vadd.f32 %v4028, 0.014752088
      %v4030 = vmul.f32 %v4014, %v4029
      %v4031 = vadd.f32 %v4030, 0.112945676
      %v4032 = vmul.f32 %v4014, %v4031
      %v4033 = vadd.f32 %v4032, 0.4994258
      %v4034 = vmul.f32 %v4014, %v4033
      %v4035 = vadd.f32 %v4034, 1.0
      %v4036 = vrcp.pop %v4035
      %v4037 = vmul.f32 %v4035, %v4036
      %v4038 = vsub.f32 1.0, %v4037
      %v4039 = vmul.f32 %v4036, %v4038
      %v4040 = vadd.f32 %v4036, %v4039
      %vm4041 = vweird.f32 %v4035
      %vm4042 = vweird.f32 %v4036
      %vm4043 = vmor %vm4041, %vm4042
      %v4044 = vsel %vm4043, %v4036, %v4040
      %v4045 = vand.u32 2147483647, %v4035
      %vm4046 = vcmp.eq.f32.partialorder %v4045, 8.507059e+37
      %v4047 = vand.u32 %v4035, 2147483648
      %v4048 = vor.u32 1.1754944e-38, %v4047
      %v4049 = vsel %vm4046, %v4048, %v4044
      %v4050 = vmul.f32 %v4025, %v4049
      %v4051 = vmin.f32 %v4050, 1.0
      %v4052 = vmax.f32 %v4051, -1.0
      %v4053 = vmul.f32 %v2812, %v2812
      %v4054 = vmin.f32 16.0, %v4053
      %v4055 = vmul.f32 %v4054, 2.1237322e-06
      %v4056 = vadd.f32 %v4055, 0.00028619796
      %v4057 = vmul.f32 %v4054, %v4056
      %v4058 = vadd.f32 %v4057, 0.0036580483
      %v4059 = vmul.f32 %v4054, %v4058
      %v4060 = vadd.f32 %v4059, 0.05243302
      %v4061 = vmul.f32 %v4054, %v4060
      %v4062 = vadd.f32 %v4061, 0.18741608
      %v4063 = vmul.f32 %v4054, %v4062
      %v4064 = vadd.f32 %v4063, 1.1283791
      %v4065 = vmul.f32 %v2812, %v4064
      %v4066 = vmul.f32 %v4054, 3.8918573e-05
      %v4067 = vadd.f32 %v4066, 0.001143296
      %v4068 = vmul.f32 %v4054, %v4067
      %v4069 = vadd.f32 %v4068, 0.014752088
      %v4070 = vmul.f32 %v4054, %v4069
      %v4071 = vadd.f32 %v4070, 0.112945676
      %v4072 = vmul.f32 %v4054, %v4071
      %v4073 = vadd.f32 %v4072, 0.4994258
      %v4074 = vmul.f32 %v4054, %v4073
      %v4075 = vadd.f32 %v4074, 1.0
      %v4076 = vrcp.pop %v4075
      %v4077 = vmul.f32 %v4075, %v4076
      %v4078 = vsub.f32 1.0, %v4077
      %v4079 = vmul.f32 %v4076, %v4078
      %v4080 = vadd.f32 %v4076, %v4079
      %vm4081 = vweird.f32 %v4075
      %vm4082 = vweird.f32 %v4076
      %vm4083 = vmor %vm4081, %vm4082
      %v4084 = vsel %vm4083, %v4076, %v4080
      %v4085 = vand.u32 2147483647, %v4075
      %vm4086 = vcmp.eq.f32.partialorder %v4085, 8.507059e+37
      %v4087 = vand.u32 %v4075, 2147483648
      %v4088 = vor.u32 1.1754944e-38, %v4087
      %v4089 = vsel %vm4086, %v4088, %v4084
      %v4090 = vmul.f32 %v4065, %v4089
      %v4091 = vmin.f32 %v4090, 1.0
      %v4092 = vmax.f32 %v4091, -1.0
      %v4093 = vadd.f32 %v2852, 1.0
      %v4094 = vadd.f32 %v2892, 1.0
      %v4095 = vadd.f32 %v2932, 1.0
      %v4096 = vadd.f32 %v2972, 1.0
      %v4097 = vadd.f32 %v3012, 1.0
      %v4098 = vadd.f32 %v3052, 1.0
      %v4099 = vadd.f32 %v3092, 1.0
      %v4100 = vadd.f32 %v3132, 1.0
      %v4101 = vadd.f32 %v3172, 1.0
      %v4102 = vadd.f32 %v3212, 1.0
      %v4103 = vadd.f32 %v3252, 1.0
      %v4104 = vadd.f32 %v3292, 1.0
      %v4105 = vadd.f32 %v3332, 1.0
      %v4106 = vadd.f32 %v3372, 1.0
      %v4107 = vadd.f32 %v3412, 1.0
      %v4108 = vadd.f32 %v3452, 1.0
      %v4109 = vadd.f32 %v3492, 1.0
      %v4110 = vadd.f32 %v3532, 1.0
      %v4111 = vadd.f32 %v3572, 1.0
      %v4112 = vadd.f32 %v3612, 1.0
      %v4113 = vadd.f32 %v3652, 1.0
      %v4114 = vadd.f32 %v3692, 1.0
      %v4115 = vadd.f32 %v3732, 1.0
      %v4116 = vadd.f32 %v3772, 1.0
      %v4117 = vadd.f32 %v3812, 1.0
      %v4118 = vadd.f32 %v3852, 1.0
      %v4119 = vadd.f32 %v3892, 1.0
      %v4120 = vadd.f32 %v3932, 1.0
      %v4121 = vadd.f32 %v3972, 1.0
      %v4122 = vadd.f32 %v4012, 1.0
      %v4123 = vadd.f32 %v4052, 1.0
      %v4124 = vadd.f32 %v4092, 1.0
      %v4125 = vmul.f32 %v2749, %v4093
      %v4126 = vmul.f32 %v2750, %v4094
      %v4127 = vmul.f32 %v2751, %v4095
      %v4128 = vmul.f32 %v2752, %v4096
      %v4129 = vmul.f32 %v2753, %v4097
      %v4130 = vmul.f32 %v2754, %v4098
      %v4131 = vmul.f32 %v2755, %v4099
      %v4132 = vmul.f32 %v2756, %v4100
      %v4133 = vmul.f32 %v2757, %v4101
      %v4134 = vmul.f32 %v2758, %v4102
      %v4135 = vmul.f32 %v2759, %v4103
      %v4136 = vmul.f32 %v2760, %v4104
      %v4137 = vmul.f32 %v2761, %v4105
      %v4138 = vmul.f32 %v2762, %v4106
      %v4139 = vmul.f32 %v2763, %v4107
      %v4140 = vmul.f32 %v2764, %v4108
      %v4141 = vmul.f32 %v2765, %v4109
      %v4142 = vmul.f32 %v2766, %v4110
      %v4143 = vmul.f32 %v2767, %v4111
      %v4144 = vmul.f32 %v2768, %v4112
      %v4145 = vmul.f32 %v2769, %v4113
      %v4146 = vmul.f32 %v2770, %v4114
      %v4147 = vmul.f32 %v2771, %v4115
      %v4148 = vmul.f32 %v2772, %v4116
      %v4149 = vmul.f32 %v2773, %v4117
      %v4150 = vmul.f32 %v2774, %v4118
      %v4151 = vmul.f32 %v2775, %v4119
      %v4152 = vmul.f32 %v2776, %v4120
      %v4153 = vmul.f32 %v2777, %v4121
      %v4154 = vmul.f32 %v2778, %v4122
      %v4155 = vmul.f32 %v2779, %v4123
      %v4156 = vmul.f32 %v2780, %v4124
      %4157 = vst.msk [vmem:[#allocation2] sm:$0xff] %vm339, 0.0
      %4158 = vst.msk [vmem:[#allocation2 + $0x8] sm:$0xff] %vm339, 0.0
      %vm4159 = vcmask 9216
      %4160 = vst.msk [vmem:[#allocation2 + $0x10] sm:$0x3] %vm4159, 0.0
      %4161 = vst.msk [vmem:[#allocation2 + $0x18] sm:$0xff] %vm339, 0.0
      %4162 = vst.msk [vmem:[#allocation2 + $0x20] sm:$0xff] %vm339, 0.0
      %4163 = vst.msk [vmem:[#allocation2 + $0x28] sm:$0x3] %vm4159, 0.0
      %4164 = vst.msk [vmem:[#allocation2 + $0x30] sm:$0xff] %vm339, 0.0
      %4165 = vst.msk [vmem:[#allocation2 + $0x38] sm:$0xff] %vm339, 0.0
      %4166 = vst.msk [vmem:[#allocation2 + $0x40] sm:$0x3] %vm4159, 0.0
      %4167 = vst.msk [vmem:[#allocation2 + $0x48] sm:$0xff] %vm339, 0.0
      %4168 = vst.msk [vmem:[#allocation2 + $0x50] sm:$0xff] %vm339, 0.0
      %4169 = vst.msk [vmem:[#allocation2 + $0x58] sm:$0x3] %vm4159, 0.0
      %4170 = vst.msk [vmem:[#allocation2 + $0x60] sm:$0xff] %vm339, 0.0
      %4171 = vst.msk [vmem:[#allocation2 + $0x68] sm:$0xff] %vm339, 0.0
      %4172 = vst.msk [vmem:[#allocation2 + $0x70] sm:$0x3] %vm4159, 0.0
      %4173 = vst.msk [vmem:[#allocation2 + $0x78] sm:$0xff] %vm339, 0.0
      %4174 = vst.msk [vmem:[#allocation2 + $0x80] sm:$0xff] %vm339, 0.0
      %4175 = vst.msk [vmem:[#allocation2 + $0x88] sm:$0x3] %vm4159, 0.0
      %4176 = vst.msk [vmem:[#allocation2 + $0x90] sm:$0xff] %vm339, 0.0
      %4177 = vst.msk [vmem:[#allocation2 + $0x98] sm:$0xff] %vm339, 0.0
      %4178 = vst.msk [vmem:[#allocation2 + $0xa0] sm:$0x3] %vm4159, 0.0
      %4179 = vst.msk [vmem:[#allocation2 + $0xa8] sm:$0xff] %vm339, 0.0
      %4180 = vst.msk [vmem:[#allocation2 + $0xb0] sm:$0xff] %vm339, 0.0
      %4181 = vst.msk [vmem:[#allocation2 + $0xb8] sm:$0x3] %vm4159, 0.0
      %4182 = vst.msk [vmem:[#allocation2 + $0xc0] sm:$0xff] %vm339, 0.0
      %4183 = vst.msk [vmem:[#allocation2 + $0xc8] sm:$0xff] %vm339, 0.0
      %4184 = vst.msk [vmem:[#allocation2 + $0xd0] sm:$0x3] %vm4159, 0.0
      %4185 = vst.msk [vmem:[#allocation2 + $0xd8] sm:$0xff] %vm339, 0.0
      %4186 = vst.msk [vmem:[#allocation2 + $0xe0] sm:$0xff] %vm339, 0.0
      %4187 = vst.msk [vmem:[#allocation2 + $0xe8] sm:$0x3] %vm4159, 0.0
      %4188 = vst.msk [vmem:[#allocation2 + $0xf0] sm:$0xff] %vm339, 0.0
      %4189 = vst.msk [vmem:[#allocation2 + $0xf8] sm:$0xff] %vm339, 0.0
      %4190 = vst.msk [vmem:[#allocation2 + $0x100] sm:$0x3] %vm4159, 0.0
      %4191 = vst.msk [vmem:[#allocation2 + $0x108] sm:$0xff] %vm339, 0.0
      %4192 = vst.msk [vmem:[#allocation2 + $0x110] sm:$0xff] %vm339, 0.0
      %4193 = vst.msk [vmem:[#allocation2 + $0x118] sm:$0x3] %vm4159, 0.0
      %4194 = vst.msk [vmem:[#allocation2 + $0x120] sm:$0xff] %vm339, 0.0
      %4195 = vst.msk [vmem:[#allocation2 + $0x128] sm:$0xff] %vm339, 0.0
      %4196 = vst.msk [vmem:[#allocation2 + $0x130] sm:$0x3] %vm4159, 0.0
      %4197 = vst.msk [vmem:[#allocation2 + $0x138] sm:$0xff] %vm339, 0.0
      %4198 = vst.msk [vmem:[#allocation2 + $0x140] sm:$0xff] %vm339, 0.0
      %4199 = vst.msk [vmem:[#allocation2 + $0x148] sm:$0x3] %vm4159, 0.0
      %4200 = vst.msk [vmem:[#allocation2 + $0x150] sm:$0xff] %vm339, 0.0
      %4201 = vst.msk [vmem:[#allocation2 + $0x158] sm:$0xff] %vm339, 0.0
      %4202 = vst.msk [vmem:[#allocation2 + $0x160] sm:$0x3] %vm4159, 0.0
      %4203 = vst.msk [vmem:[#allocation2 + $0x168] sm:$0xff] %vm339, 0.0
      %4204 = vst.msk [vmem:[#allocation2 + $0x170] sm:$0xff] %vm339, 0.0
      %4205 = vst.msk [vmem:[#allocation2 + $0x178] sm:$0x3] %vm4159, 0.0
      %4206 = vst.msk [vmem:[#allocation2 + $0x180] sm:$0xff] %vm339, 0.0
      %4207 = vst.msk [vmem:[#allocation2 + $0x188] sm:$0xff] %vm339, 0.0
      %4208 = vst.msk [vmem:[#allocation2 + $0x190] sm:$0x3] %vm4159, 0.0
      %4209 = vst.msk [vmem:[#allocation2 + $0x198] sm:$0xff] %vm339, 0.0
      %4210 = vst.msk [vmem:[#allocation2 + $0x1a0] sm:$0xff] %vm339, 0.0
      %4211 = vst.msk [vmem:[#allocation2 + $0x1a8] sm:$0x3] %vm4159, 0.0
      %s4212 = scalar_lea.vmem [#allocation2], 24
      %4213 = vst.msk [vmem:[%s4212 + $0x1] sm:$0xff] %vm339, %v4125
      %4214 = vst.msk [vmem:[%s4212 + $0x9] sm:$0xff] %vm339, %v4126
      %4215 = vst.msk [vmem:[%s4212 + $0x19] sm:$0xff] %vm339, %v4127
      %4216 = vst.msk [vmem:[%s4212 + $0x21] sm:$0xff] %vm339, %v4128
      %4217 = vst.msk [vmem:[%s4212 + $0x31] sm:$0xff] %vm339, %v4129
      %4218 = vst.msk [vmem:[%s4212 + $0x39] sm:$0xff] %vm339, %v4130
      %4219 = vst.msk [vmem:[%s4212 + $0x49] sm:$0xff] %vm339, %v4131
      %4220 = vst.msk [vmem:[%s4212 + $0x51] sm:$0xff] %vm339, %v4132
      %4221 = vst.msk [vmem:[%s4212 + $0x61] sm:$0xff] %vm339, %v4133
      %4222 = vst.msk [vmem:[%s4212 + $0x69] sm:$0xff] %vm339, %v4134
      %4223 = vst.msk [vmem:[%s4212 + $0x79] sm:$0xff] %vm339, %v4135
      %4224 = vst.msk [vmem:[%s4212 + $0x81] sm:$0xff] %vm339, %v4136
      %4225 = vst.msk [vmem:[%s4212 + $0x91] sm:$0xff] %vm339, %v4137
      %4226 = vst.msk [vmem:[%s4212 + $0x99] sm:$0xff] %vm339, %v4138
      %4227 = vst.msk [vmem:[%s4212 + $0xa9] sm:$0xff] %vm339, %v4139
      %4228 = vst.msk [vmem:[%s4212 + $0xb1] sm:$0xff] %vm339, %v4140
      %4229 = vst.msk [vmem:[%s4212 + $0xc1] sm:$0xff] %vm339, %v4141
      %4230 = vst.msk [vmem:[%s4212 + $0xc9] sm:$0xff] %vm339, %v4142
      %4231 = vst.msk [vmem:[%s4212 + $0xd9] sm:$0xff] %vm339, %v4143
      %4232 = vst.msk [vmem:[%s4212 + $0xe1] sm:$0xff] %vm339, %v4144
      %4233 = vst.msk [vmem:[%s4212 + $0xf1] sm:$0xff] %vm339, %v4145
      %4234 = vst.msk [vmem:[%s4212 + $0xf9] sm:$0xff] %vm339, %v4146
      %4235 = vst.msk [vmem:[%s4212 + $0x109] sm:$0xff] %vm339, %v4147
      %4236 = vst.msk [vmem:[%s4212 + $0x111] sm:$0xff] %vm339, %v4148
      %4237 = vst.msk [vmem:[%s4212 + $0x121] sm:$0xff] %vm339, %v4149
      %4238 = vst.msk [vmem:[%s4212 + $0x129] sm:$0xff] %vm339, %v4150
      %4239 = vst.msk [vmem:[%s4212 + $0x139] sm:$0xff] %vm339, %v4151
      %4240 = vst.msk [vmem:[%s4212 + $0x141] sm:$0xff] %vm339, %v4152
      %4241 = vst.msk [vmem:[%s4212 + $0x151] sm:$0xff] %vm339, %v4153
      %4242 = vst.msk [vmem:[%s4212 + $0x159] sm:$0xff] %vm339, %v4154
      %4243 = vst.msk [vmem:[%s4212 + $0x169] sm:$0xff] %vm339, %v4155
      %4244 = vst.msk [vmem:[%s4212 + $0x171] sm:$0xff] %vm339, %v4156
      %v4245 = vld [vmem:[#allocation2] sm:$0xff]
      %v4246 = vld [vmem:[#allocation2 + $0x8] sm:$0xff]
      %v4247 = vld [vmem:[#allocation2 + $0x18] sm:$0xff]
      %v4248 = vld [vmem:[#allocation2 + $0x20] sm:$0xff]
      %v4249 = vld [vmem:[#allocation2 + $0x30] sm:$0xff]
      %v4250 = vld [vmem:[#allocation2 + $0x38] sm:$0xff]
      %v4251 = vld [vmem:[#allocation2 + $0x48] sm:$0xff]
      %v4252 = vld [vmem:[#allocation2 + $0x50] sm:$0xff]
      %v4253 = vld [vmem:[#allocation2 + $0x60] sm:$0xff]
      %v4254 = vld [vmem:[#allocation2 + $0x68] sm:$0xff]
      %v4255 = vld [vmem:[#allocation2 + $0x78] sm:$0xff]
      %v4256 = vld [vmem:[#allocation2 + $0x80] sm:$0xff]
      %v4257 = vld [vmem:[#allocation2 + $0x90] sm:$0xff]
      %v4258 = vld [vmem:[#allocation2 + $0x98] sm:$0xff]
      %v4259 = vld [vmem:[#allocation2 + $0xa8] sm:$0xff]
      %v4260 = vld [vmem:[#allocation2 + $0xb0] sm:$0xff]
      %v4261 = vld [vmem:[#allocation2 + $0xc0] sm:$0xff]
      %v4262 = vld [vmem:[#allocation2 + $0xc8] sm:$0xff]
      %v4263 = vld [vmem:[#allocation2 + $0xd8] sm:$0xff]
      %v4264 = vld [vmem:[#allocation2 + $0xe0] sm:$0xff]
      %v4265 = vld [vmem:[#allocation2 + $0xf0] sm:$0xff]
      %v4266 = vld [vmem:[#allocation2 + $0xf8] sm:$0xff]
      %v4267 = vld [vmem:[#allocation2 + $0x108] sm:$0xff]
      %v4268 = vld [vmem:[#allocation2 + $0x110] sm:$0xff]
      %v4269 = vld [vmem:[#allocation2 + $0x120] sm:$0xff]
      %v4270 = vld [vmem:[#allocation2 + $0x128] sm:$0xff]
      %v4271 = vld [vmem:[#allocation2 + $0x138] sm:$0xff]
      %v4272 = vld [vmem:[#allocation2 + $0x140] sm:$0xff]
      %v4273 = vld [vmem:[#allocation2 + $0x150] sm:$0xff]
      %v4274 = vld [vmem:[#allocation2 + $0x158] sm:$0xff]
      %v4275 = vld [vmem:[#allocation2 + $0x168] sm:$0xff]
      %v4276 = vld [vmem:[#allocation2 + $0x170] sm:$0xff]
      %v4277 = vld [vmem:[%s4] sm:$0x3]
      %v4278 = vld [vmem:[#allocation2 + $0x1] sm:$0xff]
      %v4279 = vld [vmem:[#allocation2 + $0x9] sm:$0xff]
      %v4280 = vld [vmem:[#allocation2 + $0x19] sm:$0xff]
      %v4281 = vld [vmem:[#allocation2 + $0x21] sm:$0xff]
      %v4282 = vld [vmem:[#allocation2 + $0x31] sm:$0xff]
      %v4283 = vld [vmem:[#allocation2 + $0x39] sm:$0xff]
      %v4284 = vld [vmem:[#allocation2 + $0x49] sm:$0xff]
      %v4285 = vld [vmem:[#allocation2 + $0x51] sm:$0xff]
      %v4286 = vld [vmem:[#allocation2 + $0x61] sm:$0xff]
      %v4287 = vld [vmem:[#allocation2 + $0x69] sm:$0xff]
      %v4288 = vld [vmem:[#allocation2 + $0x79] sm:$0xff]
      %v4289 = vld [vmem:[#allocation2 + $0x81] sm:$0xff]
      %v4290 = vld [vmem:[#allocation2 + $0x91] sm:$0xff]
      %v4291 = vld [vmem:[#allocation2 + $0x99] sm:$0xff]
      %v4292 = vld [vmem:[#allocation2 + $0xa9] sm:$0xff]
      %v4293 = vld [vmem:[#allocation2 + $0xb1] sm:$0xff]
      %v4294 = vld [vmem:[#allocation2 + $0xc1] sm:$0xff]
      %v4295 = vld [vmem:[#allocation2 + $0xc9] sm:$0xff]
      %v4296 = vld [vmem:[#allocation2 + $0xd9] sm:$0xff]
      %v4297 = vld [vmem:[#allocation2 + $0xe1] sm:$0xff]
      %v4298 = vld [vmem:[#allocation2 + $0xf1] sm:$0xff]
      %v4299 = vld [vmem:[#allocation2 + $0xf9] sm:$0xff]
      %v4300 = vld [vmem:[#allocation2 + $0x109] sm:$0xff]
      %v4301 = vld [vmem:[#allocation2 + $0x111] sm:$0xff]
      %v4302 = vld [vmem:[#allocation2 + $0x121] sm:$0xff]
      %v4303 = vld [vmem:[#allocation2 + $0x129] sm:$0xff]
      %v4304 = vld [vmem:[#allocation2 + $0x139] sm:$0xff]
      %v4305 = vld [vmem:[#allocation2 + $0x141] sm:$0xff]
      %v4306 = vld [vmem:[#allocation2 + $0x151] sm:$0xff]
      %v4307 = vld [vmem:[#allocation2 + $0x159] sm:$0xff]
      %v4308 = vld [vmem:[#allocation2 + $0x169] sm:$0xff]
      %v4309 = vld [vmem:[#allocation2 + $0x171] sm:$0xff]
      %s4310 = scalar_lea.vmem %s4, 2
      %v4311 = vld [vmem:[%s4310] sm:$0x3]
      %v4313 = vsel %vm339, %v4278, 0
      %v4316 = vsel %vm339, %v4279, 0
      %v4319 = vsel %vm339, %v4280, 0
      %v4322 = vsel %vm339, %v4281, 0
      %v4325 = vsel %vm339, %v4282, 0
      %v4328 = vsel %vm339, %v4283, 0
      %v4331 = vsel %vm339, %v4284, 0
      %v4334 = vsel %vm339, %v4285, 0
      %v4337 = vsel %vm339, %v4286, 0
      %v4340 = vsel %vm339, %v4287, 0
      %v4343 = vsel %vm339, %v4288, 0
      %v4346 = vsel %vm339, %v4289, 0
      %v4349 = vsel %vm339, %v4290, 0
      %v4352 = vsel %vm339, %v4291, 0
      %v4355 = vsel %vm339, %v4292, 0
      %v4358 = vsel %vm339, %v4293, 0
      %v4361 = vsel %vm339, %v4294, 0
      %v4364 = vsel %vm339, %v4295, 0
      %v4367 = vsel %vm339, %v4296, 0
      %v4370 = vsel %vm339, %v4297, 0
      %v4373 = vsel %vm339, %v4298, 0
      %v4376 = vsel %vm339, %v4299, 0
      %v4379 = vsel %vm339, %v4300, 0
      %v4382 = vsel %vm339, %v4301, 0
      %v4385 = vsel %vm339, %v4302, 0
      %v4388 = vsel %vm339, %v4303, 0
      %v4391 = vsel %vm339, %v4304, 0
      %v4394 = vsel %vm339, %v4305, 0
      %v4397 = vsel %vm339, %v4306, 0
      %v4400 = vsel %vm339, %v4307, 0
      %v4403 = vsel %vm339, %v4308, 0
      %v4406 = vsel %vm339, %v4309, 0
      %v4409 = vsel %vm436, %v4311, 0
      %4411 = vmatpush.msra.mxu0 0.0
      %4412 = vmatpush.msra.mxu0 0.0
      %4413 = vmatpush.msra.mxu0 0.0
      %4414 = vmatpush.msra.mxu0 0.0
      %4415 = vmatpush.msra.mxu0 0.0
      %4416 = vmatpush.msra.mxu0 0.0
      %4417 = vmatpush.msra.mxu0 0.0
      %4418 = vmatpush.msra.mxu0 0.0
      %4419 = vmatpush.msra.mxu0 0.0
      %4420 = vmatpush.msra.mxu0 0.0
      %4421 = vmatpush.msra.mxu0 0.0
      %4422 = vmatpush.msra.mxu0 0.0
      %4423 = vmatpush.msra.mxu0 0.0
      %4424 = vmatpush.msra.mxu0 0.0
      %4425 = vmatpush.msra.mxu0 0.0
      %4426 = vmatpush.msra.mxu0 %v4409
      %4427 = vmatmul.f32.gmra.mxu0 %v4313
      %v4428 = vpop.f32.mrf.mxu0
      %v4429 = vadd.f32 0.0, %v4428
      %4430 = vmatmul.f32.gmra.mxu0 %v4316
      %v4431 = vpop.f32.mrf.mxu0
      %v4432 = vadd.f32 0.0, %v4431
      %4433 = vmatmul.f32.gmra.mxu0 %v4319
      %v4434 = vpop.f32.mrf.mxu0
      %v4435 = vadd.f32 0.0, %v4434
      %4436 = vmatmul.f32.gmra.mxu0 %v4322
      %v4437 = vpop.f32.mrf.mxu0
      %v4438 = vadd.f32 0.0, %v4437
      %4439 = vmatmul.f32.gmra.mxu0 %v4325
      %v4440 = vpop.f32.mrf.mxu0
      %v4441 = vadd.f32 0.0, %v4440
      %4442 = vmatmul.f32.gmra.mxu0 %v4328
      %v4443 = vpop.f32.mrf.mxu0
      %v4444 = vadd.f32 0.0, %v4443
      %4445 = vmatmul.f32.gmra.mxu0 %v4331
      %v4446 = vpop.f32.mrf.mxu0
      %v4447 = vadd.f32 0.0, %v4446
      %4448 = vmatmul.f32.gmra.mxu0 %v4334
      %v4449 = vpop.f32.mrf.mxu0
      %v4450 = vadd.f32 0.0, %v4449
      %4451 = vmatmul.f32.gmra.mxu0 %v4337
      %v4452 = vpop.f32.mrf.mxu0
      %v4453 = vadd.f32 0.0, %v4452
      %4454 = vmatmul.f32.gmra.mxu0 %v4340
      %v4455 = vpop.f32.mrf.mxu0
      %v4456 = vadd.f32 0.0, %v4455
      %4457 = vmatmul.f32.gmra.mxu0 %v4343
      %v4458 = vpop.f32.mrf.mxu0
      %v4459 = vadd.f32 0.0, %v4458
      %4460 = vmatmul.f32.gmra.mxu0 %v4346
      %v4461 = vpop.f32.mrf.mxu0
      %v4462 = vadd.f32 0.0, %v4461
      %4463 = vmatmul.f32.gmra.mxu0 %v4349
      %v4464 = vpop.f32.mrf.mxu0
      %v4465 = vadd.f32 0.0, %v4464
      %4466 = vmatmul.f32.gmra.mxu0 %v4352
      %v4467 = vpop.f32.mrf.mxu0
      %v4468 = vadd.f32 0.0, %v4467
      %4469 = vmatmul.f32.gmra.mxu0 %v4355
      %v4470 = vpop.f32.mrf.mxu0
      %v4471 = vadd.f32 0.0, %v4470
      %4472 = vmatmul.f32.gmra.mxu0 %v4358
      %v4473 = vpop.f32.mrf.mxu0
      %v4474 = vadd.f32 0.0, %v4473
      %4475 = vmatmul.f32.gmra.mxu0 %v4361
      %v4476 = vpop.f32.mrf.mxu0
      %v4477 = vadd.f32 0.0, %v4476
      %4478 = vmatmul.f32.gmra.mxu0 %v4364
      %v4479 = vpop.f32.mrf.mxu0
      %v4480 = vadd.f32 0.0, %v4479
      %4481 = vmatmul.f32.gmra.mxu0 %v4367
      %v4482 = vpop.f32.mrf.mxu0
      %v4483 = vadd.f32 0.0, %v4482
      %4484 = vmatmul.f32.gmra.mxu0 %v4370
      %v4485 = vpop.f32.mrf.mxu0
      %v4486 = vadd.f32 0.0, %v4485
      %4487 = vmatmul.f32.gmra.mxu0 %v4373
      %v4488 = vpop.f32.mrf.mxu0
      %v4489 = vadd.f32 0.0, %v4488
      %4490 = vmatmul.f32.gmra.mxu0 %v4376
      %v4491 = vpop.f32.mrf.mxu0
      %v4492 = vadd.f32 0.0, %v4491
      %4493 = vmatmul.f32.gmra.mxu0 %v4379
      %v4494 = vpop.f32.mrf.mxu0
      %v4495 = vadd.f32 0.0, %v4494
      %4496 = vmatmul.f32.gmra.mxu0 %v4382
      %v4497 = vpop.f32.mrf.mxu0
      %v4498 = vadd.f32 0.0, %v4497
      %4499 = vmatmul.f32.gmra.mxu0 %v4385
      %v4500 = vpop.f32.mrf.mxu0
      %v4501 = vadd.f32 0.0, %v4500
      %4502 = vmatmul.f32.gmra.mxu0 %v4388
      %v4503 = vpop.f32.mrf.mxu0
      %v4504 = vadd.f32 0.0, %v4503
      %4505 = vmatmul.f32.gmra.mxu0 %v4391
      %v4506 = vpop.f32.mrf.mxu0
      %v4507 = vadd.f32 0.0, %v4506
      %4508 = vmatmul.f32.gmra.mxu0 %v4394
      %v4509 = vpop.f32.mrf.mxu0
      %v4510 = vadd.f32 0.0, %v4509
      %4511 = vmatmul.f32.gmra.mxu0 %v4397
      %v4512 = vpop.f32.mrf.mxu0
      %v4513 = vadd.f32 0.0, %v4512
      %4514 = vmatmul.f32.gmra.mxu0 %v4400
      %v4515 = vpop.f32.mrf.mxu0
      %v4516 = vadd.f32 0.0, %v4515
      %4517 = vmatmul.f32.gmra.mxu0 %v4403
      %v4518 = vpop.f32.mrf.mxu0
      %v4519 = vadd.f32 0.0, %v4518
      %4520 = vmatmul.f32.gmra.mxu0 %v4406
      %v4521 = vpop.f32.mrf.mxu0
      %v4522 = vadd.f32 0.0, %v4521
      %4523 = vdwg.mxu0
      %v4525 = vsel %vm339, %v4245, 0
      %v4528 = vsel %vm339, %v4246, 0
      %v4531 = vsel %vm339, %v4247, 0
      %v4534 = vsel %vm339, %v4248, 0
      %v4537 = vsel %vm339, %v4249, 0
      %v4540 = vsel %vm339, %v4250, 0
      %v4543 = vsel %vm339, %v4251, 0
      %v4546 = vsel %vm339, %v4252, 0
      %v4549 = vsel %vm339, %v4253, 0
      %v4552 = vsel %vm339, %v4254, 0
      %v4555 = vsel %vm339, %v4255, 0
      %v4558 = vsel %vm339, %v4256, 0
      %v4561 = vsel %vm339, %v4257, 0
      %v4564 = vsel %vm339, %v4258, 0
      %v4567 = vsel %vm339, %v4259, 0
      %v4570 = vsel %vm339, %v4260, 0
      %v4573 = vsel %vm339, %v4261, 0
      %v4576 = vsel %vm339, %v4262, 0
      %v4579 = vsel %vm339, %v4263, 0
      %v4582 = vsel %vm339, %v4264, 0
      %v4585 = vsel %vm339, %v4265, 0
      %v4588 = vsel %vm339, %v4266, 0
      %v4591 = vsel %vm339, %v4267, 0
      %v4594 = vsel %vm339, %v4268, 0
      %v4597 = vsel %vm339, %v4269, 0
      %v4600 = vsel %vm339, %v4270, 0
      %v4603 = vsel %vm339, %v4271, 0
      %v4606 = vsel %vm339, %v4272, 0
      %v4609 = vsel %vm339, %v4273, 0
      %v4612 = vsel %vm339, %v4274, 0
      %v4615 = vsel %vm339, %v4275, 0
      %v4618 = vsel %vm339, %v4276, 0
      %v4621 = vsel %vm436, %v4277, 0
      %4623 = vmatpush.msra.mxu0 0.0
      %4624 = vmatpush.msra.mxu0 0.0
      %4625 = vmatpush.msra.mxu0 0.0
      %4626 = vmatpush.msra.mxu0 0.0
      %4627 = vmatpush.msra.mxu0 0.0
      %4628 = vmatpush.msra.mxu0 0.0
      %4629 = vmatpush.msra.mxu0 0.0
      %4630 = vmatpush.msra.mxu0 0.0
      %4631 = vmatpush.msra.mxu0 0.0
      %4632 = vmatpush.msra.mxu0 0.0
      %4633 = vmatpush.msra.mxu0 0.0
      %4634 = vmatpush.msra.mxu0 0.0
      %4635 = vmatpush.msra.mxu0 0.0
      %4636 = vmatpush.msra.mxu0 0.0
      %4637 = vmatpush.msra.mxu0 0.0
      %4638 = vmatpush.msra.mxu0 %v4621
      %4639 = vmatmul.f32.gmra.mxu0 %v4525
      %v4640 = vpop.f32.mrf.mxu0
      %v4641 = vadd.f32 %v4429, %v4640
      %4642 = vmatmul.f32.gmra.mxu0 %v4528
      %v4643 = vpop.f32.mrf.mxu0
      %v4644 = vadd.f32 %v4432, %v4643
      %4645 = vmatmul.f32.gmra.mxu0 %v4531
      %v4646 = vpop.f32.mrf.mxu0
      %v4647 = vadd.f32 %v4435, %v4646
      %4648 = vmatmul.f32.gmra.mxu0 %v4534
      %v4649 = vpop.f32.mrf.mxu0
      %v4650 = vadd.f32 %v4438, %v4649
      %4651 = vmatmul.f32.gmra.mxu0 %v4537
      %v4652 = vpop.f32.mrf.mxu0
      %v4653 = vadd.f32 %v4441, %v4652
      %4654 = vmatmul.f32.gmra.mxu0 %v4540
      %v4655 = vpop.f32.mrf.mxu0
      %v4656 = vadd.f32 %v4444, %v4655
      %4657 = vmatmul.f32.gmra.mxu0 %v4543
      %v4658 = vpop.f32.mrf.mxu0
      %v4659 = vadd.f32 %v4447, %v4658
      %4660 = vmatmul.f32.gmra.mxu0 %v4546
      %v4661 = vpop.f32.mrf.mxu0
      %v4662 = vadd.f32 %v4450, %v4661
      %4663 = vmatmul.f32.gmra.mxu0 %v4549
      %v4664 = vpop.f32.mrf.mxu0
      %v4665 = vadd.f32 %v4453, %v4664
      %4666 = vmatmul.f32.gmra.mxu0 %v4552
      %v4667 = vpop.f32.mrf.mxu0
      %v4668 = vadd.f32 %v4456, %v4667
      %4669 = vmatmul.f32.gmra.mxu0 %v4555
      %v4670 = vpop.f32.mrf.mxu0
      %v4671 = vadd.f32 %v4459, %v4670
      %4672 = vmatmul.f32.gmra.mxu0 %v4558
      %v4673 = vpop.f32.mrf.mxu0
      %v4674 = vadd.f32 %v4462, %v4673
      %4675 = vmatmul.f32.gmra.mxu0 %v4561
      %v4676 = vpop.f32.mrf.mxu0
      %v4677 = vadd.f32 %v4465, %v4676
      %4678 = vmatmul.f32.gmra.mxu0 %v4564
      %v4679 = vpop.f32.mrf.mxu0
      %v4680 = vadd.f32 %v4468, %v4679
      %4681 = vmatmul.f32.gmra.mxu0 %v4567
      %v4682 = vpop.f32.mrf.mxu0
      %v4683 = vadd.f32 %v4471, %v4682
      %4684 = vmatmul.f32.gmra.mxu0 %v4570
      %v4685 = vpop.f32.mrf.mxu0
      %v4686 = vadd.f32 %v4474, %v4685
      %4687 = vmatmul.f32.gmra.mxu0 %v4573
      %v4688 = vpop.f32.mrf.mxu0
      %v4689 = vadd.f32 %v4477, %v4688
      %4690 = vmatmul.f32.gmra.mxu0 %v4576
      %v4691 = vpop.f32.mrf.mxu0
      %v4692 = vadd.f32 %v4480, %v4691
      %4693 = vmatmul.f32.gmra.mxu0 %v4579
      %v4694 = vpop.f32.mrf.mxu0
      %v4695 = vadd.f32 %v4483, %v4694
      %4696 = vmatmul.f32.gmra.mxu0 %v4582
      %v4697 = vpop.f32.mrf.mxu0
      %v4698 = vadd.f32 %v4486, %v4697
      %4699 = vmatmul.f32.gmra.mxu0 %v4585
      %v4700 = vpop.f32.mrf.mxu0
      %v4701 = vadd.f32 %v4489, %v4700
      %4702 = vmatmul.f32.gmra.mxu0 %v4588
      %v4703 = vpop.f32.mrf.mxu0
      %v4704 = vadd.f32 %v4492, %v4703
      %4705 = vmatmul.f32.gmra.mxu0 %v4591
      %v4706 = vpop.f32.mrf.mxu0
      %v4707 = vadd.f32 %v4495, %v4706
      %4708 = vmatmul.f32.gmra.mxu0 %v4594
      %v4709 = vpop.f32.mrf.mxu0
      %v4710 = vadd.f32 %v4498, %v4709
      %4711 = vmatmul.f32.gmra.mxu0 %v4597
      %v4712 = vpop.f32.mrf.mxu0
      %v4713 = vadd.f32 %v4501, %v4712
      %4714 = vmatmul.f32.gmra.mxu0 %v4600
      %v4715 = vpop.f32.mrf.mxu0
      %v4716 = vadd.f32 %v4504, %v4715
      %4717 = vmatmul.f32.gmra.mxu0 %v4603
      %v4718 = vpop.f32.mrf.mxu0
      %v4719 = vadd.f32 %v4507, %v4718
      %4720 = vmatmul.f32.gmra.mxu0 %v4606
      %v4721 = vpop.f32.mrf.mxu0
      %v4722 = vadd.f32 %v4510, %v4721
      %4723 = vmatmul.f32.gmra.mxu0 %v4609
      %v4724 = vpop.f32.mrf.mxu0
      %v4725 = vadd.f32 %v4513, %v4724
      %4726 = vmatmul.f32.gmra.mxu0 %v4612
      %v4727 = vpop.f32.mrf.mxu0
      %v4728 = vadd.f32 %v4516, %v4727
      %4729 = vmatmul.f32.gmra.mxu0 %v4615
      %v4730 = vpop.f32.mrf.mxu0
      %v4731 = vadd.f32 %v4519, %v4730
      %4732 = vmatmul.f32.gmra.mxu0 %v4618
      %v4733 = vpop.f32.mrf.mxu0
      %v4734 = vadd.f32 %v4522, %v4733
      %4735 = vdwg.mxu0
      %v4736 = vld [vmem:[#allocation2 + $0x2] sm:$0xff]
      %v4737 = vld [vmem:[#allocation2 + $0xa] sm:$0xff]
      %v4738 = vld [vmem:[#allocation2 + $0x1a] sm:$0xff]
      %v4739 = vld [vmem:[#allocation2 + $0x22] sm:$0xff]
      %v4740 = vld [vmem:[#allocation2 + $0x32] sm:$0xff]
      %v4741 = vld [vmem:[#allocation2 + $0x3a] sm:$0xff]
      %v4742 = vld [vmem:[#allocation2 + $0x4a] sm:$0xff]
      %v4743 = vld [vmem:[#allocation2 + $0x52] sm:$0xff]
      %v4744 = vld [vmem:[#allocation2 + $0x62] sm:$0xff]
      %v4745 = vld [vmem:[#allocation2 + $0x6a] sm:$0xff]
      %v4746 = vld [vmem:[#allocation2 + $0x7a] sm:$0xff]
      %v4747 = vld [vmem:[#allocation2 + $0x82] sm:$0xff]
      %v4748 = vld [vmem:[#allocation2 + $0x92] sm:$0xff]
      %v4749 = vld [vmem:[#allocation2 + $0x9a] sm:$0xff]
      %v4750 = vld [vmem:[#allocation2 + $0xaa] sm:$0xff]
      %v4751 = vld [vmem:[#allocation2 + $0xb2] sm:$0xff]
      %v4752 = vld [vmem:[#allocation2 + $0xc2] sm:$0xff]
      %v4753 = vld [vmem:[#allocation2 + $0xca] sm:$0xff]
      %v4754 = vld [vmem:[#allocation2 + $0xda] sm:$0xff]
      %v4755 = vld [vmem:[#allocation2 + $0xe2] sm:$0xff]
      %v4756 = vld [vmem:[#allocation2 + $0xf2] sm:$0xff]
      %v4757 = vld [vmem:[#allocation2 + $0xfa] sm:$0xff]
      %v4758 = vld [vmem:[#allocation2 + $0x10a] sm:$0xff]
      %v4759 = vld [vmem:[#allocation2 + $0x112] sm:$0xff]
      %v4760 = vld [vmem:[#allocation2 + $0x122] sm:$0xff]
      %v4761 = vld [vmem:[#allocation2 + $0x12a] sm:$0xff]
      %v4762 = vld [vmem:[#allocation2 + $0x13a] sm:$0xff]
      %v4763 = vld [vmem:[#allocation2 + $0x142] sm:$0xff]
      %v4764 = vld [vmem:[#allocation2 + $0x152] sm:$0xff]
      %v4765 = vld [vmem:[#allocation2 + $0x15a] sm:$0xff]
      %v4766 = vld [vmem:[#allocation2 + $0x16a] sm:$0xff]
      %v4767 = vld [vmem:[#allocation2 + $0x172] sm:$0xff]
      %s4768 = scalar_lea.vmem %s4, 4
      %v4769 = vld [vmem:[%s4768] sm:$0x3]
      %v4771 = vsel %vm339, %v4736, 0
      %v4774 = vsel %vm339, %v4737, 0
      %v4777 = vsel %vm339, %v4738, 0
      %v4780 = vsel %vm339, %v4739, 0
      %v4783 = vsel %vm339, %v4740, 0
      %v4786 = vsel %vm339, %v4741, 0
      %v4789 = vsel %vm339, %v4742, 0
      %v4792 = vsel %vm339, %v4743, 0
      %v4795 = vsel %vm339, %v4744, 0
      %v4798 = vsel %vm339, %v4745, 0
      %v4801 = vsel %vm339, %v4746, 0
      %v4804 = vsel %vm339, %v4747, 0
      %v4807 = vsel %vm339, %v4748, 0
      %v4810 = vsel %vm339, %v4749, 0
      %v4813 = vsel %vm339, %v4750, 0
      %v4816 = vsel %vm339, %v4751, 0
      %v4819 = vsel %vm339, %v4752, 0
      %v4822 = vsel %vm339, %v4753, 0
      %v4825 = vsel %vm339, %v4754, 0
      %v4828 = vsel %vm339, %v4755, 0
      %v4831 = vsel %vm339, %v4756, 0
      %v4834 = vsel %vm339, %v4757, 0
      %v4837 = vsel %vm339, %v4758, 0
      %v4840 = vsel %vm339, %v4759, 0
      %v4843 = vsel %vm339, %v4760, 0
      %v4846 = vsel %vm339, %v4761, 0
      %v4849 = vsel %vm339, %v4762, 0
      %v4852 = vsel %vm339, %v4763, 0
      %v4855 = vsel %vm339, %v4764, 0
      %v4858 = vsel %vm339, %v4765, 0
      %v4861 = vsel %vm339, %v4766, 0
      %v4864 = vsel %vm339, %v4767, 0
      %v4867 = vsel %vm436, %v4769, 0
      %4869 = vmatpush.msra.mxu0 0.0
      %4870 = vmatpush.msra.mxu0 0.0
      %4871 = vmatpush.msra.mxu0 0.0
      %4872 = vmatpush.msra.mxu0 0.0
      %4873 = vmatpush.msra.mxu0 0.0
      %4874 = vmatpush.msra.mxu0 0.0
      %4875 = vmatpush.msra.mxu0 0.0
      %4876 = vmatpush.msra.mxu0 0.0
      %4877 = vmatpush.msra.mxu0 0.0
      %4878 = vmatpush.msra.mxu0 0.0
      %4879 = vmatpush.msra.mxu0 0.0
      %4880 = vmatpush.msra.mxu0 0.0
      %4881 = vmatpush.msra.mxu0 0.0
      %4882 = vmatpush.msra.mxu0 0.0
      %4883 = vmatpush.msra.mxu0 0.0
      %4884 = vmatpush.msra.mxu0 %v4867
      %4885 = vmatmul.f32.gmra.mxu0 %v4771
      %v4886 = vpop.f32.mrf.mxu0
      %v4887 = vadd.f32 0.0, %v4886
      %4888 = vmatmul.f32.gmra.mxu0 %v4774
      %v4889 = vpop.f32.mrf.mxu0
      %v4890 = vadd.f32 0.0, %v4889
      %4891 = vmatmul.f32.gmra.mxu0 %v4777
      %v4892 = vpop.f32.mrf.mxu0
      %v4893 = vadd.f32 0.0, %v4892
      %4894 = vmatmul.f32.gmra.mxu0 %v4780
      %v4895 = vpop.f32.mrf.mxu0
      %v4896 = vadd.f32 0.0, %v4895
      %4897 = vmatmul.f32.gmra.mxu0 %v4783
      %v4898 = vpop.f32.mrf.mxu0
      %v4899 = vadd.f32 0.0, %v4898
      %4900 = vmatmul.f32.gmra.mxu0 %v4786
      %v4901 = vpop.f32.mrf.mxu0
      %v4902 = vadd.f32 0.0, %v4901
      %4903 = vmatmul.f32.gmra.mxu0 %v4789
      %v4904 = vpop.f32.mrf.mxu0
      %v4905 = vadd.f32 0.0, %v4904
      %4906 = vmatmul.f32.gmra.mxu0 %v4792
      %v4907 = vpop.f32.mrf.mxu0
      %v4908 = vadd.f32 0.0, %v4907
      %4909 = vmatmul.f32.gmra.mxu0 %v4795
      %v4910 = vpop.f32.mrf.mxu0
      %v4911 = vadd.f32 0.0, %v4910
      %4912 = vmatmul.f32.gmra.mxu0 %v4798
      %v4913 = vpop.f32.mrf.mxu0
      %v4914 = vadd.f32 0.0, %v4913
      %4915 = vmatmul.f32.gmra.mxu0 %v4801
      %v4916 = vpop.f32.mrf.mxu0
      %v4917 = vadd.f32 0.0, %v4916
      %4918 = vmatmul.f32.gmra.mxu0 %v4804
      %v4919 = vpop.f32.mrf.mxu0
      %v4920 = vadd.f32 0.0, %v4919
      %4921 = vmatmul.f32.gmra.mxu0 %v4807
      %v4922 = vpop.f32.mrf.mxu0
      %v4923 = vadd.f32 0.0, %v4922
      %4924 = vmatmul.f32.gmra.mxu0 %v4810
      %v4925 = vpop.f32.mrf.mxu0
      %v4926 = vadd.f32 0.0, %v4925
      %4927 = vmatmul.f32.gmra.mxu0 %v4813
      %v4928 = vpop.f32.mrf.mxu0
      %v4929 = vadd.f32 0.0, %v4928
      %4930 = vmatmul.f32.gmra.mxu0 %v4816
      %v4931 = vpop.f32.mrf.mxu0
      %v4932 = vadd.f32 0.0, %v4931
      %4933 = vmatmul.f32.gmra.mxu0 %v4819
      %v4934 = vpop.f32.mrf.mxu0
      %v4935 = vadd.f32 0.0, %v4934
      %4936 = vmatmul.f32.gmra.mxu0 %v4822
      %v4937 = vpop.f32.mrf.mxu0
      %v4938 = vadd.f32 0.0, %v4937
      %4939 = vmatmul.f32.gmra.mxu0 %v4825
      %v4940 = vpop.f32.mrf.mxu0
      %v4941 = vadd.f32 0.0, %v4940
      %4942 = vmatmul.f32.gmra.mxu0 %v4828
      %v4943 = vpop.f32.mrf.mxu0
      %v4944 = vadd.f32 0.0, %v4943
      %4945 = vmatmul.f32.gmra.mxu0 %v4831
      %v4946 = vpop.f32.mrf.mxu0
      %v4947 = vadd.f32 0.0, %v4946
      %4948 = vmatmul.f32.gmra.mxu0 %v4834
      %v4949 = vpop.f32.mrf.mxu0
      %v4950 = vadd.f32 0.0, %v4949
      %4951 = vmatmul.f32.gmra.mxu0 %v4837
      %v4952 = vpop.f32.mrf.mxu0
      %v4953 = vadd.f32 0.0, %v4952
      %4954 = vmatmul.f32.gmra.mxu0 %v4840
      %v4955 = vpop.f32.mrf.mxu0
      %v4956 = vadd.f32 0.0, %v4955
      %4957 = vmatmul.f32.gmra.mxu0 %v4843
      %v4958 = vpop.f32.mrf.mxu0
      %v4959 = vadd.f32 0.0, %v4958
      %4960 = vmatmul.f32.gmra.mxu0 %v4846
      %v4961 = vpop.f32.mrf.mxu0
      %v4962 = vadd.f32 0.0, %v4961
      %4963 = vmatmul.f32.gmra.mxu0 %v4849
      %v4964 = vpop.f32.mrf.mxu0
      %v4965 = vadd.f32 0.0, %v4964
      %4966 = vmatmul.f32.gmra.mxu0 %v4852
      %v4967 = vpop.f32.mrf.mxu0
      %v4968 = vadd.f32 0.0, %v4967
      %4969 = vmatmul.f32.gmra.mxu0 %v4855
      %v4970 = vpop.f32.mrf.mxu0
      %v4971 = vadd.f32 0.0, %v4970
      %4972 = vmatmul.f32.gmra.mxu0 %v4858
      %v4973 = vpop.f32.mrf.mxu0
      %v4974 = vadd.f32 0.0, %v4973
      %4975 = vmatmul.f32.gmra.mxu0 %v4861
      %v4976 = vpop.f32.mrf.mxu0
      %v4977 = vadd.f32 0.0, %v4976
      %4978 = vmatmul.f32.gmra.mxu0 %v4864
      %v4979 = vpop.f32.mrf.mxu0
      %v4980 = vadd.f32 0.0, %v4979
      %4981 = vdwg.mxu0
      %v4982 = vadd.f32 %v4641, %v4887
      %v4983 = vadd.f32 %v4644, %v4890
      %v4984 = vadd.f32 %v4647, %v4893
      %v4985 = vadd.f32 %v4650, %v4896
      %v4986 = vadd.f32 %v4653, %v4899
      %v4987 = vadd.f32 %v4656, %v4902
      %v4988 = vadd.f32 %v4659, %v4905
      %v4989 = vadd.f32 %v4662, %v4908
      %v4990 = vadd.f32 %v4665, %v4911
      %v4991 = vadd.f32 %v4668, %v4914
      %v4992 = vadd.f32 %v4671, %v4917
      %v4993 = vadd.f32 %v4674, %v4920
      %v4994 = vadd.f32 %v4677, %v4923
      %v4995 = vadd.f32 %v4680, %v4926
      %v4996 = vadd.f32 %v4683, %v4929
      %v4997 = vadd.f32 %v4686, %v4932
      %v4998 = vadd.f32 %v4689, %v4935
      %v4999 = vadd.f32 %v4692, %v4938
      %v5000 = vadd.f32 %v4695, %v4941
      %v5001 = vadd.f32 %v4698, %v4944
      %v5002 = vadd.f32 %v4701, %v4947
      %v5003 = vadd.f32 %v4704, %v4950
      %v5004 = vadd.f32 %v4707, %v4953
      %v5005 = vadd.f32 %v4710, %v4956
      %v5006 = vadd.f32 %v4713, %v4959
      %v5007 = vadd.f32 %v4716, %v4962
      %v5008 = vadd.f32 %v4719, %v4965
      %v5009 = vadd.f32 %v4722, %v4968
      %v5010 = vadd.f32 %v4725, %v4971
      %v5011 = vadd.f32 %v4728, %v4974
      %v5012 = vadd.f32 %v4731, %v4977
      %v5013 = vadd.f32 %v4734, %v4980
      %v5014 = vld [vmem:[%s4212] sm:$0xff]
      %v5015 = vld [vmem:[%s4212 + $0x8] sm:$0xff]
      %v5016 = vld [vmem:[%s4212 + $0x18] sm:$0xff]
      %v5017 = vld [vmem:[%s4212 + $0x20] sm:$0xff]
      %v5018 = vld [vmem:[%s4212 + $0x30] sm:$0xff]
      %v5019 = vld [vmem:[%s4212 + $0x38] sm:$0xff]
      %v5020 = vld [vmem:[%s4212 + $0x48] sm:$0xff]
      %v5021 = vld [vmem:[%s4212 + $0x50] sm:$0xff]
      %v5022 = vld [vmem:[%s4212 + $0x60] sm:$0xff]
      %v5023 = vld [vmem:[%s4212 + $0x68] sm:$0xff]
      %v5024 = vld [vmem:[%s4212 + $0x78] sm:$0xff]
      %v5025 = vld [vmem:[%s4212 + $0x80] sm:$0xff]
      %v5026 = vld [vmem:[%s4212 + $0x90] sm:$0xff]
      %v5027 = vld [vmem:[%s4212 + $0x98] sm:$0xff]
      %v5028 = vld [vmem:[%s4212 + $0xa8] sm:$0xff]
      %v5029 = vld [vmem:[%s4212 + $0xb0] sm:$0xff]
      %v5030 = vld [vmem:[%s4212 + $0xc0] sm:$0xff]
      %v5031 = vld [vmem:[%s4212 + $0xc8] sm:$0xff]
      %v5032 = vld [vmem:[%s4212 + $0xd8] sm:$0xff]
      %v5033 = vld [vmem:[%s4212 + $0xe0] sm:$0xff]
      %v5034 = vld [vmem:[%s4212 + $0xf0] sm:$0xff]
      %v5035 = vld [vmem:[%s4212 + $0xf8] sm:$0xff]
      %v5036 = vld [vmem:[%s4212 + $0x108] sm:$0xff]
      %v5037 = vld [vmem:[%s4212 + $0x110] sm:$0xff]
      %v5038 = vld [vmem:[%s4212 + $0x120] sm:$0xff]
      %v5039 = vld [vmem:[%s4212 + $0x128] sm:$0xff]
      %v5040 = vld [vmem:[%s4212 + $0x138] sm:$0xff]
      %v5041 = vld [vmem:[%s4212 + $0x140] sm:$0xff]
      %v5042 = vld [vmem:[%s4212 + $0x150] sm:$0xff]
      %v5043 = vld [vmem:[%s4212 + $0x158] sm:$0xff]
      %v5044 = vld [vmem:[%s4212 + $0x168] sm:$0xff]
      %v5045 = vld [vmem:[%s4212 + $0x170] sm:$0xff]
      %s5046 = scalar_lea.vmem %s4, 6
      %v5047 = vld [vmem:[%s5046] sm:$0x3]
      %v5049 = vsel %vm339, %v5014, 0
      %v5052 = vsel %vm339, %v5015, 0
      %v5055 = vsel %vm339, %v5016, 0
      %v5058 = vsel %vm339, %v5017, 0
      %v5061 = vsel %vm339, %v5018, 0
      %v5064 = vsel %vm339, %v5019, 0
      %v5067 = vsel %vm339, %v5020, 0
      %v5070 = vsel %vm339, %v5021, 0
      %v5073 = vsel %vm339, %v5022, 0
      %v5076 = vsel %vm339, %v5023, 0
      %v5079 = vsel %vm339, %v5024, 0
      %v5082 = vsel %vm339, %v5025, 0
      %v5085 = vsel %vm339, %v5026, 0
      %v5088 = vsel %vm339, %v5027, 0
      %v5091 = vsel %vm339, %v5028, 0
      %v5094 = vsel %vm339, %v5029, 0
      %v5097 = vsel %vm339, %v5030, 0
      %v5100 = vsel %vm339, %v5031, 0
      %v5103 = vsel %vm339, %v5032, 0
      %v5106 = vsel %vm339, %v5033, 0
      %v5109 = vsel %vm339, %v5034, 0
      %v5112 = vsel %vm339, %v5035, 0
      %v5115 = vsel %vm339, %v5036, 0
      %v5118 = vsel %vm339, %v5037, 0
      %v5121 = vsel %vm339, %v5038, 0
      %v5124 = vsel %vm339, %v5039, 0
      %v5127 = vsel %vm339, %v5040, 0
      %v5130 = vsel %vm339, %v5041, 0
      %v5133 = vsel %vm339, %v5042, 0
      %v5136 = vsel %vm339, %v5043, 0
      %v5139 = vsel %vm339, %v5044, 0
      %v5142 = vsel %vm339, %v5045, 0
      %v5145 = vsel %vm436, %v5047, 0
      %5147 = vmatpush.msra.mxu0 0.0
      %5148 = vmatpush.msra.mxu0 0.0
      %5149 = vmatpush.msra.mxu0 0.0
      %5150 = vmatpush.msra.mxu0 0.0
      %5151 = vmatpush.msra.mxu0 0.0
      %5152 = vmatpush.msra.mxu0 0.0
      %5153 = vmatpush.msra.mxu0 0.0
      %5154 = vmatpush.msra.mxu0 0.0
      %5155 = vmatpush.msra.mxu0 0.0
      %5156 = vmatpush.msra.mxu0 0.0
      %5157 = vmatpush.msra.mxu0 0.0
      %5158 = vmatpush.msra.mxu0 0.0
      %5159 = vmatpush.msra.mxu0 0.0
      %5160 = vmatpush.msra.mxu0 0.0
      %5161 = vmatpush.msra.mxu0 0.0
      %5162 = vmatpush.msra.mxu0 %v5145
      %5163 = vmatmul.f32.gmra.mxu0 %v5049
      %v5164 = vpop.f32.mrf.mxu0
      %v5165 = vadd.f32 0.0, %v5164
      %5166 = vmatmul.f32.gmra.mxu0 %v5052
      %v5167 = vpop.f32.mrf.mxu0
      %v5168 = vadd.f32 0.0, %v5167
      %5169 = vmatmul.f32.gmra.mxu0 %v5055
      %v5170 = vpop.f32.mrf.mxu0
      %v5171 = vadd.f32 0.0, %v5170
      %5172 = vmatmul.f32.gmra.mxu0 %v5058
      %v5173 = vpop.f32.mrf.mxu0
      %v5174 = vadd.f32 0.0, %v5173
      %5175 = vmatmul.f32.gmra.mxu0 %v5061
      %v5176 = vpop.f32.mrf.mxu0
      %v5177 = vadd.f32 0.0, %v5176
      %5178 = vmatmul.f32.gmra.mxu0 %v5064
      %v5179 = vpop.f32.mrf.mxu0
      %v5180 = vadd.f32 0.0, %v5179
      %5181 = vmatmul.f32.gmra.mxu0 %v5067
      %v5182 = vpop.f32.mrf.mxu0
      %v5183 = vadd.f32 0.0, %v5182
      %5184 = vmatmul.f32.gmra.mxu0 %v5070
      %v5185 = vpop.f32.mrf.mxu0
      %v5186 = vadd.f32 0.0, %v5185
      %5187 = vmatmul.f32.gmra.mxu0 %v5073
      %v5188 = vpop.f32.mrf.mxu0
      %v5189 = vadd.f32 0.0, %v5188
      %5190 = vmatmul.f32.gmra.mxu0 %v5076
      %v5191 = vpop.f32.mrf.mxu0
      %v5192 = vadd.f32 0.0, %v5191
      %5193 = vmatmul.f32.gmra.mxu0 %v5079
      %v5194 = vpop.f32.mrf.mxu0
      %v5195 = vadd.f32 0.0, %v5194
      %5196 = vmatmul.f32.gmra.mxu0 %v5082
      %v5197 = vpop.f32.mrf.mxu0
      %v5198 = vadd.f32 0.0, %v5197
      %5199 = vmatmul.f32.gmra.mxu0 %v5085
      %v5200 = vpop.f32.mrf.mxu0
      %v5201 = vadd.f32 0.0, %v5200
      %5202 = vmatmul.f32.gmra.mxu0 %v5088
      %v5203 = vpop.f32.mrf.mxu0
      %v5204 = vadd.f32 0.0, %v5203
      %5205 = vmatmul.f32.gmra.mxu0 %v5091
      %v5206 = vpop.f32.mrf.mxu0
      %v5207 = vadd.f32 0.0, %v5206
      %5208 = vmatmul.f32.gmra.mxu0 %v5094
      %v5209 = vpop.f32.mrf.mxu0
      %v5210 = vadd.f32 0.0, %v5209
      %5211 = vmatmul.f32.gmra.mxu0 %v5097
      %v5212 = vpop.f32.mrf.mxu0
      %v5213 = vadd.f32 0.0, %v5212
      %5214 = vmatmul.f32.gmra.mxu0 %v5100
      %v5215 = vpop.f32.mrf.mxu0
      %v5216 = vadd.f32 0.0, %v5215
      %5217 = vmatmul.f32.gmra.mxu0 %v5103
      %v5218 = vpop.f32.mrf.mxu0
      %v5219 = vadd.f32 0.0, %v5218
      %5220 = vmatmul.f32.gmra.mxu0 %v5106
      %v5221 = vpop.f32.mrf.mxu0
      %v5222 = vadd.f32 0.0, %v5221
      %5223 = vmatmul.f32.gmra.mxu0 %v5109
      %v5224 = vpop.f32.mrf.mxu0
      %v5225 = vadd.f32 0.0, %v5224
      %5226 = vmatmul.f32.gmra.mxu0 %v5112
      %v5227 = vpop.f32.mrf.mxu0
      %v5228 = vadd.f32 0.0, %v5227
      %5229 = vmatmul.f32.gmra.mxu0 %v5115
      %v5230 = vpop.f32.mrf.mxu0
      %v5231 = vadd.f32 0.0, %v5230
      %5232 = vmatmul.f32.gmra.mxu0 %v5118
      %v5233 = vpop.f32.mrf.mxu0
      %v5234 = vadd.f32 0.0, %v5233
      %5235 = vmatmul.f32.gmra.mxu0 %v5121
      %v5236 = vpop.f32.mrf.mxu0
      %v5237 = vadd.f32 0.0, %v5236
      %5238 = vmatmul.f32.gmra.mxu0 %v5124
      %v5239 = vpop.f32.mrf.mxu0
      %v5240 = vadd.f32 0.0, %v5239
      %5241 = vmatmul.f32.gmra.mxu0 %v5127
      %v5242 = vpop.f32.mrf.mxu0
      %v5243 = vadd.f32 0.0, %v5242
      %5244 = vmatmul.f32.gmra.mxu0 %v5130
      %v5245 = vpop.f32.mrf.mxu0
      %v5246 = vadd.f32 0.0, %v5245
      %5247 = vmatmul.f32.gmra.mxu0 %v5133
      %v5248 = vpop.f32.mrf.mxu0
      %v5249 = vadd.f32 0.0, %v5248
      %5250 = vmatmul.f32.gmra.mxu0 %v5136
      %v5251 = vpop.f32.mrf.mxu0
      %v5252 = vadd.f32 0.0, %v5251
      %5253 = vmatmul.f32.gmra.mxu0 %v5139
      %v5254 = vpop.f32.mrf.mxu0
      %v5255 = vadd.f32 0.0, %v5254
      %5256 = vmatmul.f32.gmra.mxu0 %v5142
      %v5257 = vpop.f32.mrf.mxu0
      %v5258 = vadd.f32 0.0, %v5257
      %5259 = vdwg.mxu0
      %v5260 = vadd.f32 %v4982, %v5165
      %v5261 = vadd.f32 %v4983, %v5168
      %v5262 = vadd.f32 %v4984, %v5171
      %v5263 = vadd.f32 %v4985, %v5174
      %v5264 = vadd.f32 %v4986, %v5177
      %v5265 = vadd.f32 %v4987, %v5180
      %v5266 = vadd.f32 %v4988, %v5183
      %v5267 = vadd.f32 %v4989, %v5186
      %v5268 = vadd.f32 %v4990, %v5189
      %v5269 = vadd.f32 %v4991, %v5192
      %v5270 = vadd.f32 %v4992, %v5195
      %v5271 = vadd.f32 %v4993, %v5198
      %v5272 = vadd.f32 %v4994, %v5201
      %v5273 = vadd.f32 %v4995, %v5204
      %v5274 = vadd.f32 %v4996, %v5207
      %v5275 = vadd.f32 %v4997, %v5210
      %v5276 = vadd.f32 %v4998, %v5213
      %v5277 = vadd.f32 %v4999, %v5216
      %v5278 = vadd.f32 %v5000, %v5219
      %v5279 = vadd.f32 %v5001, %v5222
      %v5280 = vadd.f32 %v5002, %v5225
      %v5281 = vadd.f32 %v5003, %v5228
      %v5282 = vadd.f32 %v5004, %v5231
      %v5283 = vadd.f32 %v5005, %v5234
      %v5284 = vadd.f32 %v5006, %v5237
      %v5285 = vadd.f32 %v5007, %v5240
      %v5286 = vadd.f32 %v5008, %v5243
      %v5287 = vadd.f32 %v5009, %v5246
      %v5288 = vadd.f32 %v5010, %v5249
      %v5289 = vadd.f32 %v5011, %v5252
      %v5290 = vadd.f32 %v5012, %v5255
      %v5291 = vadd.f32 %v5013, %v5258
      %v5292 = vld [vmem:[%s4212 + $0x1] sm:$0xff]
      %v5293 = vld [vmem:[%s4212 + $0x9] sm:$0xff]
      %v5294 = vld [vmem:[%s4212 + $0x19] sm:$0xff]
      %v5295 = vld [vmem:[%s4212 + $0x21] sm:$0xff]
      %v5296 = vld [vmem:[%s4212 + $0x31] sm:$0xff]
      %v5297 = vld [vmem:[%s4212 + $0x39] sm:$0xff]
      %v5298 = vld [vmem:[%s4212 + $0x49] sm:$0xff]
      %v5299 = vld [vmem:[%s4212 + $0x51] sm:$0xff]
      %v5300 = vld [vmem:[%s4212 + $0x61] sm:$0xff]
      %v5301 = vld [vmem:[%s4212 + $0x69] sm:$0xff]
      %v5302 = vld [vmem:[%s4212 + $0x79] sm:$0xff]
      %v5303 = vld [vmem:[%s4212 + $0x81] sm:$0xff]
      %v5304 = vld [vmem:[%s4212 + $0x91] sm:$0xff]
      %v5305 = vld [vmem:[%s4212 + $0x99] sm:$0xff]
      %v5306 = vld [vmem:[%s4212 + $0xa9] sm:$0xff]
      %v5307 = vld [vmem:[%s4212 + $0xb1] sm:$0xff]
      %v5308 = vld [vmem:[%s4212 + $0xc1] sm:$0xff]
      %v5309 = vld [vmem:[%s4212 + $0xc9] sm:$0xff]
      %v5310 = vld [vmem:[%s4212 + $0xd9] sm:$0xff]
      %v5311 = vld [vmem:[%s4212 + $0xe1] sm:$0xff]
      %v5312 = vld [vmem:[%s4212 + $0xf1] sm:$0xff]
      %v5313 = vld [vmem:[%s4212 + $0xf9] sm:$0xff]
      %v5314 = vld [vmem:[%s4212 + $0x109] sm:$0xff]
      %v5315 = vld [vmem:[%s4212 + $0x111] sm:$0xff]
      %v5316 = vld [vmem:[%s4212 + $0x121] sm:$0xff]
      %v5317 = vld [vmem:[%s4212 + $0x129] sm:$0xff]
      %v5318 = vld [vmem:[%s4212 + $0x139] sm:$0xff]
      %v5319 = vld [vmem:[%s4212 + $0x141] sm:$0xff]
      %v5320 = vld [vmem:[%s4212 + $0x151] sm:$0xff]
      %v5321 = vld [vmem:[%s4212 + $0x159] sm:$0xff]
      %v5322 = vld [vmem:[%s4212 + $0x169] sm:$0xff]
      %v5323 = vld [vmem:[%s4212 + $0x171] sm:$0xff]
      %s5324 = scalar_lea.vmem %s4, 8
      %v5325 = vld [vmem:[%s5324] sm:$0x3]
      %v5327 = vsel %vm339, %v5292, 0
      %v5330 = vsel %vm339, %v5293, 0
      %v5333 = vsel %vm339, %v5294, 0
      %v5336 = vsel %vm339, %v5295, 0
      %v5339 = vsel %vm339, %v5296, 0
      %v5342 = vsel %vm339, %v5297, 0
      %v5345 = vsel %vm339, %v5298, 0
      %v5348 = vsel %vm339, %v5299, 0
      %v5351 = vsel %vm339, %v5300, 0
      %v5354 = vsel %vm339, %v5301, 0
      %v5357 = vsel %vm339, %v5302, 0
      %v5360 = vsel %vm339, %v5303, 0
      %v5363 = vsel %vm339, %v5304, 0
      %v5366 = vsel %vm339, %v5305, 0
      %v5369 = vsel %vm339, %v5306, 0
      %v5372 = vsel %vm339, %v5307, 0
      %v5375 = vsel %vm339, %v5308, 0
      %v5378 = vsel %vm339, %v5309, 0
      %v5381 = vsel %vm339, %v5310, 0
      %v5384 = vsel %vm339, %v5311, 0
      %v5387 = vsel %vm339, %v5312, 0
      %v5390 = vsel %vm339, %v5313, 0
      %v5393 = vsel %vm339, %v5314, 0
      %v5396 = vsel %vm339, %v5315, 0
      %v5399 = vsel %vm339, %v5316, 0
      %v5402 = vsel %vm339, %v5317, 0
      %v5405 = vsel %vm339, %v5318, 0
      %v5408 = vsel %vm339, %v5319, 0
      %v5411 = vsel %vm339, %v5320, 0
      %v5414 = vsel %vm339, %v5321, 0
      %v5417 = vsel %vm339, %v5322, 0
      %v5420 = vsel %vm339, %v5323, 0
      %v5423 = vsel %vm436, %v5325, 0
      %5425 = vmatpush.msra.mxu0 0.0
      %5426 = vmatpush.msra.mxu0 0.0
      %5427 = vmatpush.msra.mxu0 0.0
      %5428 = vmatpush.msra.mxu0 0.0
      %5429 = vmatpush.msra.mxu0 0.0
      %5430 = vmatpush.msra.mxu0 0.0
      %5431 = vmatpush.msra.mxu0 0.0
      %5432 = vmatpush.msra.mxu0 0.0
      %5433 = vmatpush.msra.mxu0 0.0
      %5434 = vmatpush.msra.mxu0 0.0
      %5435 = vmatpush.msra.mxu0 0.0
      %5436 = vmatpush.msra.mxu0 0.0
      %5437 = vmatpush.msra.mxu0 0.0
      %5438 = vmatpush.msra.mxu0 0.0
      %5439 = vmatpush.msra.mxu0 0.0
      %5440 = vmatpush.msra.mxu0 %v5423
      %5441 = vmatmul.f32.gmra.mxu0 %v5327
      %v5442 = vpop.f32.mrf.mxu0
      %v5443 = vadd.f32 0.0, %v5442
      %5444 = vmatmul.f32.gmra.mxu0 %v5330
      %v5445 = vpop.f32.mrf.mxu0
      %v5446 = vadd.f32 0.0, %v5445
      %5447 = vmatmul.f32.gmra.mxu0 %v5333
      %v5448 = vpop.f32.mrf.mxu0
      %v5449 = vadd.f32 0.0, %v5448
      %5450 = vmatmul.f32.gmra.mxu0 %v5336
      %v5451 = vpop.f32.mrf.mxu0
      %v5452 = vadd.f32 0.0, %v5451
      %5453 = vmatmul.f32.gmra.mxu0 %v5339
      %v5454 = vpop.f32.mrf.mxu0
      %v5455 = vadd.f32 0.0, %v5454
      %5456 = vmatmul.f32.gmra.mxu0 %v5342
      %v5457 = vpop.f32.mrf.mxu0
      %v5458 = vadd.f32 0.0, %v5457
      %5459 = vmatmul.f32.gmra.mxu0 %v5345
      %v5460 = vpop.f32.mrf.mxu0
      %v5461 = vadd.f32 0.0, %v5460
      %5462 = vmatmul.f32.gmra.mxu0 %v5348
      %v5463 = vpop.f32.mrf.mxu0
      %v5464 = vadd.f32 0.0, %v5463
      %5465 = vmatmul.f32.gmra.mxu0 %v5351
      %v5466 = vpop.f32.mrf.mxu0
      %v5467 = vadd.f32 0.0, %v5466
      %5468 = vmatmul.f32.gmra.mxu0 %v5354
      %v5469 = vpop.f32.mrf.mxu0
      %v5470 = vadd.f32 0.0, %v5469
      %5471 = vmatmul.f32.gmra.mxu0 %v5357
      %v5472 = vpop.f32.mrf.mxu0
      %v5473 = vadd.f32 0.0, %v5472
      %5474 = vmatmul.f32.gmra.mxu0 %v5360
      %v5475 = vpop.f32.mrf.mxu0
      %v5476 = vadd.f32 0.0, %v5475
      %5477 = vmatmul.f32.gmra.mxu0 %v5363
      %v5478 = vpop.f32.mrf.mxu0
      %v5479 = vadd.f32 0.0, %v5478
      %5480 = vmatmul.f32.gmra.mxu0 %v5366
      %v5481 = vpop.f32.mrf.mxu0
      %v5482 = vadd.f32 0.0, %v5481
      %5483 = vmatmul.f32.gmra.mxu0 %v5369
      %v5484 = vpop.f32.mrf.mxu0
      %v5485 = vadd.f32 0.0, %v5484
      %5486 = vmatmul.f32.gmra.mxu0 %v5372
      %v5487 = vpop.f32.mrf.mxu0
      %v5488 = vadd.f32 0.0, %v5487
      %5489 = vmatmul.f32.gmra.mxu0 %v5375
      %v5490 = vpop.f32.mrf.mxu0
      %v5491 = vadd.f32 0.0, %v5490
      %5492 = vmatmul.f32.gmra.mxu0 %v5378
      %v5493 = vpop.f32.mrf.mxu0
      %v5494 = vadd.f32 0.0, %v5493
      %5495 = vmatmul.f32.gmra.mxu0 %v5381
      %v5496 = vpop.f32.mrf.mxu0
      %v5497 = vadd.f32 0.0, %v5496
      %5498 = vmatmul.f32.gmra.mxu0 %v5384
      %v5499 = vpop.f32.mrf.mxu0
      %v5500 = vadd.f32 0.0, %v5499
      %5501 = vmatmul.f32.gmra.mxu0 %v5387
      %v5502 = vpop.f32.mrf.mxu0
      %v5503 = vadd.f32 0.0, %v5502
      %5504 = vmatmul.f32.gmra.mxu0 %v5390
      %v5505 = vpop.f32.mrf.mxu0
      %v5506 = vadd.f32 0.0, %v5505
      %5507 = vmatmul.f32.gmra.mxu0 %v5393
      %v5508 = vpop.f32.mrf.mxu0
      %v5509 = vadd.f32 0.0, %v5508
      %5510 = vmatmul.f32.gmra.mxu0 %v5396
      %v5511 = vpop.f32.mrf.mxu0
      %v5512 = vadd.f32 0.0, %v5511
      %5513 = vmatmul.f32.gmra.mxu0 %v5399
      %v5514 = vpop.f32.mrf.mxu0
      %v5515 = vadd.f32 0.0, %v5514
      %5516 = vmatmul.f32.gmra.mxu0 %v5402
      %v5517 = vpop.f32.mrf.mxu0
      %v5518 = vadd.f32 0.0, %v5517
      %5519 = vmatmul.f32.gmra.mxu0 %v5405
      %v5520 = vpop.f32.mrf.mxu0
      %v5521 = vadd.f32 0.0, %v5520
      %5522 = vmatmul.f32.gmra.mxu0 %v5408
      %v5523 = vpop.f32.mrf.mxu0
      %v5524 = vadd.f32 0.0, %v5523
      %5525 = vmatmul.f32.gmra.mxu0 %v5411
      %v5526 = vpop.f32.mrf.mxu0
      %v5527 = vadd.f32 0.0, %v5526
      %5528 = vmatmul.f32.gmra.mxu0 %v5414
      %v5529 = vpop.f32.mrf.mxu0
      %v5530 = vadd.f32 0.0, %v5529
      %5531 = vmatmul.f32.gmra.mxu0 %v5417
      %v5532 = vpop.f32.mrf.mxu0
      %v5533 = vadd.f32 0.0, %v5532
      %5534 = vmatmul.f32.gmra.mxu0 %v5420
      %v5535 = vpop.f32.mrf.mxu0
      %v5536 = vadd.f32 0.0, %v5535
      %5537 = vdwg.mxu0
      %v5538 = vadd.f32 %v5260, %v5443
      %v5539 = vadd.f32 %v5261, %v5446
      %v5540 = vadd.f32 %v5262, %v5449
      %v5541 = vadd.f32 %v5263, %v5452
      %v5542 = vadd.f32 %v5264, %v5455
      %v5543 = vadd.f32 %v5265, %v5458
      %v5544 = vadd.f32 %v5266, %v5461
      %v5545 = vadd.f32 %v5267, %v5464
      %v5546 = vadd.f32 %v5268, %v5467
      %v5547 = vadd.f32 %v5269, %v5470
      %v5548 = vadd.f32 %v5270, %v5473
      %v5549 = vadd.f32 %v5271, %v5476
      %v5550 = vadd.f32 %v5272, %v5479
      %v5551 = vadd.f32 %v5273, %v5482
      %v5552 = vadd.f32 %v5274, %v5485
      %v5553 = vadd.f32 %v5275, %v5488
      %v5554 = vadd.f32 %v5276, %v5491
      %v5555 = vadd.f32 %v5277, %v5494
      %v5556 = vadd.f32 %v5278, %v5497
      %v5557 = vadd.f32 %v5279, %v5500
      %v5558 = vadd.f32 %v5280, %v5503
      %v5559 = vadd.f32 %v5281, %v5506
      %v5560 = vadd.f32 %v5282, %v5509
      %v5561 = vadd.f32 %v5283, %v5512
      %v5562 = vadd.f32 %v5284, %v5515
      %v5563 = vadd.f32 %v5285, %v5518
      %v5564 = vadd.f32 %v5286, %v5521
      %v5565 = vadd.f32 %v5287, %v5524
      %v5566 = vadd.f32 %v5288, %v5527
      %v5567 = vadd.f32 %v5289, %v5530
      %v5568 = vadd.f32 %v5290, %v5533
      %v5569 = vadd.f32 %v5291, %v5536
      %v5570 = vld [vmem:[%s4212 + $0x2] sm:$0xff]
      %v5571 = vld [vmem:[%s4212 + $0xa] sm:$0xff]
      %v5572 = vld [vmem:[%s4212 + $0x1a] sm:$0xff]
      %v5573 = vld [vmem:[%s4212 + $0x22] sm:$0xff]
      %v5574 = vld [vmem:[%s4212 + $0x32] sm:$0xff]
      %v5575 = vld [vmem:[%s4212 + $0x3a] sm:$0xff]
      %v5576 = vld [vmem:[%s4212 + $0x4a] sm:$0xff]
      %v5577 = vld [vmem:[%s4212 + $0x52] sm:$0xff]
      %v5578 = vld [vmem:[%s4212 + $0x62] sm:$0xff]
      %v5579 = vld [vmem:[%s4212 + $0x6a] sm:$0xff]
      %v5580 = vld [vmem:[%s4212 + $0x7a] sm:$0xff]
      %v5581 = vld [vmem:[%s4212 + $0x82] sm:$0xff]
      %v5582 = vld [vmem:[%s4212 + $0x92] sm:$0xff]
      %v5583 = vld [vmem:[%s4212 + $0x9a] sm:$0xff]
      %v5584 = vld [vmem:[%s4212 + $0xaa] sm:$0xff]
      %v5585 = vld [vmem:[%s4212 + $0xb2] sm:$0xff]
      %v5586 = vld [vmem:[%s4212 + $0xc2] sm:$0xff]
      %v5587 = vld [vmem:[%s4212 + $0xca] sm:$0xff]
      %v5588 = vld [vmem:[%s4212 + $0xda] sm:$0xff]
      %v5589 = vld [vmem:[%s4212 + $0xe2] sm:$0xff]
      %v5590 = vld [vmem:[%s4212 + $0xf2] sm:$0xff]
      %v5591 = vld [vmem:[%s4212 + $0xfa] sm:$0xff]
      %v5592 = vld [vmem:[%s4212 + $0x10a] sm:$0xff]
      %v5593 = vld [vmem:[%s4212 + $0x112] sm:$0xff]
      %v5594 = vld [vmem:[%s4212 + $0x122] sm:$0xff]
      %v5595 = vld [vmem:[%s4212 + $0x12a] sm:$0xff]
      %v5596 = vld [vmem:[%s4212 + $0x13a] sm:$0xff]
      %v5597 = vld [vmem:[%s4212 + $0x142] sm:$0xff]
      %v5598 = vld [vmem:[%s4212 + $0x152] sm:$0xff]
      %v5599 = vld [vmem:[%s4212 + $0x15a] sm:$0xff]
      %v5600 = vld [vmem:[%s4212 + $0x16a] sm:$0xff]
      %v5601 = vld [vmem:[%s4212 + $0x172] sm:$0xff]
      %s5602 = scalar_lea.vmem %s4, 10
      %v5603 = vld [vmem:[%s5602] sm:$0x3]
      %v5605 = vsel %vm339, %v5570, 0
      %v5608 = vsel %vm339, %v5571, 0
      %v5611 = vsel %vm339, %v5572, 0
      %v5614 = vsel %vm339, %v5573, 0
      %v5617 = vsel %vm339, %v5574, 0
      %v5620 = vsel %vm339, %v5575, 0
      %v5623 = vsel %vm339, %v5576, 0
      %v5626 = vsel %vm339, %v5577, 0
      %v5629 = vsel %vm339, %v5578, 0
      %v5632 = vsel %vm339, %v5579, 0
      %v5635 = vsel %vm339, %v5580, 0
      %v5638 = vsel %vm339, %v5581, 0
      %v5641 = vsel %vm339, %v5582, 0
      %v5644 = vsel %vm339, %v5583, 0
      %v5647 = vsel %vm339, %v5584, 0
      %v5650 = vsel %vm339, %v5585, 0
      %v5653 = vsel %vm339, %v5586, 0
      %v5656 = vsel %vm339, %v5587, 0
      %v5659 = vsel %vm339, %v5588, 0
      %v5662 = vsel %vm339, %v5589, 0
      %v5665 = vsel %vm339, %v5590, 0
      %v5668 = vsel %vm339, %v5591, 0
      %v5671 = vsel %vm339, %v5592, 0
      %v5674 = vsel %vm339, %v5593, 0
      %v5677 = vsel %vm339, %v5594, 0
      %v5680 = vsel %vm339, %v5595, 0
      %v5683 = vsel %vm339, %v5596, 0
      %v5686 = vsel %vm339, %v5597, 0
      %v5689 = vsel %vm339, %v5598, 0
      %v5692 = vsel %vm339, %v5599, 0
      %v5695 = vsel %vm339, %v5600, 0
      %v5698 = vsel %vm339, %v5601, 0
      %v5701 = vsel %vm436, %v5603, 0
      %5703 = vmatpush.msra.mxu0 0.0
      %5704 = vmatpush.msra.mxu0 0.0
      %5705 = vmatpush.msra.mxu0 0.0
      %5706 = vmatpush.msra.mxu0 0.0
      %5707 = vmatpush.msra.mxu0 0.0
      %5708 = vmatpush.msra.mxu0 0.0
      %5709 = vmatpush.msra.mxu0 0.0
      %5710 = vmatpush.msra.mxu0 0.0
      %5711 = vmatpush.msra.mxu0 0.0
      %5712 = vmatpush.msra.mxu0 0.0
      %5713 = vmatpush.msra.mxu0 0.0
      %5714 = vmatpush.msra.mxu0 0.0
      %5715 = vmatpush.msra.mxu0 0.0
      %5716 = vmatpush.msra.mxu0 0.0
      %5717 = vmatpush.msra.mxu0 0.0
      %5718 = vmatpush.msra.mxu0 %v5701
      %5719 = vmatmul.f32.gmra.mxu0 %v5605
      %v5720 = vpop.f32.mrf.mxu0
      %v5721 = vadd.f32 0.0, %v5720
      %5722 = vmatmul.f32.gmra.mxu0 %v5608
      %v5723 = vpop.f32.mrf.mxu0
      %v5724 = vadd.f32 0.0, %v5723
      %5725 = vmatmul.f32.gmra.mxu0 %v5611
      %v5726 = vpop.f32.mrf.mxu0
      %v5727 = vadd.f32 0.0, %v5726
      %5728 = vmatmul.f32.gmra.mxu0 %v5614
      %v5729 = vpop.f32.mrf.mxu0
      %v5730 = vadd.f32 0.0, %v5729
      %5731 = vmatmul.f32.gmra.mxu0 %v5617
      %v5732 = vpop.f32.mrf.mxu0
      %v5733 = vadd.f32 0.0, %v5732
      %5734 = vmatmul.f32.gmra.mxu0 %v5620
      %v5735 = vpop.f32.mrf.mxu0
      %v5736 = vadd.f32 0.0, %v5735
      %5737 = vmatmul.f32.gmra.mxu0 %v5623
      %v5738 = vpop.f32.mrf.mxu0
      %v5739 = vadd.f32 0.0, %v5738
      %5740 = vmatmul.f32.gmra.mxu0 %v5626
      %v5741 = vpop.f32.mrf.mxu0
      %v5742 = vadd.f32 0.0, %v5741
      %5743 = vmatmul.f32.gmra.mxu0 %v5629
      %v5744 = vpop.f32.mrf.mxu0
      %v5745 = vadd.f32 0.0, %v5744
      %5746 = vmatmul.f32.gmra.mxu0 %v5632
      %v5747 = vpop.f32.mrf.mxu0
      %v5748 = vadd.f32 0.0, %v5747
      %5749 = vmatmul.f32.gmra.mxu0 %v5635
      %v5750 = vpop.f32.mrf.mxu0
      %v5751 = vadd.f32 0.0, %v5750
      %5752 = vmatmul.f32.gmra.mxu0 %v5638
      %v5753 = vpop.f32.mrf.mxu0
      %v5754 = vadd.f32 0.0, %v5753
      %5755 = vmatmul.f32.gmra.mxu0 %v5641
      %v5756 = vpop.f32.mrf.mxu0
      %v5757 = vadd.f32 0.0, %v5756
      %5758 = vmatmul.f32.gmra.mxu0 %v5644
      %v5759 = vpop.f32.mrf.mxu0
      %v5760 = vadd.f32 0.0, %v5759
      %5761 = vmatmul.f32.gmra.mxu0 %v5647
      %v5762 = vpop.f32.mrf.mxu0
      %v5763 = vadd.f32 0.0, %v5762
      %5764 = vmatmul.f32.gmra.mxu0 %v5650
      %v5765 = vpop.f32.mrf.mxu0
      %v5766 = vadd.f32 0.0, %v5765
      %5767 = vmatmul.f32.gmra.mxu0 %v5653
      %v5768 = vpop.f32.mrf.mxu0
      %v5769 = vadd.f32 0.0, %v5768
      %5770 = vmatmul.f32.gmra.mxu0 %v5656
      %v5771 = vpop.f32.mrf.mxu0
      %v5772 = vadd.f32 0.0, %v5771
      %5773 = vmatmul.f32.gmra.mxu0 %v5659
      %v5774 = vpop.f32.mrf.mxu0
      %v5775 = vadd.f32 0.0, %v5774
      %5776 = vmatmul.f32.gmra.mxu0 %v5662
      %v5777 = vpop.f32.mrf.mxu0
      %v5778 = vadd.f32 0.0, %v5777
      %5779 = vmatmul.f32.gmra.mxu0 %v5665
      %v5780 = vpop.f32.mrf.mxu0
      %v5781 = vadd.f32 0.0, %v5780
      %5782 = vmatmul.f32.gmra.mxu0 %v5668
      %v5783 = vpop.f32.mrf.mxu0
      %v5784 = vadd.f32 0.0, %v5783
      %5785 = vmatmul.f32.gmra.mxu0 %v5671
      %v5786 = vpop.f32.mrf.mxu0
      %v5787 = vadd.f32 0.0, %v5786
      %5788 = vmatmul.f32.gmra.mxu0 %v5674
      %v5789 = vpop.f32.mrf.mxu0
      %v5790 = vadd.f32 0.0, %v5789
      %5791 = vmatmul.f32.gmra.mxu0 %v5677
      %v5792 = vpop.f32.mrf.mxu0
      %v5793 = vadd.f32 0.0, %v5792
      %5794 = vmatmul.f32.gmra.mxu0 %v5680
      %v5795 = vpop.f32.mrf.mxu0
      %v5796 = vadd.f32 0.0, %v5795
      %5797 = vmatmul.f32.gmra.mxu0 %v5683
      %v5798 = vpop.f32.mrf.mxu0
      %v5799 = vadd.f32 0.0, %v5798
      %5800 = vmatmul.f32.gmra.mxu0 %v5686
      %v5801 = vpop.f32.mrf.mxu0
      %v5802 = vadd.f32 0.0, %v5801
      %5803 = vmatmul.f32.gmra.mxu0 %v5689
      %v5804 = vpop.f32.mrf.mxu0
      %v5805 = vadd.f32 0.0, %v5804
      %5806 = vmatmul.f32.gmra.mxu0 %v5692
      %v5807 = vpop.f32.mrf.mxu0
      %v5808 = vadd.f32 0.0, %v5807
      %5809 = vmatmul.f32.gmra.mxu0 %v5695
      %v5810 = vpop.f32.mrf.mxu0
      %v5811 = vadd.f32 0.0, %v5810
      %5812 = vmatmul.f32.gmra.mxu0 %v5698
      %v5813 = vpop.f32.mrf.mxu0
      %v5814 = vadd.f32 0.0, %v5813
      %5815 = vdwg.mxu0
      %v5816 = vadd.f32 %v5538, %v5721
      %v5817 = vadd.f32 %v5539, %v5724
      %v5818 = vadd.f32 %v5540, %v5727
      %v5819 = vadd.f32 %v5541, %v5730
      %v5820 = vadd.f32 %v5542, %v5733
      %v5821 = vadd.f32 %v5543, %v5736
      %v5822 = vadd.f32 %v5544, %v5739
      %v5823 = vadd.f32 %v5545, %v5742
      %v5824 = vadd.f32 %v5546, %v5745
      %v5825 = vadd.f32 %v5547, %v5748
      %v5826 = vadd.f32 %v5548, %v5751
      %v5827 = vadd.f32 %v5549, %v5754
      %v5828 = vadd.f32 %v5550, %v5757
      %v5829 = vadd.f32 %v5551, %v5760
      %v5830 = vadd.f32 %v5552, %v5763
      %v5831 = vadd.f32 %v5553, %v5766
      %v5832 = vadd.f32 %v5554, %v5769
      %v5833 = vadd.f32 %v5555, %v5772
      %v5834 = vadd.f32 %v5556, %v5775
      %v5835 = vadd.f32 %v5557, %v5778
      %v5836 = vadd.f32 %v5558, %v5781
      %v5837 = vadd.f32 %v5559, %v5784
      %v5838 = vadd.f32 %v5560, %v5787
      %v5839 = vadd.f32 %v5561, %v5790
      %v5840 = vadd.f32 %v5562, %v5793
      %v5841 = vadd.f32 %v5563, %v5796
      %v5842 = vadd.f32 %v5564, %v5799
      %v5843 = vadd.f32 %v5565, %v5802
      %v5844 = vadd.f32 %v5566, %v5805
      %v5845 = vadd.f32 %v5567, %v5808
      %v5846 = vadd.f32 %v5568, %v5811
      %v5847 = vadd.f32 %v5569, %v5814
      %s5848 = scalar_lea.vmem [#allocation2], 48
      %v5849 = vld [vmem:[%s5848] sm:$0xff]
      %v5850 = vld [vmem:[%s5848 + $0x8] sm:$0xff]
      %v5851 = vld [vmem:[%s5848 + $0x18] sm:$0xff]
      %v5852 = vld [vmem:[%s5848 + $0x20] sm:$0xff]
      %v5853 = vld [vmem:[%s5848 + $0x30] sm:$0xff]
      %v5854 = vld [vmem:[%s5848 + $0x38] sm:$0xff]
      %v5855 = vld [vmem:[%s5848 + $0x48] sm:$0xff]
      %v5856 = vld [vmem:[%s5848 + $0x50] sm:$0xff]
      %v5857 = vld [vmem:[%s5848 + $0x60] sm:$0xff]
      %v5858 = vld [vmem:[%s5848 + $0x68] sm:$0xff]
      %v5859 = vld [vmem:[%s5848 + $0x78] sm:$0xff]
      %v5860 = vld [vmem:[%s5848 + $0x80] sm:$0xff]
      %v5861 = vld [vmem:[%s5848 + $0x90] sm:$0xff]
      %v5862 = vld [vmem:[%s5848 + $0x98] sm:$0xff]
      %v5863 = vld [vmem:[%s5848 + $0xa8] sm:$0xff]
      %v5864 = vld [vmem:[%s5848 + $0xb0] sm:$0xff]
      %v5865 = vld [vmem:[%s5848 + $0xc0] sm:$0xff]
      %v5866 = vld [vmem:[%s5848 + $0xc8] sm:$0xff]
      %v5867 = vld [vmem:[%s5848 + $0xd8] sm:$0xff]
      %v5868 = vld [vmem:[%s5848 + $0xe0] sm:$0xff]
      %v5869 = vld [vmem:[%s5848 + $0xf0] sm:$0xff]
      %v5870 = vld [vmem:[%s5848 + $0xf8] sm:$0xff]
      %v5871 = vld [vmem:[%s5848 + $0x108] sm:$0xff]
      %v5872 = vld [vmem:[%s5848 + $0x110] sm:$0xff]
      %v5873 = vld [vmem:[%s5848 + $0x120] sm:$0xff]
      %v5874 = vld [vmem:[%s5848 + $0x128] sm:$0xff]
      %v5875 = vld [vmem:[%s5848 + $0x138] sm:$0xff]
      %v5876 = vld [vmem:[%s5848 + $0x140] sm:$0xff]
      %v5877 = vld [vmem:[%s5848 + $0x150] sm:$0xff]
      %v5878 = vld [vmem:[%s5848 + $0x158] sm:$0xff]
      %v5879 = vld [vmem:[%s5848 + $0x168] sm:$0xff]
      %v5880 = vld [vmem:[%s5848 + $0x170] sm:$0xff]
      %s5881 = scalar_lea.vmem %s4, 12
      %v5882 = vld [vmem:[%s5881] sm:$0x3]
      %v5884 = vsel %vm339, %v5849, 0
      %v5887 = vsel %vm339, %v5850, 0
      %v5890 = vsel %vm339, %v5851, 0
      %v5893 = vsel %vm339, %v5852, 0
      %v5896 = vsel %vm339, %v5853, 0
      %v5899 = vsel %vm339, %v5854, 0
      %v5902 = vsel %vm339, %v5855, 0
      %v5905 = vsel %vm339, %v5856, 0
      %v5908 = vsel %vm339, %v5857, 0
      %v5911 = vsel %vm339, %v5858, 0
      %v5914 = vsel %vm339, %v5859, 0
      %v5917 = vsel %vm339, %v5860, 0
      %v5920 = vsel %vm339, %v5861, 0
      %v5923 = vsel %vm339, %v5862, 0
      %v5926 = vsel %vm339, %v5863, 0
      %v5929 = vsel %vm339, %v5864, 0
      %v5932 = vsel %vm339, %v5865, 0
      %v5935 = vsel %vm339, %v5866, 0
      %v5938 = vsel %vm339, %v5867, 0
      %v5941 = vsel %vm339, %v5868, 0
      %v5944 = vsel %vm339, %v5869, 0
      %v5947 = vsel %vm339, %v5870, 0
      %v5950 = vsel %vm339, %v5871, 0
      %v5953 = vsel %vm339, %v5872, 0
      %v5956 = vsel %vm339, %v5873, 0
      %v5959 = vsel %vm339, %v5874, 0
      %v5962 = vsel %vm339, %v5875, 0
      %v5965 = vsel %vm339, %v5876, 0
      %v5968 = vsel %vm339, %v5877, 0
      %v5971 = vsel %vm339, %v5878, 0
      %v5974 = vsel %vm339, %v5879, 0
      %v5977 = vsel %vm339, %v5880, 0
      %v5980 = vsel %vm436, %v5882, 0
      %5982 = vmatpush.msra.mxu0 0.0
      %5983 = vmatpush.msra.mxu0 0.0
      %5984 = vmatpush.msra.mxu0 0.0
      %5985 = vmatpush.msra.mxu0 0.0
      %5986 = vmatpush.msra.mxu0 0.0
      %5987 = vmatpush.msra.mxu0 0.0
      %5988 = vmatpush.msra.mxu0 0.0
      %5989 = vmatpush.msra.mxu0 0.0
      %5990 = vmatpush.msra.mxu0 0.0
      %5991 = vmatpush.msra.mxu0 0.0
      %5992 = vmatpush.msra.mxu0 0.0
      %5993 = vmatpush.msra.mxu0 0.0
      %5994 = vmatpush.msra.mxu0 0.0
      %5995 = vmatpush.msra.mxu0 0.0
      %5996 = vmatpush.msra.mxu0 0.0
      %5997 = vmatpush.msra.mxu0 %v5980
      %5998 = vmatmul.f32.gmra.mxu0 %v5884
      %v5999 = vpop.f32.mrf.mxu0
      %v6000 = vadd.f32 0.0, %v5999
      %6001 = vmatmul.f32.gmra.mxu0 %v5887
      %v6002 = vpop.f32.mrf.mxu0
      %v6003 = vadd.f32 0.0, %v6002
      %6004 = vmatmul.f32.gmra.mxu0 %v5890
      %v6005 = vpop.f32.mrf.mxu0
      %v6006 = vadd.f32 0.0, %v6005
      %6007 = vmatmul.f32.gmra.mxu0 %v5893
      %v6008 = vpop.f32.mrf.mxu0
      %v6009 = vadd.f32 0.0, %v6008
      %6010 = vmatmul.f32.gmra.mxu0 %v5896
      %v6011 = vpop.f32.mrf.mxu0
      %v6012 = vadd.f32 0.0, %v6011
      %6013 = vmatmul.f32.gmra.mxu0 %v5899
      %v6014 = vpop.f32.mrf.mxu0
      %v6015 = vadd.f32 0.0, %v6014
      %6016 = vmatmul.f32.gmra.mxu0 %v5902
      %v6017 = vpop.f32.mrf.mxu0
      %v6018 = vadd.f32 0.0, %v6017
      %6019 = vmatmul.f32.gmra.mxu0 %v5905
      %v6020 = vpop.f32.mrf.mxu0
      %v6021 = vadd.f32 0.0, %v6020
      %6022 = vmatmul.f32.gmra.mxu0 %v5908
      %v6023 = vpop.f32.mrf.mxu0
      %v6024 = vadd.f32 0.0, %v6023
      %6025 = vmatmul.f32.gmra.mxu0 %v5911
      %v6026 = vpop.f32.mrf.mxu0
      %v6027 = vadd.f32 0.0, %v6026
      %6028 = vmatmul.f32.gmra.mxu0 %v5914
      %v6029 = vpop.f32.mrf.mxu0
      %v6030 = vadd.f32 0.0, %v6029
      %6031 = vmatmul.f32.gmra.mxu0 %v5917
      %v6032 = vpop.f32.mrf.mxu0
      %v6033 = vadd.f32 0.0, %v6032
      %6034 = vmatmul.f32.gmra.mxu0 %v5920
      %v6035 = vpop.f32.mrf.mxu0
      %v6036 = vadd.f32 0.0, %v6035
      %6037 = vmatmul.f32.gmra.mxu0 %v5923
      %v6038 = vpop.f32.mrf.mxu0
      %v6039 = vadd.f32 0.0, %v6038
      %6040 = vmatmul.f32.gmra.mxu0 %v5926
      %v6041 = vpop.f32.mrf.mxu0
      %v6042 = vadd.f32 0.0, %v6041
      %6043 = vmatmul.f32.gmra.mxu0 %v5929
      %v6044 = vpop.f32.mrf.mxu0
      %v6045 = vadd.f32 0.0, %v6044
      %6046 = vmatmul.f32.gmra.mxu0 %v5932
      %v6047 = vpop.f32.mrf.mxu0
      %v6048 = vadd.f32 0.0, %v6047
      %6049 = vmatmul.f32.gmra.mxu0 %v5935
      %v6050 = vpop.f32.mrf.mxu0
      %v6051 = vadd.f32 0.0, %v6050
      %6052 = vmatmul.f32.gmra.mxu0 %v5938
      %v6053 = vpop.f32.mrf.mxu0
      %v6054 = vadd.f32 0.0, %v6053
      %6055 = vmatmul.f32.gmra.mxu0 %v5941
      %v6056 = vpop.f32.mrf.mxu0
      %v6057 = vadd.f32 0.0, %v6056
      %6058 = vmatmul.f32.gmra.mxu0 %v5944
      %v6059 = vpop.f32.mrf.mxu0
      %v6060 = vadd.f32 0.0, %v6059
      %6061 = vmatmul.f32.gmra.mxu0 %v5947
      %v6062 = vpop.f32.mrf.mxu0
      %v6063 = vadd.f32 0.0, %v6062
      %6064 = vmatmul.f32.gmra.mxu0 %v5950
      %v6065 = vpop.f32.mrf.mxu0
      %v6066 = vadd.f32 0.0, %v6065
      %6067 = vmatmul.f32.gmra.mxu0 %v5953
      %v6068 = vpop.f32.mrf.mxu0
      %v6069 = vadd.f32 0.0, %v6068
      %6070 = vmatmul.f32.gmra.mxu0 %v5956
      %v6071 = vpop.f32.mrf.mxu0
      %v6072 = vadd.f32 0.0, %v6071
      %6073 = vmatmul.f32.gmra.mxu0 %v5959
      %v6074 = vpop.f32.mrf.mxu0
      %v6075 = vadd.f32 0.0, %v6074
      %6076 = vmatmul.f32.gmra.mxu0 %v5962
      %v6077 = vpop.f32.mrf.mxu0
      %v6078 = vadd.f32 0.0, %v6077
      %6079 = vmatmul.f32.gmra.mxu0 %v5965
      %v6080 = vpop.f32.mrf.mxu0
      %v6081 = vadd.f32 0.0, %v6080
      %6082 = vmatmul.f32.gmra.mxu0 %v5968
      %v6083 = vpop.f32.mrf.mxu0
      %v6084 = vadd.f32 0.0, %v6083
      %6085 = vmatmul.f32.gmra.mxu0 %v5971
      %v6086 = vpop.f32.mrf.mxu0
      %v6087 = vadd.f32 0.0, %v6086
      %6088 = vmatmul.f32.gmra.mxu0 %v5974
      %v6089 = vpop.f32.mrf.mxu0
      %v6090 = vadd.f32 0.0, %v6089
      %6091 = vmatmul.f32.gmra.mxu0 %v5977
      %v6092 = vpop.f32.mrf.mxu0
      %v6093 = vadd.f32 0.0, %v6092
      %6094 = vdwg.mxu0
      %v6095 = vadd.f32 %v5816, %v6000
      %v6096 = vadd.f32 %v5817, %v6003
      %v6097 = vadd.f32 %v5818, %v6006
      %v6098 = vadd.f32 %v5819, %v6009
      %v6099 = vadd.f32 %v5820, %v6012
      %v6100 = vadd.f32 %v5821, %v6015
      %v6101 = vadd.f32 %v5822, %v6018
      %v6102 = vadd.f32 %v5823, %v6021
      %v6103 = vadd.f32 %v5824, %v6024
      %v6104 = vadd.f32 %v5825, %v6027
      %v6105 = vadd.f32 %v5826, %v6030
      %v6106 = vadd.f32 %v5827, %v6033
      %v6107 = vadd.f32 %v5828, %v6036
      %v6108 = vadd.f32 %v5829, %v6039
      %v6109 = vadd.f32 %v5830, %v6042
      %v6110 = vadd.f32 %v5831, %v6045
      %v6111 = vadd.f32 %v5832, %v6048
      %v6112 = vadd.f32 %v5833, %v6051
      %v6113 = vadd.f32 %v5834, %v6054
      %v6114 = vadd.f32 %v5835, %v6057
      %v6115 = vadd.f32 %v5836, %v6060
      %v6116 = vadd.f32 %v5837, %v6063
      %v6117 = vadd.f32 %v5838, %v6066
      %v6118 = vadd.f32 %v5839, %v6069
      %v6119 = vadd.f32 %v5840, %v6072
      %v6120 = vadd.f32 %v5841, %v6075
      %v6121 = vadd.f32 %v5842, %v6078
      %v6122 = vadd.f32 %v5843, %v6081
      %v6123 = vadd.f32 %v5844, %v6084
      %v6124 = vadd.f32 %v5845, %v6087
      %v6125 = vadd.f32 %v5846, %v6090
      %v6126 = vadd.f32 %v5847, %v6093
      %v6127 = vld [vmem:[%s5848 + $0x1] sm:$0xff]
      %v6128 = vld [vmem:[%s5848 + $0x9] sm:$0xff]
      %v6129 = vld [vmem:[%s5848 + $0x19] sm:$0xff]
      %v6130 = vld [vmem:[%s5848 + $0x21] sm:$0xff]
      %v6131 = vld [vmem:[%s5848 + $0x31] sm:$0xff]
      %v6132 = vld [vmem:[%s5848 + $0x39] sm:$0xff]
      %v6133 = vld [vmem:[%s5848 + $0x49] sm:$0xff]
      %v6134 = vld [vmem:[%s5848 + $0x51] sm:$0xff]
      %v6135 = vld [vmem:[%s5848 + $0x61] sm:$0xff]
      %v6136 = vld [vmem:[%s5848 + $0x69] sm:$0xff]
      %v6137 = vld [vmem:[%s5848 + $0x79] sm:$0xff]
      %v6138 = vld [vmem:[%s5848 + $0x81] sm:$0xff]
      %v6139 = vld [vmem:[%s5848 + $0x91] sm:$0xff]
      %v6140 = vld [vmem:[%s5848 + $0x99] sm:$0xff]
      %v6141 = vld [vmem:[%s5848 + $0xa9] sm:$0xff]
      %v6142 = vld [vmem:[%s5848 + $0xb1] sm:$0xff]
      %v6143 = vld [vmem:[%s5848 + $0xc1] sm:$0xff]
      %v6144 = vld [vmem:[%s5848 + $0xc9] sm:$0xff]
      %v6145 = vld [vmem:[%s5848 + $0xd9] sm:$0xff]
      %v6146 = vld [vmem:[%s5848 + $0xe1] sm:$0xff]
      %v6147 = vld [vmem:[%s5848 + $0xf1] sm:$0xff]
      %v6148 = vld [vmem:[%s5848 + $0xf9] sm:$0xff]
      %v6149 = vld [vmem:[%s5848 + $0x109] sm:$0xff]
      %v6150 = vld [vmem:[%s5848 + $0x111] sm:$0xff]
      %v6151 = vld [vmem:[%s5848 + $0x121] sm:$0xff]
      %v6152 = vld [vmem:[%s5848 + $0x129] sm:$0xff]
      %v6153 = vld [vmem:[%s5848 + $0x139] sm:$0xff]
      %v6154 = vld [vmem:[%s5848 + $0x141] sm:$0xff]
      %v6155 = vld [vmem:[%s5848 + $0x151] sm:$0xff]
      %v6156 = vld [vmem:[%s5848 + $0x159] sm:$0xff]
      %v6157 = vld [vmem:[%s5848 + $0x169] sm:$0xff]
      %v6158 = vld [vmem:[%s5848 + $0x171] sm:$0xff]
      %s6159 = scalar_lea.vmem %s4, 14
      %v6160 = vld [vmem:[%s6159] sm:$0x3]
      %v6162 = vsel %vm339, %v6127, 0
      %v6165 = vsel %vm339, %v6128, 0
      %v6168 = vsel %vm339, %v6129, 0
      %v6171 = vsel %vm339, %v6130, 0
      %v6174 = vsel %vm339, %v6131, 0
      %v6177 = vsel %vm339, %v6132, 0
      %v6180 = vsel %vm339, %v6133, 0
      %v6183 = vsel %vm339, %v6134, 0
      %v6186 = vsel %vm339, %v6135, 0
      %v6189 = vsel %vm339, %v6136, 0
      %v6192 = vsel %vm339, %v6137, 0
      %v6195 = vsel %vm339, %v6138, 0
      %v6198 = vsel %vm339, %v6139, 0
      %v6201 = vsel %vm339, %v6140, 0
      %v6204 = vsel %vm339, %v6141, 0
      %v6207 = vsel %vm339, %v6142, 0
      %v6210 = vsel %vm339, %v6143, 0
      %v6213 = vsel %vm339, %v6144, 0
      %v6216 = vsel %vm339, %v6145, 0
      %v6219 = vsel %vm339, %v6146, 0
      %v6222 = vsel %vm339, %v6147, 0
      %v6225 = vsel %vm339, %v6148, 0
      %v6228 = vsel %vm339, %v6149, 0
      %v6231 = vsel %vm339, %v6150, 0
      %v6234 = vsel %vm339, %v6151, 0
      %v6237 = vsel %vm339, %v6152, 0
      %v6240 = vsel %vm339, %v6153, 0
      %v6243 = vsel %vm339, %v6154, 0
      %v6246 = vsel %vm339, %v6155, 0
      %v6249 = vsel %vm339, %v6156, 0
      %v6252 = vsel %vm339, %v6157, 0
      %v6255 = vsel %vm339, %v6158, 0
      %v6258 = vsel %vm436, %v6160, 0
      %6260 = vmatpush.msra.mxu0 0.0
      %6261 = vmatpush.msra.mxu0 0.0
      %6262 = vmatpush.msra.mxu0 0.0
      %6263 = vmatpush.msra.mxu0 0.0
      %6264 = vmatpush.msra.mxu0 0.0
      %6265 = vmatpush.msra.mxu0 0.0
      %6266 = vmatpush.msra.mxu0 0.0
      %6267 = vmatpush.msra.mxu0 0.0
      %6268 = vmatpush.msra.mxu0 0.0
      %6269 = vmatpush.msra.mxu0 0.0
      %6270 = vmatpush.msra.mxu0 0.0
      %6271 = vmatpush.msra.mxu0 0.0
      %6272 = vmatpush.msra.mxu0 0.0
      %6273 = vmatpush.msra.mxu0 0.0
      %6274 = vmatpush.msra.mxu0 0.0
      %6275 = vmatpush.msra.mxu0 %v6258
      %6276 = vmatmul.f32.gmra.mxu0 %v6162
      %v6277 = vpop.f32.mrf.mxu0
      %v6278 = vadd.f32 0.0, %v6277
      %6279 = vmatmul.f32.gmra.mxu0 %v6165
      %v6280 = vpop.f32.mrf.mxu0
      %v6281 = vadd.f32 0.0, %v6280
      %6282 = vmatmul.f32.gmra.mxu0 %v6168
      %v6283 = vpop.f32.mrf.mxu0
      %v6284 = vadd.f32 0.0, %v6283
      %6285 = vmatmul.f32.gmra.mxu0 %v6171
      %v6286 = vpop.f32.mrf.mxu0
      %v6287 = vadd.f32 0.0, %v6286
      %6288 = vmatmul.f32.gmra.mxu0 %v6174
      %v6289 = vpop.f32.mrf.mxu0
      %v6290 = vadd.f32 0.0, %v6289
      %6291 = vmatmul.f32.gmra.mxu0 %v6177
      %v6292 = vpop.f32.mrf.mxu0
      %v6293 = vadd.f32 0.0, %v6292
      %6294 = vmatmul.f32.gmra.mxu0 %v6180
      %v6295 = vpop.f32.mrf.mxu0
      %v6296 = vadd.f32 0.0, %v6295
      %6297 = vmatmul.f32.gmra.mxu0 %v6183
      %v6298 = vpop.f32.mrf.mxu0
      %v6299 = vadd.f32 0.0, %v6298
      %6300 = vmatmul.f32.gmra.mxu0 %v6186
      %v6301 = vpop.f32.mrf.mxu0
      %v6302 = vadd.f32 0.0, %v6301
      %6303 = vmatmul.f32.gmra.mxu0 %v6189
      %v6304 = vpop.f32.mrf.mxu0
      %v6305 = vadd.f32 0.0, %v6304
      %6306 = vmatmul.f32.gmra.mxu0 %v6192
      %v6307 = vpop.f32.mrf.mxu0
      %v6308 = vadd.f32 0.0, %v6307
      %6309 = vmatmul.f32.gmra.mxu0 %v6195
      %v6310 = vpop.f32.mrf.mxu0
      %v6311 = vadd.f32 0.0, %v6310
      %6312 = vmatmul.f32.gmra.mxu0 %v6198
      %v6313 = vpop.f32.mrf.mxu0
      %v6314 = vadd.f32 0.0, %v6313
      %6315 = vmatmul.f32.gmra.mxu0 %v6201
      %v6316 = vpop.f32.mrf.mxu0
      %v6317 = vadd.f32 0.0, %v6316
      %6318 = vmatmul.f32.gmra.mxu0 %v6204
      %v6319 = vpop.f32.mrf.mxu0
      %v6320 = vadd.f32 0.0, %v6319
      %6321 = vmatmul.f32.gmra.mxu0 %v6207
      %v6322 = vpop.f32.mrf.mxu0
      %v6323 = vadd.f32 0.0, %v6322
      %6324 = vmatmul.f32.gmra.mxu0 %v6210
      %v6325 = vpop.f32.mrf.mxu0
      %v6326 = vadd.f32 0.0, %v6325
      %6327 = vmatmul.f32.gmra.mxu0 %v6213
      %v6328 = vpop.f32.mrf.mxu0
      %v6329 = vadd.f32 0.0, %v6328
      %6330 = vmatmul.f32.gmra.mxu0 %v6216
      %v6331 = vpop.f32.mrf.mxu0
      %v6332 = vadd.f32 0.0, %v6331
      %6333 = vmatmul.f32.gmra.mxu0 %v6219
      %v6334 = vpop.f32.mrf.mxu0
      %v6335 = vadd.f32 0.0, %v6334
      %6336 = vmatmul.f32.gmra.mxu0 %v6222
      %v6337 = vpop.f32.mrf.mxu0
      %v6338 = vadd.f32 0.0, %v6337
      %6339 = vmatmul.f32.gmra.mxu0 %v6225
      %v6340 = vpop.f32.mrf.mxu0
      %v6341 = vadd.f32 0.0, %v6340
      %6342 = vmatmul.f32.gmra.mxu0 %v6228
      %v6343 = vpop.f32.mrf.mxu0
      %v6344 = vadd.f32 0.0, %v6343
      %6345 = vmatmul.f32.gmra.mxu0 %v6231
      %v6346 = vpop.f32.mrf.mxu0
      %v6347 = vadd.f32 0.0, %v6346
      %6348 = vmatmul.f32.gmra.mxu0 %v6234
      %v6349 = vpop.f32.mrf.mxu0
      %v6350 = vadd.f32 0.0, %v6349
      %6351 = vmatmul.f32.gmra.mxu0 %v6237
      %v6352 = vpop.f32.mrf.mxu0
      %v6353 = vadd.f32 0.0, %v6352
      %6354 = vmatmul.f32.gmra.mxu0 %v6240
      %v6355 = vpop.f32.mrf.mxu0
      %v6356 = vadd.f32 0.0, %v6355
      %6357 = vmatmul.f32.gmra.mxu0 %v6243
      %v6358 = vpop.f32.mrf.mxu0
      %v6359 = vadd.f32 0.0, %v6358
      %6360 = vmatmul.f32.gmra.mxu0 %v6246
      %v6361 = vpop.f32.mrf.mxu0
      %v6362 = vadd.f32 0.0, %v6361
      %6363 = vmatmul.f32.gmra.mxu0 %v6249
      %v6364 = vpop.f32.mrf.mxu0
      %v6365 = vadd.f32 0.0, %v6364
      %6366 = vmatmul.f32.gmra.mxu0 %v6252
      %v6367 = vpop.f32.mrf.mxu0
      %v6368 = vadd.f32 0.0, %v6367
      %6369 = vmatmul.f32.gmra.mxu0 %v6255
      %v6370 = vpop.f32.mrf.mxu0
      %v6371 = vadd.f32 0.0, %v6370
      %6372 = vdwg.mxu0
      %v6373 = vadd.f32 %v6095, %v6278
      %v6374 = vadd.f32 %v6096, %v6281
      %v6375 = vadd.f32 %v6097, %v6284
      %v6376 = vadd.f32 %v6098, %v6287
      %v6377 = vadd.f32 %v6099, %v6290
      %v6378 = vadd.f32 %v6100, %v6293
      %v6379 = vadd.f32 %v6101, %v6296
      %v6380 = vadd.f32 %v6102, %v6299
      %v6381 = vadd.f32 %v6103, %v6302
      %v6382 = vadd.f32 %v6104, %v6305
      %v6383 = vadd.f32 %v6105, %v6308
      %v6384 = vadd.f32 %v6106, %v6311
      %v6385 = vadd.f32 %v6107, %v6314
      %v6386 = vadd.f32 %v6108, %v6317
      %v6387 = vadd.f32 %v6109, %v6320
      %v6388 = vadd.f32 %v6110, %v6323
      %v6389 = vadd.f32 %v6111, %v6326
      %v6390 = vadd.f32 %v6112, %v6329
      %v6391 = vadd.f32 %v6113, %v6332
      %v6392 = vadd.f32 %v6114, %v6335
      %v6393 = vadd.f32 %v6115, %v6338
      %v6394 = vadd.f32 %v6116, %v6341
      %v6395 = vadd.f32 %v6117, %v6344
      %v6396 = vadd.f32 %v6118, %v6347
      %v6397 = vadd.f32 %v6119, %v6350
      %v6398 = vadd.f32 %v6120, %v6353
      %v6399 = vadd.f32 %v6121, %v6356
      %v6400 = vadd.f32 %v6122, %v6359
      %v6401 = vadd.f32 %v6123, %v6362
      %v6402 = vadd.f32 %v6124, %v6365
      %v6403 = vadd.f32 %v6125, %v6368
      %v6404 = vadd.f32 %v6126, %v6371
      %v6405 = vld [vmem:[%s5848 + $0x2] sm:$0xff]
      %v6406 = vld [vmem:[%s5848 + $0xa] sm:$0xff]
      %v6407 = vld [vmem:[%s5848 + $0x1a] sm:$0xff]
      %v6408 = vld [vmem:[%s5848 + $0x22] sm:$0xff]
      %v6409 = vld [vmem:[%s5848 + $0x32] sm:$0xff]
      %v6410 = vld [vmem:[%s5848 + $0x3a] sm:$0xff]
      %v6411 = vld [vmem:[%s5848 + $0x4a] sm:$0xff]
      %v6412 = vld [vmem:[%s5848 + $0x52] sm:$0xff]
      %v6413 = vld [vmem:[%s5848 + $0x62] sm:$0xff]
      %v6414 = vld [vmem:[%s5848 + $0x6a] sm:$0xff]
      %v6415 = vld [vmem:[%s5848 + $0x7a] sm:$0xff]
      %v6416 = vld [vmem:[%s5848 + $0x82] sm:$0xff]
      %v6417 = vld [vmem:[%s5848 + $0x92] sm:$0xff]
      %v6418 = vld [vmem:[%s5848 + $0x9a] sm:$0xff]
      %v6419 = vld [vmem:[%s5848 + $0xaa] sm:$0xff]
      %v6420 = vld [vmem:[%s5848 + $0xb2] sm:$0xff]
      %v6421 = vld [vmem:[%s5848 + $0xc2] sm:$0xff]
      %v6422 = vld [vmem:[%s5848 + $0xca] sm:$0xff]
      %v6423 = vld [vmem:[%s5848 + $0xda] sm:$0xff]
      %v6424 = vld [vmem:[%s5848 + $0xe2] sm:$0xff]
      %v6425 = vld [vmem:[%s5848 + $0xf2] sm:$0xff]
      %v6426 = vld [vmem:[%s5848 + $0xfa] sm:$0xff]
      %v6427 = vld [vmem:[%s5848 + $0x10a] sm:$0xff]
      %v6428 = vld [vmem:[%s5848 + $0x112] sm:$0xff]
      %v6429 = vld [vmem:[%s5848 + $0x122] sm:$0xff]
      %v6430 = vld [vmem:[%s5848 + $0x12a] sm:$0xff]
      %v6431 = vld [vmem:[%s5848 + $0x13a] sm:$0xff]
      %v6432 = vld [vmem:[%s5848 + $0x142] sm:$0xff]
      %v6433 = vld [vmem:[%s5848 + $0x152] sm:$0xff]
      %v6434 = vld [vmem:[%s5848 + $0x15a] sm:$0xff]
      %v6435 = vld [vmem:[%s5848 + $0x16a] sm:$0xff]
      %v6436 = vld [vmem:[%s5848 + $0x172] sm:$0xff]
      %s6437 = scalar_lea.vmem %s4, 16
      %v6438 = vld [vmem:[%s6437] sm:$0x3]
      %v6440 = vsel %vm339, %v6405, 0
      %v6443 = vsel %vm339, %v6406, 0
      %v6446 = vsel %vm339, %v6407, 0
      %v6449 = vsel %vm339, %v6408, 0
      %v6452 = vsel %vm339, %v6409, 0
      %v6455 = vsel %vm339, %v6410, 0
      %v6458 = vsel %vm339, %v6411, 0
      %v6461 = vsel %vm339, %v6412, 0
      %v6464 = vsel %vm339, %v6413, 0
      %v6467 = vsel %vm339, %v6414, 0
      %v6470 = vsel %vm339, %v6415, 0
      %v6473 = vsel %vm339, %v6416, 0
      %v6476 = vsel %vm339, %v6417, 0
      %v6479 = vsel %vm339, %v6418, 0
      %v6482 = vsel %vm339, %v6419, 0
      %v6485 = vsel %vm339, %v6420, 0
      %v6488 = vsel %vm339, %v6421, 0
      %v6491 = vsel %vm339, %v6422, 0
      %v6494 = vsel %vm339, %v6423, 0
      %v6497 = vsel %vm339, %v6424, 0
      %v6500 = vsel %vm339, %v6425, 0
      %v6503 = vsel %vm339, %v6426, 0
      %v6506 = vsel %vm339, %v6427, 0
      %v6509 = vsel %vm339, %v6428, 0
      %v6512 = vsel %vm339, %v6429, 0
      %v6515 = vsel %vm339, %v6430, 0
      %v6518 = vsel %vm339, %v6431, 0
      %v6521 = vsel %vm339, %v6432, 0
      %v6524 = vsel %vm339, %v6433, 0
      %v6527 = vsel %vm339, %v6434, 0
      %v6530 = vsel %vm339, %v6435, 0
      %v6533 = vsel %vm339, %v6436, 0
      %v6536 = vsel %vm436, %v6438, 0
      %6538 = vmatpush.msra.mxu0 0.0
      %6539 = vmatpush.msra.mxu0 0.0
      %6540 = vmatpush.msra.mxu0 0.0
      %6541 = vmatpush.msra.mxu0 0.0
      %6542 = vmatpush.msra.mxu0 0.0
      %6543 = vmatpush.msra.mxu0 0.0
      %6544 = vmatpush.msra.mxu0 0.0
      %6545 = vmatpush.msra.mxu0 0.0
      %6546 = vmatpush.msra.mxu0 0.0
      %6547 = vmatpush.msra.mxu0 0.0
      %6548 = vmatpush.msra.mxu0 0.0
      %6549 = vmatpush.msra.mxu0 0.0
      %6550 = vmatpush.msra.mxu0 0.0
      %6551 = vmatpush.msra.mxu0 0.0
      %6552 = vmatpush.msra.mxu0 0.0
      %6553 = vmatpush.msra.mxu0 %v6536
      %6554 = vmatmul.f32.gmra.mxu0 %v6440
      %v6555 = vpop.f32.mrf.mxu0
      %v6556 = vadd.f32 0.0, %v6555
      %6557 = vmatmul.f32.gmra.mxu0 %v6443
      %v6558 = vpop.f32.mrf.mxu0
      %v6559 = vadd.f32 0.0, %v6558
      %6560 = vmatmul.f32.gmra.mxu0 %v6446
      %v6561 = vpop.f32.mrf.mxu0
      %v6562 = vadd.f32 0.0, %v6561
      %6563 = vmatmul.f32.gmra.mxu0 %v6449
      %v6564 = vpop.f32.mrf.mxu0
      %v6565 = vadd.f32 0.0, %v6564
      %6566 = vmatmul.f32.gmra.mxu0 %v6452
      %v6567 = vpop.f32.mrf.mxu0
      %v6568 = vadd.f32 0.0, %v6567
      %6569 = vmatmul.f32.gmra.mxu0 %v6455
      %v6570 = vpop.f32.mrf.mxu0
      %v6571 = vadd.f32 0.0, %v6570
      %6572 = vmatmul.f32.gmra.mxu0 %v6458
      %v6573 = vpop.f32.mrf.mxu0
      %v6574 = vadd.f32 0.0, %v6573
      %6575 = vmatmul.f32.gmra.mxu0 %v6461
      %v6576 = vpop.f32.mrf.mxu0
      %v6577 = vadd.f32 0.0, %v6576
      %6578 = vmatmul.f32.gmra.mxu0 %v6464
      %v6579 = vpop.f32.mrf.mxu0
      %v6580 = vadd.f32 0.0, %v6579
      %6581 = vmatmul.f32.gmra.mxu0 %v6467
      %v6582 = vpop.f32.mrf.mxu0
      %v6583 = vadd.f32 0.0, %v6582
      %6584 = vmatmul.f32.gmra.mxu0 %v6470
      %v6585 = vpop.f32.mrf.mxu0
      %v6586 = vadd.f32 0.0, %v6585
      %6587 = vmatmul.f32.gmra.mxu0 %v6473
      %v6588 = vpop.f32.mrf.mxu0
      %v6589 = vadd.f32 0.0, %v6588
      %6590 = vmatmul.f32.gmra.mxu0 %v6476
      %v6591 = vpop.f32.mrf.mxu0
      %v6592 = vadd.f32 0.0, %v6591
      %6593 = vmatmul.f32.gmra.mxu0 %v6479
      %v6594 = vpop.f32.mrf.mxu0
      %v6595 = vadd.f32 0.0, %v6594
      %6596 = vmatmul.f32.gmra.mxu0 %v6482
      %v6597 = vpop.f32.mrf.mxu0
      %v6598 = vadd.f32 0.0, %v6597
      %6599 = vmatmul.f32.gmra.mxu0 %v6485
      %v6600 = vpop.f32.mrf.mxu0
      %v6601 = vadd.f32 0.0, %v6600
      %6602 = vmatmul.f32.gmra.mxu0 %v6488
      %v6603 = vpop.f32.mrf.mxu0
      %v6604 = vadd.f32 0.0, %v6603
      %6605 = vmatmul.f32.gmra.mxu0 %v6491
      %v6606 = vpop.f32.mrf.mxu0
      %v6607 = vadd.f32 0.0, %v6606
      %6608 = vmatmul.f32.gmra.mxu0 %v6494
      %v6609 = vpop.f32.mrf.mxu0
      %v6610 = vadd.f32 0.0, %v6609
      %6611 = vmatmul.f32.gmra.mxu0 %v6497
      %v6612 = vpop.f32.mrf.mxu0
      %v6613 = vadd.f32 0.0, %v6612
      %6614 = vmatmul.f32.gmra.mxu0 %v6500
      %v6615 = vpop.f32.mrf.mxu0
      %v6616 = vadd.f32 0.0, %v6615
      %6617 = vmatmul.f32.gmra.mxu0 %v6503
      %v6618 = vpop.f32.mrf.mxu0
      %v6619 = vadd.f32 0.0, %v6618
      %6620 = vmatmul.f32.gmra.mxu0 %v6506
      %v6621 = vpop.f32.mrf.mxu0
      %v6622 = vadd.f32 0.0, %v6621
      %6623 = vmatmul.f32.gmra.mxu0 %v6509
      %v6624 = vpop.f32.mrf.mxu0
      %v6625 = vadd.f32 0.0, %v6624
      %6626 = vmatmul.f32.gmra.mxu0 %v6512
      %v6627 = vpop.f32.mrf.mxu0
      %v6628 = vadd.f32 0.0, %v6627
      %6629 = vmatmul.f32.gmra.mxu0 %v6515
      %v6630 = vpop.f32.mrf.mxu0
      %v6631 = vadd.f32 0.0, %v6630
      %6632 = vmatmul.f32.gmra.mxu0 %v6518
      %v6633 = vpop.f32.mrf.mxu0
      %v6634 = vadd.f32 0.0, %v6633
      %6635 = vmatmul.f32.gmra.mxu0 %v6521
      %v6636 = vpop.f32.mrf.mxu0
      %v6637 = vadd.f32 0.0, %v6636
      %6638 = vmatmul.f32.gmra.mxu0 %v6524
      %v6639 = vpop.f32.mrf.mxu0
      %v6640 = vadd.f32 0.0, %v6639
      %6641 = vmatmul.f32.gmra.mxu0 %v6527
      %v6642 = vpop.f32.mrf.mxu0
      %v6643 = vadd.f32 0.0, %v6642
      %6644 = vmatmul.f32.gmra.mxu0 %v6530
      %v6645 = vpop.f32.mrf.mxu0
      %v6646 = vadd.f32 0.0, %v6645
      %6647 = vmatmul.f32.gmra.mxu0 %v6533
      %v6648 = vpop.f32.mrf.mxu0
      %v6649 = vadd.f32 0.0, %v6648
      %6650 = vdwg.mxu0
      %v6651 = vadd.f32 %v6373, %v6556
      %v6652 = vadd.f32 %v6374, %v6559
      %v6653 = vadd.f32 %v6375, %v6562
      %v6654 = vadd.f32 %v6376, %v6565
      %v6655 = vadd.f32 %v6377, %v6568
      %v6656 = vadd.f32 %v6378, %v6571
      %v6657 = vadd.f32 %v6379, %v6574
      %v6658 = vadd.f32 %v6380, %v6577
      %v6659 = vadd.f32 %v6381, %v6580
      %v6660 = vadd.f32 %v6382, %v6583
      %v6661 = vadd.f32 %v6383, %v6586
      %v6662 = vadd.f32 %v6384, %v6589
      %v6663 = vadd.f32 %v6385, %v6592
      %v6664 = vadd.f32 %v6386, %v6595
      %v6665 = vadd.f32 %v6387, %v6598
      %v6666 = vadd.f32 %v6388, %v6601
      %v6667 = vadd.f32 %v6389, %v6604
      %v6668 = vadd.f32 %v6390, %v6607
      %v6669 = vadd.f32 %v6391, %v6610
      %v6670 = vadd.f32 %v6392, %v6613
      %v6671 = vadd.f32 %v6393, %v6616
      %v6672 = vadd.f32 %v6394, %v6619
      %v6673 = vadd.f32 %v6395, %v6622
      %v6674 = vadd.f32 %v6396, %v6625
      %v6675 = vadd.f32 %v6397, %v6628
      %v6676 = vadd.f32 %v6398, %v6631
      %v6677 = vadd.f32 %v6399, %v6634
      %v6678 = vadd.f32 %v6400, %v6637
      %v6679 = vadd.f32 %v6401, %v6640
      %v6680 = vadd.f32 %v6402, %v6643
      %v6681 = vadd.f32 %v6403, %v6646
      %v6682 = vadd.f32 %v6404, %v6649
      %v6683 = vld [vmem:[%s5] sm:$0x1]
      %v6685 = vperm.slane %v6683, 0
      %v6687 = vadd.f32 %v6651, %v6685
      %v6688 = vadd.f32 %v6652, %v6685
      %v6689 = vadd.f32 %v6653, %v6685
      %v6690 = vadd.f32 %v6654, %v6685
      %v6691 = vadd.f32 %v6655, %v6685
      %v6692 = vadd.f32 %v6656, %v6685
      %v6693 = vadd.f32 %v6657, %v6685
      %v6694 = vadd.f32 %v6658, %v6685
      %v6695 = vadd.f32 %v6659, %v6685
      %v6696 = vadd.f32 %v6660, %v6685
      %v6697 = vadd.f32 %v6661, %v6685
      %v6698 = vadd.f32 %v6662, %v6685
      %v6699 = vadd.f32 %v6663, %v6685
      %v6700 = vadd.f32 %v6664, %v6685
      %v6701 = vadd.f32 %v6665, %v6685
      %v6702 = vadd.f32 %v6666, %v6685
      %v6703 = vadd.f32 %v6667, %v6685
      %v6704 = vadd.f32 %v6668, %v6685
      %v6705 = vadd.f32 %v6669, %v6685
      %v6706 = vadd.f32 %v6670, %v6685
      %v6707 = vadd.f32 %v6671, %v6685
      %v6708 = vadd.f32 %v6672, %v6685
      %v6709 = vadd.f32 %v6673, %v6685
      %v6710 = vadd.f32 %v6674, %v6685
      %v6711 = vadd.f32 %v6675, %v6685
      %v6712 = vadd.f32 %v6676, %v6685
      %v6713 = vadd.f32 %v6677, %v6685
      %v6714 = vadd.f32 %v6678, %v6685
      %v6715 = vadd.f32 %v6679, %v6685
      %v6716 = vadd.f32 %v6680, %v6685
      %v6717 = vadd.f32 %v6681, %v6685
      %v6718 = vadd.f32 %v6682, %v6685
      %v6719 = vmul.f32 %v6687, 0.5
      %v6720 = vmul.f32 %v6688, 0.5
      %v6721 = vmul.f32 %v6689, 0.5
      %v6722 = vmul.f32 %v6690, 0.5
      %v6723 = vmul.f32 %v6691, 0.5
      %v6724 = vmul.f32 %v6692, 0.5
      %v6725 = vmul.f32 %v6693, 0.5
      %v6726 = vmul.f32 %v6694, 0.5
      %v6727 = vmul.f32 %v6695, 0.5
      %v6728 = vmul.f32 %v6696, 0.5
      %v6729 = vmul.f32 %v6697, 0.5
      %v6730 = vmul.f32 %v6698, 0.5
      %v6731 = vmul.f32 %v6699, 0.5
      %v6732 = vmul.f32 %v6700, 0.5
      %v6733 = vmul.f32 %v6701, 0.5
      %v6734 = vmul.f32 %v6702, 0.5
      %v6735 = vmul.f32 %v6703, 0.5
      %v6736 = vmul.f32 %v6704, 0.5
      %v6737 = vmul.f32 %v6705, 0.5
      %v6738 = vmul.f32 %v6706, 0.5
      %v6739 = vmul.f32 %v6707, 0.5
      %v6740 = vmul.f32 %v6708, 0.5
      %v6741 = vmul.f32 %v6709, 0.5
      %v6742 = vmul.f32 %v6710, 0.5
      %v6743 = vmul.f32 %v6711, 0.5
      %v6744 = vmul.f32 %v6712, 0.5
      %v6745 = vmul.f32 %v6713, 0.5
      %v6746 = vmul.f32 %v6714, 0.5
      %v6747 = vmul.f32 %v6715, 0.5
      %v6748 = vmul.f32 %v6716, 0.5
      %v6749 = vmul.f32 %v6717, 0.5
      %v6750 = vmul.f32 %v6718, 0.5
      %v6751 = vmul.f32 %v6687, 0.70710677
      %v6752 = vmul.f32 %v6688, 0.70710677
      %v6753 = vmul.f32 %v6689, 0.70710677
      %v6754 = vmul.f32 %v6690, 0.70710677
      %v6755 = vmul.f32 %v6691, 0.70710677
      %v6756 = vmul.f32 %v6692, 0.70710677
      %v6757 = vmul.f32 %v6693, 0.70710677
      %v6758 = vmul.f32 %v6694, 0.70710677
      %v6759 = vmul.f32 %v6695, 0.70710677
      %v6760 = vmul.f32 %v6696, 0.70710677
      %v6761 = vmul.f32 %v6697, 0.70710677
      %v6762 = vmul.f32 %v6698, 0.70710677
      %v6763 = vmul.f32 %v6699, 0.70710677
      %v6764 = vmul.f32 %v6700, 0.70710677
      %v6765 = vmul.f32 %v6701, 0.70710677
      %v6766 = vmul.f32 %v6702, 0.70710677
      %v6767 = vmul.f32 %v6703, 0.70710677
      %v6768 = vmul.f32 %v6704, 0.70710677
      %v6769 = vmul.f32 %v6705, 0.70710677
      %v6770 = vmul.f32 %v6706, 0.70710677
      %v6771 = vmul.f32 %v6707, 0.70710677
      %v6772 = vmul.f32 %v6708, 0.70710677
      %v6773 = vmul.f32 %v6709, 0.70710677
      %v6774 = vmul.f32 %v6710, 0.70710677
      %v6775 = vmul.f32 %v6711, 0.70710677
      %v6776 = vmul.f32 %v6712, 0.70710677
      %v6777 = vmul.f32 %v6713, 0.70710677
      %v6778 = vmul.f32 %v6714, 0.70710677
      %v6779 = vmul.f32 %v6715, 0.70710677
      %v6780 = vmul.f32 %v6716, 0.70710677
      %v6781 = vmul.f32 %v6717, 0.70710677
      %v6782 = vmul.f32 %v6718, 0.70710677
      %v6783 = vmul.f32 %v6751, %v6751
      %v6784 = vmin.f32 16.0, %v6783
      %v6785 = vmul.f32 %v6784, 2.1237322e-06
      %v6786 = vadd.f32 %v6785, 0.00028619796
      %v6787 = vmul.f32 %v6784, %v6786
      %v6788 = vadd.f32 %v6787, 0.0036580483
      %v6789 = vmul.f32 %v6784, %v6788
      %v6790 = vadd.f32 %v6789, 0.05243302
      %v6791 = vmul.f32 %v6784, %v6790
      %v6792 = vadd.f32 %v6791, 0.18741608
      %v6793 = vmul.f32 %v6784, %v6792
      %v6794 = vadd.f32 %v6793, 1.1283791
      %v6795 = vmul.f32 %v6751, %v6794
      %v6796 = vmul.f32 %v6784, 3.8918573e-05
      %v6797 = vadd.f32 %v6796, 0.001143296
      %v6798 = vmul.f32 %v6784, %v6797
      %v6799 = vadd.f32 %v6798, 0.014752088
      %v6800 = vmul.f32 %v6784, %v6799
      %v6801 = vadd.f32 %v6800, 0.112945676
      %v6802 = vmul.f32 %v6784, %v6801
      %v6803 = vadd.f32 %v6802, 0.4994258
      %v6804 = vmul.f32 %v6784, %v6803
      %v6805 = vadd.f32 %v6804, 1.0
      %v6806 = vrcp.pop %v6805
      %v6807 = vmul.f32 %v6805, %v6806
      %v6808 = vsub.f32 1.0, %v6807
      %v6809 = vmul.f32 %v6806, %v6808
      %v6810 = vadd.f32 %v6806, %v6809
      %vm6811 = vweird.f32 %v6805
      %vm6812 = vweird.f32 %v6806
      %vm6813 = vmor %vm6811, %vm6812
      %v6814 = vsel %vm6813, %v6806, %v6810
      %v6815 = vand.u32 2147483647, %v6805
      %vm6816 = vcmp.eq.f32.partialorder %v6815, 8.507059e+37
      %v6817 = vand.u32 %v6805, 2147483648
      %v6818 = vor.u32 1.1754944e-38, %v6817
      %v6819 = vsel %vm6816, %v6818, %v6814
      %v6820 = vmul.f32 %v6795, %v6819
      %v6821 = vmin.f32 %v6820, 1.0
      %v6822 = vmax.f32 %v6821, -1.0
      %v6823 = vmul.f32 %v6752, %v6752
      %v6824 = vmin.f32 16.0, %v6823
      %v6825 = vmul.f32 %v6824, 2.1237322e-06
      %v6826 = vadd.f32 %v6825, 0.00028619796
      %v6827 = vmul.f32 %v6824, %v6826
      %v6828 = vadd.f32 %v6827, 0.0036580483
      %v6829 = vmul.f32 %v6824, %v6828
      %v6830 = vadd.f32 %v6829, 0.05243302
      %v6831 = vmul.f32 %v6824, %v6830
      %v6832 = vadd.f32 %v6831, 0.18741608
      %v6833 = vmul.f32 %v6824, %v6832
      %v6834 = vadd.f32 %v6833, 1.1283791
      %v6835 = vmul.f32 %v6752, %v6834
      %v6836 = vmul.f32 %v6824, 3.8918573e-05
      %v6837 = vadd.f32 %v6836, 0.001143296
      %v6838 = vmul.f32 %v6824, %v6837
      %v6839 = vadd.f32 %v6838, 0.014752088
      %v6840 = vmul.f32 %v6824, %v6839
      %v6841 = vadd.f32 %v6840, 0.112945676
      %v6842 = vmul.f32 %v6824, %v6841
      %v6843 = vadd.f32 %v6842, 0.4994258
      %v6844 = vmul.f32 %v6824, %v6843
      %v6845 = vadd.f32 %v6844, 1.0
      %v6846 = vrcp.pop %v6845
      %v6847 = vmul.f32 %v6845, %v6846
      %v6848 = vsub.f32 1.0, %v6847
      %v6849 = vmul.f32 %v6846, %v6848
      %v6850 = vadd.f32 %v6846, %v6849
      %vm6851 = vweird.f32 %v6845
      %vm6852 = vweird.f32 %v6846
      %vm6853 = vmor %vm6851, %vm6852
      %v6854 = vsel %vm6853, %v6846, %v6850
      %v6855 = vand.u32 2147483647, %v6845
      %vm6856 = vcmp.eq.f32.partialorder %v6855, 8.507059e+37
      %v6857 = vand.u32 %v6845, 2147483648
      %v6858 = vor.u32 1.1754944e-38, %v6857
      %v6859 = vsel %vm6856, %v6858, %v6854
      %v6860 = vmul.f32 %v6835, %v6859
      %v6861 = vmin.f32 %v6860, 1.0
      %v6862 = vmax.f32 %v6861, -1.0
      %v6863 = vmul.f32 %v6753, %v6753
      %v6864 = vmin.f32 16.0, %v6863
      %v6865 = vmul.f32 %v6864, 2.1237322e-06
      %v6866 = vadd.f32 %v6865, 0.00028619796
      %v6867 = vmul.f32 %v6864, %v6866
      %v6868 = vadd.f32 %v6867, 0.0036580483
      %v6869 = vmul.f32 %v6864, %v6868
      %v6870 = vadd.f32 %v6869, 0.05243302
      %v6871 = vmul.f32 %v6864, %v6870
      %v6872 = vadd.f32 %v6871, 0.18741608
      %v6873 = vmul.f32 %v6864, %v6872
      %v6874 = vadd.f32 %v6873, 1.1283791
      %v6875 = vmul.f32 %v6753, %v6874
      %v6876 = vmul.f32 %v6864, 3.8918573e-05
      %v6877 = vadd.f32 %v6876, 0.001143296
      %v6878 = vmul.f32 %v6864, %v6877
      %v6879 = vadd.f32 %v6878, 0.014752088
      %v6880 = vmul.f32 %v6864, %v6879
      %v6881 = vadd.f32 %v6880, 0.112945676
      %v6882 = vmul.f32 %v6864, %v6881
      %v6883 = vadd.f32 %v6882, 0.4994258
      %v6884 = vmul.f32 %v6864, %v6883
      %v6885 = vadd.f32 %v6884, 1.0
      %v6886 = vrcp.pop %v6885
      %v6887 = vmul.f32 %v6885, %v6886
      %v6888 = vsub.f32 1.0, %v6887
      %v6889 = vmul.f32 %v6886, %v6888
      %v6890 = vadd.f32 %v6886, %v6889
      %vm6891 = vweird.f32 %v6885
      %vm6892 = vweird.f32 %v6886
      %vm6893 = vmor %vm6891, %vm6892
      %v6894 = vsel %vm6893, %v6886, %v6890
      %v6895 = vand.u32 2147483647, %v6885
      %vm6896 = vcmp.eq.f32.partialorder %v6895, 8.507059e+37
      %v6897 = vand.u32 %v6885, 2147483648
      %v6898 = vor.u32 1.1754944e-38, %v6897
      %v6899 = vsel %vm6896, %v6898, %v6894
      %v6900 = vmul.f32 %v6875, %v6899
      %v6901 = vmin.f32 %v6900, 1.0
      %v6902 = vmax.f32 %v6901, -1.0
      %v6903 = vmul.f32 %v6754, %v6754
      %v6904 = vmin.f32 16.0, %v6903
      %v6905 = vmul.f32 %v6904, 2.1237322e-06
      %v6906 = vadd.f32 %v6905, 0.00028619796
      %v6907 = vmul.f32 %v6904, %v6906
      %v6908 = vadd.f32 %v6907, 0.0036580483
      %v6909 = vmul.f32 %v6904, %v6908
      %v6910 = vadd.f32 %v6909, 0.05243302
      %v6911 = vmul.f32 %v6904, %v6910
      %v6912 = vadd.f32 %v6911, 0.18741608
      %v6913 = vmul.f32 %v6904, %v6912
      %v6914 = vadd.f32 %v6913, 1.1283791
      %v6915 = vmul.f32 %v6754, %v6914
      %v6916 = vmul.f32 %v6904, 3.8918573e-05
      %v6917 = vadd.f32 %v6916, 0.001143296
      %v6918 = vmul.f32 %v6904, %v6917
      %v6919 = vadd.f32 %v6918, 0.014752088
      %v6920 = vmul.f32 %v6904, %v6919
      %v6921 = vadd.f32 %v6920, 0.112945676
      %v6922 = vmul.f32 %v6904, %v6921
      %v6923 = vadd.f32 %v6922, 0.4994258
      %v6924 = vmul.f32 %v6904, %v6923
      %v6925 = vadd.f32 %v6924, 1.0
      %v6926 = vrcp.pop %v6925
      %v6927 = vmul.f32 %v6925, %v6926
      %v6928 = vsub.f32 1.0, %v6927
      %v6929 = vmul.f32 %v6926, %v6928
      %v6930 = vadd.f32 %v6926, %v6929
      %vm6931 = vweird.f32 %v6925
      %vm6932 = vweird.f32 %v6926
      %vm6933 = vmor %vm6931, %vm6932
      %v6934 = vsel %vm6933, %v6926, %v6930
      %v6935 = vand.u32 2147483647, %v6925
      %vm6936 = vcmp.eq.f32.partialorder %v6935, 8.507059e+37
      %v6937 = vand.u32 %v6925, 2147483648
      %v6938 = vor.u32 1.1754944e-38, %v6937
      %v6939 = vsel %vm6936, %v6938, %v6934
      %v6940 = vmul.f32 %v6915, %v6939
      %v6941 = vmin.f32 %v6940, 1.0
      %v6942 = vmax.f32 %v6941, -1.0
      %v6943 = vmul.f32 %v6755, %v6755
      %v6944 = vmin.f32 16.0, %v6943
      %v6945 = vmul.f32 %v6944, 2.1237322e-06
      %v6946 = vadd.f32 %v6945, 0.00028619796
      %v6947 = vmul.f32 %v6944, %v6946
      %v6948 = vadd.f32 %v6947, 0.0036580483
      %v6949 = vmul.f32 %v6944, %v6948
      %v6950 = vadd.f32 %v6949, 0.05243302
      %v6951 = vmul.f32 %v6944, %v6950
      %v6952 = vadd.f32 %v6951, 0.18741608
      %v6953 = vmul.f32 %v6944, %v6952
      %v6954 = vadd.f32 %v6953, 1.1283791
      %v6955 = vmul.f32 %v6755, %v6954
      %v6956 = vmul.f32 %v6944, 3.8918573e-05
      %v6957 = vadd.f32 %v6956, 0.001143296
      %v6958 = vmul.f32 %v6944, %v6957
      %v6959 = vadd.f32 %v6958, 0.014752088
      %v6960 = vmul.f32 %v6944, %v6959
      %v6961 = vadd.f32 %v6960, 0.112945676
      %v6962 = vmul.f32 %v6944, %v6961
      %v6963 = vadd.f32 %v6962, 0.4994258
      %v6964 = vmul.f32 %v6944, %v6963
      %v6965 = vadd.f32 %v6964, 1.0
      %v6966 = vrcp.pop %v6965
      %v6967 = vmul.f32 %v6965, %v6966
      %v6968 = vsub.f32 1.0, %v6967
      %v6969 = vmul.f32 %v6966, %v6968
      %v6970 = vadd.f32 %v6966, %v6969
      %vm6971 = vweird.f32 %v6965
      %vm6972 = vweird.f32 %v6966
      %vm6973 = vmor %vm6971, %vm6972
      %v6974 = vsel %vm6973, %v6966, %v6970
      %v6975 = vand.u32 2147483647, %v6965
      %vm6976 = vcmp.eq.f32.partialorder %v6975, 8.507059e+37
      %v6977 = vand.u32 %v6965, 2147483648
      %v6978 = vor.u32 1.1754944e-38, %v6977
      %v6979 = vsel %vm6976, %v6978, %v6974
      %v6980 = vmul.f32 %v6955, %v6979
      %v6981 = vmin.f32 %v6980, 1.0
      %v6982 = vmax.f32 %v6981, -1.0
      %v6983 = vmul.f32 %v6756, %v6756
      %v6984 = vmin.f32 16.0, %v6983
      %v6985 = vmul.f32 %v6984, 2.1237322e-06
      %v6986 = vadd.f32 %v6985, 0.00028619796
      %v6987 = vmul.f32 %v6984, %v6986
      %v6988 = vadd.f32 %v6987, 0.0036580483
      %v6989 = vmul.f32 %v6984, %v6988
      %v6990 = vadd.f32 %v6989, 0.05243302
      %v6991 = vmul.f32 %v6984, %v6990
      %v6992 = vadd.f32 %v6991, 0.18741608
      %v6993 = vmul.f32 %v6984, %v6992
      %v6994 = vadd.f32 %v6993, 1.1283791
      %v6995 = vmul.f32 %v6756, %v6994
      %v6996 = vmul.f32 %v6984, 3.8918573e-05
      %v6997 = vadd.f32 %v6996, 0.001143296
      %v6998 = vmul.f32 %v6984, %v6997
      %v6999 = vadd.f32 %v6998, 0.014752088
      %v7000 = vmul.f32 %v6984, %v6999
      %v7001 = vadd.f32 %v7000, 0.112945676
      %v7002 = vmul.f32 %v6984, %v7001
      %v7003 = vadd.f32 %v7002, 0.4994258
      %v7004 = vmul.f32 %v6984, %v7003
      %v7005 = vadd.f32 %v7004, 1.0
      %v7006 = vrcp.pop %v7005
      %v7007 = vmul.f32 %v7005, %v7006
      %v7008 = vsub.f32 1.0, %v7007
      %v7009 = vmul.f32 %v7006, %v7008
      %v7010 = vadd.f32 %v7006, %v7009
      %vm7011 = vweird.f32 %v7005
      %vm7012 = vweird.f32 %v7006
      %vm7013 = vmor %vm7011, %vm7012
      %v7014 = vsel %vm7013, %v7006, %v7010
      %v7015 = vand.u32 2147483647, %v7005
      %vm7016 = vcmp.eq.f32.partialorder %v7015, 8.507059e+37
      %v7017 = vand.u32 %v7005, 2147483648
      %v7018 = vor.u32 1.1754944e-38, %v7017
      %v7019 = vsel %vm7016, %v7018, %v7014
      %v7020 = vmul.f32 %v6995, %v7019
      %v7021 = vmin.f32 %v7020, 1.0
      %v7022 = vmax.f32 %v7021, -1.0
      %v7023 = vmul.f32 %v6757, %v6757
      %v7024 = vmin.f32 16.0, %v7023
      %v7025 = vmul.f32 %v7024, 2.1237322e-06
      %v7026 = vadd.f32 %v7025, 0.00028619796
      %v7027 = vmul.f32 %v7024, %v7026
      %v7028 = vadd.f32 %v7027, 0.0036580483
      %v7029 = vmul.f32 %v7024, %v7028
      %v7030 = vadd.f32 %v7029, 0.05243302
      %v7031 = vmul.f32 %v7024, %v7030
      %v7032 = vadd.f32 %v7031, 0.18741608
      %v7033 = vmul.f32 %v7024, %v7032
      %v7034 = vadd.f32 %v7033, 1.1283791
      %v7035 = vmul.f32 %v6757, %v7034
      %v7036 = vmul.f32 %v7024, 3.8918573e-05
      %v7037 = vadd.f32 %v7036, 0.001143296
      %v7038 = vmul.f32 %v7024, %v7037
      %v7039 = vadd.f32 %v7038, 0.014752088
      %v7040 = vmul.f32 %v7024, %v7039
      %v7041 = vadd.f32 %v7040, 0.112945676
      %v7042 = vmul.f32 %v7024, %v7041
      %v7043 = vadd.f32 %v7042, 0.4994258
      %v7044 = vmul.f32 %v7024, %v7043
      %v7045 = vadd.f32 %v7044, 1.0
      %v7046 = vrcp.pop %v7045
      %v7047 = vmul.f32 %v7045, %v7046
      %v7048 = vsub.f32 1.0, %v7047
      %v7049 = vmul.f32 %v7046, %v7048
      %v7050 = vadd.f32 %v7046, %v7049
      %vm7051 = vweird.f32 %v7045
      %vm7052 = vweird.f32 %v7046
      %vm7053 = vmor %vm7051, %vm7052
      %v7054 = vsel %vm7053, %v7046, %v7050
      %v7055 = vand.u32 2147483647, %v7045
      %vm7056 = vcmp.eq.f32.partialorder %v7055, 8.507059e+37
      %v7057 = vand.u32 %v7045, 2147483648
      %v7058 = vor.u32 1.1754944e-38, %v7057
      %v7059 = vsel %vm7056, %v7058, %v7054
      %v7060 = vmul.f32 %v7035, %v7059
      %v7061 = vmin.f32 %v7060, 1.0
      %v7062 = vmax.f32 %v7061, -1.0
      %v7063 = vmul.f32 %v6758, %v6758
      %v7064 = vmin.f32 16.0, %v7063
      %v7065 = vmul.f32 %v7064, 2.1237322e-06
      %v7066 = vadd.f32 %v7065, 0.00028619796
      %v7067 = vmul.f32 %v7064, %v7066
      %v7068 = vadd.f32 %v7067, 0.0036580483
      %v7069 = vmul.f32 %v7064, %v7068
      %v7070 = vadd.f32 %v7069, 0.05243302
      %v7071 = vmul.f32 %v7064, %v7070
      %v7072 = vadd.f32 %v7071, 0.18741608
      %v7073 = vmul.f32 %v7064, %v7072
      %v7074 = vadd.f32 %v7073, 1.1283791
      %v7075 = vmul.f32 %v6758, %v7074
      %v7076 = vmul.f32 %v7064, 3.8918573e-05
      %v7077 = vadd.f32 %v7076, 0.001143296
      %v7078 = vmul.f32 %v7064, %v7077
      %v7079 = vadd.f32 %v7078, 0.014752088
      %v7080 = vmul.f32 %v7064, %v7079
      %v7081 = vadd.f32 %v7080, 0.112945676
      %v7082 = vmul.f32 %v7064, %v7081
      %v7083 = vadd.f32 %v7082, 0.4994258
      %v7084 = vmul.f32 %v7064, %v7083
      %v7085 = vadd.f32 %v7084, 1.0
      %v7086 = vrcp.pop %v7085
      %v7087 = vmul.f32 %v7085, %v7086
      %v7088 = vsub.f32 1.0, %v7087
      %v7089 = vmul.f32 %v7086, %v7088
      %v7090 = vadd.f32 %v7086, %v7089
      %vm7091 = vweird.f32 %v7085
      %vm7092 = vweird.f32 %v7086
      %vm7093 = vmor %vm7091, %vm7092
      %v7094 = vsel %vm7093, %v7086, %v7090
      %v7095 = vand.u32 2147483647, %v7085
      %vm7096 = vcmp.eq.f32.partialorder %v7095, 8.507059e+37
      %v7097 = vand.u32 %v7085, 2147483648
      %v7098 = vor.u32 1.1754944e-38, %v7097
      %v7099 = vsel %vm7096, %v7098, %v7094
      %v7100 = vmul.f32 %v7075, %v7099
      %v7101 = vmin.f32 %v7100, 1.0
      %v7102 = vmax.f32 %v7101, -1.0
      %v7103 = vmul.f32 %v6759, %v6759
      %v7104 = vmin.f32 16.0, %v7103
      %v7105 = vmul.f32 %v7104, 2.1237322e-06
      %v7106 = vadd.f32 %v7105, 0.00028619796
      %v7107 = vmul.f32 %v7104, %v7106
      %v7108 = vadd.f32 %v7107, 0.0036580483
      %v7109 = vmul.f32 %v7104, %v7108
      %v7110 = vadd.f32 %v7109, 0.05243302
      %v7111 = vmul.f32 %v7104, %v7110
      %v7112 = vadd.f32 %v7111, 0.18741608
      %v7113 = vmul.f32 %v7104, %v7112
      %v7114 = vadd.f32 %v7113, 1.1283791
      %v7115 = vmul.f32 %v6759, %v7114
      %v7116 = vmul.f32 %v7104, 3.8918573e-05
      %v7117 = vadd.f32 %v7116, 0.001143296
      %v7118 = vmul.f32 %v7104, %v7117
      %v7119 = vadd.f32 %v7118, 0.014752088
      %v7120 = vmul.f32 %v7104, %v7119
      %v7121 = vadd.f32 %v7120, 0.112945676
      %v7122 = vmul.f32 %v7104, %v7121
      %v7123 = vadd.f32 %v7122, 0.4994258
      %v7124 = vmul.f32 %v7104, %v7123
      %v7125 = vadd.f32 %v7124, 1.0
      %v7126 = vrcp.pop %v7125
      %v7127 = vmul.f32 %v7125, %v7126
      %v7128 = vsub.f32 1.0, %v7127
      %v7129 = vmul.f32 %v7126, %v7128
      %v7130 = vadd.f32 %v7126, %v7129
      %vm7131 = vweird.f32 %v7125
      %vm7132 = vweird.f32 %v7126
      %vm7133 = vmor %vm7131, %vm7132
      %v7134 = vsel %vm7133, %v7126, %v7130
      %v7135 = vand.u32 2147483647, %v7125
      %vm7136 = vcmp.eq.f32.partialorder %v7135, 8.507059e+37
      %v7137 = vand.u32 %v7125, 2147483648
      %v7138 = vor.u32 1.1754944e-38, %v7137
      %v7139 = vsel %vm7136, %v7138, %v7134
      %v7140 = vmul.f32 %v7115, %v7139
      %v7141 = vmin.f32 %v7140, 1.0
      %v7142 = vmax.f32 %v7141, -1.0
      %v7143 = vmul.f32 %v6760, %v6760
      %v7144 = vmin.f32 16.0, %v7143
      %v7145 = vmul.f32 %v7144, 2.1237322e-06
      %v7146 = vadd.f32 %v7145, 0.00028619796
      %v7147 = vmul.f32 %v7144, %v7146
      %v7148 = vadd.f32 %v7147, 0.0036580483
      %v7149 = vmul.f32 %v7144, %v7148
      %v7150 = vadd.f32 %v7149, 0.05243302
      %v7151 = vmul.f32 %v7144, %v7150
      %v7152 = vadd.f32 %v7151, 0.18741608
      %v7153 = vmul.f32 %v7144, %v7152
      %v7154 = vadd.f32 %v7153, 1.1283791
      %v7155 = vmul.f32 %v6760, %v7154
      %v7156 = vmul.f32 %v7144, 3.8918573e-05
      %v7157 = vadd.f32 %v7156, 0.001143296
      %v7158 = vmul.f32 %v7144, %v7157
      %v7159 = vadd.f32 %v7158, 0.014752088
      %v7160 = vmul.f32 %v7144, %v7159
      %v7161 = vadd.f32 %v7160, 0.112945676
      %v7162 = vmul.f32 %v7144, %v7161
      %v7163 = vadd.f32 %v7162, 0.4994258
      %v7164 = vmul.f32 %v7144, %v7163
      %v7165 = vadd.f32 %v7164, 1.0
      %v7166 = vrcp.pop %v7165
      %v7167 = vmul.f32 %v7165, %v7166
      %v7168 = vsub.f32 1.0, %v7167
      %v7169 = vmul.f32 %v7166, %v7168
      %v7170 = vadd.f32 %v7166, %v7169
      %vm7171 = vweird.f32 %v7165
      %vm7172 = vweird.f32 %v7166
      %vm7173 = vmor %vm7171, %vm7172
      %v7174 = vsel %vm7173, %v7166, %v7170
      %v7175 = vand.u32 2147483647, %v7165
      %vm7176 = vcmp.eq.f32.partialorder %v7175, 8.507059e+37
      %v7177 = vand.u32 %v7165, 2147483648
      %v7178 = vor.u32 1.1754944e-38, %v7177
      %v7179 = vsel %vm7176, %v7178, %v7174
      %v7180 = vmul.f32 %v7155, %v7179
      %v7181 = vmin.f32 %v7180, 1.0
      %v7182 = vmax.f32 %v7181, -1.0
      %v7183 = vmul.f32 %v6761, %v6761
      %v7184 = vmin.f32 16.0, %v7183
      %v7185 = vmul.f32 %v7184, 2.1237322e-06
      %v7186 = vadd.f32 %v7185, 0.00028619796
      %v7187 = vmul.f32 %v7184, %v7186
      %v7188 = vadd.f32 %v7187, 0.0036580483
      %v7189 = vmul.f32 %v7184, %v7188
      %v7190 = vadd.f32 %v7189, 0.05243302
      %v7191 = vmul.f32 %v7184, %v7190
      %v7192 = vadd.f32 %v7191, 0.18741608
      %v7193 = vmul.f32 %v7184, %v7192
      %v7194 = vadd.f32 %v7193, 1.1283791
      %v7195 = vmul.f32 %v6761, %v7194
      %v7196 = vmul.f32 %v7184, 3.8918573e-05
      %v7197 = vadd.f32 %v7196, 0.001143296
      %v7198 = vmul.f32 %v7184, %v7197
      %v7199 = vadd.f32 %v7198, 0.014752088
      %v7200 = vmul.f32 %v7184, %v7199
      %v7201 = vadd.f32 %v7200, 0.112945676
      %v7202 = vmul.f32 %v7184, %v7201
      %v7203 = vadd.f32 %v7202, 0.4994258
      %v7204 = vmul.f32 %v7184, %v7203
      %v7205 = vadd.f32 %v7204, 1.0
      %v7206 = vrcp.pop %v7205
      %v7207 = vmul.f32 %v7205, %v7206
      %v7208 = vsub.f32 1.0, %v7207
      %v7209 = vmul.f32 %v7206, %v7208
      %v7210 = vadd.f32 %v7206, %v7209
      %vm7211 = vweird.f32 %v7205
      %vm7212 = vweird.f32 %v7206
      %vm7213 = vmor %vm7211, %vm7212
      %v7214 = vsel %vm7213, %v7206, %v7210
      %v7215 = vand.u32 2147483647, %v7205
      %vm7216 = vcmp.eq.f32.partialorder %v7215, 8.507059e+37
      %v7217 = vand.u32 %v7205, 2147483648
      %v7218 = vor.u32 1.1754944e-38, %v7217
      %v7219 = vsel %vm7216, %v7218, %v7214
      %v7220 = vmul.f32 %v7195, %v7219
      %v7221 = vmin.f32 %v7220, 1.0
      %v7222 = vmax.f32 %v7221, -1.0
      %v7223 = vmul.f32 %v6762, %v6762
      %v7224 = vmin.f32 16.0, %v7223
      %v7225 = vmul.f32 %v7224, 2.1237322e-06
      %v7226 = vadd.f32 %v7225, 0.00028619796
      %v7227 = vmul.f32 %v7224, %v7226
      %v7228 = vadd.f32 %v7227, 0.0036580483
      %v7229 = vmul.f32 %v7224, %v7228
      %v7230 = vadd.f32 %v7229, 0.05243302
      %v7231 = vmul.f32 %v7224, %v7230
      %v7232 = vadd.f32 %v7231, 0.18741608
      %v7233 = vmul.f32 %v7224, %v7232
      %v7234 = vadd.f32 %v7233, 1.1283791
      %v7235 = vmul.f32 %v6762, %v7234
      %v7236 = vmul.f32 %v7224, 3.8918573e-05
      %v7237 = vadd.f32 %v7236, 0.001143296
      %v7238 = vmul.f32 %v7224, %v7237
      %v7239 = vadd.f32 %v7238, 0.014752088
      %v7240 = vmul.f32 %v7224, %v7239
      %v7241 = vadd.f32 %v7240, 0.112945676
      %v7242 = vmul.f32 %v7224, %v7241
      %v7243 = vadd.f32 %v7242, 0.4994258
      %v7244 = vmul.f32 %v7224, %v7243
      %v7245 = vadd.f32 %v7244, 1.0
      %v7246 = vrcp.pop %v7245
      %v7247 = vmul.f32 %v7245, %v7246
      %v7248 = vsub.f32 1.0, %v7247
      %v7249 = vmul.f32 %v7246, %v7248
      %v7250 = vadd.f32 %v7246, %v7249
      %vm7251 = vweird.f32 %v7245
      %vm7252 = vweird.f32 %v7246
      %vm7253 = vmor %vm7251, %vm7252
      %v7254 = vsel %vm7253, %v7246, %v7250
      %v7255 = vand.u32 2147483647, %v7245
      %vm7256 = vcmp.eq.f32.partialorder %v7255, 8.507059e+37
      %v7257 = vand.u32 %v7245, 2147483648
      %v7258 = vor.u32 1.1754944e-38, %v7257
      %v7259 = vsel %vm7256, %v7258, %v7254
      %v7260 = vmul.f32 %v7235, %v7259
      %v7261 = vmin.f32 %v7260, 1.0
      %v7262 = vmax.f32 %v7261, -1.0
      %v7263 = vmul.f32 %v6763, %v6763
      %v7264 = vmin.f32 16.0, %v7263
      %v7265 = vmul.f32 %v7264, 2.1237322e-06
      %v7266 = vadd.f32 %v7265, 0.00028619796
      %v7267 = vmul.f32 %v7264, %v7266
      %v7268 = vadd.f32 %v7267, 0.0036580483
      %v7269 = vmul.f32 %v7264, %v7268
      %v7270 = vadd.f32 %v7269, 0.05243302
      %v7271 = vmul.f32 %v7264, %v7270
      %v7272 = vadd.f32 %v7271, 0.18741608
      %v7273 = vmul.f32 %v7264, %v7272
      %v7274 = vadd.f32 %v7273, 1.1283791
      %v7275 = vmul.f32 %v6763, %v7274
      %v7276 = vmul.f32 %v7264, 3.8918573e-05
      %v7277 = vadd.f32 %v7276, 0.001143296
      %v7278 = vmul.f32 %v7264, %v7277
      %v7279 = vadd.f32 %v7278, 0.014752088
      %v7280 = vmul.f32 %v7264, %v7279
      %v7281 = vadd.f32 %v7280, 0.112945676
      %v7282 = vmul.f32 %v7264, %v7281
      %v7283 = vadd.f32 %v7282, 0.4994258
      %v7284 = vmul.f32 %v7264, %v7283
      %v7285 = vadd.f32 %v7284, 1.0
      %v7286 = vrcp.pop %v7285
      %v7287 = vmul.f32 %v7285, %v7286
      %v7288 = vsub.f32 1.0, %v7287
      %v7289 = vmul.f32 %v7286, %v7288
      %v7290 = vadd.f32 %v7286, %v7289
      %vm7291 = vweird.f32 %v7285
      %vm7292 = vweird.f32 %v7286
      %vm7293 = vmor %vm7291, %vm7292
      %v7294 = vsel %vm7293, %v7286, %v7290
      %v7295 = vand.u32 2147483647, %v7285
      %vm7296 = vcmp.eq.f32.partialorder %v7295, 8.507059e+37
      %v7297 = vand.u32 %v7285, 2147483648
      %v7298 = vor.u32 1.1754944e-38, %v7297
      %v7299 = vsel %vm7296, %v7298, %v7294
      %v7300 = vmul.f32 %v7275, %v7299
      %v7301 = vmin.f32 %v7300, 1.0
      %v7302 = vmax.f32 %v7301, -1.0
      %v7303 = vmul.f32 %v6764, %v6764
      %v7304 = vmin.f32 16.0, %v7303
      %v7305 = vmul.f32 %v7304, 2.1237322e-06
      %v7306 = vadd.f32 %v7305, 0.00028619796
      %v7307 = vmul.f32 %v7304, %v7306
      %v7308 = vadd.f32 %v7307, 0.0036580483
      %v7309 = vmul.f32 %v7304, %v7308
      %v7310 = vadd.f32 %v7309, 0.05243302
      %v7311 = vmul.f32 %v7304, %v7310
      %v7312 = vadd.f32 %v7311, 0.18741608
      %v7313 = vmul.f32 %v7304, %v7312
      %v7314 = vadd.f32 %v7313, 1.1283791
      %v7315 = vmul.f32 %v6764, %v7314
      %v7316 = vmul.f32 %v7304, 3.8918573e-05
      %v7317 = vadd.f32 %v7316, 0.001143296
      %v7318 = vmul.f32 %v7304, %v7317
      %v7319 = vadd.f32 %v7318, 0.014752088
      %v7320 = vmul.f32 %v7304, %v7319
      %v7321 = vadd.f32 %v7320, 0.112945676
      %v7322 = vmul.f32 %v7304, %v7321
      %v7323 = vadd.f32 %v7322, 0.4994258
      %v7324 = vmul.f32 %v7304, %v7323
      %v7325 = vadd.f32 %v7324, 1.0
      %v7326 = vrcp.pop %v7325
      %v7327 = vmul.f32 %v7325, %v7326
      %v7328 = vsub.f32 1.0, %v7327
      %v7329 = vmul.f32 %v7326, %v7328
      %v7330 = vadd.f32 %v7326, %v7329
      %vm7331 = vweird.f32 %v7325
      %vm7332 = vweird.f32 %v7326
      %vm7333 = vmor %vm7331, %vm7332
      %v7334 = vsel %vm7333, %v7326, %v7330
      %v7335 = vand.u32 2147483647, %v7325
      %vm7336 = vcmp.eq.f32.partialorder %v7335, 8.507059e+37
      %v7337 = vand.u32 %v7325, 2147483648
      %v7338 = vor.u32 1.1754944e-38, %v7337
      %v7339 = vsel %vm7336, %v7338, %v7334
      %v7340 = vmul.f32 %v7315, %v7339
      %v7341 = vmin.f32 %v7340, 1.0
      %v7342 = vmax.f32 %v7341, -1.0
      %v7343 = vmul.f32 %v6765, %v6765
      %v7344 = vmin.f32 16.0, %v7343
      %v7345 = vmul.f32 %v7344, 2.1237322e-06
      %v7346 = vadd.f32 %v7345, 0.00028619796
      %v7347 = vmul.f32 %v7344, %v7346
      %v7348 = vadd.f32 %v7347, 0.0036580483
      %v7349 = vmul.f32 %v7344, %v7348
      %v7350 = vadd.f32 %v7349, 0.05243302
      %v7351 = vmul.f32 %v7344, %v7350
      %v7352 = vadd.f32 %v7351, 0.18741608
      %v7353 = vmul.f32 %v7344, %v7352
      %v7354 = vadd.f32 %v7353, 1.1283791
      %v7355 = vmul.f32 %v6765, %v7354
      %v7356 = vmul.f32 %v7344, 3.8918573e-05
      %v7357 = vadd.f32 %v7356, 0.001143296
      %v7358 = vmul.f32 %v7344, %v7357
      %v7359 = vadd.f32 %v7358, 0.014752088
      %v7360 = vmul.f32 %v7344, %v7359
      %v7361 = vadd.f32 %v7360, 0.112945676
      %v7362 = vmul.f32 %v7344, %v7361
      %v7363 = vadd.f32 %v7362, 0.4994258
      %v7364 = vmul.f32 %v7344, %v7363
      %v7365 = vadd.f32 %v7364, 1.0
      %v7366 = vrcp.pop %v7365
      %v7367 = vmul.f32 %v7365, %v7366
      %v7368 = vsub.f32 1.0, %v7367
      %v7369 = vmul.f32 %v7366, %v7368
      %v7370 = vadd.f32 %v7366, %v7369
      %vm7371 = vweird.f32 %v7365
      %vm7372 = vweird.f32 %v7366
      %vm7373 = vmor %vm7371, %vm7372
      %v7374 = vsel %vm7373, %v7366, %v7370
      %v7375 = vand.u32 2147483647, %v7365
      %vm7376 = vcmp.eq.f32.partialorder %v7375, 8.507059e+37
      %v7377 = vand.u32 %v7365, 2147483648
      %v7378 = vor.u32 1.1754944e-38, %v7377
      %v7379 = vsel %vm7376, %v7378, %v7374
      %v7380 = vmul.f32 %v7355, %v7379
      %v7381 = vmin.f32 %v7380, 1.0
      %v7382 = vmax.f32 %v7381, -1.0
      %v7383 = vmul.f32 %v6766, %v6766
      %v7384 = vmin.f32 16.0, %v7383
      %v7385 = vmul.f32 %v7384, 2.1237322e-06
      %v7386 = vadd.f32 %v7385, 0.00028619796
      %v7387 = vmul.f32 %v7384, %v7386
      %v7388 = vadd.f32 %v7387, 0.0036580483
      %v7389 = vmul.f32 %v7384, %v7388
      %v7390 = vadd.f32 %v7389, 0.05243302
      %v7391 = vmul.f32 %v7384, %v7390
      %v7392 = vadd.f32 %v7391, 0.18741608
      %v7393 = vmul.f32 %v7384, %v7392
      %v7394 = vadd.f32 %v7393, 1.1283791
      %v7395 = vmul.f32 %v6766, %v7394
      %v7396 = vmul.f32 %v7384, 3.8918573e-05
      %v7397 = vadd.f32 %v7396, 0.001143296
      %v7398 = vmul.f32 %v7384, %v7397
      %v7399 = vadd.f32 %v7398, 0.014752088
      %v7400 = vmul.f32 %v7384, %v7399
      %v7401 = vadd.f32 %v7400, 0.112945676
      %v7402 = vmul.f32 %v7384, %v7401
      %v7403 = vadd.f32 %v7402, 0.4994258
      %v7404 = vmul.f32 %v7384, %v7403
      %v7405 = vadd.f32 %v7404, 1.0
      %v7406 = vrcp.pop %v7405
      %v7407 = vmul.f32 %v7405, %v7406
      %v7408 = vsub.f32 1.0, %v7407
      %v7409 = vmul.f32 %v7406, %v7408
      %v7410 = vadd.f32 %v7406, %v7409
      %vm7411 = vweird.f32 %v7405
      %vm7412 = vweird.f32 %v7406
      %vm7413 = vmor %vm7411, %vm7412
      %v7414 = vsel %vm7413, %v7406, %v7410
      %v7415 = vand.u32 2147483647, %v7405
      %vm7416 = vcmp.eq.f32.partialorder %v7415, 8.507059e+37
      %v7417 = vand.u32 %v7405, 2147483648
      %v7418 = vor.u32 1.1754944e-38, %v7417
      %v7419 = vsel %vm7416, %v7418, %v7414
      %v7420 = vmul.f32 %v7395, %v7419
      %v7421 = vmin.f32 %v7420, 1.0
      %v7422 = vmax.f32 %v7421, -1.0
      %v7423 = vmul.f32 %v6767, %v6767
      %v7424 = vmin.f32 16.0, %v7423
      %v7425 = vmul.f32 %v7424, 2.1237322e-06
      %v7426 = vadd.f32 %v7425, 0.00028619796
      %v7427 = vmul.f32 %v7424, %v7426
      %v7428 = vadd.f32 %v7427, 0.0036580483
      %v7429 = vmul.f32 %v7424, %v7428
      %v7430 = vadd.f32 %v7429, 0.05243302
      %v7431 = vmul.f32 %v7424, %v7430
      %v7432 = vadd.f32 %v7431, 0.18741608
      %v7433 = vmul.f32 %v7424, %v7432
      %v7434 = vadd.f32 %v7433, 1.1283791
      %v7435 = vmul.f32 %v6767, %v7434
      %v7436 = vmul.f32 %v7424, 3.8918573e-05
      %v7437 = vadd.f32 %v7436, 0.001143296
      %v7438 = vmul.f32 %v7424, %v7437
      %v7439 = vadd.f32 %v7438, 0.014752088
      %v7440 = vmul.f32 %v7424, %v7439
      %v7441 = vadd.f32 %v7440, 0.112945676
      %v7442 = vmul.f32 %v7424, %v7441
      %v7443 = vadd.f32 %v7442, 0.4994258
      %v7444 = vmul.f32 %v7424, %v7443
      %v7445 = vadd.f32 %v7444, 1.0
      %v7446 = vrcp.pop %v7445
      %v7447 = vmul.f32 %v7445, %v7446
      %v7448 = vsub.f32 1.0, %v7447
      %v7449 = vmul.f32 %v7446, %v7448
      %v7450 = vadd.f32 %v7446, %v7449
      %vm7451 = vweird.f32 %v7445
      %vm7452 = vweird.f32 %v7446
      %vm7453 = vmor %vm7451, %vm7452
      %v7454 = vsel %vm7453, %v7446, %v7450
      %v7455 = vand.u32 2147483647, %v7445
      %vm7456 = vcmp.eq.f32.partialorder %v7455, 8.507059e+37
      %v7457 = vand.u32 %v7445, 2147483648
      %v7458 = vor.u32 1.1754944e-38, %v7457
      %v7459 = vsel %vm7456, %v7458, %v7454
      %v7460 = vmul.f32 %v7435, %v7459
      %v7461 = vmin.f32 %v7460, 1.0
      %v7462 = vmax.f32 %v7461, -1.0
      %v7463 = vmul.f32 %v6768, %v6768
      %v7464 = vmin.f32 16.0, %v7463
      %v7465 = vmul.f32 %v7464, 2.1237322e-06
      %v7466 = vadd.f32 %v7465, 0.00028619796
      %v7467 = vmul.f32 %v7464, %v7466
      %v7468 = vadd.f32 %v7467, 0.0036580483
      %v7469 = vmul.f32 %v7464, %v7468
      %v7470 = vadd.f32 %v7469, 0.05243302
      %v7471 = vmul.f32 %v7464, %v7470
      %v7472 = vadd.f32 %v7471, 0.18741608
      %v7473 = vmul.f32 %v7464, %v7472
      %v7474 = vadd.f32 %v7473, 1.1283791
      %v7475 = vmul.f32 %v6768, %v7474
      %v7476 = vmul.f32 %v7464, 3.8918573e-05
      %v7477 = vadd.f32 %v7476, 0.001143296
      %v7478 = vmul.f32 %v7464, %v7477
      %v7479 = vadd.f32 %v7478, 0.014752088
      %v7480 = vmul.f32 %v7464, %v7479
      %v7481 = vadd.f32 %v7480, 0.112945676
      %v7482 = vmul.f32 %v7464, %v7481
      %v7483 = vadd.f32 %v7482, 0.4994258
      %v7484 = vmul.f32 %v7464, %v7483
      %v7485 = vadd.f32 %v7484, 1.0
      %v7486 = vrcp.pop %v7485
      %v7487 = vmul.f32 %v7485, %v7486
      %v7488 = vsub.f32 1.0, %v7487
      %v7489 = vmul.f32 %v7486, %v7488
      %v7490 = vadd.f32 %v7486, %v7489
      %vm7491 = vweird.f32 %v7485
      %vm7492 = vweird.f32 %v7486
      %vm7493 = vmor %vm7491, %vm7492
      %v7494 = vsel %vm7493, %v7486, %v7490
      %v7495 = vand.u32 2147483647, %v7485
      %vm7496 = vcmp.eq.f32.partialorder %v7495, 8.507059e+37
      %v7497 = vand.u32 %v7485, 2147483648
      %v7498 = vor.u32 1.1754944e-38, %v7497
      %v7499 = vsel %vm7496, %v7498, %v7494
      %v7500 = vmul.f32 %v7475, %v7499
      %v7501 = vmin.f32 %v7500, 1.0
      %v7502 = vmax.f32 %v7501, -1.0
      %v7503 = vmul.f32 %v6769, %v6769
      %v7504 = vmin.f32 16.0, %v7503
      %v7505 = vmul.f32 %v7504, 2.1237322e-06
      %v7506 = vadd.f32 %v7505, 0.00028619796
      %v7507 = vmul.f32 %v7504, %v7506
      %v7508 = vadd.f32 %v7507, 0.0036580483
      %v7509 = vmul.f32 %v7504, %v7508
      %v7510 = vadd.f32 %v7509, 0.05243302
      %v7511 = vmul.f32 %v7504, %v7510
      %v7512 = vadd.f32 %v7511, 0.18741608
      %v7513 = vmul.f32 %v7504, %v7512
      %v7514 = vadd.f32 %v7513, 1.1283791
      %v7515 = vmul.f32 %v6769, %v7514
      %v7516 = vmul.f32 %v7504, 3.8918573e-05
      %v7517 = vadd.f32 %v7516, 0.001143296
      %v7518 = vmul.f32 %v7504, %v7517
      %v7519 = vadd.f32 %v7518, 0.014752088
      %v7520 = vmul.f32 %v7504, %v7519
      %v7521 = vadd.f32 %v7520, 0.112945676
      %v7522 = vmul.f32 %v7504, %v7521
      %v7523 = vadd.f32 %v7522, 0.4994258
      %v7524 = vmul.f32 %v7504, %v7523
      %v7525 = vadd.f32 %v7524, 1.0
      %v7526 = vrcp.pop %v7525
      %v7527 = vmul.f32 %v7525, %v7526
      %v7528 = vsub.f32 1.0, %v7527
      %v7529 = vmul.f32 %v7526, %v7528
      %v7530 = vadd.f32 %v7526, %v7529
      %vm7531 = vweird.f32 %v7525
      %vm7532 = vweird.f32 %v7526
      %vm7533 = vmor %vm7531, %vm7532
      %v7534 = vsel %vm7533, %v7526, %v7530
      %v7535 = vand.u32 2147483647, %v7525
      %vm7536 = vcmp.eq.f32.partialorder %v7535, 8.507059e+37
      %v7537 = vand.u32 %v7525, 2147483648
      %v7538 = vor.u32 1.1754944e-38, %v7537
      %v7539 = vsel %vm7536, %v7538, %v7534
      %v7540 = vmul.f32 %v7515, %v7539
      %v7541 = vmin.f32 %v7540, 1.0
      %v7542 = vmax.f32 %v7541, -1.0
      %v7543 = vmul.f32 %v6770, %v6770
      %v7544 = vmin.f32 16.0, %v7543
      %v7545 = vmul.f32 %v7544, 2.1237322e-06
      %v7546 = vadd.f32 %v7545, 0.00028619796
      %v7547 = vmul.f32 %v7544, %v7546
      %v7548 = vadd.f32 %v7547, 0.0036580483
      %v7549 = vmul.f32 %v7544, %v7548
      %v7550 = vadd.f32 %v7549, 0.05243302
      %v7551 = vmul.f32 %v7544, %v7550
      %v7552 = vadd.f32 %v7551, 0.18741608
      %v7553 = vmul.f32 %v7544, %v7552
      %v7554 = vadd.f32 %v7553, 1.1283791
      %v7555 = vmul.f32 %v6770, %v7554
      %v7556 = vmul.f32 %v7544, 3.8918573e-05
      %v7557 = vadd.f32 %v7556, 0.001143296
      %v7558 = vmul.f32 %v7544, %v7557
      %v7559 = vadd.f32 %v7558, 0.014752088
      %v7560 = vmul.f32 %v7544, %v7559
      %v7561 = vadd.f32 %v7560, 0.112945676
      %v7562 = vmul.f32 %v7544, %v7561
      %v7563 = vadd.f32 %v7562, 0.4994258
      %v7564 = vmul.f32 %v7544, %v7563
      %v7565 = vadd.f32 %v7564, 1.0
      %v7566 = vrcp.pop %v7565
      %v7567 = vmul.f32 %v7565, %v7566
      %v7568 = vsub.f32 1.0, %v7567
      %v7569 = vmul.f32 %v7566, %v7568
      %v7570 = vadd.f32 %v7566, %v7569
      %vm7571 = vweird.f32 %v7565
      %vm7572 = vweird.f32 %v7566
      %vm7573 = vmor %vm7571, %vm7572
      %v7574 = vsel %vm7573, %v7566, %v7570
      %v7575 = vand.u32 2147483647, %v7565
      %vm7576 = vcmp.eq.f32.partialorder %v7575, 8.507059e+37
      %v7577 = vand.u32 %v7565, 2147483648
      %v7578 = vor.u32 1.1754944e-38, %v7577
      %v7579 = vsel %vm7576, %v7578, %v7574
      %v7580 = vmul.f32 %v7555, %v7579
      %v7581 = vmin.f32 %v7580, 1.0
      %v7582 = vmax.f32 %v7581, -1.0
      %v7583 = vmul.f32 %v6771, %v6771
      %v7584 = vmin.f32 16.0, %v7583
      %v7585 = vmul.f32 %v7584, 2.1237322e-06
      %v7586 = vadd.f32 %v7585, 0.00028619796
      %v7587 = vmul.f32 %v7584, %v7586
      %v7588 = vadd.f32 %v7587, 0.0036580483
      %v7589 = vmul.f32 %v7584, %v7588
      %v7590 = vadd.f32 %v7589, 0.05243302
      %v7591 = vmul.f32 %v7584, %v7590
      %v7592 = vadd.f32 %v7591, 0.18741608
      %v7593 = vmul.f32 %v7584, %v7592
      %v7594 = vadd.f32 %v7593, 1.1283791
      %v7595 = vmul.f32 %v6771, %v7594
      %v7596 = vmul.f32 %v7584, 3.8918573e-05
      %v7597 = vadd.f32 %v7596, 0.001143296
      %v7598 = vmul.f32 %v7584, %v7597
      %v7599 = vadd.f32 %v7598, 0.014752088
      %v7600 = vmul.f32 %v7584, %v7599
      %v7601 = vadd.f32 %v7600, 0.112945676
      %v7602 = vmul.f32 %v7584, %v7601
      %v7603 = vadd.f32 %v7602, 0.4994258
      %v7604 = vmul.f32 %v7584, %v7603
      %v7605 = vadd.f32 %v7604, 1.0
      %v7606 = vrcp.pop %v7605
      %v7607 = vmul.f32 %v7605, %v7606
      %v7608 = vsub.f32 1.0, %v7607
      %v7609 = vmul.f32 %v7606, %v7608
      %v7610 = vadd.f32 %v7606, %v7609
      %vm7611 = vweird.f32 %v7605
      %vm7612 = vweird.f32 %v7606
      %vm7613 = vmor %vm7611, %vm7612
      %v7614 = vsel %vm7613, %v7606, %v7610
      %v7615 = vand.u32 2147483647, %v7605
      %vm7616 = vcmp.eq.f32.partialorder %v7615, 8.507059e+37
      %v7617 = vand.u32 %v7605, 2147483648
      %v7618 = vor.u32 1.1754944e-38, %v7617
      %v7619 = vsel %vm7616, %v7618, %v7614
      %v7620 = vmul.f32 %v7595, %v7619
      %v7621 = vmin.f32 %v7620, 1.0
      %v7622 = vmax.f32 %v7621, -1.0
      %v7623 = vmul.f32 %v6772, %v6772
      %v7624 = vmin.f32 16.0, %v7623
      %v7625 = vmul.f32 %v7624, 2.1237322e-06
      %v7626 = vadd.f32 %v7625, 0.00028619796
      %v7627 = vmul.f32 %v7624, %v7626
      %v7628 = vadd.f32 %v7627, 0.0036580483
      %v7629 = vmul.f32 %v7624, %v7628
      %v7630 = vadd.f32 %v7629, 0.05243302
      %v7631 = vmul.f32 %v7624, %v7630
      %v7632 = vadd.f32 %v7631, 0.18741608
      %v7633 = vmul.f32 %v7624, %v7632
      %v7634 = vadd.f32 %v7633, 1.1283791
      %v7635 = vmul.f32 %v6772, %v7634
      %v7636 = vmul.f32 %v7624, 3.8918573e-05
      %v7637 = vadd.f32 %v7636, 0.001143296
      %v7638 = vmul.f32 %v7624, %v7637
      %v7639 = vadd.f32 %v7638, 0.014752088
      %v7640 = vmul.f32 %v7624, %v7639
      %v7641 = vadd.f32 %v7640, 0.112945676
      %v7642 = vmul.f32 %v7624, %v7641
      %v7643 = vadd.f32 %v7642, 0.4994258
      %v7644 = vmul.f32 %v7624, %v7643
      %v7645 = vadd.f32 %v7644, 1.0
      %v7646 = vrcp.pop %v7645
      %v7647 = vmul.f32 %v7645, %v7646
      %v7648 = vsub.f32 1.0, %v7647
      %v7649 = vmul.f32 %v7646, %v7648
      %v7650 = vadd.f32 %v7646, %v7649
      %vm7651 = vweird.f32 %v7645
      %vm7652 = vweird.f32 %v7646
      %vm7653 = vmor %vm7651, %vm7652
      %v7654 = vsel %vm7653, %v7646, %v7650
      %v7655 = vand.u32 2147483647, %v7645
      %vm7656 = vcmp.eq.f32.partialorder %v7655, 8.507059e+37
      %v7657 = vand.u32 %v7645, 2147483648
      %v7658 = vor.u32 1.1754944e-38, %v7657
      %v7659 = vsel %vm7656, %v7658, %v7654
      %v7660 = vmul.f32 %v7635, %v7659
      %v7661 = vmin.f32 %v7660, 1.0
      %v7662 = vmax.f32 %v7661, -1.0
      %v7663 = vmul.f32 %v6773, %v6773
      %v7664 = vmin.f32 16.0, %v7663
      %v7665 = vmul.f32 %v7664, 2.1237322e-06
      %v7666 = vadd.f32 %v7665, 0.00028619796
      %v7667 = vmul.f32 %v7664, %v7666
      %v7668 = vadd.f32 %v7667, 0.0036580483
      %v7669 = vmul.f32 %v7664, %v7668
      %v7670 = vadd.f32 %v7669, 0.05243302
      %v7671 = vmul.f32 %v7664, %v7670
      %v7672 = vadd.f32 %v7671, 0.18741608
      %v7673 = vmul.f32 %v7664, %v7672
      %v7674 = vadd.f32 %v7673, 1.1283791
      %v7675 = vmul.f32 %v6773, %v7674
      %v7676 = vmul.f32 %v7664, 3.8918573e-05
      %v7677 = vadd.f32 %v7676, 0.001143296
      %v7678 = vmul.f32 %v7664, %v7677
      %v7679 = vadd.f32 %v7678, 0.014752088
      %v7680 = vmul.f32 %v7664, %v7679
      %v7681 = vadd.f32 %v7680, 0.112945676
      %v7682 = vmul.f32 %v7664, %v7681
      %v7683 = vadd.f32 %v7682, 0.4994258
      %v7684 = vmul.f32 %v7664, %v7683
      %v7685 = vadd.f32 %v7684, 1.0
      %v7686 = vrcp.pop %v7685
      %v7687 = vmul.f32 %v7685, %v7686
      %v7688 = vsub.f32 1.0, %v7687
      %v7689 = vmul.f32 %v7686, %v7688
      %v7690 = vadd.f32 %v7686, %v7689
      %vm7691 = vweird.f32 %v7685
      %vm7692 = vweird.f32 %v7686
      %vm7693 = vmor %vm7691, %vm7692
      %v7694 = vsel %vm7693, %v7686, %v7690
      %v7695 = vand.u32 2147483647, %v7685
      %vm7696 = vcmp.eq.f32.partialorder %v7695, 8.507059e+37
      %v7697 = vand.u32 %v7685, 2147483648
      %v7698 = vor.u32 1.1754944e-38, %v7697
      %v7699 = vsel %vm7696, %v7698, %v7694
      %v7700 = vmul.f32 %v7675, %v7699
      %v7701 = vmin.f32 %v7700, 1.0
      %v7702 = vmax.f32 %v7701, -1.0
      %v7703 = vmul.f32 %v6774, %v6774
      %v7704 = vmin.f32 16.0, %v7703
      %v7705 = vmul.f32 %v7704, 2.1237322e-06
      %v7706 = vadd.f32 %v7705, 0.00028619796
      %v7707 = vmul.f32 %v7704, %v7706
      %v7708 = vadd.f32 %v7707, 0.0036580483
      %v7709 = vmul.f32 %v7704, %v7708
      %v7710 = vadd.f32 %v7709, 0.05243302
      %v7711 = vmul.f32 %v7704, %v7710
      %v7712 = vadd.f32 %v7711, 0.18741608
      %v7713 = vmul.f32 %v7704, %v7712
      %v7714 = vadd.f32 %v7713, 1.1283791
      %v7715 = vmul.f32 %v6774, %v7714
      %v7716 = vmul.f32 %v7704, 3.8918573e-05
      %v7717 = vadd.f32 %v7716, 0.001143296
      %v7718 = vmul.f32 %v7704, %v7717
      %v7719 = vadd.f32 %v7718, 0.014752088
      %v7720 = vmul.f32 %v7704, %v7719
      %v7721 = vadd.f32 %v7720, 0.112945676
      %v7722 = vmul.f32 %v7704, %v7721
      %v7723 = vadd.f32 %v7722, 0.4994258
      %v7724 = vmul.f32 %v7704, %v7723
      %v7725 = vadd.f32 %v7724, 1.0
      %v7726 = vrcp.pop %v7725
      %v7727 = vmul.f32 %v7725, %v7726
      %v7728 = vsub.f32 1.0, %v7727
      %v7729 = vmul.f32 %v7726, %v7728
      %v7730 = vadd.f32 %v7726, %v7729
      %vm7731 = vweird.f32 %v7725
      %vm7732 = vweird.f32 %v7726
      %vm7733 = vmor %vm7731, %vm7732
      %v7734 = vsel %vm7733, %v7726, %v7730
      %v7735 = vand.u32 2147483647, %v7725
      %vm7736 = vcmp.eq.f32.partialorder %v7735, 8.507059e+37
      %v7737 = vand.u32 %v7725, 2147483648
      %v7738 = vor.u32 1.1754944e-38, %v7737
      %v7739 = vsel %vm7736, %v7738, %v7734
      %v7740 = vmul.f32 %v7715, %v7739
      %v7741 = vmin.f32 %v7740, 1.0
      %v7742 = vmax.f32 %v7741, -1.0
      %v7743 = vmul.f32 %v6775, %v6775
      %v7744 = vmin.f32 16.0, %v7743
      %v7745 = vmul.f32 %v7744, 2.1237322e-06
      %v7746 = vadd.f32 %v7745, 0.00028619796
      %v7747 = vmul.f32 %v7744, %v7746
      %v7748 = vadd.f32 %v7747, 0.0036580483
      %v7749 = vmul.f32 %v7744, %v7748
      %v7750 = vadd.f32 %v7749, 0.05243302
      %v7751 = vmul.f32 %v7744, %v7750
      %v7752 = vadd.f32 %v7751, 0.18741608
      %v7753 = vmul.f32 %v7744, %v7752
      %v7754 = vadd.f32 %v7753, 1.1283791
      %v7755 = vmul.f32 %v6775, %v7754
      %v7756 = vmul.f32 %v7744, 3.8918573e-05
      %v7757 = vadd.f32 %v7756, 0.001143296
      %v7758 = vmul.f32 %v7744, %v7757
      %v7759 = vadd.f32 %v7758, 0.014752088
      %v7760 = vmul.f32 %v7744, %v7759
      %v7761 = vadd.f32 %v7760, 0.112945676
      %v7762 = vmul.f32 %v7744, %v7761
      %v7763 = vadd.f32 %v7762, 0.4994258
      %v7764 = vmul.f32 %v7744, %v7763
      %v7765 = vadd.f32 %v7764, 1.0
      %v7766 = vrcp.pop %v7765
      %v7767 = vmul.f32 %v7765, %v7766
      %v7768 = vsub.f32 1.0, %v7767
      %v7769 = vmul.f32 %v7766, %v7768
      %v7770 = vadd.f32 %v7766, %v7769
      %vm7771 = vweird.f32 %v7765
      %vm7772 = vweird.f32 %v7766
      %vm7773 = vmor %vm7771, %vm7772
      %v7774 = vsel %vm7773, %v7766, %v7770
      %v7775 = vand.u32 2147483647, %v7765
      %vm7776 = vcmp.eq.f32.partialorder %v7775, 8.507059e+37
      %v7777 = vand.u32 %v7765, 2147483648
      %v7778 = vor.u32 1.1754944e-38, %v7777
      %v7779 = vsel %vm7776, %v7778, %v7774
      %v7780 = vmul.f32 %v7755, %v7779
      %v7781 = vmin.f32 %v7780, 1.0
      %v7782 = vmax.f32 %v7781, -1.0
      %v7783 = vmul.f32 %v6776, %v6776
      %v7784 = vmin.f32 16.0, %v7783
      %v7785 = vmul.f32 %v7784, 2.1237322e-06
      %v7786 = vadd.f32 %v7785, 0.00028619796
      %v7787 = vmul.f32 %v7784, %v7786
      %v7788 = vadd.f32 %v7787, 0.0036580483
      %v7789 = vmul.f32 %v7784, %v7788
      %v7790 = vadd.f32 %v7789, 0.05243302
      %v7791 = vmul.f32 %v7784, %v7790
      %v7792 = vadd.f32 %v7791, 0.18741608
      %v7793 = vmul.f32 %v7784, %v7792
      %v7794 = vadd.f32 %v7793, 1.1283791
      %v7795 = vmul.f32 %v6776, %v7794
      %v7796 = vmul.f32 %v7784, 3.8918573e-05
      %v7797 = vadd.f32 %v7796, 0.001143296
      %v7798 = vmul.f32 %v7784, %v7797
      %v7799 = vadd.f32 %v7798, 0.014752088
      %v7800 = vmul.f32 %v7784, %v7799
      %v7801 = vadd.f32 %v7800, 0.112945676
      %v7802 = vmul.f32 %v7784, %v7801
      %v7803 = vadd.f32 %v7802, 0.4994258
      %v7804 = vmul.f32 %v7784, %v7803
      %v7805 = vadd.f32 %v7804, 1.0
      %v7806 = vrcp.pop %v7805
      %v7807 = vmul.f32 %v7805, %v7806
      %v7808 = vsub.f32 1.0, %v7807
      %v7809 = vmul.f32 %v7806, %v7808
      %v7810 = vadd.f32 %v7806, %v7809
      %vm7811 = vweird.f32 %v7805
      %vm7812 = vweird.f32 %v7806
      %vm7813 = vmor %vm7811, %vm7812
      %v7814 = vsel %vm7813, %v7806, %v7810
      %v7815 = vand.u32 2147483647, %v7805
      %vm7816 = vcmp.eq.f32.partialorder %v7815, 8.507059e+37
      %v7817 = vand.u32 %v7805, 2147483648
      %v7818 = vor.u32 1.1754944e-38, %v7817
      %v7819 = vsel %vm7816, %v7818, %v7814
      %v7820 = vmul.f32 %v7795, %v7819
      %v7821 = vmin.f32 %v7820, 1.0
      %v7822 = vmax.f32 %v7821, -1.0
      %v7823 = vmul.f32 %v6777, %v6777
      %v7824 = vmin.f32 16.0, %v7823
      %v7825 = vmul.f32 %v7824, 2.1237322e-06
      %v7826 = vadd.f32 %v7825, 0.00028619796
      %v7827 = vmul.f32 %v7824, %v7826
      %v7828 = vadd.f32 %v7827, 0.0036580483
      %v7829 = vmul.f32 %v7824, %v7828
      %v7830 = vadd.f32 %v7829, 0.05243302
      %v7831 = vmul.f32 %v7824, %v7830
      %v7832 = vadd.f32 %v7831, 0.18741608
      %v7833 = vmul.f32 %v7824, %v7832
      %v7834 = vadd.f32 %v7833, 1.1283791
      %v7835 = vmul.f32 %v6777, %v7834
      %v7836 = vmul.f32 %v7824, 3.8918573e-05
      %v7837 = vadd.f32 %v7836, 0.001143296
      %v7838 = vmul.f32 %v7824, %v7837
      %v7839 = vadd.f32 %v7838, 0.014752088
      %v7840 = vmul.f32 %v7824, %v7839
      %v7841 = vadd.f32 %v7840, 0.112945676
      %v7842 = vmul.f32 %v7824, %v7841
      %v7843 = vadd.f32 %v7842, 0.4994258
      %v7844 = vmul.f32 %v7824, %v7843
      %v7845 = vadd.f32 %v7844, 1.0
      %v7846 = vrcp.pop %v7845
      %v7847 = vmul.f32 %v7845, %v7846
      %v7848 = vsub.f32 1.0, %v7847
      %v7849 = vmul.f32 %v7846, %v7848
      %v7850 = vadd.f32 %v7846, %v7849
      %vm7851 = vweird.f32 %v7845
      %vm7852 = vweird.f32 %v7846
      %vm7853 = vmor %vm7851, %vm7852
      %v7854 = vsel %vm7853, %v7846, %v7850
      %v7855 = vand.u32 2147483647, %v7845
      %vm7856 = vcmp.eq.f32.partialorder %v7855, 8.507059e+37
      %v7857 = vand.u32 %v7845, 2147483648
      %v7858 = vor.u32 1.1754944e-38, %v7857
      %v7859 = vsel %vm7856, %v7858, %v7854
      %v7860 = vmul.f32 %v7835, %v7859
      %v7861 = vmin.f32 %v7860, 1.0
      %v7862 = vmax.f32 %v7861, -1.0
      %v7863 = vmul.f32 %v6778, %v6778
      %v7864 = vmin.f32 16.0, %v7863
      %v7865 = vmul.f32 %v7864, 2.1237322e-06
      %v7866 = vadd.f32 %v7865, 0.00028619796
      %v7867 = vmul.f32 %v7864, %v7866
      %v7868 = vadd.f32 %v7867, 0.0036580483
      %v7869 = vmul.f32 %v7864, %v7868
      %v7870 = vadd.f32 %v7869, 0.05243302
      %v7871 = vmul.f32 %v7864, %v7870
      %v7872 = vadd.f32 %v7871, 0.18741608
      %v7873 = vmul.f32 %v7864, %v7872
      %v7874 = vadd.f32 %v7873, 1.1283791
      %v7875 = vmul.f32 %v6778, %v7874
      %v7876 = vmul.f32 %v7864, 3.8918573e-05
      %v7877 = vadd.f32 %v7876, 0.001143296
      %v7878 = vmul.f32 %v7864, %v7877
      %v7879 = vadd.f32 %v7878, 0.014752088
      %v7880 = vmul.f32 %v7864, %v7879
      %v7881 = vadd.f32 %v7880, 0.112945676
      %v7882 = vmul.f32 %v7864, %v7881
      %v7883 = vadd.f32 %v7882, 0.4994258
      %v7884 = vmul.f32 %v7864, %v7883
      %v7885 = vadd.f32 %v7884, 1.0
      %v7886 = vrcp.pop %v7885
      %v7887 = vmul.f32 %v7885, %v7886
      %v7888 = vsub.f32 1.0, %v7887
      %v7889 = vmul.f32 %v7886, %v7888
      %v7890 = vadd.f32 %v7886, %v7889
      %vm7891 = vweird.f32 %v7885
      %vm7892 = vweird.f32 %v7886
      %vm7893 = vmor %vm7891, %vm7892
      %v7894 = vsel %vm7893, %v7886, %v7890
      %v7895 = vand.u32 2147483647, %v7885
      %vm7896 = vcmp.eq.f32.partialorder %v7895, 8.507059e+37
      %v7897 = vand.u32 %v7885, 2147483648
      %v7898 = vor.u32 1.1754944e-38, %v7897
      %v7899 = vsel %vm7896, %v7898, %v7894
      %v7900 = vmul.f32 %v7875, %v7899
      %v7901 = vmin.f32 %v7900, 1.0
      %v7902 = vmax.f32 %v7901, -1.0
      %v7903 = vmul.f32 %v6779, %v6779
      %v7904 = vmin.f32 16.0, %v7903
      %v7905 = vmul.f32 %v7904, 2.1237322e-06
      %v7906 = vadd.f32 %v7905, 0.00028619796
      %v7907 = vmul.f32 %v7904, %v7906
      %v7908 = vadd.f32 %v7907, 0.0036580483
      %v7909 = vmul.f32 %v7904, %v7908
      %v7910 = vadd.f32 %v7909, 0.05243302
      %v7911 = vmul.f32 %v7904, %v7910
      %v7912 = vadd.f32 %v7911, 0.18741608
      %v7913 = vmul.f32 %v7904, %v7912
      %v7914 = vadd.f32 %v7913, 1.1283791
      %v7915 = vmul.f32 %v6779, %v7914
      %v7916 = vmul.f32 %v7904, 3.8918573e-05
      %v7917 = vadd.f32 %v7916, 0.001143296
      %v7918 = vmul.f32 %v7904, %v7917
      %v7919 = vadd.f32 %v7918, 0.014752088
      %v7920 = vmul.f32 %v7904, %v7919
      %v7921 = vadd.f32 %v7920, 0.112945676
      %v7922 = vmul.f32 %v7904, %v7921
      %v7923 = vadd.f32 %v7922, 0.4994258
      %v7924 = vmul.f32 %v7904, %v7923
      %v7925 = vadd.f32 %v7924, 1.0
      %v7926 = vrcp.pop %v7925
      %v7927 = vmul.f32 %v7925, %v7926
      %v7928 = vsub.f32 1.0, %v7927
      %v7929 = vmul.f32 %v7926, %v7928
      %v7930 = vadd.f32 %v7926, %v7929
      %vm7931 = vweird.f32 %v7925
      %vm7932 = vweird.f32 %v7926
      %vm7933 = vmor %vm7931, %vm7932
      %v7934 = vsel %vm7933, %v7926, %v7930
      %v7935 = vand.u32 2147483647, %v7925
      %vm7936 = vcmp.eq.f32.partialorder %v7935, 8.507059e+37
      %v7937 = vand.u32 %v7925, 2147483648
      %v7938 = vor.u32 1.1754944e-38, %v7937
      %v7939 = vsel %vm7936, %v7938, %v7934
      %v7940 = vmul.f32 %v7915, %v7939
      %v7941 = vmin.f32 %v7940, 1.0
      %v7942 = vmax.f32 %v7941, -1.0
      %v7943 = vmul.f32 %v6780, %v6780
      %v7944 = vmin.f32 16.0, %v7943
      %v7945 = vmul.f32 %v7944, 2.1237322e-06
      %v7946 = vadd.f32 %v7945, 0.00028619796
      %v7947 = vmul.f32 %v7944, %v7946
      %v7948 = vadd.f32 %v7947, 0.0036580483
      %v7949 = vmul.f32 %v7944, %v7948
      %v7950 = vadd.f32 %v7949, 0.05243302
      %v7951 = vmul.f32 %v7944, %v7950
      %v7952 = vadd.f32 %v7951, 0.18741608
      %v7953 = vmul.f32 %v7944, %v7952
      %v7954 = vadd.f32 %v7953, 1.1283791
      %v7955 = vmul.f32 %v6780, %v7954
      %v7956 = vmul.f32 %v7944, 3.8918573e-05
      %v7957 = vadd.f32 %v7956, 0.001143296
      %v7958 = vmul.f32 %v7944, %v7957
      %v7959 = vadd.f32 %v7958, 0.014752088
      %v7960 = vmul.f32 %v7944, %v7959
      %v7961 = vadd.f32 %v7960, 0.112945676
      %v7962 = vmul.f32 %v7944, %v7961
      %v7963 = vadd.f32 %v7962, 0.4994258
      %v7964 = vmul.f32 %v7944, %v7963
      %v7965 = vadd.f32 %v7964, 1.0
      %v7966 = vrcp.pop %v7965
      %v7967 = vmul.f32 %v7965, %v7966
      %v7968 = vsub.f32 1.0, %v7967
      %v7969 = vmul.f32 %v7966, %v7968
      %v7970 = vadd.f32 %v7966, %v7969
      %vm7971 = vweird.f32 %v7965
      %vm7972 = vweird.f32 %v7966
      %vm7973 = vmor %vm7971, %vm7972
      %v7974 = vsel %vm7973, %v7966, %v7970
      %v7975 = vand.u32 2147483647, %v7965
      %vm7976 = vcmp.eq.f32.partialorder %v7975, 8.507059e+37
      %v7977 = vand.u32 %v7965, 2147483648
      %v7978 = vor.u32 1.1754944e-38, %v7977
      %v7979 = vsel %vm7976, %v7978, %v7974
      %v7980 = vmul.f32 %v7955, %v7979
      %v7981 = vmin.f32 %v7980, 1.0
      %v7982 = vmax.f32 %v7981, -1.0
      %v7983 = vmul.f32 %v6781, %v6781
      %v7984 = vmin.f32 16.0, %v7983
      %v7985 = vmul.f32 %v7984, 2.1237322e-06
      %v7986 = vadd.f32 %v7985, 0.00028619796
      %v7987 = vmul.f32 %v7984, %v7986
      %v7988 = vadd.f32 %v7987, 0.0036580483
      %v7989 = vmul.f32 %v7984, %v7988
      %v7990 = vadd.f32 %v7989, 0.05243302
      %v7991 = vmul.f32 %v7984, %v7990
      %v7992 = vadd.f32 %v7991, 0.18741608
      %v7993 = vmul.f32 %v7984, %v7992
      %v7994 = vadd.f32 %v7993, 1.1283791
      %v7995 = vmul.f32 %v6781, %v7994
      %v7996 = vmul.f32 %v7984, 3.8918573e-05
      %v7997 = vadd.f32 %v7996, 0.001143296
      %v7998 = vmul.f32 %v7984, %v7997
      %v7999 = vadd.f32 %v7998, 0.014752088
      %v8000 = vmul.f32 %v7984, %v7999
      %v8001 = vadd.f32 %v8000, 0.112945676
      %v8002 = vmul.f32 %v7984, %v8001
      %v8003 = vadd.f32 %v8002, 0.4994258
      %v8004 = vmul.f32 %v7984, %v8003
      %v8005 = vadd.f32 %v8004, 1.0
      %v8006 = vrcp.pop %v8005
      %v8007 = vmul.f32 %v8005, %v8006
      %v8008 = vsub.f32 1.0, %v8007
      %v8009 = vmul.f32 %v8006, %v8008
      %v8010 = vadd.f32 %v8006, %v8009
      %vm8011 = vweird.f32 %v8005
      %vm8012 = vweird.f32 %v8006
      %vm8013 = vmor %vm8011, %vm8012
      %v8014 = vsel %vm8013, %v8006, %v8010
      %v8015 = vand.u32 2147483647, %v8005
      %vm8016 = vcmp.eq.f32.partialorder %v8015, 8.507059e+37
      %v8017 = vand.u32 %v8005, 2147483648
      %v8018 = vor.u32 1.1754944e-38, %v8017
      %v8019 = vsel %vm8016, %v8018, %v8014
      %v8020 = vmul.f32 %v7995, %v8019
      %v8021 = vmin.f32 %v8020, 1.0
      %v8022 = vmax.f32 %v8021, -1.0
      %v8023 = vmul.f32 %v6782, %v6782
      %v8024 = vmin.f32 16.0, %v8023
      %v8025 = vmul.f32 %v8024, 2.1237322e-06
      %v8026 = vadd.f32 %v8025, 0.00028619796
      %v8027 = vmul.f32 %v8024, %v8026
      %v8028 = vadd.f32 %v8027, 0.0036580483
      %v8029 = vmul.f32 %v8024, %v8028
      %v8030 = vadd.f32 %v8029, 0.05243302
      %v8031 = vmul.f32 %v8024, %v8030
      %v8032 = vadd.f32 %v8031, 0.18741608
      %v8033 = vmul.f32 %v8024, %v8032
      %v8034 = vadd.f32 %v8033, 1.1283791
      %v8035 = vmul.f32 %v6782, %v8034
      %v8036 = vmul.f32 %v8024, 3.8918573e-05
      %v8037 = vadd.f32 %v8036, 0.001143296
      %v8038 = vmul.f32 %v8024, %v8037
      %v8039 = vadd.f32 %v8038, 0.014752088
      %v8040 = vmul.f32 %v8024, %v8039
      %v8041 = vadd.f32 %v8040, 0.112945676
      %v8042 = vmul.f32 %v8024, %v8041
      %v8043 = vadd.f32 %v8042, 0.4994258
      %v8044 = vmul.f32 %v8024, %v8043
      %v8045 = vadd.f32 %v8044, 1.0
      %v8046 = vrcp.pop %v8045
      %v8047 = vmul.f32 %v8045, %v8046
      %v8048 = vsub.f32 1.0, %v8047
      %v8049 = vmul.f32 %v8046, %v8048
      %v8050 = vadd.f32 %v8046, %v8049
      %vm8051 = vweird.f32 %v8045
      %vm8052 = vweird.f32 %v8046
      %vm8053 = vmor %vm8051, %vm8052
      %v8054 = vsel %vm8053, %v8046, %v8050
      %v8055 = vand.u32 2147483647, %v8045
      %vm8056 = vcmp.eq.f32.partialorder %v8055, 8.507059e+37
      %v8057 = vand.u32 %v8045, 2147483648
      %v8058 = vor.u32 1.1754944e-38, %v8057
      %v8059 = vsel %vm8056, %v8058, %v8054
      %v8060 = vmul.f32 %v8035, %v8059
      %v8061 = vmin.f32 %v8060, 1.0
      %v8062 = vmax.f32 %v8061, -1.0
      %v8063 = vadd.f32 %v6822, 1.0
      %v8064 = vadd.f32 %v6862, 1.0
      %v8065 = vadd.f32 %v6902, 1.0
      %v8066 = vadd.f32 %v6942, 1.0
      %v8067 = vadd.f32 %v6982, 1.0
      %v8068 = vadd.f32 %v7022, 1.0
      %v8069 = vadd.f32 %v7062, 1.0
      %v8070 = vadd.f32 %v7102, 1.0
      %v8071 = vadd.f32 %v7142, 1.0
      %v8072 = vadd.f32 %v7182, 1.0
      %v8073 = vadd.f32 %v7222, 1.0
      %v8074 = vadd.f32 %v7262, 1.0
      %v8075 = vadd.f32 %v7302, 1.0
      %v8076 = vadd.f32 %v7342, 1.0
      %v8077 = vadd.f32 %v7382, 1.0
      %v8078 = vadd.f32 %v7422, 1.0
      %v8079 = vadd.f32 %v7462, 1.0
      %v8080 = vadd.f32 %v7502, 1.0
      %v8081 = vadd.f32 %v7542, 1.0
      %v8082 = vadd.f32 %v7582, 1.0
      %v8083 = vadd.f32 %v7622, 1.0
      %v8084 = vadd.f32 %v7662, 1.0
      %v8085 = vadd.f32 %v7702, 1.0
      %v8086 = vadd.f32 %v7742, 1.0
      %v8087 = vadd.f32 %v7782, 1.0
      %v8088 = vadd.f32 %v7822, 1.0
      %v8089 = vadd.f32 %v7862, 1.0
      %v8090 = vadd.f32 %v7902, 1.0
      %v8091 = vadd.f32 %v7942, 1.0
      %v8092 = vadd.f32 %v7982, 1.0
      %v8093 = vadd.f32 %v8022, 1.0
      %v8094 = vadd.f32 %v8062, 1.0
      %v8095 = vmul.f32 %v6719, %v8063
      %v8096 = vmul.f32 %v6720, %v8064
      %v8097 = vmul.f32 %v6721, %v8065
      %v8098 = vmul.f32 %v6722, %v8066
      %v8099 = vmul.f32 %v6723, %v8067
      %v8100 = vmul.f32 %v6724, %v8068
      %v8101 = vmul.f32 %v6725, %v8069
      %v8102 = vmul.f32 %v6726, %v8070
      %v8103 = vmul.f32 %v6727, %v8071
      %v8104 = vmul.f32 %v6728, %v8072
      %v8105 = vmul.f32 %v6729, %v8073
      %v8106 = vmul.f32 %v6730, %v8074
      %v8107 = vmul.f32 %v6731, %v8075
      %v8108 = vmul.f32 %v6732, %v8076
      %v8109 = vmul.f32 %v6733, %v8077
      %v8110 = vmul.f32 %v6734, %v8078
      %v8111 = vmul.f32 %v6735, %v8079
      %v8112 = vmul.f32 %v6736, %v8080
      %v8113 = vmul.f32 %v6737, %v8081
      %v8114 = vmul.f32 %v6738, %v8082
      %v8115 = vmul.f32 %v6739, %v8083
      %v8116 = vmul.f32 %v6740, %v8084
      %v8117 = vmul.f32 %v6741, %v8085
      %v8118 = vmul.f32 %v6742, %v8086
      %v8119 = vmul.f32 %v6743, %v8087
      %v8120 = vmul.f32 %v6744, %v8088
      %v8121 = vmul.f32 %v6745, %v8089
      %v8122 = vmul.f32 %v6746, %v8090
      %v8123 = vmul.f32 %v6747, %v8091
      %v8124 = vmul.f32 %v6748, %v8092
      %v8125 = vmul.f32 %v6749, %v8093
      %v8126 = vmul.f32 %v6750, %v8094
      %v8127 = vld [vmem:[%s266] sm:$0xff]
      %v8128 = vld [vmem:[%s266 + $0x8] sm:$0xff]
      %v8129 = vld [vmem:[%s266 + $0x10] sm:$0xff]
      %v8130 = vld [vmem:[%s266 + $0x18] sm:$0xff]
      %v8131 = vld [vmem:[%s266 + $0x20] sm:$0xff]
      %v8132 = vld [vmem:[%s266 + $0x28] sm:$0xff]
      %v8133 = vld [vmem:[%s266 + $0x30] sm:$0xff]
      %v8134 = vld [vmem:[%s266 + $0x38] sm:$0xff]
      %v8135 = vld [vmem:[%s266 + $0x40] sm:$0xff]
      %v8136 = vld [vmem:[%s266 + $0x48] sm:$0xff]
      %v8137 = vld [vmem:[%s266 + $0x50] sm:$0xff]
      %v8138 = vld [vmem:[%s266 + $0x58] sm:$0xff]
      %v8139 = vld [vmem:[%s266 + $0x60] sm:$0xff]
      %v8140 = vld [vmem:[%s266 + $0x68] sm:$0xff]
      %v8141 = vld [vmem:[%s266 + $0x70] sm:$0xff]
      %v8142 = vld [vmem:[%s266 + $0x78] sm:$0xff]
      %v8143 = vld [vmem:[%s266 + $0x80] sm:$0xff]
      %v8144 = vld [vmem:[%s266 + $0x88] sm:$0xff]
      %v8145 = vld [vmem:[%s266 + $0x90] sm:$0xff]
      %v8146 = vld [vmem:[%s266 + $0x98] sm:$0xff]
      %v8147 = vld [vmem:[%s266 + $0xa0] sm:$0xff]
      %v8148 = vld [vmem:[%s266 + $0xa8] sm:$0xff]
      %v8149 = vld [vmem:[%s266 + $0xb0] sm:$0xff]
      %v8150 = vld [vmem:[%s266 + $0xb8] sm:$0xff]
      %v8151 = vld [vmem:[%s266 + $0xc0] sm:$0xff]
      %v8152 = vld [vmem:[%s266 + $0xc8] sm:$0xff]
      %v8153 = vld [vmem:[%s266 + $0xd0] sm:$0xff]
      %v8154 = vld [vmem:[%s266 + $0xd8] sm:$0xff]
      %v8155 = vld [vmem:[%s266 + $0xe0] sm:$0xff]
      %v8156 = vld [vmem:[%s266 + $0xe8] sm:$0xff]
      %v8157 = vld [vmem:[%s266 + $0xf0] sm:$0xff]
      %v8158 = vld [vmem:[%s266 + $0xf8] sm:$0xff]
      %v8159 = vadd.f32 %v8095, %v8127
      %v8160 = vadd.f32 %v8096, %v8128
      %v8161 = vadd.f32 %v8097, %v8129
      %v8162 = vadd.f32 %v8098, %v8130
      %v8163 = vadd.f32 %v8099, %v8131
      %v8164 = vadd.f32 %v8100, %v8132
      %v8165 = vadd.f32 %v8101, %v8133
      %v8166 = vadd.f32 %v8102, %v8134
      %v8167 = vadd.f32 %v8103, %v8135
      %v8168 = vadd.f32 %v8104, %v8136
      %v8169 = vadd.f32 %v8105, %v8137
      %v8170 = vadd.f32 %v8106, %v8138
      %v8171 = vadd.f32 %v8107, %v8139
      %v8172 = vadd.f32 %v8108, %v8140
      %v8173 = vadd.f32 %v8109, %v8141
      %v8174 = vadd.f32 %v8110, %v8142
      %v8175 = vadd.f32 %v8111, %v8143
      %v8176 = vadd.f32 %v8112, %v8144
      %v8177 = vadd.f32 %v8113, %v8145
      %v8178 = vadd.f32 %v8114, %v8146
      %v8179 = vadd.f32 %v8115, %v8147
      %v8180 = vadd.f32 %v8116, %v8148
      %v8181 = vadd.f32 %v8117, %v8149
      %v8182 = vadd.f32 %v8118, %v8150
      %v8183 = vadd.f32 %v8119, %v8151
      %v8184 = vadd.f32 %v8120, %v8152
      %v8185 = vadd.f32 %v8121, %v8153
      %v8186 = vadd.f32 %v8122, %v8154
      %v8187 = vadd.f32 %v8123, %v8155
      %v8188 = vadd.f32 %v8124, %v8156
      %v8189 = vadd.f32 %v8125, %v8157
      %v8190 = vadd.f32 %v8126, %v8158
      %8191 = vst.msk [vmem:[%s271] sm:$0xff] %vm339, %v8159
      %8192 = vst.msk [vmem:[%s271 + $0x8] sm:$0xff] %vm339, %v8160
      %8193 = vst.msk [vmem:[%s271 + $0x10] sm:$0xff] %vm339, %v8161
      %8194 = vst.msk [vmem:[%s271 + $0x18] sm:$0xff] %vm339, %v8162
      %8195 = vst.msk [vmem:[%s271 + $0x20] sm:$0xff] %vm339, %v8163
      %8196 = vst.msk [vmem:[%s271 + $0x28] sm:$0xff] %vm339, %v8164
      %8197 = vst.msk [vmem:[%s271 + $0x30] sm:$0xff] %vm339, %v8165
      %8198 = vst.msk [vmem:[%s271 + $0x38] sm:$0xff] %vm339, %v8166
      %8199 = vst.msk [vmem:[%s271 + $0x40] sm:$0xff] %vm339, %v8167
      %8200 = vst.msk [vmem:[%s271 + $0x48] sm:$0xff] %vm339, %v8168
      %8201 = vst.msk [vmem:[%s271 + $0x50] sm:$0xff] %vm339, %v8169
      %8202 = vst.msk [vmem:[%s271 + $0x58] sm:$0xff] %vm339, %v8170
      %8203 = vst.msk [vmem:[%s271 + $0x60] sm:$0xff] %vm339, %v8171
      %8204 = vst.msk [vmem:[%s271 + $0x68] sm:$0xff] %vm339, %v8172
      %8205 = vst.msk [vmem:[%s271 + $0x70] sm:$0xff] %vm339, %v8173
      %8206 = vst.msk [vmem:[%s271 + $0x78] sm:$0xff] %vm339, %v8174
      %8207 = vst.msk [vmem:[%s271 + $0x80] sm:$0xff] %vm339, %v8175
      %8208 = vst.msk [vmem:[%s271 + $0x88] sm:$0xff] %vm339, %v8176
      %8209 = vst.msk [vmem:[%s271 + $0x90] sm:$0xff] %vm339, %v8177
      %8210 = vst.msk [vmem:[%s271 + $0x98] sm:$0xff] %vm339, %v8178
      %8211 = vst.msk [vmem:[%s271 + $0xa0] sm:$0xff] %vm339, %v8179
      %8212 = vst.msk [vmem:[%s271 + $0xa8] sm:$0xff] %vm339, %v8180
      %8213 = vst.msk [vmem:[%s271 + $0xb0] sm:$0xff] %vm339, %v8181
      %8214 = vst.msk [vmem:[%s271 + $0xb8] sm:$0xff] %vm339, %v8182
      %8215 = vst.msk [vmem:[%s271 + $0xc0] sm:$0xff] %vm339, %v8183
      %8216 = vst.msk [vmem:[%s271 + $0xc8] sm:$0xff] %vm339, %v8184
      %8217 = vst.msk [vmem:[%s271 + $0xd0] sm:$0xff] %vm339, %v8185
      %8218 = vst.msk [vmem:[%s271 + $0xd8] sm:$0xff] %vm339, %v8186
      %8219 = vst.msk [vmem:[%s271 + $0xe0] sm:$0xff] %vm339, %v8187
      %8220 = vst.msk [vmem:[%s271 + $0xe8] sm:$0xff] %vm339, %v8188
      %8221 = vst.msk [vmem:[%s271 + $0xf0] sm:$0xff] %vm339, %v8189
      %8222 = vst.msk [vmem:[%s271 + $0xf8] sm:$0xff] %vm339, %v8190
      %p8223 = scmp.lt.s32.totalorder %s17, 1
      %s8224 = scalar_select %p8223, %s17, 1
      %s8225 = smul.addr %s8224, 32
      %s8226 = smul.addr %s8225, 8
      %s8227 = scalar_lea.vmem %s6, %s8226
      // Predicated region
      $region45: #{frb_forward.3} parent=43 // pred_check
        %p8228 = pneg %p171
      $region46: #{frb_forward.3} parent=43 // pred_check_branch
        %8230 = sbr.rel (%p8228) target = $region48
      $region47: #{frb_forward.3} parent=43 // pred_region
        _
      $region48: #{frb_forward.3} parent=43 // pred_fallthru
        _
    $region44: #{frb_forward.3} parent=5 // pred_fallthru
      _
    %p8231 = scmp.le.s32.totalorder 2, %s12
    // Predicated region
    $region49: #{frb_forward.3} parent=5 // pred_check
      %p8232 = pneg %p8231
    $region50: #{frb_forward.3} parent=5 // pred_check_branch
      %8234 = sbr.rel (%p8232) target = $region52
    $region51: #{frb_forward.3} parent=5 // pred_region
      %s8235 = ssub.s32 %s12, 2
      // Predicated region
      $region53: #{frb_forward.3} parent=51 // pred_check
        %p8236 = pneg %p177
      $region54: #{frb_forward.3} parent=51 // pred_check_branch
        %8238 = sbr.rel (%p8236) target = $region56
      $region55: #{frb_forward.3} parent=51 // pred_region
        %p8239 = scmp.lt.s32.totalorder %s18, 1
        %s8240 = scalar_select %p8239, %s18, 1
        %s8241 = smul.addr %s8240, 32
        %s8242 = smul.addr %s8241, 8
        %s8243 = scalar_lea.vmem %s6, %s8242
      $region56: #{frb_forward.3} parent=51 // pred_fallthru
        _
    $region52: #{frb_forward.3} parent=5 // pred_fallthru
      _
  $region6: #{frb_forward.3} parent=0 // loop_footer
    %s16 = sadd.s32 1, %s12
  $region7: #{frb_forward.3} parent=0 // loop_footer_branch
    %11 = sbr.rel target = $region3
  $region8: #{frb_forward.3} parent=0 // loop_exit
    _

</llo_original>
